<compile_context>
chip_gen: v6e
topology: v6e:2x2x1
jax: 0.10.0
libtpu: 0.0.40
codegen_flags: <defaults>
</compile_context>

<pallas_src>
import functools
import numpy as np
import jax
import jax.numpy as jnp
from jax.experimental import pallas as pl
from jax.experimental.pallas import tpu as pltpu

# Match f32 matmul precision between the kernel and the pure-JAX reference.
jax.config.update("jax_default_matmul_precision", "highest")

# ----------------------------- config (small) -----------------------------
N_VOCAB = 64
EMBED_DIM = 32
LSTM_SIZE = 32
NUM_LAYERS = 2
SEQ_LEN = 8      # T
BATCH = 2        # B  (the module's init_state calls this "sequence_length")
BATCH_PAD = 8    # one full f32 sublane group
FC_PAD = 128     # lane-dense logits width (>= N_VOCAB, multiple of 128)


# ----------------------------- fused forward kernel ------------------------
def fused_forward_kernel(tok_ref, embw0_ref, b0_ref, wrec_ref, b1_ref,
                         h0_ref, c0_ref, fcw_ref, fcb_ref,
                         logits_ref, hN_ref, cN_ref, *, seq_len, batch):
    """Single-invocation kernel (no grid): embedding gather + wavefronted
    2-layer LSTM + FC projection, everything resident in VMEM."""
    T, Bp = seq_len, batch
    V = embw0_ref.shape[0]
    H = hN_ref.shape[-1]
    G = 4 * H

    # ---- embedding gather fused with the hoisted layer-0 input projection:
    # gates_x0[t*Bp+b] = emb[tok] @ W_ih0 + b0  (one-hot matmul, V is tiny) ----
    tok = tok_ref[...]                                               # (T*Bp, 1)
    one_hot = (jax.lax.broadcasted_iota(jnp.int32, (T * Bp, V), 1) == tok
               ).astype(jnp.float32)                                 # (T*Bp, V)
    gates_x0 = (jnp.dot(one_hot, embw0_ref[...],
                        preferred_element_type=jnp.float32)
                + b0_ref[...])                                       # (T*Bp, G)

    wrec = wrec_ref[...]                                             # (2H, 2G)
    b1 = b1_ref[...]                                                 # (1, G)

    h0 = h0_ref[0]
    c0 = c0_ref[0]
    h1 = h0_ref[1]
    c1 = c0_ref[1]

    def gate_update(gates, c):
        # i, f, o: sigmoid.  g: tanh recovered as 2*sigmoid(2x)-1; the x2 is
        # pre-folded into the g-gate weight/bias columns, so one full-width
        # sigmoid replaces sigmoid+tanh on the serial chain.
        sg = jax.nn.sigmoid(gates)
        i_g = sg[:, 0 * H:1 * H]
        f_g = sg[:, 1 * H:2 * H]
        g_g = 2.0 * sg[:, 2 * H:3 * H] - 1.0
        o_g = sg[:, 3 * H:4 * H]
        c_new = f_g * c + i_g * g_g
        h_new = o_g * jnp.tanh(c_new)
        return h_new, c_new

    y1 = []
    # Wavefront: step s runs layer-0 timestep s and layer-1 timestep s-1.
    # Both recurrent matmuls are fused into one (Bp,2H)x(2H,2G) MXU pass:
    #   rec[:, :G]  = h0 @ W_hh0
    #   rec[:, G:]  = h0 @ W_ih1 + h1 @ W_hh1
    for s in range(T + 1):                                           # unrolled
        lhs = jnp.concatenate([h0, h1], axis=1)                      # (Bp, 2H)
        rec = jnp.dot(lhs, wrec, preferred_element_type=jnp.float32) # (Bp, 2G)
        if s < T:                                                    # layer 0
            g0 = gates_x0[s * Bp:(s + 1) * Bp, :] + rec[:, :G]
            h0, c0 = gate_update(g0, c0)
        if s >= 1:                                                   # layer 1
            g1 = rec[:, G:] + b1
            h1, c1 = gate_update(g1, c1)
            y1.append(h1)

    y1 = jnp.concatenate(y1, axis=0)                                 # (T*Bp, H)

    # ---- final FC projection: one lane-dense (T*Bp, 128) store ----
    logits_ref[...] = (jnp.dot(y1, fcw_ref[...],
                               preferred_element_type=jnp.float32)
                       + fcb_ref[...])
    hN_ref[0] = h0
    hN_ref[1] = h1
    cN_ref[0] = c0
    cN_ref[1] = c1


# ----------------------------- parameter prep (once, outside jit) ----------
def prepare_kernel_params(params):
    """Fold the model params into kernel-ready tensors: g-gate columns scaled
    by 2 (tanh-via-sigmoid), embedding folded into W_ih0, layer-1 recurrent /
    input weights packed into one block matrix, fc padded to 128 lanes."""
    H = LSTM_SIZE
    G = 4 * H

    def scale_g(w):  # scale the g-gate columns (2H:3H of last dim) by 2
        return w.at[..., 2 * H:3 * H].multiply(2.0)

    wih0 = scale_g(params["w_ih_t_0"])                  # (E, 4H)
    whh0 = scale_g(params["w_hh_t_0"])                  # (H, 4H)
    b0 = scale_g(params["b_0"]).reshape(1, G)
    wih1 = scale_g(params["w_ih_t_1"])                  # (H, 4H)
    whh1 = scale_g(params["w_hh_t_1"])                  # (H, 4H)
    b1 = scale_g(params["b_1"]).reshape(1, G)

    embw0 = jnp.dot(params["embedding"], wih0)          # (V, 4H)

    wrec = jnp.zeros((2 * H, 2 * G), jnp.float32)
    wrec = wrec.at[:H, :G].set(whh0)                    # h0 -> layer-0 gates
    wrec = wrec.at[:H, G:].set(wih1)                    # h0 -> layer-1 input
    wrec = wrec.at[H:, G:].set(whh1)                    # h1 -> layer-1 gates

    fcw = jnp.zeros((H, FC_PAD), jnp.float32).at[:, :N_VOCAB].set(
        params["fc_w_t"])
    fcb = jnp.zeros((1, FC_PAD), jnp.float32).at[:, :N_VOCAB].set(
        params["fc_b"].reshape(1, -1))

    return {"embw0": embw0, "b0": b0, "wrec": wrec, "b1": b1,
            "fcw": fcw, "fcb": fcb}


# ----------------------------- wrapper --------------------------------------
def fused_forward(kparams, x_tokens, prev_state):
    """x_tokens: int32 (T, B); prev_state: (h, c) each (num_layers, B, H)."""
    h_prev, c_prev = prev_state
    T, B = x_tokens.shape
    Bp = max(BATCH_PAD, ((B + 7) // 8) * 8)

    # Pad batch to a full sublane group; padded rows zero-init, sliced away.
    x_pad = jnp.zeros((T, Bp), jnp.int32).at[:, :B].set(
        x_tokens.astype(jnp.int32))
    tok2d = x_pad.reshape(T * Bp, 1)
    hp = jnp.zeros((NUM_LAYERS, Bp, LSTM_SIZE), jnp.float32).at[:, :B, :].set(
        h_prev)
    cp = jnp.zeros((NUM_LAYERS, Bp, LSTM_SIZE), jnp.float32).at[:, :B, :].set(
        c_prev)

    kernel = functools.partial(fused_forward_kernel, seq_len=T, batch=Bp)
    in_specs = [pl.BlockSpec(memory_space=pltpu.MemorySpace.VMEM)
                for _ in range(9)]
    out_specs = tuple(pl.BlockSpec(memory_space=pltpu.MemorySpace.VMEM)
                      for _ in range(3))

    logits_pad, hN, cN = pl.pallas_call(
        kernel,
        out_shape=(
            jax.ShapeDtypeStruct((T * Bp, FC_PAD), jnp.float32),
            jax.ShapeDtypeStruct((NUM_LAYERS, Bp, LSTM_SIZE), jnp.float32),
            jax.ShapeDtypeStruct((NUM_LAYERS, Bp, LSTM_SIZE), jnp.float32),
        ),
        in_specs=in_specs,
        out_specs=out_specs,
    )(tok2d, kparams["embw0"], kparams["b0"], kparams["wrec"], kparams["b1"],
      hp, cp, kparams["fcw"], kparams["fcb"])

    logits = logits_pad.reshape(T, Bp, FC_PAD)[:, :B, :N_VOCAB]
    return logits, (hN[:, :B, :], cN[:, :B, :])


model_forward = jax.jit(fused_forward)


# ----------------------------- pure-JAX reference --------------------------
def reference_forward(params, x_tokens, prev_state):
    h_prev, c_prev = prev_state
    embed = jnp.take(params["embedding"], x_tokens, axis=0)

    def step(carry, x_t, wih, whh, b):
        h, c = carry
        gates = x_t @ wih + h @ whh + b
        H = h.shape[-1]
        i = jax.nn.sigmoid(gates[:, :H])
        f = jax.nn.sigmoid(gates[:, H:2 * H])
        g = jnp.tanh(gates[:, 2 * H:3 * H])
        o = jax.nn.sigmoid(gates[:, 3 * H:])
        c_new = f * c + i * g
        h_new = o * jnp.tanh(c_new)
        return (h_new, c_new), h_new

    layer_in = embed
    hs, cs = [], []
    for l in range(NUM_LAYERS):
        fn = functools.partial(step, wih=params[f"w_ih_t_{l}"],
                               whh=params[f"w_hh_t_{l}"], b=params[f"b_{l}"])
        (hN, cN), out_seq = jax.lax.scan(fn, (h_prev[l], c_prev[l]), layer_in)
        layer_in = out_seq
        hs.append(hN)
        cs.append(cN)
    logits = layer_in @ params["fc_w_t"] + params["fc_b"]
    return logits, (jnp.stack(hs), jnp.stack(cs))


# ----------------------------- parameter init ------------------------------
def init_params(key):
    params = {}
    keys = jax.random.split(key, 4 + 4 * NUM_LAYERS)
    ki = iter(keys)
    # nn.Embedding: N(0, 1)
    params["embedding"] = jax.random.normal(
        next(ki), (N_VOCAB, EMBED_DIM), jnp.float32)
    # nn.LSTM: U(-1/sqrt(H), 1/sqrt(H)); stored transposed as (D_in, 4H)/(H, 4H)
    k = 1.0 / np.sqrt(LSTM_SIZE)
    for l in range(NUM_LAYERS):
        d_in = EMBED_DIM if l == 0 else LSTM_SIZE
        params[f"w_ih_t_{l}"] = jax.random.uniform(
            next(ki), (d_in, 4 * LSTM_SIZE), jnp.float32, -k, k)
        params[f"w_hh_t_{l}"] = jax.random.uniform(
            next(ki), (LSTM_SIZE, 4 * LSTM_SIZE), jnp.float32, -k, k)
        b_ih = jax.random.uniform(next(ki), (4 * LSTM_SIZE,), jnp.float32, -k, k)
        b_hh = jax.random.uniform(next(ki), (4 * LSTM_SIZE,), jnp.float32, -k, k)
        params[f"b_{l}"] = b_ih + b_hh
    # nn.Linear: U(-1/sqrt(H), 1/sqrt(H)); stored transposed as (H, V)
    kf = 1.0 / np.sqrt(LSTM_SIZE)
    params["fc_w_t"] = jax.random.uniform(
        next(ki), (LSTM_SIZE, N_VOCAB), jnp.float32, -kf, kf)
    params["fc_b"] = jax.random.uniform(
        next(ki), (N_VOCAB,), jnp.float32, -kf, kf)
    return params


def init_state(batch):
    # matches Model.init_state (num_layers, "sequence_length"=batch, lstm_size)
    return (jnp.zeros((NUM_LAYERS, batch, LSTM_SIZE), jnp.float32),
            jnp.zeros((NUM_LAYERS, batch, LSTM_SIZE), jnp.float32))


# ----------------------------- main ---------------------------------------
if __name__ == "__main__":
    root = jax.random.PRNGKey(0)
    k_tok, k_param = jax.random.split(root)

    params = init_params(k_param)
    kparams = prepare_kernel_params(params)   # one-time weight prep
    x = jax.random.randint(k_tok, (SEQ_LEN, BATCH), 0, N_VOCAB, jnp.int32)
    state0 = init_state(BATCH)

    logits, (h, c) = model_forward(kparams, x, state0)
    jax.block_until_ready((logits, h, c))

    # sanity check vs pure-JAX reference (on the original, unfolded params)
    ref_logits, (ref_h, ref_c) = reference_forward(params, x, state0)
    np.testing.assert_allclose(np.asarray(logits), np.asarray(ref_logits),
                               rtol=1e-4, atol=1e-4)
    np.testing.assert_allclose(np.asarray(h), np.asarray(ref_h),
                               rtol=1e-4, atol=1e-4)
    np.testing.assert_allclose(np.asarray(c), np.asarray(ref_c),
                               rtol=1e-4, atol=1e-4)

    assert logits.shape == (SEQ_LEN, BATCH, N_VOCAB)
    assert h.shape == (NUM_LAYERS, BATCH, LSTM_SIZE)
    assert c.shape == (NUM_LAYERS, BATCH, LSTM_SIZE)
    print("KERNEL_OK")
</pallas_src>

<mosaic_0001>
module attributes {stable_mosaic.version = 11 : i64} {
  func.func @fused_forward_kernel(%arg0: memref<64x1xi32, #tpu.memory_space<vmem>>, %arg1: memref<64x128xf32, #tpu.memory_space<vmem>>, %arg2: memref<1x128xf32, #tpu.memory_space<vmem>>, %arg3: memref<64x256xf32, #tpu.memory_space<vmem>>, %arg4: memref<1x128xf32, #tpu.memory_space<vmem>>, %arg5: memref<2x8x32xf32, #tpu.memory_space<vmem>>, %arg6: memref<2x8x32xf32, #tpu.memory_space<vmem>>, %arg7: memref<32x128xf32, #tpu.memory_space<vmem>>, %arg8: memref<1x128xf32, #tpu.memory_space<vmem>>, %arg9: memref<64x128xf32, #tpu.memory_space<vmem>>, %arg10: memref<2x8x32xf32, #tpu.memory_space<vmem>>, %arg11: memref<2x8x32xf32, #tpu.memory_space<vmem>>) attributes {dimension_semantics = [], scalar_prefetch = 0 : i64, scratch_operands = 0 : i64, tpu.core_type = #tpu.core_type<tc>} {
    %c0 = arith.constant 0 : index
    %c0_0 = arith.constant 0 : index
    %0 = vector.load %arg0[%c0, %c0_0] : memref<64x1xi32, #tpu.memory_space<vmem>>, vector<64x1xi32>
    %1 = tpu.iota {dimensions = array<i32: 1>} : vector<64x64xi32>
    %2 = vector.broadcast %0 : vector<64x1xi32> to vector<64x64xi32>
    %3 = arith.cmpi eq, %1, %2 : vector<64x64xi32>
    %4 = arith.extui %3 : vector<64x64xi1> to vector<64x64xi32>
    %5 = arith.sitofp %4 : vector<64x64xi32> to vector<64x64xf32>
    %c0_1 = arith.constant 0 : index
    %c0_2 = arith.constant 0 : index
    %6 = vector.load %arg1[%c0_1, %c0_2] : memref<64x128xf32, #tpu.memory_space<vmem>>, vector<64x128xf32>
    %cst = arith.constant dense<0.000000e+00> : vector<64x128xf32>
    %7 = tpu.matmul %5, %6, %cst {dimension_numbers = #tpu.dot_dimension_numbers<[1], [0], [0], [1], [0, 0, 1, 1], [], []>, precision = #tpu.contract_precision<fp32>} : vector<64x64xf32>, vector<64x128xf32>, vector<64x128xf32> -> vector<64x128xf32>
    %c0_3 = arith.constant 0 : index
    %c0_4 = arith.constant 0 : index
    %8 = vector.load %arg2[%c0_3, %c0_4] : memref<1x128xf32, #tpu.memory_space<vmem>>, vector<1x128xf32>
    %9 = vector.broadcast %8 : vector<1x128xf32> to vector<64x128xf32>
    %10 = arith.addf %7, %9 : vector<64x128xf32>
    %c0_5 = arith.constant 0 : index
    %c0_6 = arith.constant 0 : index
    %11 = vector.load %arg3[%c0_5, %c0_6] : memref<64x256xf32, #tpu.memory_space<vmem>>, vector<64x256xf32>
    %c0_7 = arith.constant 0 : index
    %c0_8 = arith.constant 0 : index
    %12 = vector.load %arg4[%c0_7, %c0_8] : memref<1x128xf32, #tpu.memory_space<vmem>>, vector<1x128xf32>
    %c0_9 = arith.constant 0 : index
    %c0_10 = arith.constant 0 : index
    %c0_11 = arith.constant 0 : index
    %13 = vector.load %arg5[%c0_9, %c0_10, %c0_11] : memref<2x8x32xf32, #tpu.memory_space<vmem>>, vector<1x8x32xf32>
    %14 = vector.shape_cast %13 : vector<1x8x32xf32> to vector<8x32xf32>
    %c0_12 = arith.constant 0 : index
    %c0_13 = arith.constant 0 : index
    %c0_14 = arith.constant 0 : index
    %15 = vector.load %arg6[%c0_12, %c0_13, %c0_14] : memref<2x8x32xf32, #tpu.memory_space<vmem>>, vector<1x8x32xf32>
    %16 = vector.shape_cast %15 : vector<1x8x32xf32> to vector<8x32xf32>
    %c1 = arith.constant 1 : index
    %c0_15 = arith.constant 0 : index
    %c0_16 = arith.constant 0 : index
    %17 = vector.load %arg5[%c1, %c0_15, %c0_16] : memref<2x8x32xf32, #tpu.memory_space<vmem>>, vector<1x8x32xf32>
    %18 = vector.shape_cast %17 : vector<1x8x32xf32> to vector<8x32xf32>
    %c1_17 = arith.constant 1 : index
    %c0_18 = arith.constant 0 : index
    %c0_19 = arith.constant 0 : index
    %19 = vector.load %arg6[%c1_17, %c0_18, %c0_19] : memref<2x8x32xf32, #tpu.memory_space<vmem>>, vector<1x8x32xf32>
    %20 = vector.shape_cast %19 : vector<1x8x32xf32> to vector<8x32xf32>
    %21 = tpu.concatenate %14, %18 in 1 : vector<8x32xf32>, vector<8x32xf32> -> vector<8x64xf32>
    %cst_20 = arith.constant dense<0.000000e+00> : vector<8x256xf32>
    %22 = tpu.matmul %21, %11, %cst_20 {dimension_numbers = #tpu.dot_dimension_numbers<[1], [0], [0], [1], [0, 0, 1, 1], [], []>, precision = #tpu.contract_precision<fp32>} : vector<8x64xf32>, vector<64x256xf32>, vector<8x256xf32> -> vector<8x256xf32>
    %23 = vector.extract_strided_slice %10 {offsets = [0, 0], sizes = [8, 128], strides = [1, 1]} : vector<64x128xf32> to vector<8x128xf32>
    %24 = vector.extract_strided_slice %22 {offsets = [0, 0], sizes = [8, 128], strides = [1, 1]} : vector<8x256xf32> to vector<8x128xf32>
    %25 = arith.addf %23, %24 : vector<8x128xf32>
    %26 = arith.negf %25 : vector<8x128xf32>
    %27 = math.exp %26 : vector<8x128xf32>
    %cst_21 = arith.constant 1.000000e+00 : f32
    %28 = vector.broadcast %cst_21 : f32 to vector<8x128xf32>
    %29 = arith.addf %28, %27 : vector<8x128xf32>
    %30 = arith.divf %28, %29 : vector<8x128xf32>
    %31 = vector.extract_strided_slice %30 {offsets = [0, 0], sizes = [8, 32], strides = [1, 1]} : vector<8x128xf32> to vector<8x32xf32>
    %32 = vector.extract_strided_slice %30 {offsets = [0, 32], sizes = [8, 32], strides = [1, 1]} : vector<8x128xf32> to vector<8x32xf32>
    %33 = vector.extract_strided_slice %30 {offsets = [0, 64], sizes = [8, 32], strides = [1, 1]} : vector<8x128xf32> to vector<8x32xf32>
    %cst_22 = arith.constant 2.000000e+00 : f32
    %34 = vector.broadcast %cst_22 : f32 to vector<8x32xf32>
    %35 = arith.mulf %34, %33 : vector<8x32xf32>
    %cst_23 = arith.constant 1.000000e+00 : f32
    %36 = vector.broadcast %cst_23 : f32 to vector<8x32xf32>
    %37 = arith.subf %35, %36 : vector<8x32xf32>
    %38 = vector.extract_strided_slice %30 {offsets = [0, 96], sizes = [8, 32], strides = [1, 1]} : vector<8x128xf32> to vector<8x32xf32>
    %39 = arith.mulf %32, %16 : vector<8x32xf32>
    %40 = arith.mulf %31, %37 : vector<8x32xf32>
    %41 = arith.addf %39, %40 : vector<8x32xf32>
    %42 = math.tanh %41 : vector<8x32xf32>
    %43 = arith.mulf %38, %42 : vector<8x32xf32>
    %44 = tpu.concatenate %43, %18 in 1 : vector<8x32xf32>, vector<8x32xf32> -> vector<8x64xf32>
    %cst_24 = arith.constant dense<0.000000e+00> : vector<8x256xf32>
    %45 = tpu.matmul %44, %11, %cst_24 {dimension_numbers = #tpu.dot_dimension_numbers<[1], [0], [0], [1], [0, 0, 1, 1], [], []>, precision = #tpu.contract_precision<fp32>} : vector<8x64xf32>, vector<64x256xf32>, vector<8x256xf32> -> vector<8x256xf32>
    %46 = vector.extract_strided_slice %10 {offsets = [8, 0], sizes = [8, 128], strides = [1, 1]} : vector<64x128xf32> to vector<8x128xf32>
    %47 = vector.extract_strided_slice %45 {offsets = [0, 0], sizes = [8, 128], strides = [1, 1]} : vector<8x256xf32> to vector<8x128xf32>
    %48 = arith.addf %46, %47 : vector<8x128xf32>
    %49 = arith.negf %48 : vector<8x128xf32>
    %50 = math.exp %49 : vector<8x128xf32>
    %cst_25 = arith.constant 1.000000e+00 : f32
    %51 = vector.broadcast %cst_25 : f32 to vector<8x128xf32>
    %52 = arith.addf %51, %50 : vector<8x128xf32>
    %53 = arith.divf %51, %52 : vector<8x128xf32>
    %54 = vector.extract_strided_slice %53 {offsets = [0, 0], sizes = [8, 32], strides = [1, 1]} : vector<8x128xf32> to vector<8x32xf32>
    %55 = vector.extract_strided_slice %53 {offsets = [0, 32], sizes = [8, 32], strides = [1, 1]} : vector<8x128xf32> to vector<8x32xf32>
    %56 = vector.extract_strided_slice %53 {offsets = [0, 64], sizes = [8, 32], strides = [1, 1]} : vector<8x128xf32> to vector<8x32xf32>
    %cst_26 = arith.constant 2.000000e+00 : f32
    %57 = vector.broadcast %cst_26 : f32 to vector<8x32xf32>
    %58 = arith.mulf %57, %56 : vector<8x32xf32>
    %cst_27 = arith.constant 1.000000e+00 : f32
    %59 = vector.broadcast %cst_27 : f32 to vector<8x32xf32>
    %60 = arith.subf %58, %59 : vector<8x32xf32>
    %61 = vector.extract_strided_slice %53 {offsets = [0, 96], sizes = [8, 32], strides = [1, 1]} : vector<8x128xf32> to vector<8x32xf32>
    %62 = arith.mulf %55, %41 : vector<8x32xf32>
    %63 = arith.mulf %54, %60 : vector<8x32xf32>
    %64 = arith.addf %62, %63 : vector<8x32xf32>
    %65 = math.tanh %64 : vector<8x32xf32>
    %66 = arith.mulf %61, %65 : vector<8x32xf32>
    %67 = vector.extract_strided_slice %45 {offsets = [0, 128], sizes = [8, 128], strides = [1, 1]} : vector<8x256xf32> to vector<8x128xf32>
    %68 = vector.broadcast %12 : vector<1x128xf32> to vector<8x128xf32>
    %69 = arith.addf %67, %68 : vector<8x128xf32>
    %70 = arith.negf %69 : vector<8x128xf32>
    %71 = math.exp %70 : vector<8x128xf32>
    %cst_28 = arith.constant 1.000000e+00 : f32
    %72 = vector.broadcast %cst_28 : f32 to vector<8x128xf32>
    %73 = arith.addf %72, %71 : vector<8x128xf32>
    %74 = arith.divf %72, %73 : vector<8x128xf32>
    %75 = vector.extract_strided_slice %74 {offsets = [0, 0], sizes = [8, 32], strides = [1, 1]} : vector<8x128xf32> to vector<8x32xf32>
    %76 = vector.extract_strided_slice %74 {offsets = [0, 32], sizes = [8, 32], strides = [1, 1]} : vector<8x128xf32> to vector<8x32xf32>
    %77 = vector.extract_strided_slice %74 {offsets = [0, 64], sizes = [8, 32], strides = [1, 1]} : vector<8x128xf32> to vector<8x32xf32>
    %cst_29 = arith.constant 2.000000e+00 : f32
    %78 = vector.broadcast %cst_29 : f32 to vector<8x32xf32>
    %79 = arith.mulf %78, %77 : vector<8x32xf32>
    %cst_30 = arith.constant 1.000000e+00 : f32
    %80 = vector.broadcast %cst_30 : f32 to vector<8x32xf32>
    %81 = arith.subf %79, %80 : vector<8x32xf32>
    %82 = vector.extract_strided_slice %74 {offsets = [0, 96], sizes = [8, 32], strides = [1, 1]} : vector<8x128xf32> to vector<8x32xf32>
    %83 = arith.mulf %76, %20 : vector<8x32xf32>
    %84 = arith.mulf %75, %81 : vector<8x32xf32>
    %85 = arith.addf %83, %84 : vector<8x32xf32>
    %86 = math.tanh %85 : vector<8x32xf32>
    %87 = arith.mulf %82, %86 : vector<8x32xf32>
    %88 = tpu.concatenate %66, %87 in 1 : vector<8x32xf32>, vector<8x32xf32> -> vector<8x64xf32>
    %cst_31 = arith.constant dense<0.000000e+00> : vector<8x256xf32>
    %89 = tpu.matmul %88, %11, %cst_31 {dimension_numbers = #tpu.dot_dimension_numbers<[1], [0], [0], [1], [0, 0, 1, 1], [], []>, precision = #tpu.contract_precision<fp32>} : vector<8x64xf32>, vector<64x256xf32>, vector<8x256xf32> -> vector<8x256xf32>
    %90 = vector.extract_strided_slice %10 {offsets = [16, 0], sizes = [8, 128], strides = [1, 1]} : vector<64x128xf32> to vector<8x128xf32>
    %91 = vector.extract_strided_slice %89 {offsets = [0, 0], sizes = [8, 128], strides = [1, 1]} : vector<8x256xf32> to vector<8x128xf32>
    %92 = arith.addf %90, %91 : vector<8x128xf32>
    %93 = arith.negf %92 : vector<8x128xf32>
    %94 = math.exp %93 : vector<8x128xf32>
    %cst_32 = arith.constant 1.000000e+00 : f32
    %95 = vector.broadcast %cst_32 : f32 to vector<8x128xf32>
    %96 = arith.addf %95, %94 : vector<8x128xf32>
    %97 = arith.divf %95, %96 : vector<8x128xf32>
    %98 = vector.extract_strided_slice %97 {offsets = [0, 0], sizes = [8, 32], strides = [1, 1]} : vector<8x128xf32> to vector<8x32xf32>
    %99 = vector.extract_strided_slice %97 {offsets = [0, 32], sizes = [8, 32], strides = [1, 1]} : vector<8x128xf32> to vector<8x32xf32>
    %100 = vector.extract_strided_slice %97 {offsets = [0, 64], sizes = [8, 32], strides = [1, 1]} : vector<8x128xf32> to vector<8x32xf32>
    %cst_33 = arith.constant 2.000000e+00 : f32
    %101 = vector.broadcast %cst_33 : f32 to vector<8x32xf32>
    %102 = arith.mulf %101, %100 : vector<8x32xf32>
    %cst_34 = arith.constant 1.000000e+00 : f32
    %103 = vector.broadcast %cst_34 : f32 to vector<8x32xf32>
    %104 = arith.subf %102, %103 : vector<8x32xf32>
    %105 = vector.extract_strided_slice %97 {offsets = [0, 96], sizes = [8, 32], strides = [1, 1]} : vector<8x128xf32> to vector<8x32xf32>
    %106 = arith.mulf %99, %64 : vector<8x32xf32>
    %107 = arith.mulf %98, %104 : vector<8x32xf32>
    %108 = arith.addf %106, %107 : vector<8x32xf32>
    %109 = math.tanh %108 : vector<8x32xf32>
    %110 = arith.mulf %105, %109 : vector<8x32xf32>
    %111 = vector.extract_strided_slice %89 {offsets = [0, 128], sizes = [8, 128], strides = [1, 1]} : vector<8x256xf32> to vector<8x128xf32>
    %112 = vector.broadcast %12 : vector<1x128xf32> to vector<8x128xf32>
    %113 = arith.addf %111, %112 : vector<8x128xf32>
    %114 = arith.negf %113 : vector<8x128xf32>
    %115 = math.exp %114 : vector<8x128xf32>
    %cst_35 = arith.constant 1.000000e+00 : f32
    %116 = vector.broadcast %cst_35 : f32 to vector<8x128xf32>
    %117 = arith.addf %116, %115 : vector<8x128xf32>
    %118 = arith.divf %116, %117 : vector<8x128xf32>
    %119 = vector.extract_strided_slice %118 {offsets = [0, 0], sizes = [8, 32], strides = [1, 1]} : vector<8x128xf32> to vector<8x32xf32>
    %120 = vector.extract_strided_slice %118 {offsets = [0, 32], sizes = [8, 32], strides = [1, 1]} : vector<8x128xf32> to vector<8x32xf32>
    %121 = vector.extract_strided_slice %118 {offsets = [0, 64], sizes = [8, 32], strides = [1, 1]} : vector<8x128xf32> to vector<8x32xf32>
    %cst_36 = arith.constant 2.000000e+00 : f32
    %122 = vector.broadcast %cst_36 : f32 to vector<8x32xf32>
    %123 = arith.mulf %122, %121 : vector<8x32xf32>
    %cst_37 = arith.constant 1.000000e+00 : f32
    %124 = vector.broadcast %cst_37 : f32 to vector<8x32xf32>
    %125 = arith.subf %123, %124 : vector<8x32xf32>
    %126 = vector.extract_strided_slice %118 {offsets = [0, 96], sizes = [8, 32], strides = [1, 1]} : vector<8x128xf32> to vector<8x32xf32>
    %127 = arith.mulf %120, %85 : vector<8x32xf32>
    %128 = arith.mulf %119, %125 : vector<8x32xf32>
    %129 = arith.addf %127, %128 : vector<8x32xf32>
    %130 = math.tanh %129 : vector<8x32xf32>
    %131 = arith.mulf %126, %130 : vector<8x32xf32>
    %132 = tpu.concatenate %110, %131 in 1 : vector<8x32xf32>, vector<8x32xf32> -> vector<8x64xf32>
    %cst_38 = arith.constant dense<0.000000e+00> : vector<8x256xf32>
    %133 = tpu.matmul %132, %11, %cst_38 {dimension_numbers = #tpu.dot_dimension_numbers<[1], [0], [0], [1], [0, 0, 1, 1], [], []>, precision = #tpu.contract_precision<fp32>} : vector<8x64xf32>, vector<64x256xf32>, vector<8x256xf32> -> vector<8x256xf32>
    %134 = vector.extract_strided_slice %10 {offsets = [24, 0], sizes = [8, 128], strides = [1, 1]} : vector<64x128xf32> to vector<8x128xf32>
    %135 = vector.extract_strided_slice %133 {offsets = [0, 0], sizes = [8, 128], strides = [1, 1]} : vector<8x256xf32> to vector<8x128xf32>
    %136 = arith.addf %134, %135 : vector<8x128xf32>
    %137 = arith.negf %136 : vector<8x128xf32>
    %138 = math.exp %137 : vector<8x128xf32>
    %cst_39 = arith.constant 1.000000e+00 : f32
    %139 = vector.broadcast %cst_39 : f32 to vector<8x128xf32>
    %140 = arith.addf %139, %138 : vector<8x128xf32>
    %141 = arith.divf %139, %140 : vector<8x128xf32>
    %142 = vector.extract_strided_slice %141 {offsets = [0, 0], sizes = [8, 32], strides = [1, 1]} : vector<8x128xf32> to vector<8x32xf32>
    %143 = vector.extract_strided_slice %141 {offsets = [0, 32], sizes = [8, 32], strides = [1, 1]} : vector<8x128xf32> to vector<8x32xf32>
    %144 = vector.extract_strided_slice %141 {offsets = [0, 64], sizes = [8, 32], strides = [1, 1]} : vector<8x128xf32> to vector<8x32xf32>
    %cst_40 = arith.constant 2.000000e+00 : f32
    %145 = vector.broadcast %cst_40 : f32 to vector<8x32xf32>
    %146 = arith.mulf %145, %144 : vector<8x32xf32>
    %cst_41 = arith.constant 1.000000e+00 : f32
    %147 = vector.broadcast %cst_41 : f32 to vector<8x32xf32>
    %148 = arith.subf %146, %147 : vector<8x32xf32>
    %149 = vector.extract_strided_slice %141 {offsets = [0, 96], sizes = [8, 32], strides = [1, 1]} : vector<8x128xf32> to vector<8x32xf32>
    %150 = arith.mulf %143, %108 : vector<8x32xf32>
    %151 = arith.mulf %142, %148 : vector<8x32xf32>
    %152 = arith.addf %150, %151 : vector<8x32xf32>
    %153 = math.tanh %152 : vector<8x32xf32>
    %154 = arith.mulf %149, %153 : vector<8x32xf32>
    %155 = vector.extract_strided_slice %133 {offsets = [0, 128], sizes = [8, 128], strides = [1, 1]} : vector<8x256xf32> to vector<8x128xf32>
    %156 = vector.broadcast %12 : vector<1x128xf32> to vector<8x128xf32>
    %157 = arith.addf %155, %156 : vector<8x128xf32>
    %158 = arith.negf %157 : vector<8x128xf32>
    %159 = math.exp %158 : vector<8x128xf32>
    %cst_42 = arith.constant 1.000000e+00 : f32
    %160 = vector.broadcast %cst_42 : f32 to vector<8x128xf32>
    %161 = arith.addf %160, %159 : vector<8x128xf32>
    %162 = arith.divf %160, %161 : vector<8x128xf32>
    %163 = vector.extract_strided_slice %162 {offsets = [0, 0], sizes = [8, 32], strides = [1, 1]} : vector<8x128xf32> to vector<8x32xf32>
    %164 = vector.extract_strided_slice %162 {offsets = [0, 32], sizes = [8, 32], strides = [1, 1]} : vector<8x128xf32> to vector<8x32xf32>
    %165 = vector.extract_strided_slice %162 {offsets = [0, 64], sizes = [8, 32], strides = [1, 1]} : vector<8x128xf32> to vector<8x32xf32>
    %cst_43 = arith.constant 2.000000e+00 : f32
    %166 = vector.broadcast %cst_43 : f32 to vector<8x32xf32>
    %167 = arith.mulf %166, %165 : vector<8x32xf32>
    %cst_44 = arith.constant 1.000000e+00 : f32
    %168 = vector.broadcast %cst_44 : f32 to vector<8x32xf32>
    %169 = arith.subf %167, %168 : vector<8x32xf32>
    %170 = vector.extract_strided_slice %162 {offsets = [0, 96], sizes = [8, 32], strides = [1, 1]} : vector<8x128xf32> to vector<8x32xf32>
    %171 = arith.mulf %164, %129 : vector<8x32xf32>
    %172 = arith.mulf %163, %169 : vector<8x32xf32>
    %173 = arith.addf %171, %172 : vector<8x32xf32>
    %174 = math.tanh %173 : vector<8x32xf32>
    %175 = arith.mulf %170, %174 : vector<8x32xf32>
    %176 = tpu.concatenate %154, %175 in 1 : vector<8x32xf32>, vector<8x32xf32> -> vector<8x64xf32>
    %cst_45 = arith.constant dense<0.000000e+00> : vector<8x256xf32>
    %177 = tpu.matmul %176, %11, %cst_45 {dimension_numbers = #tpu.dot_dimension_numbers<[1], [0], [0], [1], [0, 0, 1, 1], [], []>, precision = #tpu.contract_precision<fp32>} : vector<8x64xf32>, vector<64x256xf32>, vector<8x256xf32> -> vector<8x256xf32>
    %178 = vector.extract_strided_slice %10 {offsets = [32, 0], sizes = [8, 128], strides = [1, 1]} : vector<64x128xf32> to vector<8x128xf32>
    %179 = vector.extract_strided_slice %177 {offsets = [0, 0], sizes = [8, 128], strides = [1, 1]} : vector<8x256xf32> to vector<8x128xf32>
    %180 = arith.addf %178, %179 : vector<8x128xf32>
    %181 = arith.negf %180 : vector<8x128xf32>
    %182 = math.exp %181 : vector<8x128xf32>
    %cst_46 = arith.constant 1.000000e+00 : f32
    %183 = vector.broadcast %cst_46 : f32 to vector<8x128xf32>
    %184 = arith.addf %183, %182 : vector<8x128xf32>
    %185 = arith.divf %183, %184 : vector<8x128xf32>
    %186 = vector.extract_strided_slice %185 {offsets = [0, 0], sizes = [8, 32], strides = [1, 1]} : vector<8x128xf32> to vector<8x32xf32>
    %187 = vector.extract_strided_slice %185 {offsets = [0, 32], sizes = [8, 32], strides = [1, 1]} : vector<8x128xf32> to vector<8x32xf32>
    %188 = vector.extract_strided_slice %185 {offsets = [0, 64], sizes = [8, 32], strides = [1, 1]} : vector<8x128xf32> to vector<8x32xf32>
    %cst_47 = arith.constant 2.000000e+00 : f32
    %189 = vector.broadcast %cst_47 : f32 to vector<8x32xf32>
    %190 = arith.mulf %189, %188 : vector<8x32xf32>
    %cst_48 = arith.constant 1.000000e+00 : f32
    %191 = vector.broadcast %cst_48 : f32 to vector<8x32xf32>
    %192 = arith.subf %190, %191 : vector<8x32xf32>
    %193 = vector.extract_strided_slice %185 {offsets = [0, 96], sizes = [8, 32], strides = [1, 1]} : vector<8x128xf32> to vector<8x32xf32>
    %194 = arith.mulf %187, %152 : vector<8x32xf32>
    %195 = arith.mulf %186, %192 : vector<8x32xf32>
    %196 = arith.addf %194, %195 : vector<8x32xf32>
    %197 = math.tanh %196 : vector<8x32xf32>
    %198 = arith.mulf %193, %197 : vector<8x32xf32>
    %199 = vector.extract_strided_slice %177 {offsets = [0, 128], sizes = [8, 128], strides = [1, 1]} : vector<8x256xf32> to vector<8x128xf32>
    %200 = vector.broadcast %12 : vector<1x128xf32> to vector<8x128xf32>
    %201 = arith.addf %199, %200 : vector<8x128xf32>
    %202 = arith.negf %201 : vector<8x128xf32>
    %203 = math.exp %202 : vector<8x128xf32>
    %cst_49 = arith.constant 1.000000e+00 : f32
    %204 = vector.broadcast %cst_49 : f32 to vector<8x128xf32>
    %205 = arith.addf %204, %203 : vector<8x128xf32>
    %206 = arith.divf %204, %205 : vector<8x128xf32>
    %207 = vector.extract_strided_slice %206 {offsets = [0, 0], sizes = [8, 32], strides = [1, 1]} : vector<8x128xf32> to vector<8x32xf32>
    %208 = vector.extract_strided_slice %206 {offsets = [0, 32], sizes = [8, 32], strides = [1, 1]} : vector<8x128xf32> to vector<8x32xf32>
    %209 = vector.extract_strided_slice %206 {offsets = [0, 64], sizes = [8, 32], strides = [1, 1]} : vector<8x128xf32> to vector<8x32xf32>
    %cst_50 = arith.constant 2.000000e+00 : f32
    %210 = vector.broadcast %cst_50 : f32 to vector<8x32xf32>
    %211 = arith.mulf %210, %209 : vector<8x32xf32>
    %cst_51 = arith.constant 1.000000e+00 : f32
    %212 = vector.broadcast %cst_51 : f32 to vector<8x32xf32>
    %213 = arith.subf %211, %212 : vector<8x32xf32>
    %214 = vector.extract_strided_slice %206 {offsets = [0, 96], sizes = [8, 32], strides = [1, 1]} : vector<8x128xf32> to vector<8x32xf32>
    %215 = arith.mulf %208, %173 : vector<8x32xf32>
    %216 = arith.mulf %207, %213 : vector<8x32xf32>
    %217 = arith.addf %215, %216 : vector<8x32xf32>
    %218 = math.tanh %217 : vector<8x32xf32>
    %219 = arith.mulf %214, %218 : vector<8x32xf32>
    %220 = tpu.concatenate %198, %219 in 1 : vector<8x32xf32>, vector<8x32xf32> -> vector<8x64xf32>
    %cst_52 = arith.constant dense<0.000000e+00> : vector<8x256xf32>
    %221 = tpu.matmul %220, %11, %cst_52 {dimension_numbers = #tpu.dot_dimension_numbers<[1], [0], [0], [1], [0, 0, 1, 1], [], []>, precision = #tpu.contract_precision<fp32>} : vector<8x64xf32>, vector<64x256xf32>, vector<8x256xf32> -> vector<8x256xf32>
    %222 = vector.extract_strided_slice %10 {offsets = [40, 0], sizes = [8, 128], strides = [1, 1]} : vector<64x128xf32> to vector<8x128xf32>
    %223 = vector.extract_strided_slice %221 {offsets = [0, 0], sizes = [8, 128], strides = [1, 1]} : vector<8x256xf32> to vector<8x128xf32>
    %224 = arith.addf %222, %223 : vector<8x128xf32>
    %225 = arith.negf %224 : vector<8x128xf32>
    %226 = math.exp %225 : vector<8x128xf32>
    %cst_53 = arith.constant 1.000000e+00 : f32
    %227 = vector.broadcast %cst_53 : f32 to vector<8x128xf32>
    %228 = arith.addf %227, %226 : vector<8x128xf32>
    %229 = arith.divf %227, %228 : vector<8x128xf32>
    %230 = vector.extract_strided_slice %229 {offsets = [0, 0], sizes = [8, 32], strides = [1, 1]} : vector<8x128xf32> to vector<8x32xf32>
    %231 = vector.extract_strided_slice %229 {offsets = [0, 32], sizes = [8, 32], strides = [1, 1]} : vector<8x128xf32> to vector<8x32xf32>
    %232 = vector.extract_strided_slice %229 {offsets = [0, 64], sizes = [8, 32], strides = [1, 1]} : vector<8x128xf32> to vector<8x32xf32>
    %cst_54 = arith.constant 2.000000e+00 : f32
    %233 = vector.broadcast %cst_54 : f32 to vector<8x32xf32>
    %234 = arith.mulf %233, %232 : vector<8x32xf32>
    %cst_55 = arith.constant 1.000000e+00 : f32
    %235 = vector.broadcast %cst_55 : f32 to vector<8x32xf32>
    %236 = arith.subf %234, %235 : vector<8x32xf32>
    %237 = vector.extract_strided_slice %229 {offsets = [0, 96], sizes = [8, 32], strides = [1, 1]} : vector<8x128xf32> to vector<8x32xf32>
    %238 = arith.mulf %231, %196 : vector<8x32xf32>
    %239 = arith.mulf %230, %236 : vector<8x32xf32>
    %240 = arith.addf %238, %239 : vector<8x32xf32>
    %241 = math.tanh %240 : vector<8x32xf32>
    %242 = arith.mulf %237, %241 : vector<8x32xf32>
    %243 = vector.extract_strided_slice %221 {offsets = [0, 128], sizes = [8, 128], strides = [1, 1]} : vector<8x256xf32> to vector<8x128xf32>
    %244 = vector.broadcast %12 : vector<1x128xf32> to vector<8x128xf32>
    %245 = arith.addf %243, %244 : vector<8x128xf32>
    %246 = arith.negf %245 : vector<8x128xf32>
    %247 = math.exp %246 : vector<8x128xf32>
    %cst_56 = arith.constant 1.000000e+00 : f32
    %248 = vector.broadcast %cst_56 : f32 to vector<8x128xf32>
    %249 = arith.addf %248, %247 : vector<8x128xf32>
    %250 = arith.divf %248, %249 : vector<8x128xf32>
    %251 = vector.extract_strided_slice %250 {offsets = [0, 0], sizes = [8, 32], strides = [1, 1]} : vector<8x128xf32> to vector<8x32xf32>
    %252 = vector.extract_strided_slice %250 {offsets = [0, 32], sizes = [8, 32], strides = [1, 1]} : vector<8x128xf32> to vector<8x32xf32>
    %253 = vector.extract_strided_slice %250 {offsets = [0, 64], sizes = [8, 32], strides = [1, 1]} : vector<8x128xf32> to vector<8x32xf32>
    %cst_57 = arith.constant 2.000000e+00 : f32
    %254 = vector.broadcast %cst_57 : f32 to vector<8x32xf32>
    %255 = arith.mulf %254, %253 : vector<8x32xf32>
    %cst_58 = arith.constant 1.000000e+00 : f32
    %256 = vector.broadcast %cst_58 : f32 to vector<8x32xf32>
    %257 = arith.subf %255, %256 : vector<8x32xf32>
    %258 = vector.extract_strided_slice %250 {offsets = [0, 96], sizes = [8, 32], strides = [1, 1]} : vector<8x128xf32> to vector<8x32xf32>
    %259 = arith.mulf %252, %217 : vector<8x32xf32>
    %260 = arith.mulf %251, %257 : vector<8x32xf32>
    %261 = arith.addf %259, %260 : vector<8x32xf32>
    %262 = math.tanh %261 : vector<8x32xf32>
    %263 = arith.mulf %258, %262 : vector<8x32xf32>
    %264 = tpu.concatenate %242, %263 in 1 : vector<8x32xf32>, vector<8x32xf32> -> vector<8x64xf32>
    %cst_59 = arith.constant dense<0.000000e+00> : vector<8x256xf32>
    %265 = tpu.matmul %264, %11, %cst_59 {dimension_numbers = #tpu.dot_dimension_numbers<[1], [0], [0], [1], [0, 0, 1, 1], [], []>, precision = #tpu.contract_precision<fp32>} : vector<8x64xf32>, vector<64x256xf32>, vector<8x256xf32> -> vector<8x256xf32>
    %266 = vector.extract_strided_slice %10 {offsets = [48, 0], sizes = [8, 128], strides = [1, 1]} : vector<64x128xf32> to vector<8x128xf32>
    %267 = vector.extract_strided_slice %265 {offsets = [0, 0], sizes = [8, 128], strides = [1, 1]} : vector<8x256xf32> to vector<8x128xf32>
    %268 = arith.addf %266, %267 : vector<8x128xf32>
    %269 = arith.negf %268 : vector<8x128xf32>
    %270 = math.exp %269 : vector<8x128xf32>
    %cst_60 = arith.constant 1.000000e+00 : f32
    %271 = vector.broadcast %cst_60 : f32 to vector<8x128xf32>
    %272 = arith.addf %271, %270 : vector<8x128xf32>
    %273 = arith.divf %271, %272 : vector<8x128xf32>
    %274 = vector.extract_strided_slice %273 {offsets = [0, 0], sizes = [8, 32], strides = [1, 1]} : vector<8x128xf32> to vector<8x32xf32>
    %275 = vector.extract_strided_slice %273 {offsets = [0, 32], sizes = [8, 32], strides = [1, 1]} : vector<8x128xf32> to vector<8x32xf32>
    %276 = vector.extract_strided_slice %273 {offsets = [0, 64], sizes = [8, 32], strides = [1, 1]} : vector<8x128xf32> to vector<8x32xf32>
    %cst_61 = arith.constant 2.000000e+00 : f32
    %277 = vector.broadcast %cst_61 : f32 to vector<8x32xf32>
    %278 = arith.mulf %277, %276 : vector<8x32xf32>
    %cst_62 = arith.constant 1.000000e+00 : f32
    %279 = vector.broadcast %cst_62 : f32 to vector<8x32xf32>
    %280 = arith.subf %278, %279 : vector<8x32xf32>
    %281 = vector.extract_strided_slice %273 {offsets = [0, 96], sizes = [8, 32], strides = [1, 1]} : vector<8x128xf32> to vector<8x32xf32>
    %282 = arith.mulf %275, %240 : vector<8x32xf32>
    %283 = arith.mulf %274, %280 : vector<8x32xf32>
    %284 = arith.addf %282, %283 : vector<8x32xf32>
    %285 = math.tanh %284 : vector<8x32xf32>
    %286 = arith.mulf %281, %285 : vector<8x32xf32>
    %287 = vector.extract_strided_slice %265 {offsets = [0, 128], sizes = [8, 128], strides = [1, 1]} : vector<8x256xf32> to vector<8x128xf32>
    %288 = vector.broadcast %12 : vector<1x128xf32> to vector<8x128xf32>
    %289 = arith.addf %287, %288 : vector<8x128xf32>
    %290 = arith.negf %289 : vector<8x128xf32>
    %291 = math.exp %290 : vector<8x128xf32>
    %cst_63 = arith.constant 1.000000e+00 : f32
    %292 = vector.broadcast %cst_63 : f32 to vector<8x128xf32>
    %293 = arith.addf %292, %291 : vector<8x128xf32>
    %294 = arith.divf %292, %293 : vector<8x128xf32>
    %295 = vector.extract_strided_slice %294 {offsets = [0, 0], sizes = [8, 32], strides = [1, 1]} : vector<8x128xf32> to vector<8x32xf32>
    %296 = vector.extract_strided_slice %294 {offsets = [0, 32], sizes = [8, 32], strides = [1, 1]} : vector<8x128xf32> to vector<8x32xf32>
    %297 = vector.extract_strided_slice %294 {offsets = [0, 64], sizes = [8, 32], strides = [1, 1]} : vector<8x128xf32> to vector<8x32xf32>
    %cst_64 = arith.constant 2.000000e+00 : f32
    %298 = vector.broadcast %cst_64 : f32 to vector<8x32xf32>
    %299 = arith.mulf %298, %297 : vector<8x32xf32>
    %cst_65 = arith.constant 1.000000e+00 : f32
    %300 = vector.broadcast %cst_65 : f32 to vector<8x32xf32>
    %301 = arith.subf %299, %300 : vector<8x32xf32>
    %302 = vector.extract_strided_slice %294 {offsets = [0, 96], sizes = [8, 32], strides = [1, 1]} : vector<8x128xf32> to vector<8x32xf32>
    %303 = arith.mulf %296, %261 : vector<8x32xf32>
    %304 = arith.mulf %295, %301 : vector<8x32xf32>
    %305 = arith.addf %303, %304 : vector<8x32xf32>
    %306 = math.tanh %305 : vector<8x32xf32>
    %307 = arith.mulf %302, %306 : vector<8x32xf32>
    %308 = tpu.concatenate %286, %307 in 1 : vector<8x32xf32>, vector<8x32xf32> -> vector<8x64xf32>
    %cst_66 = arith.constant dense<0.000000e+00> : vector<8x256xf32>
    %309 = tpu.matmul %308, %11, %cst_66 {dimension_numbers = #tpu.dot_dimension_numbers<[1], [0], [0], [1], [0, 0, 1, 1], [], []>, precision = #tpu.contract_precision<fp32>} : vector<8x64xf32>, vector<64x256xf32>, vector<8x256xf32> -> vector<8x256xf32>
    %310 = vector.extract_strided_slice %10 {offsets = [56, 0], sizes = [8, 128], strides = [1, 1]} : vector<64x128xf32> to vector<8x128xf32>
    %311 = vector.extract_strided_slice %309 {offsets = [0, 0], sizes = [8, 128], strides = [1, 1]} : vector<8x256xf32> to vector<8x128xf32>
    %312 = arith.addf %310, %311 : vector<8x128xf32>
    %313 = arith.negf %312 : vector<8x128xf32>
    %314 = math.exp %313 : vector<8x128xf32>
    %cst_67 = arith.constant 1.000000e+00 : f32
    %315 = vector.broadcast %cst_67 : f32 to vector<8x128xf32>
    %316 = arith.addf %315, %314 : vector<8x128xf32>
    %317 = arith.divf %315, %316 : vector<8x128xf32>
    %318 = vector.extract_strided_slice %317 {offsets = [0, 0], sizes = [8, 32], strides = [1, 1]} : vector<8x128xf32> to vector<8x32xf32>
    %319 = vector.extract_strided_slice %317 {offsets = [0, 32], sizes = [8, 32], strides = [1, 1]} : vector<8x128xf32> to vector<8x32xf32>
    %320 = vector.extract_strided_slice %317 {offsets = [0, 64], sizes = [8, 32], strides = [1, 1]} : vector<8x128xf32> to vector<8x32xf32>
    %cst_68 = arith.constant 2.000000e+00 : f32
    %321 = vector.broadcast %cst_68 : f32 to vector<8x32xf32>
    %322 = arith.mulf %321, %320 : vector<8x32xf32>
    %cst_69 = arith.constant 1.000000e+00 : f32
    %323 = vector.broadcast %cst_69 : f32 to vector<8x32xf32>
    %324 = arith.subf %322, %323 : vector<8x32xf32>
    %325 = vector.extract_strided_slice %317 {offsets = [0, 96], sizes = [8, 32], strides = [1, 1]} : vector<8x128xf32> to vector<8x32xf32>
    %326 = arith.mulf %319, %284 : vector<8x32xf32>
    %327 = arith.mulf %318, %324 : vector<8x32xf32>
    %328 = arith.addf %326, %327 : vector<8x32xf32>
    %329 = math.tanh %328 : vector<8x32xf32>
    %330 = arith.mulf %325, %329 : vector<8x32xf32>
    %331 = vector.extract_strided_slice %309 {offsets = [0, 128], sizes = [8, 128], strides = [1, 1]} : vector<8x256xf32> to vector<8x128xf32>
    %332 = vector.broadcast %12 : vector<1x128xf32> to vector<8x128xf32>
    %333 = arith.addf %331, %332 : vector<8x128xf32>
    %334 = arith.negf %333 : vector<8x128xf32>
    %335 = math.exp %334 : vector<8x128xf32>
    %cst_70 = arith.constant 1.000000e+00 : f32
    %336 = vector.broadcast %cst_70 : f32 to vector<8x128xf32>
    %337 = arith.addf %336, %335 : vector<8x128xf32>
    %338 = arith.divf %336, %337 : vector<8x128xf32>
    %339 = vector.extract_strided_slice %338 {offsets = [0, 0], sizes = [8, 32], strides = [1, 1]} : vector<8x128xf32> to vector<8x32xf32>
    %340 = vector.extract_strided_slice %338 {offsets = [0, 32], sizes = [8, 32], strides = [1, 1]} : vector<8x128xf32> to vector<8x32xf32>
    %341 = vector.extract_strided_slice %338 {offsets = [0, 64], sizes = [8, 32], strides = [1, 1]} : vector<8x128xf32> to vector<8x32xf32>
    %cst_71 = arith.constant 2.000000e+00 : f32
    %342 = vector.broadcast %cst_71 : f32 to vector<8x32xf32>
    %343 = arith.mulf %342, %341 : vector<8x32xf32>
    %cst_72 = arith.constant 1.000000e+00 : f32
    %344 = vector.broadcast %cst_72 : f32 to vector<8x32xf32>
    %345 = arith.subf %343, %344 : vector<8x32xf32>
    %346 = vector.extract_strided_slice %338 {offsets = [0, 96], sizes = [8, 32], strides = [1, 1]} : vector<8x128xf32> to vector<8x32xf32>
    %347 = arith.mulf %340, %305 : vector<8x32xf32>
    %348 = arith.mulf %339, %345 : vector<8x32xf32>
    %349 = arith.addf %347, %348 : vector<8x32xf32>
    %350 = math.tanh %349 : vector<8x32xf32>
    %351 = arith.mulf %346, %350 : vector<8x32xf32>
    %352 = tpu.concatenate %330, %351 in 1 : vector<8x32xf32>, vector<8x32xf32> -> vector<8x64xf32>
    %cst_73 = arith.constant dense<0.000000e+00> : vector<8x256xf32>
    %353 = tpu.matmul %352, %11, %cst_73 {dimension_numbers = #tpu.dot_dimension_numbers<[1], [0], [0], [1], [0, 0, 1, 1], [], []>, precision = #tpu.contract_precision<fp32>} : vector<8x64xf32>, vector<64x256xf32>, vector<8x256xf32> -> vector<8x256xf32>
    %354 = vector.extract_strided_slice %353 {offsets = [0, 128], sizes = [8, 128], strides = [1, 1]} : vector<8x256xf32> to vector<8x128xf32>
    %355 = vector.broadcast %12 : vector<1x128xf32> to vector<8x128xf32>
    %356 = arith.addf %354, %355 : vector<8x128xf32>
    %357 = arith.negf %356 : vector<8x128xf32>
    %358 = math.exp %357 : vector<8x128xf32>
    %cst_74 = arith.constant 1.000000e+00 : f32
    %359 = vector.broadcast %cst_74 : f32 to vector<8x128xf32>
    %360 = arith.addf %359, %358 : vector<8x128xf32>
    %361 = arith.divf %359, %360 : vector<8x128xf32>
    %362 = vector.extract_strided_slice %361 {offsets = [0, 0], sizes = [8, 32], strides = [1, 1]} : vector<8x128xf32> to vector<8x32xf32>
    %363 = vector.extract_strided_slice %361 {offsets = [0, 32], sizes = [8, 32], strides = [1, 1]} : vector<8x128xf32> to vector<8x32xf32>
    %364 = vector.extract_strided_slice %361 {offsets = [0, 64], sizes = [8, 32], strides = [1, 1]} : vector<8x128xf32> to vector<8x32xf32>
    %cst_75 = arith.constant 2.000000e+00 : f32
    %365 = vector.broadcast %cst_75 : f32 to vector<8x32xf32>
    %366 = arith.mulf %365, %364 : vector<8x32xf32>
    %cst_76 = arith.constant 1.000000e+00 : f32
    %367 = vector.broadcast %cst_76 : f32 to vector<8x32xf32>
    %368 = arith.subf %366, %367 : vector<8x32xf32>
    %369 = vector.extract_strided_slice %361 {offsets = [0, 96], sizes = [8, 32], strides = [1, 1]} : vector<8x128xf32> to vector<8x32xf32>
    %370 = arith.mulf %363, %349 : vector<8x32xf32>
    %371 = arith.mulf %362, %368 : vector<8x32xf32>
    %372 = arith.addf %370, %371 : vector<8x32xf32>
    %373 = math.tanh %372 : vector<8x32xf32>
    %374 = arith.mulf %369, %373 : vector<8x32xf32>
    %375 = tpu.concatenate %87, %131, %175, %219, %263, %307, %351, %374 in 0 : vector<8x32xf32>, vector<8x32xf32>, vector<8x32xf32>, vector<8x32xf32>, vector<8x32xf32>, vector<8x32xf32>, vector<8x32xf32>, vector<8x32xf32> -> vector<64x32xf32>
    %c0_77 = arith.constant 0 : index
    %c0_78 = arith.constant 0 : index
    %376 = vector.load %arg7[%c0_77, %c0_78] : memref<32x128xf32, #tpu.memory_space<vmem>>, vector<32x128xf32>
    %cst_79 = arith.constant dense<0.000000e+00> : vector<64x128xf32>
    %377 = tpu.matmul %375, %376, %cst_79 {dimension_numbers = #tpu.dot_dimension_numbers<[1], [0], [0], [1], [0, 0, 1, 1], [], []>, precision = #tpu.contract_precision<fp32>} : vector<64x32xf32>, vector<32x128xf32>, vector<64x128xf32> -> vector<64x128xf32>
    %c0_80 = arith.constant 0 : index
    %c0_81 = arith.constant 0 : index
    %378 = vector.load %arg8[%c0_80, %c0_81] : memref<1x128xf32, #tpu.memory_space<vmem>>, vector<1x128xf32>
    %379 = vector.broadcast %378 : vector<1x128xf32> to vector<64x128xf32>
    %380 = arith.addf %377, %379 : vector<64x128xf32>
    %c0_82 = arith.constant 0 : index
    %c0_83 = arith.constant 0 : index
    %381 = vector.load %arg9[%c0_82, %c0_83] : memref<64x128xf32, #tpu.memory_space<vmem>>, vector<64x128xf32>
    tpu.vector_store %arg9[%c0_82, %c0_83], %380 {strides = array<i32>} : memref<64x128xf32, #tpu.memory_space<vmem>>, vector<64x128xf32>,
    %c0_84 = arith.constant 0 : index
    %c0_85 = arith.constant 0 : index
    %c0_86 = arith.constant 0 : index
    %382 = vector.load %arg10[%c0_84, %c0_85, %c0_86] : memref<2x8x32xf32, #tpu.memory_space<vmem>>, vector<1x8x32xf32>
    %383 = vector.shape_cast %382 : vector<1x8x32xf32> to vector<8x32xf32>
    %384 = vector.shape_cast %330 : vector<8x32xf32> to vector<1x8x32xf32>
    tpu.vector_store %arg10[%c0_84, %c0_85, %c0_86], %384 {strides = array<i32>} : memref<2x8x32xf32, #tpu.memory_space<vmem>>, vector<1x8x32xf32>,
    %c1_87 = arith.constant 1 : index
    %c0_88 = arith.constant 0 : index
    %c0_89 = arith.constant 0 : index
    %385 = vector.load %arg10[%c1_87, %c0_88, %c0_89] : memref<2x8x32xf32, #tpu.memory_space<vmem>>, vector<1x8x32xf32>
    %386 = vector.shape_cast %385 : vector<1x8x32xf32> to vector<8x32xf32>
    %387 = vector.shape_cast %374 : vector<8x32xf32> to vector<1x8x32xf32>
    tpu.vector_store %arg10[%c1_87, %c0_88, %c0_89], %387 {strides = array<i32>} : memref<2x8x32xf32, #tpu.memory_space<vmem>>, vector<1x8x32xf32>,
    %c0_90 = arith.constant 0 : index
    %c0_91 = arith.constant 0 : index
    %c0_92 = arith.constant 0 : index
    %388 = vector.load %arg11[%c0_90, %c0_91, %c0_92] : memref<2x8x32xf32, #tpu.memory_space<vmem>>, vector<1x8x32xf32>
    %389 = vector.shape_cast %388 : vector<1x8x32xf32> to vector<8x32xf32>
    %390 = vector.shape_cast %328 : vector<8x32xf32> to vector<1x8x32xf32>
    tpu.vector_store %arg11[%c0_90, %c0_91, %c0_92], %390 {strides = array<i32>} : memref<2x8x32xf32, #tpu.memory_space<vmem>>, vector<1x8x32xf32>,
    %c1_93 = arith.constant 1 : index
    %c0_94 = arith.constant 0 : index
    %c0_95 = arith.constant 0 : index
    %391 = vector.load %arg11[%c1_93, %c0_94, %c0_95] : memref<2x8x32xf32, #tpu.memory_space<vmem>>, vector<1x8x32xf32>
    %392 = vector.shape_cast %391 : vector<1x8x32xf32> to vector<8x32xf32>
    %393 = vector.shape_cast %372 : vector<8x32xf32> to vector<1x8x32xf32>
    tpu.vector_store %arg11[%c1_93, %c0_94, %c0_95], %393 {strides = array<i32>} : memref<2x8x32xf32, #tpu.memory_space<vmem>>, vector<1x8x32xf32>,
    return
  }
}

</mosaic_0001>

<llo_original>
// kernel: fused_forward.1
$region0: #{fused_forward.1}
  #allocation0 [shape = 'u32[]', space=smem, size = 0x4, offset = 0x4, fixed_abs, tag = 'smem constant byte address 0x4 - core index']
  #allocation1 [shape = 'u32[144,128]{1,0:T(1,128)}', space=vmem, size = 0x12000, scoped, tag = 'internal scratch']
  %s0 = inlined_call_operand.vmem [shape: s32[64,1], index: 0, kind: input, shape index: {}]
  %s1 = inlined_call_operand.hbm [shape: f32[64,128], index: 1, kind: input, shape index: {}]
  %s2 = inlined_call_operand.vmem [shape: f32[1,128], index: 2, kind: input, shape index: {}]
  %s3 = inlined_call_operand.vmem [shape: f32[64,256], index: 3, kind: input, shape index: {}]
  %s4 = inlined_call_operand.vmem [shape: f32[1,128], index: 4, kind: input, shape index: {}]
  %s5 = inlined_call_operand.vmem [shape: f32[2,8,32], index: 5, kind: input, shape index: {}]
  %s6 = inlined_call_operand.vmem [shape: f32[2,8,32], index: 6, kind: input, shape index: {}]
  %s7 = inlined_call_operand.hbm [shape: f32[32,128], index: 7, kind: input, shape index: {}]
  %s8 = inlined_call_operand.vmem [shape: f32[1,128], index: 8, kind: input, shape index: {}]
  %s9 = inlined_call_operand.vmem [shape: f32[64,128], index: 9, kind: output, shape index: {0}]
  %s10 = inlined_call_operand.vmem [shape: f32[2,8,32], index: 10, kind: output, shape index: {1}]
  %s11 = inlined_call_operand.vmem [shape: f32[2,8,32], index: 11, kind: output, shape index: {2}]
  %12 = xla_tuple %s9, %s10, %s11
  %s13 = sld [smem:[#allocation0]]
  $region70: #{fused_forward.1} parent=0
    _
  %s15 = ssub.s32 1, %s13
  %s16 = scalar_select 0, %s15, %s13
  $region1: #{fused_forward.1} parent=0
    #allocation2 [shape = 'u8[32768]{0}', space=vmem, size = 0x8000, scoped, tag = 'input window, operand 1, single buffered']
    #allocation3 [shape = 's32[1]{0}', space=sflag, size = 0x4, scoped, tag = 'scoped memory for fused_forward.1']
    #allocation4 [shape = 'u8[16384]{0}', space=vmem, size = 0x4000, scoped, tag = 'input window, operand 7, single buffered']
    #allocation5 [shape = 's32[1]{0}', space=sflag, size = 0x4, scoped, tag = 'scoped memory for fused_forward.1']
    %17 = vsyncpa [#allocation3], 0
    %18 = vsyncpa [#allocation5], 0
    // Predicated region
    $region2: #{fused_forward.1} parent=1 // pred_check
      _
    $region3: #{fused_forward.1} parent=1 // pred_check_branch
      %20 = sbr.rel (0) target = $region5
    $region4: #{fused_forward.1} parent=1 // pred_region
      _
    $region5: #{fused_forward.1} parent=1 // pred_fallthru
      _
    // Predicated region
    $region6: #{fused_forward.1} parent=1 // pred_check
      _
    $region7: #{fused_forward.1} parent=1 // pred_check_branch
      %22 = sbr.rel (0) target = $region9
    $region8: #{fused_forward.1} parent=1 // pred_region
      %s24 = ssub.s32 1024, 1024
      %25 = vsyncadd [#allocation3], %s24
      %s26 = sshll.u32 [#allocation2], 4
      %s27 = int_to_ptr.vmem [resolvable:$true] %s26
      %32 = dma.hbm_to_vmem [thread:$0]  %s1, 1024, %s27, [#allocation3], 128, 128, 8
    $region9: #{fused_forward.1} parent=1 // pred_fallthru
      _
    // Predicated region
    $region10: #{fused_forward.1} parent=1 // pred_check
      _
    $region11: #{fused_forward.1} parent=1 // pred_check_branch
      %34 = sbr.rel (0) target = $region13
    $region12: #{fused_forward.1} parent=1 // pred_region
      _
    $region13: #{fused_forward.1} parent=1 // pred_fallthru
      _
    // Predicated region
    $region14: #{fused_forward.1} parent=1 // pred_check
      _
    $region15: #{fused_forward.1} parent=1 // pred_check_branch
      %36 = sbr.rel (0) target = $region17
    $region16: #{fused_forward.1} parent=1 // pred_region
      _
    $region17: #{fused_forward.1} parent=1 // pred_fallthru
      _
    // Predicated region
    $region18: #{fused_forward.1} parent=1 // pred_check
      _
    $region19: #{fused_forward.1} parent=1 // pred_check_branch
      %38 = sbr.rel (0) target = $region21
    $region20: #{fused_forward.1} parent=1 // pred_region
      _
    $region21: #{fused_forward.1} parent=1 // pred_fallthru
      _
    // Predicated region
    $region22: #{fused_forward.1} parent=1 // pred_check
      _
    $region23: #{fused_forward.1} parent=1 // pred_check_branch
      %40 = sbr.rel (0) target = $region25
    $region24: #{fused_forward.1} parent=1 // pred_region
      _
    $region25: #{fused_forward.1} parent=1 // pred_fallthru
      _
    // Predicated region
    $region26: #{fused_forward.1} parent=1 // pred_check
      _
    $region27: #{fused_forward.1} parent=1 // pred_check_branch
      %42 = sbr.rel (0) target = $region29
    $region28: #{fused_forward.1} parent=1 // pred_region
      _
    $region29: #{fused_forward.1} parent=1 // pred_fallthru
      _
    // Predicated region
    $region30: #{fused_forward.1} parent=1 // pred_check
      _
    $region31: #{fused_forward.1} parent=1 // pred_check_branch
      %44 = sbr.rel (0) target = $region33
    $region32: #{fused_forward.1} parent=1 // pred_region
      %s46 = ssub.s32 512, 512
      %47 = vsyncadd [#allocation5], %s46
      %s48 = sshll.u32 [#allocation4], 4
      %s49 = int_to_ptr.vmem [resolvable:$true] %s48
      %54 = dma.hbm_to_vmem [thread:$0]  %s7, 512, %s49, [#allocation5], 128, 128, 8
    $region33: #{fused_forward.1} parent=1 // pred_fallthru
      _
    // Predicated region
    $region34: #{fused_forward.1} parent=1 // pred_check
      _
    $region35: #{fused_forward.1} parent=1 // pred_check_branch
      %56 = sbr.rel (0) target = $region37
    $region36: #{fused_forward.1} parent=1 // pred_region
      _
    $region37: #{fused_forward.1} parent=1 // pred_fallthru
      _
    // Predicated region
    $region38: #{fused_forward.1} parent=1 // pred_check
      _
    $region39: #{fused_forward.1} parent=1 // pred_check_branch
      %58 = sbr.rel (0) target = $region41
    $region40: #{fused_forward.1} parent=1 // pred_region
      %59 = dma.done [#allocation3], 1024
    $region41: #{fused_forward.1} parent=1 // pred_fallthru
      _
    // Predicated region
    $region42: #{fused_forward.1} parent=1 // pred_check
      _
    $region43: #{fused_forward.1} parent=1 // pred_check_branch
      %61 = sbr.rel (0) target = $region45
    $region44: #{fused_forward.1} parent=1 // pred_region
      %62 = dma.done [#allocation5], 512
    $region45: #{fused_forward.1} parent=1 // pred_fallthru
      _
    %v63 = vld [vmem:[%s0] sm:$0xff]
    %v64 = vld [vmem:[%s0 + $0x8] sm:$0xff]
    %v65 = vld [vmem:[%s0 + $0x10] sm:$0xff]
    %v66 = vld [vmem:[%s0 + $0x18] sm:$0xff]
    %v67 = vld [vmem:[%s0 + $0x20] sm:$0xff]
    %v68 = vld [vmem:[%s0 + $0x28] sm:$0xff]
    %v69 = vld [vmem:[%s0 + $0x30] sm:$0xff]
    %v70 = vld [vmem:[%s0 + $0x38] sm:$0xff]
    %v71 = vlaneseq
    %v72 = vand.u32 %v71, 127
    %73 = vset.pattern.permute.xlu0 0
    %74 = vperm.xlu0 %73, %v63
    %v75 = vpop.permute.xlu0 %74
    %76 = vset.pattern.permute.xlu0 0
    %77 = vperm.xlu0 %76, %v64
    %v78 = vpop.permute.xlu0 %77
    %79 = vset.pattern.permute.xlu0 0
    %80 = vperm.xlu0 %79, %v65
    %v81 = vpop.permute.xlu0 %80
    %82 = vset.pattern.permute.xlu0 0
    %83 = vperm.xlu0 %82, %v66
    %v84 = vpop.permute.xlu0 %83
    %85 = vset.pattern.permute.xlu0 0
    %86 = vperm.xlu0 %85, %v67
    %v87 = vpop.permute.xlu0 %86
    %88 = vset.pattern.permute.xlu0 0
    %89 = vperm.xlu0 %88, %v68
    %v90 = vpop.permute.xlu0 %89
    %91 = vset.pattern.permute.xlu0 0
    %92 = vperm.xlu0 %91, %v69
    %v93 = vpop.permute.xlu0 %92
    %94 = vset.pattern.permute.xlu0 0
    %95 = vperm.xlu0 %94, %v70
    %v96 = vpop.permute.xlu0 %95
    %vm97 = vcmp.eq.s32.totalorder %v72, %v75
    %vm98 = vcmp.eq.s32.totalorder %v72, %v78
    %vm99 = vcmp.eq.s32.totalorder %v72, %v81
    %vm100 = vcmp.eq.s32.totalorder %v72, %v84
    %vm101 = vcmp.eq.s32.totalorder %v72, %v87
    %vm102 = vcmp.eq.s32.totalorder %v72, %v90
    %vm103 = vcmp.eq.s32.totalorder %v72, %v93
    %vm104 = vcmp.eq.s32.totalorder %v72, %v96
    %v105 = vsel %vm97, 1, 0
    %v106 = vsel %vm98, 1, 0
    %v107 = vsel %vm99, 1, 0
    %v108 = vsel %vm100, 1, 0
    %v109 = vsel %vm101, 1, 0
    %v110 = vsel %vm102, 1, 0
    %v111 = vsel %vm103, 1, 0
    %v112 = vsel %vm104, 1, 0
    %v113 = vcvt.s32.f32 %v105
    %v114 = vcvt.s32.f32 %v106
    %v115 = vcvt.s32.f32 %v107
    %v116 = vcvt.s32.f32 %v108
    %v117 = vcvt.s32.f32 %v109
    %v118 = vcvt.s32.f32 %v110
    %v119 = vcvt.s32.f32 %v111
    %v120 = vcvt.s32.f32 %v112
    %v121 = vld [vmem:[#allocation2] sm:$0xff]
    %v122 = vld [vmem:[#allocation2 + $0x8] sm:$0xff]
    %v123 = vld [vmem:[#allocation2 + $0x10] sm:$0xff]
    %v124 = vld [vmem:[#allocation2 + $0x18] sm:$0xff]
    %v125 = vld [vmem:[#allocation2 + $0x20] sm:$0xff]
    %v126 = vld [vmem:[#allocation2 + $0x28] sm:$0xff]
    %v127 = vld [vmem:[#allocation2 + $0x30] sm:$0xff]
    %v128 = vld [vmem:[#allocation2 + $0x38] sm:$0xff]
    %v129 = vld [vmem:[%s2] sm:$0x1]
    %v131 = vlaneseq
    %v132 = vshrl.u32 %v131, 7
    %v133 = vsub.s32 0, %v132
    %v134 = vrot.slane %v129, %v133
    %vm136 = vcmask 523264
    %v138 = vsel %vm136, %v113, 0
    %v141 = vsel %vm136, %v114, 0
    %v144 = vsel %vm136, %v115, 0
    %v147 = vsel %vm136, %v116, 0
    %v150 = vsel %vm136, %v117, 0
    %v153 = vsel %vm136, %v118, 0
    %v156 = vsel %vm136, %v119, 0
    %v159 = vsel %vm136, %v120, 0
    %161 = vmatprep.subr.mxu0 0.0
    %162 = vmatpush1.msra.mxu0 0.0
    %163 = vmatprep.subr.mxu0 0.0
    %164 = vmatpush1.msra.mxu0 0.0
    %165 = vmatprep.subr.mxu0 0.0
    %166 = vmatpush1.msra.mxu0 0.0
    %167 = vmatprep.subr.mxu0 0.0
    %168 = vmatpush1.msra.mxu0 0.0
    %169 = vmatprep.subr.mxu0 0.0
    %170 = vmatpush1.msra.mxu0 0.0
    %171 = vmatprep.subr.mxu0 0.0
    %172 = vmatpush1.msra.mxu0 0.0
    %173 = vmatprep.subr.mxu0 0.0
    %174 = vmatpush1.msra.mxu0 0.0
    %175 = vmatprep.subr.mxu0 0.0
    %176 = vmatpush1.msra.mxu0 0.0
    %177 = vmatprep.subr.mxu0 0.0
    %v178 = vand.u32 %v128, 4294901760
    %179 = vmatpush1.msra.mxu0 %v178
    %180 = vmatprep.subr.mxu0 0.0
    %v181 = vand.u32 %v127, 4294901760
    %182 = vmatpush1.msra.mxu0 %v181
    %183 = vmatprep.subr.mxu0 0.0
    %v184 = vand.u32 %v126, 4294901760
    %185 = vmatpush1.msra.mxu0 %v184
    %186 = vmatprep.subr.mxu0 0.0
    %v187 = vand.u32 %v125, 4294901760
    %188 = vmatpush1.msra.mxu0 %v187
    %189 = vmatprep.subr.mxu0 0.0
    %v190 = vand.u32 %v124, 4294901760
    %191 = vmatpush1.msra.mxu0 %v190
    %192 = vmatprep.subr.mxu0 0.0
    %v193 = vand.u32 %v123, 4294901760
    %194 = vmatpush1.msra.mxu0 %v193
    %195 = vmatprep.subr.mxu0 0.0
    %v196 = vand.u32 %v122, 4294901760
    %197 = vmatpush1.msra.mxu0 %v196
    %198 = vmatprep.subr.mxu0 0.0
    %v199 = vand.u32 %v121, 4294901760
    %200 = vmatpush1.msra.mxu0 %v199
    %201 = vmatprep.subr.mxu0 0.0
    %202 = vmatpush2.msra.mxu0 0.0
    %203 = vmatprep.subr.mxu0 0.0
    %204 = vmatpush2.msra.mxu0 0.0
    %205 = vmatprep.subr.mxu0 0.0
    %206 = vmatpush2.msra.mxu0 0.0
    %207 = vmatprep.subr.mxu0 0.0
    %208 = vmatpush2.msra.mxu0 0.0
    %209 = vmatprep.subr.mxu0 0.0
    %210 = vmatpush2.msra.mxu0 0.0
    %211 = vmatprep.subr.mxu0 0.0
    %212 = vmatpush2.msra.mxu0 0.0
    %213 = vmatprep.subr.mxu0 0.0
    %214 = vmatpush2.msra.mxu0 0.0
    %215 = vmatprep.subr.mxu0 0.0
    %216 = vmatpush2.msra.mxu0 0.0
    %217 = vmatprep.subr.mxu0 0.0
    %218 = vmatpush2.msra.mxu0 0.0
    %219 = vmatprep.subr.mxu0 0.0
    %220 = vmatpush2.msra.mxu0 0.0
    %221 = vmatprep.subr.mxu0 0.0
    %222 = vmatpush2.msra.mxu0 0.0
    %223 = vmatprep.subr.mxu0 0.0
    %224 = vmatpush2.msra.mxu0 0.0
    %225 = vmatprep.subr.mxu0 0.0
    %226 = vmatpush2.msra.mxu0 0.0
    %227 = vmatprep.subr.mxu0 0.0
    %228 = vmatpush2.msra.mxu0 0.0
    %229 = vmatprep.subr.mxu0 0.0
    %230 = vmatpush2.msra.mxu0 0.0
    %231 = vmatprep.subr.mxu0 0.0
    %232 = vmatpush2.msra.mxu0 0.0
    %233 = vmatprep.mubr.f32.mxu0 0.0
    %v234 = vand.u32 %v138, 4294901760
    %v235 = vsub.f32 %v138, %v234
    %v236 = vand.u32 %v235, 4294901760
    %v237 = vsub.f32 %v235, %v236
    %v238 = vand.u32 %v237, 4294901760
    %239 = vmatmul.mubr.f32.gmra.mxu0 %v238
    %v240 = vpop.f32.mrf.mxu0
    %v241 = vadd.f32 %v134, %v240
    %v242 = vpop.f32.mrf.mxu0
    %243 = vmatprep.mubr.f32.mxu0 0.0
    %v244 = vand.u32 %v141, 4294901760
    %v245 = vsub.f32 %v141, %v244
    %v246 = vand.u32 %v245, 4294901760
    %v247 = vsub.f32 %v245, %v246
    %v248 = vand.u32 %v247, 4294901760
    %249 = vmatmul.mubr.f32.gmra.mxu0 %v248
    %v250 = vpop.f32.mrf.mxu0
    %v251 = vadd.f32 %v134, %v250
    %v252 = vpop.f32.mrf.mxu0
    %253 = vmatprep.mubr.f32.mxu0 0.0
    %v254 = vand.u32 %v144, 4294901760
    %v255 = vsub.f32 %v144, %v254
    %v256 = vand.u32 %v255, 4294901760
    %v257 = vsub.f32 %v255, %v256
    %v258 = vand.u32 %v257, 4294901760
    %259 = vmatmul.mubr.f32.gmra.mxu0 %v258
    %v260 = vpop.f32.mrf.mxu0
    %v261 = vadd.f32 %v134, %v260
    %v262 = vpop.f32.mrf.mxu0
    %263 = vmatprep.mubr.f32.mxu0 0.0
    %v264 = vand.u32 %v147, 4294901760
    %v265 = vsub.f32 %v147, %v264
    %v266 = vand.u32 %v265, 4294901760
    %v267 = vsub.f32 %v265, %v266
    %v268 = vand.u32 %v267, 4294901760
    %269 = vmatmul.mubr.f32.gmra.mxu0 %v268
    %v270 = vpop.f32.mrf.mxu0
    %v271 = vadd.f32 %v134, %v270
    %v272 = vpop.f32.mrf.mxu0
    %273 = vmatprep.mubr.f32.mxu0 0.0
    %v274 = vand.u32 %v150, 4294901760
    %v275 = vsub.f32 %v150, %v274
    %v276 = vand.u32 %v275, 4294901760
    %v277 = vsub.f32 %v275, %v276
    %v278 = vand.u32 %v277, 4294901760
    %279 = vmatmul.mubr.f32.gmra.mxu0 %v278
    %v280 = vpop.f32.mrf.mxu0
    %v281 = vadd.f32 %v134, %v280
    %v282 = vpop.f32.mrf.mxu0
    %283 = vmatprep.mubr.f32.mxu0 0.0
    %v284 = vand.u32 %v153, 4294901760
    %v285 = vsub.f32 %v153, %v284
    %v286 = vand.u32 %v285, 4294901760
    %v287 = vsub.f32 %v285, %v286
    %v288 = vand.u32 %v287, 4294901760
    %289 = vmatmul.mubr.f32.gmra.mxu0 %v288
    %v290 = vpop.f32.mrf.mxu0
    %v291 = vadd.f32 %v134, %v290
    %v292 = vpop.f32.mrf.mxu0
    %293 = vmatprep.mubr.f32.mxu0 0.0
    %v294 = vand.u32 %v156, 4294901760
    %v295 = vsub.f32 %v156, %v294
    %v296 = vand.u32 %v295, 4294901760
    %v297 = vsub.f32 %v295, %v296
    %v298 = vand.u32 %v297, 4294901760
    %299 = vmatmul.mubr.f32.gmra.mxu0 %v298
    %v300 = vpop.f32.mrf.mxu0
    %v301 = vadd.f32 %v134, %v300
    %v302 = vpop.f32.mrf.mxu0
    %303 = vmatprep.mubr.f32.mxu0 0.0
    %v304 = vand.u32 %v159, 4294901760
    %v305 = vsub.f32 %v159, %v304
    %v306 = vand.u32 %v305, 4294901760
    %v307 = vsub.f32 %v305, %v306
    %v308 = vand.u32 %v307, 4294901760
    %309 = vmatmul.mubr.f32.gmra.mxu0 %v308
    %v310 = vpop.f32.mrf.mxu0
    %v311 = vadd.f32 %v134, %v310
    %v312 = vpop.f32.mrf.mxu0
    %313 = vdwg.mxu0
    %314 = vmatprep.subr.mxu0 0.0
    %315 = vmatpush1.msra.mxu0 0.0
    %316 = vmatprep.subr.mxu0 0.0
    %317 = vmatpush1.msra.mxu0 0.0
    %318 = vmatprep.subr.mxu0 0.0
    %319 = vmatpush1.msra.mxu0 0.0
    %320 = vmatprep.subr.mxu0 0.0
    %321 = vmatpush1.msra.mxu0 0.0
    %322 = vmatprep.subr.mxu0 0.0
    %323 = vmatpush1.msra.mxu0 0.0
    %324 = vmatprep.subr.mxu0 0.0
    %325 = vmatpush1.msra.mxu0 0.0
    %326 = vmatprep.subr.mxu0 0.0
    %327 = vmatpush1.msra.mxu0 0.0
    %328 = vmatprep.subr.mxu0 0.0
    %329 = vmatpush1.msra.mxu0 0.0
    %330 = vmatprep.subr.mxu0 0.0
    %v331 = vand.u32 %v128, 4294901760
    %v332 = vsub.f32 %v128, %v331
    %v333 = vand.u32 %v332, 4294901760
    %v334 = vsub.f32 %v332, %v333
    %v335 = vand.u32 %v334, 4294901760
    %336 = vmatpush1.msra.mxu0 %v335
    %337 = vmatprep.subr.mxu0 0.0
    %v338 = vand.u32 %v127, 4294901760
    %v339 = vsub.f32 %v127, %v338
    %v340 = vand.u32 %v339, 4294901760
    %v341 = vsub.f32 %v339, %v340
    %v342 = vand.u32 %v341, 4294901760
    %343 = vmatpush1.msra.mxu0 %v342
    %344 = vmatprep.subr.mxu0 0.0
    %v345 = vand.u32 %v126, 4294901760
    %v346 = vsub.f32 %v126, %v345
    %v347 = vand.u32 %v346, 4294901760
    %v348 = vsub.f32 %v346, %v347
    %v349 = vand.u32 %v348, 4294901760
    %350 = vmatpush1.msra.mxu0 %v349
    %351 = vmatprep.subr.mxu0 0.0
    %v352 = vand.u32 %v125, 4294901760
    %v353 = vsub.f32 %v125, %v352
    %v354 = vand.u32 %v353, 4294901760
    %v355 = vsub.f32 %v353, %v354
    %v356 = vand.u32 %v355, 4294901760
    %357 = vmatpush1.msra.mxu0 %v356
    %358 = vmatprep.subr.mxu0 0.0
    %v359 = vand.u32 %v124, 4294901760
    %v360 = vsub.f32 %v124, %v359
    %v361 = vand.u32 %v360, 4294901760
    %v362 = vsub.f32 %v360, %v361
    %v363 = vand.u32 %v362, 4294901760
    %364 = vmatpush1.msra.mxu0 %v363
    %365 = vmatprep.subr.mxu0 0.0
    %v366 = vand.u32 %v123, 4294901760
    %v367 = vsub.f32 %v123, %v366
    %v368 = vand.u32 %v367, 4294901760
    %v369 = vsub.f32 %v367, %v368
    %v370 = vand.u32 %v369, 4294901760
    %371 = vmatpush1.msra.mxu0 %v370
    %372 = vmatprep.subr.mxu0 0.0
    %v373 = vand.u32 %v122, 4294901760
    %v374 = vsub.f32 %v122, %v373
    %v375 = vand.u32 %v374, 4294901760
    %v376 = vsub.f32 %v374, %v375
    %v377 = vand.u32 %v376, 4294901760
    %378 = vmatpush1.msra.mxu0 %v377
    %379 = vmatprep.subr.mxu0 0.0
    %v380 = vand.u32 %v121, 4294901760
    %v381 = vsub.f32 %v121, %v380
    %v382 = vand.u32 %v381, 4294901760
    %v383 = vsub.f32 %v381, %v382
    %v384 = vand.u32 %v383, 4294901760
    %385 = vmatpush1.msra.mxu0 %v384
    %386 = vmatprep.subr.mxu0 0.0
    %387 = vmatpush2.msra.mxu0 0.0
    %388 = vmatprep.subr.mxu0 0.0
    %389 = vmatpush2.msra.mxu0 0.0
    %390 = vmatprep.subr.mxu0 0.0
    %391 = vmatpush2.msra.mxu0 0.0
    %392 = vmatprep.subr.mxu0 0.0
    %393 = vmatpush2.msra.mxu0 0.0
    %394 = vmatprep.subr.mxu0 0.0
    %395 = vmatpush2.msra.mxu0 0.0
    %396 = vmatprep.subr.mxu0 0.0
    %397 = vmatpush2.msra.mxu0 0.0
    %398 = vmatprep.subr.mxu0 0.0
    %399 = vmatpush2.msra.mxu0 0.0
    %400 = vmatprep.subr.mxu0 0.0
    %401 = vmatpush2.msra.mxu0 0.0
    %402 = vmatprep.subr.mxu0 0.0
    %403 = vmatpush2.msra.mxu0 0.0
    %404 = vmatprep.subr.mxu0 0.0
    %405 = vmatpush2.msra.mxu0 0.0
    %406 = vmatprep.subr.mxu0 0.0
    %407 = vmatpush2.msra.mxu0 0.0
    %408 = vmatprep.subr.mxu0 0.0
    %409 = vmatpush2.msra.mxu0 0.0
    %410 = vmatprep.subr.mxu0 0.0
    %411 = vmatpush2.msra.mxu0 0.0
    %412 = vmatprep.subr.mxu0 0.0
    %413 = vmatpush2.msra.mxu0 0.0
    %414 = vmatprep.subr.mxu0 0.0
    %415 = vmatpush2.msra.mxu0 0.0
    %416 = vmatprep.subr.mxu0 0.0
    %417 = vmatpush2.msra.mxu0 0.0
    %418 = vmatprep.mubr.f32.mxu0 0.0
    %v419 = vand.u32 %v138, 4294901760
    %420 = vmatmul.mubr.f32.gmra.mxu0 %v419
    %v421 = vpop.f32.mrf.mxu0
    %v422 = vadd.f32 %v241, %v421
    %v423 = vpop.f32.mrf.mxu0
    %424 = vmatprep.mubr.f32.mxu0 0.0
    %v425 = vand.u32 %v141, 4294901760
    %426 = vmatmul.mubr.f32.gmra.mxu0 %v425
    %v427 = vpop.f32.mrf.mxu0
    %v428 = vadd.f32 %v251, %v427
    %v429 = vpop.f32.mrf.mxu0
    %430 = vmatprep.mubr.f32.mxu0 0.0
    %v431 = vand.u32 %v144, 4294901760
    %432 = vmatmul.mubr.f32.gmra.mxu0 %v431
    %v433 = vpop.f32.mrf.mxu0
    %v434 = vadd.f32 %v261, %v433
    %v435 = vpop.f32.mrf.mxu0
    %436 = vmatprep.mubr.f32.mxu0 0.0
    %v437 = vand.u32 %v147, 4294901760
    %438 = vmatmul.mubr.f32.gmra.mxu0 %v437
    %v439 = vpop.f32.mrf.mxu0
    %v440 = vadd.f32 %v271, %v439
    %v441 = vpop.f32.mrf.mxu0
    %442 = vmatprep.mubr.f32.mxu0 0.0
    %v443 = vand.u32 %v150, 4294901760
    %444 = vmatmul.mubr.f32.gmra.mxu0 %v443
    %v445 = vpop.f32.mrf.mxu0
    %v446 = vadd.f32 %v281, %v445
    %v447 = vpop.f32.mrf.mxu0
    %448 = vmatprep.mubr.f32.mxu0 0.0
    %v449 = vand.u32 %v153, 4294901760
    %450 = vmatmul.mubr.f32.gmra.mxu0 %v449
    %v451 = vpop.f32.mrf.mxu0
    %v452 = vadd.f32 %v291, %v451
    %v453 = vpop.f32.mrf.mxu0
    %454 = vmatprep.mubr.f32.mxu0 0.0
    %v455 = vand.u32 %v156, 4294901760
    %456 = vmatmul.mubr.f32.gmra.mxu0 %v455
    %v457 = vpop.f32.mrf.mxu0
    %v458 = vadd.f32 %v301, %v457
    %v459 = vpop.f32.mrf.mxu0
    %460 = vmatprep.mubr.f32.mxu0 0.0
    %v461 = vand.u32 %v159, 4294901760
    %462 = vmatmul.mubr.f32.gmra.mxu0 %v461
    %v463 = vpop.f32.mrf.mxu0
    %v464 = vadd.f32 %v311, %v463
    %v465 = vpop.f32.mrf.mxu0
    %466 = vdwg.mxu0
    %467 = vmatprep.subr.mxu0 0.0
    %468 = vmatpush1.msra.mxu0 0.0
    %469 = vmatprep.subr.mxu0 0.0
    %470 = vmatpush1.msra.mxu0 0.0
    %471 = vmatprep.subr.mxu0 0.0
    %472 = vmatpush1.msra.mxu0 0.0
    %473 = vmatprep.subr.mxu0 0.0
    %474 = vmatpush1.msra.mxu0 0.0
    %475 = vmatprep.subr.mxu0 0.0
    %476 = vmatpush1.msra.mxu0 0.0
    %477 = vmatprep.subr.mxu0 0.0
    %478 = vmatpush1.msra.mxu0 0.0
    %479 = vmatprep.subr.mxu0 0.0
    %480 = vmatpush1.msra.mxu0 0.0
    %481 = vmatprep.subr.mxu0 0.0
    %482 = vmatpush1.msra.mxu0 0.0
    %483 = vmatprep.subr.mxu0 0.0
    %v484 = vand.u32 %v128, 4294901760
    %v485 = vsub.f32 %v128, %v484
    %486 = vmatpush1.msra.mxu0 %v485
    %487 = vmatprep.subr.mxu0 0.0
    %v488 = vand.u32 %v127, 4294901760
    %v489 = vsub.f32 %v127, %v488
    %490 = vmatpush1.msra.mxu0 %v489
    %491 = vmatprep.subr.mxu0 0.0
    %v492 = vand.u32 %v126, 4294901760
    %v493 = vsub.f32 %v126, %v492
    %494 = vmatpush1.msra.mxu0 %v493
    %495 = vmatprep.subr.mxu0 0.0
    %v496 = vand.u32 %v125, 4294901760
    %v497 = vsub.f32 %v125, %v496
    %498 = vmatpush1.msra.mxu0 %v497
    %499 = vmatprep.subr.mxu0 0.0
    %v500 = vand.u32 %v124, 4294901760
    %v501 = vsub.f32 %v124, %v500
    %502 = vmatpush1.msra.mxu0 %v501
    %503 = vmatprep.subr.mxu0 0.0
    %v504 = vand.u32 %v123, 4294901760
    %v505 = vsub.f32 %v123, %v504
    %506 = vmatpush1.msra.mxu0 %v505
    %507 = vmatprep.subr.mxu0 0.0
    %v508 = vand.u32 %v122, 4294901760
    %v509 = vsub.f32 %v122, %v508
    %510 = vmatpush1.msra.mxu0 %v509
    %511 = vmatprep.subr.mxu0 0.0
    %v512 = vand.u32 %v121, 4294901760
    %v513 = vsub.f32 %v121, %v512
    %514 = vmatpush1.msra.mxu0 %v513
    %515 = vmatprep.subr.mxu0 0.0
    %516 = vmatpush2.msra.mxu0 0.0
    %517 = vmatprep.subr.mxu0 0.0
    %518 = vmatpush2.msra.mxu0 0.0
    %519 = vmatprep.subr.mxu0 0.0
    %520 = vmatpush2.msra.mxu0 0.0
    %521 = vmatprep.subr.mxu0 0.0
    %522 = vmatpush2.msra.mxu0 0.0
    %523 = vmatprep.subr.mxu0 0.0
    %524 = vmatpush2.msra.mxu0 0.0
    %525 = vmatprep.subr.mxu0 0.0
    %526 = vmatpush2.msra.mxu0 0.0
    %527 = vmatprep.subr.mxu0 0.0
    %528 = vmatpush2.msra.mxu0 0.0
    %529 = vmatprep.subr.mxu0 0.0
    %530 = vmatpush2.msra.mxu0 0.0
    %531 = vmatprep.subr.mxu0 0.0
    %532 = vmatpush2.msra.mxu0 0.0
    %533 = vmatprep.subr.mxu0 0.0
    %534 = vmatpush2.msra.mxu0 0.0
    %535 = vmatprep.subr.mxu0 0.0
    %536 = vmatpush2.msra.mxu0 0.0
    %537 = vmatprep.subr.mxu0 0.0
    %538 = vmatpush2.msra.mxu0 0.0
    %539 = vmatprep.subr.mxu0 0.0
    %540 = vmatpush2.msra.mxu0 0.0
    %541 = vmatprep.subr.mxu0 0.0
    %542 = vmatpush2.msra.mxu0 0.0
    %543 = vmatprep.subr.mxu0 0.0
    %544 = vmatpush2.msra.mxu0 0.0
    %545 = vmatprep.subr.mxu0 0.0
    %546 = vmatpush2.msra.mxu0 0.0
    %547 = vmatprep.mubr.f32.mxu0 0.0
    %v548 = vand.u32 %v138, 4294901760
    %v549 = vsub.f32 %v138, %v548
    %550 = vmatmul.mubr.f32.gmra.mxu0 %v549
    %v551 = vpop.f32.mrf.mxu0
    %v552 = vadd.f32 %v422, %v551
    %v553 = vpop.f32.mrf.mxu0
    %554 = vmatprep.mubr.f32.mxu0 0.0
    %v555 = vand.u32 %v141, 4294901760
    %v556 = vsub.f32 %v141, %v555
    %557 = vmatmul.mubr.f32.gmra.mxu0 %v556
    %v558 = vpop.f32.mrf.mxu0
    %v559 = vadd.f32 %v428, %v558
    %v560 = vpop.f32.mrf.mxu0
    %561 = vmatprep.mubr.f32.mxu0 0.0
    %v562 = vand.u32 %v144, 4294901760
    %v563 = vsub.f32 %v144, %v562
    %564 = vmatmul.mubr.f32.gmra.mxu0 %v563
    %v565 = vpop.f32.mrf.mxu0
    %v566 = vadd.f32 %v434, %v565
    %v567 = vpop.f32.mrf.mxu0
    %568 = vmatprep.mubr.f32.mxu0 0.0
    %v569 = vand.u32 %v147, 4294901760
    %v570 = vsub.f32 %v147, %v569
    %571 = vmatmul.mubr.f32.gmra.mxu0 %v570
    %v572 = vpop.f32.mrf.mxu0
    %v573 = vadd.f32 %v440, %v572
    %v574 = vpop.f32.mrf.mxu0
    %575 = vmatprep.mubr.f32.mxu0 0.0
    %v576 = vand.u32 %v150, 4294901760
    %v577 = vsub.f32 %v150, %v576
    %578 = vmatmul.mubr.f32.gmra.mxu0 %v577
    %v579 = vpop.f32.mrf.mxu0
    %v580 = vadd.f32 %v446, %v579
    %v581 = vpop.f32.mrf.mxu0
    %582 = vmatprep.mubr.f32.mxu0 0.0
    %v583 = vand.u32 %v153, 4294901760
    %v584 = vsub.f32 %v153, %v583
    %585 = vmatmul.mubr.f32.gmra.mxu0 %v584
    %v586 = vpop.f32.mrf.mxu0
    %v587 = vadd.f32 %v452, %v586
    %v588 = vpop.f32.mrf.mxu0
    %589 = vmatprep.mubr.f32.mxu0 0.0
    %v590 = vand.u32 %v156, 4294901760
    %v591 = vsub.f32 %v156, %v590
    %592 = vmatmul.mubr.f32.gmra.mxu0 %v591
    %v593 = vpop.f32.mrf.mxu0
    %v594 = vadd.f32 %v458, %v593
    %v595 = vpop.f32.mrf.mxu0
    %596 = vmatprep.mubr.f32.mxu0 0.0
    %v597 = vand.u32 %v159, 4294901760
    %v598 = vsub.f32 %v159, %v597
    %599 = vmatmul.mubr.f32.gmra.mxu0 %v598
    %v600 = vpop.f32.mrf.mxu0
    %v601 = vadd.f32 %v464, %v600
    %v602 = vpop.f32.mrf.mxu0
    %603 = vdwg.mxu0
    %604 = vmatprep.subr.mxu0 0.0
    %605 = vmatpush1.msra.mxu0 0.0
    %606 = vmatprep.subr.mxu0 0.0
    %607 = vmatpush1.msra.mxu0 0.0
    %608 = vmatprep.subr.mxu0 0.0
    %609 = vmatpush1.msra.mxu0 0.0
    %610 = vmatprep.subr.mxu0 0.0
    %611 = vmatpush1.msra.mxu0 0.0
    %612 = vmatprep.subr.mxu0 0.0
    %613 = vmatpush1.msra.mxu0 0.0
    %614 = vmatprep.subr.mxu0 0.0
    %615 = vmatpush1.msra.mxu0 0.0
    %616 = vmatprep.subr.mxu0 0.0
    %617 = vmatpush1.msra.mxu0 0.0
    %618 = vmatprep.subr.mxu0 0.0
    %619 = vmatpush1.msra.mxu0 0.0
    %620 = vmatprep.subr.mxu0 0.0
    %v621 = vand.u32 %v128, 4294901760
    %622 = vmatpush1.msra.mxu0 %v621
    %623 = vmatprep.subr.mxu0 0.0
    %v624 = vand.u32 %v127, 4294901760
    %625 = vmatpush1.msra.mxu0 %v624
    %626 = vmatprep.subr.mxu0 0.0
    %v627 = vand.u32 %v126, 4294901760
    %628 = vmatpush1.msra.mxu0 %v627
    %629 = vmatprep.subr.mxu0 0.0
    %v630 = vand.u32 %v125, 4294901760
    %631 = vmatpush1.msra.mxu0 %v630
    %632 = vmatprep.subr.mxu0 0.0
    %v633 = vand.u32 %v124, 4294901760
    %634 = vmatpush1.msra.mxu0 %v633
    %635 = vmatprep.subr.mxu0 0.0
    %v636 = vand.u32 %v123, 4294901760
    %637 = vmatpush1.msra.mxu0 %v636
    %638 = vmatprep.subr.mxu0 0.0
    %v639 = vand.u32 %v122, 4294901760
    %640 = vmatpush1.msra.mxu0 %v639
    %641 = vmatprep.subr.mxu0 0.0
    %v642 = vand.u32 %v121, 4294901760
    %643 = vmatpush1.msra.mxu0 %v642
    %644 = vmatprep.subr.mxu0 0.0
    %645 = vmatpush2.msra.mxu0 0.0
    %646 = vmatprep.subr.mxu0 0.0
    %647 = vmatpush2.msra.mxu0 0.0
    %648 = vmatprep.subr.mxu0 0.0
    %649 = vmatpush2.msra.mxu0 0.0
    %650 = vmatprep.subr.mxu0 0.0
    %651 = vmatpush2.msra.mxu0 0.0
    %652 = vmatprep.subr.mxu0 0.0
    %653 = vmatpush2.msra.mxu0 0.0
    %654 = vmatprep.subr.mxu0 0.0
    %655 = vmatpush2.msra.mxu0 0.0
    %656 = vmatprep.subr.mxu0 0.0
    %657 = vmatpush2.msra.mxu0 0.0
    %658 = vmatprep.subr.mxu0 0.0
    %659 = vmatpush2.msra.mxu0 0.0
    %660 = vmatprep.subr.mxu0 0.0
    %661 = vmatpush2.msra.mxu0 0.0
    %662 = vmatprep.subr.mxu0 0.0
    %663 = vmatpush2.msra.mxu0 0.0
    %664 = vmatprep.subr.mxu0 0.0
    %665 = vmatpush2.msra.mxu0 0.0
    %666 = vmatprep.subr.mxu0 0.0
    %667 = vmatpush2.msra.mxu0 0.0
    %668 = vmatprep.subr.mxu0 0.0
    %669 = vmatpush2.msra.mxu0 0.0
    %670 = vmatprep.subr.mxu0 0.0
    %671 = vmatpush2.msra.mxu0 0.0
    %672 = vmatprep.subr.mxu0 0.0
    %673 = vmatpush2.msra.mxu0 0.0
    %674 = vmatprep.subr.mxu0 0.0
    %675 = vmatpush2.msra.mxu0 0.0
    %676 = vmatprep.mubr.f32.mxu0 0.0
    %v677 = vand.u32 %v138, 4294901760
    %v678 = vsub.f32 %v138, %v677
    %v679 = vand.u32 %v678, 4294901760
    %680 = vmatmul.mubr.f32.gmra.mxu0 %v679
    %v681 = vpop.f32.mrf.mxu0
    %v682 = vadd.f32 %v552, %v681
    %v683 = vpop.f32.mrf.mxu0
    %684 = vmatprep.mubr.f32.mxu0 0.0
    %v685 = vand.u32 %v141, 4294901760
    %v686 = vsub.f32 %v141, %v685
    %v687 = vand.u32 %v686, 4294901760
    %688 = vmatmul.mubr.f32.gmra.mxu0 %v687
    %v689 = vpop.f32.mrf.mxu0
    %v690 = vadd.f32 %v559, %v689
    %v691 = vpop.f32.mrf.mxu0
    %692 = vmatprep.mubr.f32.mxu0 0.0
    %v693 = vand.u32 %v144, 4294901760
    %v694 = vsub.f32 %v144, %v693
    %v695 = vand.u32 %v694, 4294901760
    %696 = vmatmul.mubr.f32.gmra.mxu0 %v695
    %v697 = vpop.f32.mrf.mxu0
    %v698 = vadd.f32 %v566, %v697
    %v699 = vpop.f32.mrf.mxu0
    %700 = vmatprep.mubr.f32.mxu0 0.0
    %v701 = vand.u32 %v147, 4294901760
    %v702 = vsub.f32 %v147, %v701
    %v703 = vand.u32 %v702, 4294901760
    %704 = vmatmul.mubr.f32.gmra.mxu0 %v703
    %v705 = vpop.f32.mrf.mxu0
    %v706 = vadd.f32 %v573, %v705
    %v707 = vpop.f32.mrf.mxu0
    %708 = vmatprep.mubr.f32.mxu0 0.0
    %v709 = vand.u32 %v150, 4294901760
    %v710 = vsub.f32 %v150, %v709
    %v711 = vand.u32 %v710, 4294901760
    %712 = vmatmul.mubr.f32.gmra.mxu0 %v711
    %v713 = vpop.f32.mrf.mxu0
    %v714 = vadd.f32 %v580, %v713
    %v715 = vpop.f32.mrf.mxu0
    %716 = vmatprep.mubr.f32.mxu0 0.0
    %v717 = vand.u32 %v153, 4294901760
    %v718 = vsub.f32 %v153, %v717
    %v719 = vand.u32 %v718, 4294901760
    %720 = vmatmul.mubr.f32.gmra.mxu0 %v719
    %v721 = vpop.f32.mrf.mxu0
    %v722 = vadd.f32 %v587, %v721
    %v723 = vpop.f32.mrf.mxu0
    %724 = vmatprep.mubr.f32.mxu0 0.0
    %v725 = vand.u32 %v156, 4294901760
    %v726 = vsub.f32 %v156, %v725
    %v727 = vand.u32 %v726, 4294901760
    %728 = vmatmul.mubr.f32.gmra.mxu0 %v727
    %v729 = vpop.f32.mrf.mxu0
    %v730 = vadd.f32 %v594, %v729
    %v731 = vpop.f32.mrf.mxu0
    %732 = vmatprep.mubr.f32.mxu0 0.0
    %v733 = vand.u32 %v159, 4294901760
    %v734 = vsub.f32 %v159, %v733
    %v735 = vand.u32 %v734, 4294901760
    %736 = vmatmul.mubr.f32.gmra.mxu0 %v735
    %v737 = vpop.f32.mrf.mxu0
    %v738 = vadd.f32 %v601, %v737
    %v739 = vpop.f32.mrf.mxu0
    %740 = vdwg.mxu0
    %741 = vmatprep.subr.mxu0 0.0
    %742 = vmatpush1.msra.mxu0 0.0
    %743 = vmatprep.subr.mxu0 0.0
    %744 = vmatpush1.msra.mxu0 0.0
    %745 = vmatprep.subr.mxu0 0.0
    %746 = vmatpush1.msra.mxu0 0.0
    %747 = vmatprep.subr.mxu0 0.0
    %748 = vmatpush1.msra.mxu0 0.0
    %749 = vmatprep.subr.mxu0 0.0
    %750 = vmatpush1.msra.mxu0 0.0
    %751 = vmatprep.subr.mxu0 0.0
    %752 = vmatpush1.msra.mxu0 0.0
    %753 = vmatprep.subr.mxu0 0.0
    %754 = vmatpush1.msra.mxu0 0.0
    %755 = vmatprep.subr.mxu0 0.0
    %756 = vmatpush1.msra.mxu0 0.0
    %757 = vmatprep.subr.mxu0 0.0
    %v758 = vand.u32 %v128, 4294901760
    %v759 = vsub.f32 %v128, %v758
    %v760 = vand.u32 %v759, 4294901760
    %761 = vmatpush1.msra.mxu0 %v760
    %762 = vmatprep.subr.mxu0 0.0
    %v763 = vand.u32 %v127, 4294901760
    %v764 = vsub.f32 %v127, %v763
    %v765 = vand.u32 %v764, 4294901760
    %766 = vmatpush1.msra.mxu0 %v765
    %767 = vmatprep.subr.mxu0 0.0
    %v768 = vand.u32 %v126, 4294901760
    %v769 = vsub.f32 %v126, %v768
    %v770 = vand.u32 %v769, 4294901760
    %771 = vmatpush1.msra.mxu0 %v770
    %772 = vmatprep.subr.mxu0 0.0
    %v773 = vand.u32 %v125, 4294901760
    %v774 = vsub.f32 %v125, %v773
    %v775 = vand.u32 %v774, 4294901760
    %776 = vmatpush1.msra.mxu0 %v775
    %777 = vmatprep.subr.mxu0 0.0
    %v778 = vand.u32 %v124, 4294901760
    %v779 = vsub.f32 %v124, %v778
    %v780 = vand.u32 %v779, 4294901760
    %781 = vmatpush1.msra.mxu0 %v780
    %782 = vmatprep.subr.mxu0 0.0
    %v783 = vand.u32 %v123, 4294901760
    %v784 = vsub.f32 %v123, %v783
    %v785 = vand.u32 %v784, 4294901760
    %786 = vmatpush1.msra.mxu0 %v785
    %787 = vmatprep.subr.mxu0 0.0
    %v788 = vand.u32 %v122, 4294901760
    %v789 = vsub.f32 %v122, %v788
    %v790 = vand.u32 %v789, 4294901760
    %791 = vmatpush1.msra.mxu0 %v790
    %792 = vmatprep.subr.mxu0 0.0
    %v793 = vand.u32 %v121, 4294901760
    %v794 = vsub.f32 %v121, %v793
    %v795 = vand.u32 %v794, 4294901760
    %796 = vmatpush1.msra.mxu0 %v795
    %797 = vmatprep.subr.mxu0 0.0
    %798 = vmatpush2.msra.mxu0 0.0
    %799 = vmatprep.subr.mxu0 0.0
    %800 = vmatpush2.msra.mxu0 0.0
    %801 = vmatprep.subr.mxu0 0.0
    %802 = vmatpush2.msra.mxu0 0.0
    %803 = vmatprep.subr.mxu0 0.0
    %804 = vmatpush2.msra.mxu0 0.0
    %805 = vmatprep.subr.mxu0 0.0
    %806 = vmatpush2.msra.mxu0 0.0
    %807 = vmatprep.subr.mxu0 0.0
    %808 = vmatpush2.msra.mxu0 0.0
    %809 = vmatprep.subr.mxu0 0.0
    %810 = vmatpush2.msra.mxu0 0.0
    %811 = vmatprep.subr.mxu0 0.0
    %812 = vmatpush2.msra.mxu0 0.0
    %813 = vmatprep.subr.mxu0 0.0
    %814 = vmatpush2.msra.mxu0 0.0
    %815 = vmatprep.subr.mxu0 0.0
    %816 = vmatpush2.msra.mxu0 0.0
    %817 = vmatprep.subr.mxu0 0.0
    %818 = vmatpush2.msra.mxu0 0.0
    %819 = vmatprep.subr.mxu0 0.0
    %820 = vmatpush2.msra.mxu0 0.0
    %821 = vmatprep.subr.mxu0 0.0
    %822 = vmatpush2.msra.mxu0 0.0
    %823 = vmatprep.subr.mxu0 0.0
    %824 = vmatpush2.msra.mxu0 0.0
    %825 = vmatprep.subr.mxu0 0.0
    %826 = vmatpush2.msra.mxu0 0.0
    %827 = vmatprep.subr.mxu0 0.0
    %828 = vmatpush2.msra.mxu0 0.0
    %829 = vmatprep.mubr.f32.mxu0 0.0
    %v830 = vand.u32 %v138, 4294901760
    %831 = vmatmul.mubr.f32.gmra.mxu0 %v830
    %v832 = vpop.f32.mrf.mxu0
    %v833 = vadd.f32 %v682, %v832
    %v834 = vpop.f32.mrf.mxu0
    %835 = vmatprep.mubr.f32.mxu0 0.0
    %v836 = vand.u32 %v141, 4294901760
    %837 = vmatmul.mubr.f32.gmra.mxu0 %v836
    %v838 = vpop.f32.mrf.mxu0
    %v839 = vadd.f32 %v690, %v838
    %v840 = vpop.f32.mrf.mxu0
    %841 = vmatprep.mubr.f32.mxu0 0.0
    %v842 = vand.u32 %v144, 4294901760
    %843 = vmatmul.mubr.f32.gmra.mxu0 %v842
    %v844 = vpop.f32.mrf.mxu0
    %v845 = vadd.f32 %v698, %v844
    %v846 = vpop.f32.mrf.mxu0
    %847 = vmatprep.mubr.f32.mxu0 0.0
    %v848 = vand.u32 %v147, 4294901760
    %849 = vmatmul.mubr.f32.gmra.mxu0 %v848
    %v850 = vpop.f32.mrf.mxu0
    %v851 = vadd.f32 %v706, %v850
    %v852 = vpop.f32.mrf.mxu0
    %853 = vmatprep.mubr.f32.mxu0 0.0
    %v854 = vand.u32 %v150, 4294901760
    %855 = vmatmul.mubr.f32.gmra.mxu0 %v854
    %v856 = vpop.f32.mrf.mxu0
    %v857 = vadd.f32 %v714, %v856
    %v858 = vpop.f32.mrf.mxu0
    %859 = vmatprep.mubr.f32.mxu0 0.0
    %v860 = vand.u32 %v153, 4294901760
    %861 = vmatmul.mubr.f32.gmra.mxu0 %v860
    %v862 = vpop.f32.mrf.mxu0
    %v863 = vadd.f32 %v722, %v862
    %v864 = vpop.f32.mrf.mxu0
    %865 = vmatprep.mubr.f32.mxu0 0.0
    %v866 = vand.u32 %v156, 4294901760
    %867 = vmatmul.mubr.f32.gmra.mxu0 %v866
    %v868 = vpop.f32.mrf.mxu0
    %v869 = vadd.f32 %v730, %v868
    %v870 = vpop.f32.mrf.mxu0
    %871 = vmatprep.mubr.f32.mxu0 0.0
    %v872 = vand.u32 %v159, 4294901760
    %873 = vmatmul.mubr.f32.gmra.mxu0 %v872
    %v874 = vpop.f32.mrf.mxu0
    %v875 = vadd.f32 %v738, %v874
    %v876 = vpop.f32.mrf.mxu0
    %877 = vdwg.mxu0
    %878 = vmatprep.subr.mxu0 0.0
    %879 = vmatpush1.msra.mxu0 0.0
    %880 = vmatprep.subr.mxu0 0.0
    %881 = vmatpush1.msra.mxu0 0.0
    %882 = vmatprep.subr.mxu0 0.0
    %883 = vmatpush1.msra.mxu0 0.0
    %884 = vmatprep.subr.mxu0 0.0
    %885 = vmatpush1.msra.mxu0 0.0
    %886 = vmatprep.subr.mxu0 0.0
    %887 = vmatpush1.msra.mxu0 0.0
    %888 = vmatprep.subr.mxu0 0.0
    %889 = vmatpush1.msra.mxu0 0.0
    %890 = vmatprep.subr.mxu0 0.0
    %891 = vmatpush1.msra.mxu0 0.0
    %892 = vmatprep.subr.mxu0 0.0
    %893 = vmatpush1.msra.mxu0 0.0
    %894 = vmatprep.subr.mxu0 0.0
    %v895 = vand.u32 %v128, 4294901760
    %896 = vmatpush1.msra.mxu0 %v895
    %897 = vmatprep.subr.mxu0 0.0
    %v898 = vand.u32 %v127, 4294901760
    %899 = vmatpush1.msra.mxu0 %v898
    %900 = vmatprep.subr.mxu0 0.0
    %v901 = vand.u32 %v126, 4294901760
    %902 = vmatpush1.msra.mxu0 %v901
    %903 = vmatprep.subr.mxu0 0.0
    %v904 = vand.u32 %v125, 4294901760
    %905 = vmatpush1.msra.mxu0 %v904
    %906 = vmatprep.subr.mxu0 0.0
    %v907 = vand.u32 %v124, 4294901760
    %908 = vmatpush1.msra.mxu0 %v907
    %909 = vmatprep.subr.mxu0 0.0
    %v910 = vand.u32 %v123, 4294901760
    %911 = vmatpush1.msra.mxu0 %v910
    %912 = vmatprep.subr.mxu0 0.0
    %v913 = vand.u32 %v122, 4294901760
    %914 = vmatpush1.msra.mxu0 %v913
    %915 = vmatprep.subr.mxu0 0.0
    %v916 = vand.u32 %v121, 4294901760
    %917 = vmatpush1.msra.mxu0 %v916
    %918 = vmatprep.subr.mxu0 0.0
    %919 = vmatpush2.msra.mxu0 0.0
    %920 = vmatprep.subr.mxu0 0.0
    %921 = vmatpush2.msra.mxu0 0.0
    %922 = vmatprep.subr.mxu0 0.0
    %923 = vmatpush2.msra.mxu0 0.0
    %924 = vmatprep.subr.mxu0 0.0
    %925 = vmatpush2.msra.mxu0 0.0
    %926 = vmatprep.subr.mxu0 0.0
    %927 = vmatpush2.msra.mxu0 0.0
    %928 = vmatprep.subr.mxu0 0.0
    %929 = vmatpush2.msra.mxu0 0.0
    %930 = vmatprep.subr.mxu0 0.0
    %931 = vmatpush2.msra.mxu0 0.0
    %932 = vmatprep.subr.mxu0 0.0
    %933 = vmatpush2.msra.mxu0 0.0
    %934 = vmatprep.subr.mxu0 0.0
    %935 = vmatpush2.msra.mxu0 0.0
    %936 = vmatprep.subr.mxu0 0.0
    %937 = vmatpush2.msra.mxu0 0.0
    %938 = vmatprep.subr.mxu0 0.0
    %939 = vmatpush2.msra.mxu0 0.0
    %940 = vmatprep.subr.mxu0 0.0
    %941 = vmatpush2.msra.mxu0 0.0
    %942 = vmatprep.subr.mxu0 0.0
    %943 = vmatpush2.msra.mxu0 0.0
    %944 = vmatprep.subr.mxu0 0.0
    %945 = vmatpush2.msra.mxu0 0.0
    %946 = vmatprep.subr.mxu0 0.0
    %947 = vmatpush2.msra.mxu0 0.0
    %948 = vmatprep.subr.mxu0 0.0
    %949 = vmatpush2.msra.mxu0 0.0
    %950 = vmatprep.mubr.f32.mxu0 0.0
    %v951 = vand.u32 %v138, 4294901760
    %952 = vmatmul.mubr.f32.gmra.mxu0 %v951
    %v953 = vpop.f32.mrf.mxu0
    %v954 = vadd.f32 %v833, %v953
    %v955 = vpop.f32.mrf.mxu0
    %956 = vmatprep.mubr.f32.mxu0 0.0
    %v957 = vand.u32 %v141, 4294901760
    %958 = vmatmul.mubr.f32.gmra.mxu0 %v957
    %v959 = vpop.f32.mrf.mxu0
    %v960 = vadd.f32 %v839, %v959
    %v961 = vpop.f32.mrf.mxu0
    %962 = vmatprep.mubr.f32.mxu0 0.0
    %v963 = vand.u32 %v144, 4294901760
    %964 = vmatmul.mubr.f32.gmra.mxu0 %v963
    %v965 = vpop.f32.mrf.mxu0
    %v966 = vadd.f32 %v845, %v965
    %v967 = vpop.f32.mrf.mxu0
    %968 = vmatprep.mubr.f32.mxu0 0.0
    %v969 = vand.u32 %v147, 4294901760
    %970 = vmatmul.mubr.f32.gmra.mxu0 %v969
    %v971 = vpop.f32.mrf.mxu0
    %v972 = vadd.f32 %v851, %v971
    %v973 = vpop.f32.mrf.mxu0
    %974 = vmatprep.mubr.f32.mxu0 0.0
    %v975 = vand.u32 %v150, 4294901760
    %976 = vmatmul.mubr.f32.gmra.mxu0 %v975
    %v977 = vpop.f32.mrf.mxu0
    %v978 = vadd.f32 %v857, %v977
    %v979 = vpop.f32.mrf.mxu0
    %980 = vmatprep.mubr.f32.mxu0 0.0
    %v981 = vand.u32 %v153, 4294901760
    %982 = vmatmul.mubr.f32.gmra.mxu0 %v981
    %v983 = vpop.f32.mrf.mxu0
    %v984 = vadd.f32 %v863, %v983
    %v985 = vpop.f32.mrf.mxu0
    %986 = vmatprep.mubr.f32.mxu0 0.0
    %v987 = vand.u32 %v156, 4294901760
    %988 = vmatmul.mubr.f32.gmra.mxu0 %v987
    %v989 = vpop.f32.mrf.mxu0
    %v990 = vadd.f32 %v869, %v989
    %v991 = vpop.f32.mrf.mxu0
    %992 = vmatprep.mubr.f32.mxu0 0.0
    %v993 = vand.u32 %v159, 4294901760
    %994 = vmatmul.mubr.f32.gmra.mxu0 %v993
    %v995 = vpop.f32.mrf.mxu0
    %v996 = vadd.f32 %v875, %v995
    %v997 = vpop.f32.mrf.mxu0
    %998 = vdwg.mxu0
    %v999 = vld [vmem:[%s3] sm:$0xff]
    %v1000 = vld [vmem:[%s3 + $0x8] sm:$0xff]
    %v1001 = vld [vmem:[%s3 + $0x10] sm:$0xff]
    %v1002 = vld [vmem:[%s3 + $0x18] sm:$0xff]
    %v1003 = vld [vmem:[%s3 + $0x20] sm:$0xff]
    %v1004 = vld [vmem:[%s3 + $0x28] sm:$0xff]
    %v1005 = vld [vmem:[%s3 + $0x30] sm:$0xff]
    %v1006 = vld [vmem:[%s3 + $0x38] sm:$0xff]
    %v1007 = vld [vmem:[%s3 + $0x40] sm:$0xff]
    %v1008 = vld [vmem:[%s3 + $0x48] sm:$0xff]
    %v1009 = vld [vmem:[%s3 + $0x50] sm:$0xff]
    %v1010 = vld [vmem:[%s3 + $0x58] sm:$0xff]
    %v1011 = vld [vmem:[%s3 + $0x60] sm:$0xff]
    %v1012 = vld [vmem:[%s3 + $0x68] sm:$0xff]
    %v1013 = vld [vmem:[%s3 + $0x70] sm:$0xff]
    %v1014 = vld [vmem:[%s3 + $0x78] sm:$0xff]
    %v1015 = vld [vmem:[%s4] sm:$0x1]
    %v1016 = vld [vmem:[%s5] sm:$0xff]
    %v1017 = vld [vmem:[%s6] sm:$0xff]
    %s1018 = scalar_lea.vmem %s5, 8
    %v1019 = vld [vmem:[%s1018] sm:$0xff]
    %s1020 = scalar_lea.vmem %s6, 8
    %v1021 = vld [vmem:[%s1020] sm:$0xff]
    %1023 = vrot.lane.b32.xlu0 %v1019, 32
    %v1024 = vpop.permute.xlu0 %1023
    %vm1026 = vcmask 261120
    %v1027 = vsel %vm1026, %v1016, %v1024
    %v1029 = vsel %vm136, %v1027, 0
    %1031 = vmatprep.subr.mxu0 0.0
    %1032 = vmatpush1.msra.mxu0 0.0
    %1033 = vmatprep.subr.mxu0 0.0
    %1034 = vmatpush1.msra.mxu0 0.0
    %1035 = vmatprep.subr.mxu0 0.0
    %1036 = vmatpush1.msra.mxu0 0.0
    %1037 = vmatprep.subr.mxu0 0.0
    %1038 = vmatpush1.msra.mxu0 0.0
    %1039 = vmatprep.subr.mxu0 0.0
    %1040 = vmatpush1.msra.mxu0 0.0
    %1041 = vmatprep.subr.mxu0 0.0
    %1042 = vmatpush1.msra.mxu0 0.0
    %1043 = vmatprep.subr.mxu0 0.0
    %1044 = vmatpush1.msra.mxu0 0.0
    %1045 = vmatprep.subr.mxu0 0.0
    %1046 = vmatpush1.msra.mxu0 0.0
    %v1047 = vand.u32 %v1014, 4294901760
    %1048 = vmatprep.subr.mxu0 %v1047
    %v1049 = vand.u32 %v1013, 4294901760
    %1050 = vmatpush1.msra.mxu0 %v1049
    %v1051 = vand.u32 %v1012, 4294901760
    %1052 = vmatprep.subr.mxu0 %v1051
    %v1053 = vand.u32 %v1011, 4294901760
    %1054 = vmatpush1.msra.mxu0 %v1053
    %v1055 = vand.u32 %v1010, 4294901760
    %1056 = vmatprep.subr.mxu0 %v1055
    %v1057 = vand.u32 %v1009, 4294901760
    %1058 = vmatpush1.msra.mxu0 %v1057
    %v1059 = vand.u32 %v1008, 4294901760
    %1060 = vmatprep.subr.mxu0 %v1059
    %v1061 = vand.u32 %v1007, 4294901760
    %1062 = vmatpush1.msra.mxu0 %v1061
    %v1063 = vand.u32 %v1006, 4294901760
    %1064 = vmatprep.subr.mxu0 %v1063
    %v1065 = vand.u32 %v1005, 4294901760
    %1066 = vmatpush1.msra.mxu0 %v1065
    %v1067 = vand.u32 %v1004, 4294901760
    %1068 = vmatprep.subr.mxu0 %v1067
    %v1069 = vand.u32 %v1003, 4294901760
    %1070 = vmatpush1.msra.mxu0 %v1069
    %v1071 = vand.u32 %v1002, 4294901760
    %1072 = vmatprep.subr.mxu0 %v1071
    %v1073 = vand.u32 %v1001, 4294901760
    %1074 = vmatpush1.msra.mxu0 %v1073
    %v1075 = vand.u32 %v1000, 4294901760
    %1076 = vmatprep.subr.mxu0 %v1075
    %v1077 = vand.u32 %v999, 4294901760
    %1078 = vmatpush1.msra.mxu0 %v1077
    %1079 = vmatprep.subr.mxu0 0.0
    %1080 = vmatpush2.msra.mxu0 0.0
    %1081 = vmatprep.subr.mxu0 0.0
    %1082 = vmatpush2.msra.mxu0 0.0
    %1083 = vmatprep.subr.mxu0 0.0
    %1084 = vmatpush2.msra.mxu0 0.0
    %1085 = vmatprep.subr.mxu0 0.0
    %1086 = vmatpush2.msra.mxu0 0.0
    %1087 = vmatprep.subr.mxu0 0.0
    %1088 = vmatpush2.msra.mxu0 0.0
    %1089 = vmatprep.subr.mxu0 0.0
    %1090 = vmatpush2.msra.mxu0 0.0
    %1091 = vmatprep.subr.mxu0 0.0
    %1092 = vmatpush2.msra.mxu0 0.0
    %1093 = vmatprep.subr.mxu0 0.0
    %1094 = vmatpush2.msra.mxu0 0.0
    %1095 = vmatprep.subr.mxu0 0.0
    %1096 = vmatpush2.msra.mxu0 0.0
    %1097 = vmatprep.subr.mxu0 0.0
    %1098 = vmatpush2.msra.mxu0 0.0
    %1099 = vmatprep.subr.mxu0 0.0
    %1100 = vmatpush2.msra.mxu0 0.0
    %1101 = vmatprep.subr.mxu0 0.0
    %1102 = vmatpush2.msra.mxu0 0.0
    %1103 = vmatprep.subr.mxu0 0.0
    %1104 = vmatpush2.msra.mxu0 0.0
    %1105 = vmatprep.subr.mxu0 0.0
    %1106 = vmatpush2.msra.mxu0 0.0
    %1107 = vmatprep.subr.mxu0 0.0
    %1108 = vmatpush2.msra.mxu0 0.0
    %1109 = vmatprep.subr.mxu0 0.0
    %1110 = vmatpush2.msra.mxu0 0.0
    %1111 = vmatprep.mubr.f32.mxu0 0.0
    %v1112 = vand.u32 %v1029, 4294901760
    %v1113 = vsub.f32 %v1029, %v1112
    %v1114 = vand.u32 %v1113, 4294901760
    %v1115 = vsub.f32 %v1113, %v1114
    %v1116 = vand.u32 %v1115, 4294901760
    %1117 = vmatmul.mubr.f32.gmra.mxu0 %v1116
    %v1118 = vpop.f32.mrf.mxu0
    %v1119 = vadd.f32 0.0, %v1118
    %v1120 = vpop.f32.mrf.mxu0
    %1121 = vdwg.mxu0
    %1122 = vmatprep.subr.mxu0 0.0
    %1123 = vmatpush1.msra.mxu0 0.0
    %1124 = vmatprep.subr.mxu0 0.0
    %1125 = vmatpush1.msra.mxu0 0.0
    %1126 = vmatprep.subr.mxu0 0.0
    %1127 = vmatpush1.msra.mxu0 0.0
    %1128 = vmatprep.subr.mxu0 0.0
    %1129 = vmatpush1.msra.mxu0 0.0
    %1130 = vmatprep.subr.mxu0 0.0
    %1131 = vmatpush1.msra.mxu0 0.0
    %1132 = vmatprep.subr.mxu0 0.0
    %1133 = vmatpush1.msra.mxu0 0.0
    %1134 = vmatprep.subr.mxu0 0.0
    %1135 = vmatpush1.msra.mxu0 0.0
    %1136 = vmatprep.subr.mxu0 0.0
    %1137 = vmatpush1.msra.mxu0 0.0
    %v1138 = vand.u32 %v1014, 4294901760
    %v1139 = vsub.f32 %v1014, %v1138
    %v1140 = vand.u32 %v1139, 4294901760
    %v1141 = vsub.f32 %v1139, %v1140
    %v1142 = vand.u32 %v1141, 4294901760
    %1143 = vmatprep.subr.mxu0 %v1142
    %v1144 = vand.u32 %v1013, 4294901760
    %v1145 = vsub.f32 %v1013, %v1144
    %v1146 = vand.u32 %v1145, 4294901760
    %v1147 = vsub.f32 %v1145, %v1146
    %v1148 = vand.u32 %v1147, 4294901760
    %1149 = vmatpush1.msra.mxu0 %v1148
    %v1150 = vand.u32 %v1012, 4294901760
    %v1151 = vsub.f32 %v1012, %v1150
    %v1152 = vand.u32 %v1151, 4294901760
    %v1153 = vsub.f32 %v1151, %v1152
    %v1154 = vand.u32 %v1153, 4294901760
    %1155 = vmatprep.subr.mxu0 %v1154
    %v1156 = vand.u32 %v1011, 4294901760
    %v1157 = vsub.f32 %v1011, %v1156
    %v1158 = vand.u32 %v1157, 4294901760
    %v1159 = vsub.f32 %v1157, %v1158
    %v1160 = vand.u32 %v1159, 4294901760
    %1161 = vmatpush1.msra.mxu0 %v1160
    %v1162 = vand.u32 %v1010, 4294901760
    %v1163 = vsub.f32 %v1010, %v1162
    %v1164 = vand.u32 %v1163, 4294901760
    %v1165 = vsub.f32 %v1163, %v1164
    %v1166 = vand.u32 %v1165, 4294901760
    %1167 = vmatprep.subr.mxu0 %v1166
    %v1168 = vand.u32 %v1009, 4294901760
    %v1169 = vsub.f32 %v1009, %v1168
    %v1170 = vand.u32 %v1169, 4294901760
    %v1171 = vsub.f32 %v1169, %v1170
    %v1172 = vand.u32 %v1171, 4294901760
    %1173 = vmatpush1.msra.mxu0 %v1172
    %v1174 = vand.u32 %v1008, 4294901760
    %v1175 = vsub.f32 %v1008, %v1174
    %v1176 = vand.u32 %v1175, 4294901760
    %v1177 = vsub.f32 %v1175, %v1176
    %v1178 = vand.u32 %v1177, 4294901760
    %1179 = vmatprep.subr.mxu0 %v1178
    %v1180 = vand.u32 %v1007, 4294901760
    %v1181 = vsub.f32 %v1007, %v1180
    %v1182 = vand.u32 %v1181, 4294901760
    %v1183 = vsub.f32 %v1181, %v1182
    %v1184 = vand.u32 %v1183, 4294901760
    %1185 = vmatpush1.msra.mxu0 %v1184
    %v1186 = vand.u32 %v1006, 4294901760
    %v1187 = vsub.f32 %v1006, %v1186
    %v1188 = vand.u32 %v1187, 4294901760
    %v1189 = vsub.f32 %v1187, %v1188
    %v1190 = vand.u32 %v1189, 4294901760
    %1191 = vmatprep.subr.mxu0 %v1190
    %v1192 = vand.u32 %v1005, 4294901760
    %v1193 = vsub.f32 %v1005, %v1192
    %v1194 = vand.u32 %v1193, 4294901760
    %v1195 = vsub.f32 %v1193, %v1194
    %v1196 = vand.u32 %v1195, 4294901760
    %1197 = vmatpush1.msra.mxu0 %v1196
    %v1198 = vand.u32 %v1004, 4294901760
    %v1199 = vsub.f32 %v1004, %v1198
    %v1200 = vand.u32 %v1199, 4294901760
    %v1201 = vsub.f32 %v1199, %v1200
    %v1202 = vand.u32 %v1201, 4294901760
    %1203 = vmatprep.subr.mxu0 %v1202
    %v1204 = vand.u32 %v1003, 4294901760
    %v1205 = vsub.f32 %v1003, %v1204
    %v1206 = vand.u32 %v1205, 4294901760
    %v1207 = vsub.f32 %v1205, %v1206
    %v1208 = vand.u32 %v1207, 4294901760
    %1209 = vmatpush1.msra.mxu0 %v1208
    %v1210 = vand.u32 %v1002, 4294901760
    %v1211 = vsub.f32 %v1002, %v1210
    %v1212 = vand.u32 %v1211, 4294901760
    %v1213 = vsub.f32 %v1211, %v1212
    %v1214 = vand.u32 %v1213, 4294901760
    %1215 = vmatprep.subr.mxu0 %v1214
    %v1216 = vand.u32 %v1001, 4294901760
    %v1217 = vsub.f32 %v1001, %v1216
    %v1218 = vand.u32 %v1217, 4294901760
    %v1219 = vsub.f32 %v1217, %v1218
    %v1220 = vand.u32 %v1219, 4294901760
    %1221 = vmatpush1.msra.mxu0 %v1220
    %v1222 = vand.u32 %v1000, 4294901760
    %v1223 = vsub.f32 %v1000, %v1222
    %v1224 = vand.u32 %v1223, 4294901760
    %v1225 = vsub.f32 %v1223, %v1224
    %v1226 = vand.u32 %v1225, 4294901760
    %1227 = vmatprep.subr.mxu0 %v1226
    %v1228 = vand.u32 %v999, 4294901760
    %v1229 = vsub.f32 %v999, %v1228
    %v1230 = vand.u32 %v1229, 4294901760
    %v1231 = vsub.f32 %v1229, %v1230
    %v1232 = vand.u32 %v1231, 4294901760
    %1233 = vmatpush1.msra.mxu0 %v1232
    %1234 = vmatprep.subr.mxu0 0.0
    %1235 = vmatpush2.msra.mxu0 0.0
    %1236 = vmatprep.subr.mxu0 0.0
    %1237 = vmatpush2.msra.mxu0 0.0
    %1238 = vmatprep.subr.mxu0 0.0
    %1239 = vmatpush2.msra.mxu0 0.0
    %1240 = vmatprep.subr.mxu0 0.0
    %1241 = vmatpush2.msra.mxu0 0.0
    %1242 = vmatprep.subr.mxu0 0.0
    %1243 = vmatpush2.msra.mxu0 0.0
    %1244 = vmatprep.subr.mxu0 0.0
    %1245 = vmatpush2.msra.mxu0 0.0
    %1246 = vmatprep.subr.mxu0 0.0
    %1247 = vmatpush2.msra.mxu0 0.0
    %1248 = vmatprep.subr.mxu0 0.0
    %1249 = vmatpush2.msra.mxu0 0.0
    %1250 = vmatprep.subr.mxu0 0.0
    %1251 = vmatpush2.msra.mxu0 0.0
    %1252 = vmatprep.subr.mxu0 0.0
    %1253 = vmatpush2.msra.mxu0 0.0
    %1254 = vmatprep.subr.mxu0 0.0
    %1255 = vmatpush2.msra.mxu0 0.0
    %1256 = vmatprep.subr.mxu0 0.0
    %1257 = vmatpush2.msra.mxu0 0.0
    %1258 = vmatprep.subr.mxu0 0.0
    %1259 = vmatpush2.msra.mxu0 0.0
    %1260 = vmatprep.subr.mxu0 0.0
    %1261 = vmatpush2.msra.mxu0 0.0
    %1262 = vmatprep.subr.mxu0 0.0
    %1263 = vmatpush2.msra.mxu0 0.0
    %1264 = vmatprep.subr.mxu0 0.0
    %1265 = vmatpush2.msra.mxu0 0.0
    %1266 = vmatprep.mubr.f32.mxu0 0.0
    %v1267 = vand.u32 %v1029, 4294901760
    %1268 = vmatmul.mubr.f32.gmra.mxu0 %v1267
    %v1269 = vpop.f32.mrf.mxu0
    %v1270 = vadd.f32 %v1119, %v1269
    %v1271 = vpop.f32.mrf.mxu0
    %1272 = vdwg.mxu0
    %1273 = vmatprep.subr.mxu0 0.0
    %1274 = vmatpush1.msra.mxu0 0.0
    %1275 = vmatprep.subr.mxu0 0.0
    %1276 = vmatpush1.msra.mxu0 0.0
    %1277 = vmatprep.subr.mxu0 0.0
    %1278 = vmatpush1.msra.mxu0 0.0
    %1279 = vmatprep.subr.mxu0 0.0
    %1280 = vmatpush1.msra.mxu0 0.0
    %1281 = vmatprep.subr.mxu0 0.0
    %1282 = vmatpush1.msra.mxu0 0.0
    %1283 = vmatprep.subr.mxu0 0.0
    %1284 = vmatpush1.msra.mxu0 0.0
    %1285 = vmatprep.subr.mxu0 0.0
    %1286 = vmatpush1.msra.mxu0 0.0
    %1287 = vmatprep.subr.mxu0 0.0
    %1288 = vmatpush1.msra.mxu0 0.0
    %v1289 = vand.u32 %v1014, 4294901760
    %v1290 = vsub.f32 %v1014, %v1289
    %1291 = vmatprep.subr.mxu0 %v1290
    %v1292 = vand.u32 %v1013, 4294901760
    %v1293 = vsub.f32 %v1013, %v1292
    %1294 = vmatpush1.msra.mxu0 %v1293
    %v1295 = vand.u32 %v1012, 4294901760
    %v1296 = vsub.f32 %v1012, %v1295
    %1297 = vmatprep.subr.mxu0 %v1296
    %v1298 = vand.u32 %v1011, 4294901760
    %v1299 = vsub.f32 %v1011, %v1298
    %1300 = vmatpush1.msra.mxu0 %v1299
    %v1301 = vand.u32 %v1010, 4294901760
    %v1302 = vsub.f32 %v1010, %v1301
    %1303 = vmatprep.subr.mxu0 %v1302
    %v1304 = vand.u32 %v1009, 4294901760
    %v1305 = vsub.f32 %v1009, %v1304
    %1306 = vmatpush1.msra.mxu0 %v1305
    %v1307 = vand.u32 %v1008, 4294901760
    %v1308 = vsub.f32 %v1008, %v1307
    %1309 = vmatprep.subr.mxu0 %v1308
    %v1310 = vand.u32 %v1007, 4294901760
    %v1311 = vsub.f32 %v1007, %v1310
    %1312 = vmatpush1.msra.mxu0 %v1311
    %v1313 = vand.u32 %v1006, 4294901760
    %v1314 = vsub.f32 %v1006, %v1313
    %1315 = vmatprep.subr.mxu0 %v1314
    %v1316 = vand.u32 %v1005, 4294901760
    %v1317 = vsub.f32 %v1005, %v1316
    %1318 = vmatpush1.msra.mxu0 %v1317
    %v1319 = vand.u32 %v1004, 4294901760
    %v1320 = vsub.f32 %v1004, %v1319
    %1321 = vmatprep.subr.mxu0 %v1320
    %v1322 = vand.u32 %v1003, 4294901760
    %v1323 = vsub.f32 %v1003, %v1322
    %1324 = vmatpush1.msra.mxu0 %v1323
    %v1325 = vand.u32 %v1002, 4294901760
    %v1326 = vsub.f32 %v1002, %v1325
    %1327 = vmatprep.subr.mxu0 %v1326
    %v1328 = vand.u32 %v1001, 4294901760
    %v1329 = vsub.f32 %v1001, %v1328
    %1330 = vmatpush1.msra.mxu0 %v1329
    %v1331 = vand.u32 %v1000, 4294901760
    %v1332 = vsub.f32 %v1000, %v1331
    %1333 = vmatprep.subr.mxu0 %v1332
    %v1334 = vand.u32 %v999, 4294901760
    %v1335 = vsub.f32 %v999, %v1334
    %1336 = vmatpush1.msra.mxu0 %v1335
    %1337 = vmatprep.subr.mxu0 0.0
    %1338 = vmatpush2.msra.mxu0 0.0
    %1339 = vmatprep.subr.mxu0 0.0
    %1340 = vmatpush2.msra.mxu0 0.0
    %1341 = vmatprep.subr.mxu0 0.0
    %1342 = vmatpush2.msra.mxu0 0.0
    %1343 = vmatprep.subr.mxu0 0.0
    %1344 = vmatpush2.msra.mxu0 0.0
    %1345 = vmatprep.subr.mxu0 0.0
    %1346 = vmatpush2.msra.mxu0 0.0
    %1347 = vmatprep.subr.mxu0 0.0
    %1348 = vmatpush2.msra.mxu0 0.0
    %1349 = vmatprep.subr.mxu0 0.0
    %1350 = vmatpush2.msra.mxu0 0.0
    %1351 = vmatprep.subr.mxu0 0.0
    %1352 = vmatpush2.msra.mxu0 0.0
    %1353 = vmatprep.subr.mxu0 0.0
    %1354 = vmatpush2.msra.mxu0 0.0
    %1355 = vmatprep.subr.mxu0 0.0
    %1356 = vmatpush2.msra.mxu0 0.0
    %1357 = vmatprep.subr.mxu0 0.0
    %1358 = vmatpush2.msra.mxu0 0.0
    %1359 = vmatprep.subr.mxu0 0.0
    %1360 = vmatpush2.msra.mxu0 0.0
    %1361 = vmatprep.subr.mxu0 0.0
    %1362 = vmatpush2.msra.mxu0 0.0
    %1363 = vmatprep.subr.mxu0 0.0
    %1364 = vmatpush2.msra.mxu0 0.0
    %1365 = vmatprep.subr.mxu0 0.0
    %1366 = vmatpush2.msra.mxu0 0.0
    %1367 = vmatprep.subr.mxu0 0.0
    %1368 = vmatpush2.msra.mxu0 0.0
    %1369 = vmatprep.mubr.f32.mxu0 0.0
    %v1370 = vand.u32 %v1029, 4294901760
    %v1371 = vsub.f32 %v1029, %v1370
    %1372 = vmatmul.mubr.f32.gmra.mxu0 %v1371
    %v1373 = vpop.f32.mrf.mxu0
    %v1374 = vadd.f32 %v1270, %v1373
    %v1375 = vpop.f32.mrf.mxu0
    %1376 = vdwg.mxu0
    %1377 = vmatprep.subr.mxu0 0.0
    %1378 = vmatpush1.msra.mxu0 0.0
    %1379 = vmatprep.subr.mxu0 0.0
    %1380 = vmatpush1.msra.mxu0 0.0
    %1381 = vmatprep.subr.mxu0 0.0
    %1382 = vmatpush1.msra.mxu0 0.0
    %1383 = vmatprep.subr.mxu0 0.0
    %1384 = vmatpush1.msra.mxu0 0.0
    %1385 = vmatprep.subr.mxu0 0.0
    %1386 = vmatpush1.msra.mxu0 0.0
    %1387 = vmatprep.subr.mxu0 0.0
    %1388 = vmatpush1.msra.mxu0 0.0
    %1389 = vmatprep.subr.mxu0 0.0
    %1390 = vmatpush1.msra.mxu0 0.0
    %1391 = vmatprep.subr.mxu0 0.0
    %1392 = vmatpush1.msra.mxu0 0.0
    %v1393 = vand.u32 %v1014, 4294901760
    %1394 = vmatprep.subr.mxu0 %v1393
    %v1395 = vand.u32 %v1013, 4294901760
    %1396 = vmatpush1.msra.mxu0 %v1395
    %v1397 = vand.u32 %v1012, 4294901760
    %1398 = vmatprep.subr.mxu0 %v1397
    %v1399 = vand.u32 %v1011, 4294901760
    %1400 = vmatpush1.msra.mxu0 %v1399
    %v1401 = vand.u32 %v1010, 4294901760
    %1402 = vmatprep.subr.mxu0 %v1401
    %v1403 = vand.u32 %v1009, 4294901760
    %1404 = vmatpush1.msra.mxu0 %v1403
    %v1405 = vand.u32 %v1008, 4294901760
    %1406 = vmatprep.subr.mxu0 %v1405
    %v1407 = vand.u32 %v1007, 4294901760
    %1408 = vmatpush1.msra.mxu0 %v1407
    %v1409 = vand.u32 %v1006, 4294901760
    %1410 = vmatprep.subr.mxu0 %v1409
    %v1411 = vand.u32 %v1005, 4294901760
    %1412 = vmatpush1.msra.mxu0 %v1411
    %v1413 = vand.u32 %v1004, 4294901760
    %1414 = vmatprep.subr.mxu0 %v1413
    %v1415 = vand.u32 %v1003, 4294901760
    %1416 = vmatpush1.msra.mxu0 %v1415
    %v1417 = vand.u32 %v1002, 4294901760
    %1418 = vmatprep.subr.mxu0 %v1417
    %v1419 = vand.u32 %v1001, 4294901760
    %1420 = vmatpush1.msra.mxu0 %v1419
    %v1421 = vand.u32 %v1000, 4294901760
    %1422 = vmatprep.subr.mxu0 %v1421
    %v1423 = vand.u32 %v999, 4294901760
    %1424 = vmatpush1.msra.mxu0 %v1423
    %1425 = vmatprep.subr.mxu0 0.0
    %1426 = vmatpush2.msra.mxu0 0.0
    %1427 = vmatprep.subr.mxu0 0.0
    %1428 = vmatpush2.msra.mxu0 0.0
    %1429 = vmatprep.subr.mxu0 0.0
    %1430 = vmatpush2.msra.mxu0 0.0
    %1431 = vmatprep.subr.mxu0 0.0
    %1432 = vmatpush2.msra.mxu0 0.0
    %1433 = vmatprep.subr.mxu0 0.0
    %1434 = vmatpush2.msra.mxu0 0.0
    %1435 = vmatprep.subr.mxu0 0.0
    %1436 = vmatpush2.msra.mxu0 0.0
    %1437 = vmatprep.subr.mxu0 0.0
    %1438 = vmatpush2.msra.mxu0 0.0
    %1439 = vmatprep.subr.mxu0 0.0
    %1440 = vmatpush2.msra.mxu0 0.0
    %1441 = vmatprep.subr.mxu0 0.0
    %1442 = vmatpush2.msra.mxu0 0.0
    %1443 = vmatprep.subr.mxu0 0.0
    %1444 = vmatpush2.msra.mxu0 0.0
    %1445 = vmatprep.subr.mxu0 0.0
    %1446 = vmatpush2.msra.mxu0 0.0
    %1447 = vmatprep.subr.mxu0 0.0
    %1448 = vmatpush2.msra.mxu0 0.0
    %1449 = vmatprep.subr.mxu0 0.0
    %1450 = vmatpush2.msra.mxu0 0.0
    %1451 = vmatprep.subr.mxu0 0.0
    %1452 = vmatpush2.msra.mxu0 0.0
    %1453 = vmatprep.subr.mxu0 0.0
    %1454 = vmatpush2.msra.mxu0 0.0
    %1455 = vmatprep.subr.mxu0 0.0
    %1456 = vmatpush2.msra.mxu0 0.0
    %1457 = vmatprep.mubr.f32.mxu0 0.0
    %v1458 = vand.u32 %v1029, 4294901760
    %v1459 = vsub.f32 %v1029, %v1458
    %v1460 = vand.u32 %v1459, 4294901760
    %1461 = vmatmul.mubr.f32.gmra.mxu0 %v1460
    %v1462 = vpop.f32.mrf.mxu0
    %v1463 = vadd.f32 %v1374, %v1462
    %v1464 = vpop.f32.mrf.mxu0
    %1465 = vdwg.mxu0
    %1466 = vmatprep.subr.mxu0 0.0
    %1467 = vmatpush1.msra.mxu0 0.0
    %1468 = vmatprep.subr.mxu0 0.0
    %1469 = vmatpush1.msra.mxu0 0.0
    %1470 = vmatprep.subr.mxu0 0.0
    %1471 = vmatpush1.msra.mxu0 0.0
    %1472 = vmatprep.subr.mxu0 0.0
    %1473 = vmatpush1.msra.mxu0 0.0
    %1474 = vmatprep.subr.mxu0 0.0
    %1475 = vmatpush1.msra.mxu0 0.0
    %1476 = vmatprep.subr.mxu0 0.0
    %1477 = vmatpush1.msra.mxu0 0.0
    %1478 = vmatprep.subr.mxu0 0.0
    %1479 = vmatpush1.msra.mxu0 0.0
    %1480 = vmatprep.subr.mxu0 0.0
    %1481 = vmatpush1.msra.mxu0 0.0
    %v1482 = vand.u32 %v1014, 4294901760
    %v1483 = vsub.f32 %v1014, %v1482
    %v1484 = vand.u32 %v1483, 4294901760
    %1485 = vmatprep.subr.mxu0 %v1484
    %v1486 = vand.u32 %v1013, 4294901760
    %v1487 = vsub.f32 %v1013, %v1486
    %v1488 = vand.u32 %v1487, 4294901760
    %1489 = vmatpush1.msra.mxu0 %v1488
    %v1490 = vand.u32 %v1012, 4294901760
    %v1491 = vsub.f32 %v1012, %v1490
    %v1492 = vand.u32 %v1491, 4294901760
    %1493 = vmatprep.subr.mxu0 %v1492
    %v1494 = vand.u32 %v1011, 4294901760
    %v1495 = vsub.f32 %v1011, %v1494
    %v1496 = vand.u32 %v1495, 4294901760
    %1497 = vmatpush1.msra.mxu0 %v1496
    %v1498 = vand.u32 %v1010, 4294901760
    %v1499 = vsub.f32 %v1010, %v1498
    %v1500 = vand.u32 %v1499, 4294901760
    %1501 = vmatprep.subr.mxu0 %v1500
    %v1502 = vand.u32 %v1009, 4294901760
    %v1503 = vsub.f32 %v1009, %v1502
    %v1504 = vand.u32 %v1503, 4294901760
    %1505 = vmatpush1.msra.mxu0 %v1504
    %v1506 = vand.u32 %v1008, 4294901760
    %v1507 = vsub.f32 %v1008, %v1506
    %v1508 = vand.u32 %v1507, 4294901760
    %1509 = vmatprep.subr.mxu0 %v1508
    %v1510 = vand.u32 %v1007, 4294901760
    %v1511 = vsub.f32 %v1007, %v1510
    %v1512 = vand.u32 %v1511, 4294901760
    %1513 = vmatpush1.msra.mxu0 %v1512
    %v1514 = vand.u32 %v1006, 4294901760
    %v1515 = vsub.f32 %v1006, %v1514
    %v1516 = vand.u32 %v1515, 4294901760
    %1517 = vmatprep.subr.mxu0 %v1516
    %v1518 = vand.u32 %v1005, 4294901760
    %v1519 = vsub.f32 %v1005, %v1518
    %v1520 = vand.u32 %v1519, 4294901760
    %1521 = vmatpush1.msra.mxu0 %v1520
    %v1522 = vand.u32 %v1004, 4294901760
    %v1523 = vsub.f32 %v1004, %v1522
    %v1524 = vand.u32 %v1523, 4294901760
    %1525 = vmatprep.subr.mxu0 %v1524
    %v1526 = vand.u32 %v1003, 4294901760
    %v1527 = vsub.f32 %v1003, %v1526
    %v1528 = vand.u32 %v1527, 4294901760
    %1529 = vmatpush1.msra.mxu0 %v1528
    %v1530 = vand.u32 %v1002, 4294901760
    %v1531 = vsub.f32 %v1002, %v1530
    %v1532 = vand.u32 %v1531, 4294901760
    %1533 = vmatprep.subr.mxu0 %v1532
    %v1534 = vand.u32 %v1001, 4294901760
    %v1535 = vsub.f32 %v1001, %v1534
    %v1536 = vand.u32 %v1535, 4294901760
    %1537 = vmatpush1.msra.mxu0 %v1536
    %v1538 = vand.u32 %v1000, 4294901760
    %v1539 = vsub.f32 %v1000, %v1538
    %v1540 = vand.u32 %v1539, 4294901760
    %1541 = vmatprep.subr.mxu0 %v1540
    %v1542 = vand.u32 %v999, 4294901760
    %v1543 = vsub.f32 %v999, %v1542
    %v1544 = vand.u32 %v1543, 4294901760
    %1545 = vmatpush1.msra.mxu0 %v1544
    %1546 = vmatprep.subr.mxu0 0.0
    %1547 = vmatpush2.msra.mxu0 0.0
    %1548 = vmatprep.subr.mxu0 0.0
    %1549 = vmatpush2.msra.mxu0 0.0
    %1550 = vmatprep.subr.mxu0 0.0
    %1551 = vmatpush2.msra.mxu0 0.0
    %1552 = vmatprep.subr.mxu0 0.0
    %1553 = vmatpush2.msra.mxu0 0.0
    %1554 = vmatprep.subr.mxu0 0.0
    %1555 = vmatpush2.msra.mxu0 0.0
    %1556 = vmatprep.subr.mxu0 0.0
    %1557 = vmatpush2.msra.mxu0 0.0
    %1558 = vmatprep.subr.mxu0 0.0
    %1559 = vmatpush2.msra.mxu0 0.0
    %1560 = vmatprep.subr.mxu0 0.0
    %1561 = vmatpush2.msra.mxu0 0.0
    %1562 = vmatprep.subr.mxu0 0.0
    %1563 = vmatpush2.msra.mxu0 0.0
    %1564 = vmatprep.subr.mxu0 0.0
    %1565 = vmatpush2.msra.mxu0 0.0
    %1566 = vmatprep.subr.mxu0 0.0
    %1567 = vmatpush2.msra.mxu0 0.0
    %1568 = vmatprep.subr.mxu0 0.0
    %1569 = vmatpush2.msra.mxu0 0.0
    %1570 = vmatprep.subr.mxu0 0.0
    %1571 = vmatpush2.msra.mxu0 0.0
    %1572 = vmatprep.subr.mxu0 0.0
    %1573 = vmatpush2.msra.mxu0 0.0
    %1574 = vmatprep.subr.mxu0 0.0
    %1575 = vmatpush2.msra.mxu0 0.0
    %1576 = vmatprep.subr.mxu0 0.0
    %1577 = vmatpush2.msra.mxu0 0.0
    %1578 = vmatprep.mubr.f32.mxu0 0.0
    %v1579 = vand.u32 %v1029, 4294901760
    %1580 = vmatmul.mubr.f32.gmra.mxu0 %v1579
    %v1581 = vpop.f32.mrf.mxu0
    %v1582 = vadd.f32 %v1463, %v1581
    %v1583 = vpop.f32.mrf.mxu0
    %1584 = vdwg.mxu0
    %1585 = vmatprep.subr.mxu0 0.0
    %1586 = vmatpush1.msra.mxu0 0.0
    %1587 = vmatprep.subr.mxu0 0.0
    %1588 = vmatpush1.msra.mxu0 0.0
    %1589 = vmatprep.subr.mxu0 0.0
    %1590 = vmatpush1.msra.mxu0 0.0
    %1591 = vmatprep.subr.mxu0 0.0
    %1592 = vmatpush1.msra.mxu0 0.0
    %1593 = vmatprep.subr.mxu0 0.0
    %1594 = vmatpush1.msra.mxu0 0.0
    %1595 = vmatprep.subr.mxu0 0.0
    %1596 = vmatpush1.msra.mxu0 0.0
    %1597 = vmatprep.subr.mxu0 0.0
    %1598 = vmatpush1.msra.mxu0 0.0
    %1599 = vmatprep.subr.mxu0 0.0
    %1600 = vmatpush1.msra.mxu0 0.0
    %v1601 = vand.u32 %v1014, 4294901760
    %1602 = vmatprep.subr.mxu0 %v1601
    %v1603 = vand.u32 %v1013, 4294901760
    %1604 = vmatpush1.msra.mxu0 %v1603
    %v1605 = vand.u32 %v1012, 4294901760
    %1606 = vmatprep.subr.mxu0 %v1605
    %v1607 = vand.u32 %v1011, 4294901760
    %1608 = vmatpush1.msra.mxu0 %v1607
    %v1609 = vand.u32 %v1010, 4294901760
    %1610 = vmatprep.subr.mxu0 %v1609
    %v1611 = vand.u32 %v1009, 4294901760
    %1612 = vmatpush1.msra.mxu0 %v1611
    %v1613 = vand.u32 %v1008, 4294901760
    %1614 = vmatprep.subr.mxu0 %v1613
    %v1615 = vand.u32 %v1007, 4294901760
    %1616 = vmatpush1.msra.mxu0 %v1615
    %v1617 = vand.u32 %v1006, 4294901760
    %1618 = vmatprep.subr.mxu0 %v1617
    %v1619 = vand.u32 %v1005, 4294901760
    %1620 = vmatpush1.msra.mxu0 %v1619
    %v1621 = vand.u32 %v1004, 4294901760
    %1622 = vmatprep.subr.mxu0 %v1621
    %v1623 = vand.u32 %v1003, 4294901760
    %1624 = vmatpush1.msra.mxu0 %v1623
    %v1625 = vand.u32 %v1002, 4294901760
    %1626 = vmatprep.subr.mxu0 %v1625
    %v1627 = vand.u32 %v1001, 4294901760
    %1628 = vmatpush1.msra.mxu0 %v1627
    %v1629 = vand.u32 %v1000, 4294901760
    %1630 = vmatprep.subr.mxu0 %v1629
    %v1631 = vand.u32 %v999, 4294901760
    %1632 = vmatpush1.msra.mxu0 %v1631
    %1633 = vmatprep.subr.mxu0 0.0
    %1634 = vmatpush2.msra.mxu0 0.0
    %1635 = vmatprep.subr.mxu0 0.0
    %1636 = vmatpush2.msra.mxu0 0.0
    %1637 = vmatprep.subr.mxu0 0.0
    %1638 = vmatpush2.msra.mxu0 0.0
    %1639 = vmatprep.subr.mxu0 0.0
    %1640 = vmatpush2.msra.mxu0 0.0
    %1641 = vmatprep.subr.mxu0 0.0
    %1642 = vmatpush2.msra.mxu0 0.0
    %1643 = vmatprep.subr.mxu0 0.0
    %1644 = vmatpush2.msra.mxu0 0.0
    %1645 = vmatprep.subr.mxu0 0.0
    %1646 = vmatpush2.msra.mxu0 0.0
    %1647 = vmatprep.subr.mxu0 0.0
    %1648 = vmatpush2.msra.mxu0 0.0
    %1649 = vmatprep.subr.mxu0 0.0
    %1650 = vmatpush2.msra.mxu0 0.0
    %1651 = vmatprep.subr.mxu0 0.0
    %1652 = vmatpush2.msra.mxu0 0.0
    %1653 = vmatprep.subr.mxu0 0.0
    %1654 = vmatpush2.msra.mxu0 0.0
    %1655 = vmatprep.subr.mxu0 0.0
    %1656 = vmatpush2.msra.mxu0 0.0
    %1657 = vmatprep.subr.mxu0 0.0
    %1658 = vmatpush2.msra.mxu0 0.0
    %1659 = vmatprep.subr.mxu0 0.0
    %1660 = vmatpush2.msra.mxu0 0.0
    %1661 = vmatprep.subr.mxu0 0.0
    %1662 = vmatpush2.msra.mxu0 0.0
    %1663 = vmatprep.subr.mxu0 0.0
    %1664 = vmatpush2.msra.mxu0 0.0
    %1665 = vmatprep.mubr.f32.mxu0 0.0
    %v1666 = vand.u32 %v1029, 4294901760
    %1667 = vmatmul.mubr.f32.gmra.mxu0 %v1666
    %v1668 = vpop.f32.mrf.mxu0
    %v1669 = vadd.f32 %v1582, %v1668
    %v1670 = vpop.f32.mrf.mxu0
    %1671 = vdwg.mxu0
    %v1672 = vadd.f32 %v954, %v1669
    %v1673 = vxor.u32 %v1672, 2147483648
    %v1674 = vmul.f32 %v1673, 1.442695
    %v1675 = vpow.pop %v1674
    %v1676 = vadd.f32 %v1675, 1.0
    %v1677 = vrcp.pop %v1676
    %v1678 = vmul.f32 1.0, %v1677
    %v1679 = vmul.f32 %v1678, 2.0
    %v1680 = vsub.f32 %v1679, 1.0
    %1682 = vrot.lane.b32.xlu0 %v1017, 32
    %v1683 = vpop.permute.xlu0 %1682
    %v1685 = vmul.f32 %v1678, %v1683
    %1687 = vrot.lane.b32.xlu0 %v1680, 64
    %v1688 = vpop.permute.xlu0 %1687
    %v1690 = vmul.f32 %v1678, %v1688
    %1692 = vrot.lane.b32.xlu0 %v1690, 32
    %v1693 = vpop.permute.xlu0 %1692
    %v1695 = vadd.f32 %v1685, %v1693
    %v1696 = vtanh.pop %v1695
    %1698 = vrot.lane.b32.xlu0 %v1696, 64
    %v1699 = vpop.permute.xlu0 %1698
    %v1701 = vmul.f32 %v1678, %v1699
    %1703 = vrot.lane.b32.xlu0 %v1701, 32
    %v1704 = vpop.permute.xlu0 %1703
    %v1706 = vsel %vm1026, %v1704, %v1024
    %v1708 = vsel %vm136, %v1706, 0
    %1710 = vmatprep.subr.mxu0 0.0
    %1711 = vmatpush1.msra.mxu0 0.0
    %1712 = vmatprep.subr.mxu0 0.0
    %1713 = vmatpush1.msra.mxu0 0.0
    %1714 = vmatprep.subr.mxu0 0.0
    %1715 = vmatpush1.msra.mxu0 0.0
    %1716 = vmatprep.subr.mxu0 0.0
    %1717 = vmatpush1.msra.mxu0 0.0
    %1718 = vmatprep.subr.mxu0 0.0
    %1719 = vmatpush1.msra.mxu0 0.0
    %1720 = vmatprep.subr.mxu0 0.0
    %1721 = vmatpush1.msra.mxu0 0.0
    %1722 = vmatprep.subr.mxu0 0.0
    %1723 = vmatpush1.msra.mxu0 0.0
    %1724 = vmatprep.subr.mxu0 0.0
    %1725 = vmatpush1.msra.mxu0 0.0
    %v1726 = vand.u32 %v1014, 4294901760
    %1727 = vmatprep.subr.mxu0 %v1726
    %v1728 = vand.u32 %v1013, 4294901760
    %1729 = vmatpush1.msra.mxu0 %v1728
    %v1730 = vand.u32 %v1012, 4294901760
    %1731 = vmatprep.subr.mxu0 %v1730
    %v1732 = vand.u32 %v1011, 4294901760
    %1733 = vmatpush1.msra.mxu0 %v1732
    %v1734 = vand.u32 %v1010, 4294901760
    %1735 = vmatprep.subr.mxu0 %v1734
    %v1736 = vand.u32 %v1009, 4294901760
    %1737 = vmatpush1.msra.mxu0 %v1736
    %v1738 = vand.u32 %v1008, 4294901760
    %1739 = vmatprep.subr.mxu0 %v1738
    %v1740 = vand.u32 %v1007, 4294901760
    %1741 = vmatpush1.msra.mxu0 %v1740
    %v1742 = vand.u32 %v1006, 4294901760
    %1743 = vmatprep.subr.mxu0 %v1742
    %v1744 = vand.u32 %v1005, 4294901760
    %1745 = vmatpush1.msra.mxu0 %v1744
    %v1746 = vand.u32 %v1004, 4294901760
    %1747 = vmatprep.subr.mxu0 %v1746
    %v1748 = vand.u32 %v1003, 4294901760
    %1749 = vmatpush1.msra.mxu0 %v1748
    %v1750 = vand.u32 %v1002, 4294901760
    %1751 = vmatprep.subr.mxu0 %v1750
    %v1752 = vand.u32 %v1001, 4294901760
    %1753 = vmatpush1.msra.mxu0 %v1752
    %v1754 = vand.u32 %v1000, 4294901760
    %1755 = vmatprep.subr.mxu0 %v1754
    %v1756 = vand.u32 %v999, 4294901760
    %1757 = vmatpush1.msra.mxu0 %v1756
    %1758 = vmatprep.subr.mxu0 0.0
    %1759 = vmatpush2.msra.mxu0 0.0
    %1760 = vmatprep.subr.mxu0 0.0
    %1761 = vmatpush2.msra.mxu0 0.0
    %1762 = vmatprep.subr.mxu0 0.0
    %1763 = vmatpush2.msra.mxu0 0.0
    %1764 = vmatprep.subr.mxu0 0.0
    %1765 = vmatpush2.msra.mxu0 0.0
    %1766 = vmatprep.subr.mxu0 0.0
    %1767 = vmatpush2.msra.mxu0 0.0
    %1768 = vmatprep.subr.mxu0 0.0
    %1769 = vmatpush2.msra.mxu0 0.0
    %1770 = vmatprep.subr.mxu0 0.0
    %1771 = vmatpush2.msra.mxu0 0.0
    %1772 = vmatprep.subr.mxu0 0.0
    %1773 = vmatpush2.msra.mxu0 0.0
    %1774 = vmatprep.subr.mxu0 0.0
    %1775 = vmatpush2.msra.mxu0 0.0
    %1776 = vmatprep.subr.mxu0 0.0
    %1777 = vmatpush2.msra.mxu0 0.0
    %1778 = vmatprep.subr.mxu0 0.0
    %1779 = vmatpush2.msra.mxu0 0.0
    %1780 = vmatprep.subr.mxu0 0.0
    %1781 = vmatpush2.msra.mxu0 0.0
    %1782 = vmatprep.subr.mxu0 0.0
    %1783 = vmatpush2.msra.mxu0 0.0
    %1784 = vmatprep.subr.mxu0 0.0
    %1785 = vmatpush2.msra.mxu0 0.0
    %1786 = vmatprep.subr.mxu0 0.0
    %1787 = vmatpush2.msra.mxu0 0.0
    %1788 = vmatprep.subr.mxu0 0.0
    %1789 = vmatpush2.msra.mxu0 0.0
    %1790 = vmatprep.mubr.f32.mxu0 0.0
    %v1791 = vand.u32 %v1708, 4294901760
    %v1792 = vsub.f32 %v1708, %v1791
    %v1793 = vand.u32 %v1792, 4294901760
    %v1794 = vsub.f32 %v1792, %v1793
    %v1795 = vand.u32 %v1794, 4294901760
    %1796 = vmatmul.mubr.f32.gmra.mxu0 %v1795
    %v1797 = vpop.f32.mrf.mxu0
    %v1798 = vadd.f32 0.0, %v1797
    %v1799 = vpop.f32.mrf.mxu0
    %v1800 = vadd.f32 0.0, %v1799
    %1801 = vdwg.mxu0
    %1802 = vmatprep.subr.mxu0 0.0
    %1803 = vmatpush1.msra.mxu0 0.0
    %1804 = vmatprep.subr.mxu0 0.0
    %1805 = vmatpush1.msra.mxu0 0.0
    %1806 = vmatprep.subr.mxu0 0.0
    %1807 = vmatpush1.msra.mxu0 0.0
    %1808 = vmatprep.subr.mxu0 0.0
    %1809 = vmatpush1.msra.mxu0 0.0
    %1810 = vmatprep.subr.mxu0 0.0
    %1811 = vmatpush1.msra.mxu0 0.0
    %1812 = vmatprep.subr.mxu0 0.0
    %1813 = vmatpush1.msra.mxu0 0.0
    %1814 = vmatprep.subr.mxu0 0.0
    %1815 = vmatpush1.msra.mxu0 0.0
    %1816 = vmatprep.subr.mxu0 0.0
    %1817 = vmatpush1.msra.mxu0 0.0
    %v1818 = vand.u32 %v1014, 4294901760
    %v1819 = vsub.f32 %v1014, %v1818
    %v1820 = vand.u32 %v1819, 4294901760
    %v1821 = vsub.f32 %v1819, %v1820
    %v1822 = vand.u32 %v1821, 4294901760
    %1823 = vmatprep.subr.mxu0 %v1822
    %v1824 = vand.u32 %v1013, 4294901760
    %v1825 = vsub.f32 %v1013, %v1824
    %v1826 = vand.u32 %v1825, 4294901760
    %v1827 = vsub.f32 %v1825, %v1826
    %v1828 = vand.u32 %v1827, 4294901760
    %1829 = vmatpush1.msra.mxu0 %v1828
    %v1830 = vand.u32 %v1012, 4294901760
    %v1831 = vsub.f32 %v1012, %v1830
    %v1832 = vand.u32 %v1831, 4294901760
    %v1833 = vsub.f32 %v1831, %v1832
    %v1834 = vand.u32 %v1833, 4294901760
    %1835 = vmatprep.subr.mxu0 %v1834
    %v1836 = vand.u32 %v1011, 4294901760
    %v1837 = vsub.f32 %v1011, %v1836
    %v1838 = vand.u32 %v1837, 4294901760
    %v1839 = vsub.f32 %v1837, %v1838
    %v1840 = vand.u32 %v1839, 4294901760
    %1841 = vmatpush1.msra.mxu0 %v1840
    %v1842 = vand.u32 %v1010, 4294901760
    %v1843 = vsub.f32 %v1010, %v1842
    %v1844 = vand.u32 %v1843, 4294901760
    %v1845 = vsub.f32 %v1843, %v1844
    %v1846 = vand.u32 %v1845, 4294901760
    %1847 = vmatprep.subr.mxu0 %v1846
    %v1848 = vand.u32 %v1009, 4294901760
    %v1849 = vsub.f32 %v1009, %v1848
    %v1850 = vand.u32 %v1849, 4294901760
    %v1851 = vsub.f32 %v1849, %v1850
    %v1852 = vand.u32 %v1851, 4294901760
    %1853 = vmatpush1.msra.mxu0 %v1852
    %v1854 = vand.u32 %v1008, 4294901760
    %v1855 = vsub.f32 %v1008, %v1854
    %v1856 = vand.u32 %v1855, 4294901760
    %v1857 = vsub.f32 %v1855, %v1856
    %v1858 = vand.u32 %v1857, 4294901760
    %1859 = vmatprep.subr.mxu0 %v1858
    %v1860 = vand.u32 %v1007, 4294901760
    %v1861 = vsub.f32 %v1007, %v1860
    %v1862 = vand.u32 %v1861, 4294901760
    %v1863 = vsub.f32 %v1861, %v1862
    %v1864 = vand.u32 %v1863, 4294901760
    %1865 = vmatpush1.msra.mxu0 %v1864
    %v1866 = vand.u32 %v1006, 4294901760
    %v1867 = vsub.f32 %v1006, %v1866
    %v1868 = vand.u32 %v1867, 4294901760
    %v1869 = vsub.f32 %v1867, %v1868
    %v1870 = vand.u32 %v1869, 4294901760
    %1871 = vmatprep.subr.mxu0 %v1870
    %v1872 = vand.u32 %v1005, 4294901760
    %v1873 = vsub.f32 %v1005, %v1872
    %v1874 = vand.u32 %v1873, 4294901760
    %v1875 = vsub.f32 %v1873, %v1874
    %v1876 = vand.u32 %v1875, 4294901760
    %1877 = vmatpush1.msra.mxu0 %v1876
    %v1878 = vand.u32 %v1004, 4294901760
    %v1879 = vsub.f32 %v1004, %v1878
    %v1880 = vand.u32 %v1879, 4294901760
    %v1881 = vsub.f32 %v1879, %v1880
    %v1882 = vand.u32 %v1881, 4294901760
    %1883 = vmatprep.subr.mxu0 %v1882
    %v1884 = vand.u32 %v1003, 4294901760
    %v1885 = vsub.f32 %v1003, %v1884
    %v1886 = vand.u32 %v1885, 4294901760
    %v1887 = vsub.f32 %v1885, %v1886
    %v1888 = vand.u32 %v1887, 4294901760
    %1889 = vmatpush1.msra.mxu0 %v1888
    %v1890 = vand.u32 %v1002, 4294901760
    %v1891 = vsub.f32 %v1002, %v1890
    %v1892 = vand.u32 %v1891, 4294901760
    %v1893 = vsub.f32 %v1891, %v1892
    %v1894 = vand.u32 %v1893, 4294901760
    %1895 = vmatprep.subr.mxu0 %v1894
    %v1896 = vand.u32 %v1001, 4294901760
    %v1897 = vsub.f32 %v1001, %v1896
    %v1898 = vand.u32 %v1897, 4294901760
    %v1899 = vsub.f32 %v1897, %v1898
    %v1900 = vand.u32 %v1899, 4294901760
    %1901 = vmatpush1.msra.mxu0 %v1900
    %v1902 = vand.u32 %v1000, 4294901760
    %v1903 = vsub.f32 %v1000, %v1902
    %v1904 = vand.u32 %v1903, 4294901760
    %v1905 = vsub.f32 %v1903, %v1904
    %v1906 = vand.u32 %v1905, 4294901760
    %1907 = vmatprep.subr.mxu0 %v1906
    %v1908 = vand.u32 %v999, 4294901760
    %v1909 = vsub.f32 %v999, %v1908
    %v1910 = vand.u32 %v1909, 4294901760
    %v1911 = vsub.f32 %v1909, %v1910
    %v1912 = vand.u32 %v1911, 4294901760
    %1913 = vmatpush1.msra.mxu0 %v1912
    %1914 = vmatprep.subr.mxu0 0.0
    %1915 = vmatpush2.msra.mxu0 0.0
    %1916 = vmatprep.subr.mxu0 0.0
    %1917 = vmatpush2.msra.mxu0 0.0
    %1918 = vmatprep.subr.mxu0 0.0
    %1919 = vmatpush2.msra.mxu0 0.0
    %1920 = vmatprep.subr.mxu0 0.0
    %1921 = vmatpush2.msra.mxu0 0.0
    %1922 = vmatprep.subr.mxu0 0.0
    %1923 = vmatpush2.msra.mxu0 0.0
    %1924 = vmatprep.subr.mxu0 0.0
    %1925 = vmatpush2.msra.mxu0 0.0
    %1926 = vmatprep.subr.mxu0 0.0
    %1927 = vmatpush2.msra.mxu0 0.0
    %1928 = vmatprep.subr.mxu0 0.0
    %1929 = vmatpush2.msra.mxu0 0.0
    %1930 = vmatprep.subr.mxu0 0.0
    %1931 = vmatpush2.msra.mxu0 0.0
    %1932 = vmatprep.subr.mxu0 0.0
    %1933 = vmatpush2.msra.mxu0 0.0
    %1934 = vmatprep.subr.mxu0 0.0
    %1935 = vmatpush2.msra.mxu0 0.0
    %1936 = vmatprep.subr.mxu0 0.0
    %1937 = vmatpush2.msra.mxu0 0.0
    %1938 = vmatprep.subr.mxu0 0.0
    %1939 = vmatpush2.msra.mxu0 0.0
    %1940 = vmatprep.subr.mxu0 0.0
    %1941 = vmatpush2.msra.mxu0 0.0
    %1942 = vmatprep.subr.mxu0 0.0
    %1943 = vmatpush2.msra.mxu0 0.0
    %1944 = vmatprep.subr.mxu0 0.0
    %1945 = vmatpush2.msra.mxu0 0.0
    %1946 = vmatprep.mubr.f32.mxu0 0.0
    %v1947 = vand.u32 %v1708, 4294901760
    %1948 = vmatmul.mubr.f32.gmra.mxu0 %v1947
    %v1949 = vpop.f32.mrf.mxu0
    %v1950 = vadd.f32 %v1798, %v1949
    %v1951 = vpop.f32.mrf.mxu0
    %v1952 = vadd.f32 %v1800, %v1951
    %1953 = vdwg.mxu0
    %1954 = vmatprep.subr.mxu0 0.0
    %1955 = vmatpush1.msra.mxu0 0.0
    %1956 = vmatprep.subr.mxu0 0.0
    %1957 = vmatpush1.msra.mxu0 0.0
    %1958 = vmatprep.subr.mxu0 0.0
    %1959 = vmatpush1.msra.mxu0 0.0
    %1960 = vmatprep.subr.mxu0 0.0
    %1961 = vmatpush1.msra.mxu0 0.0
    %1962 = vmatprep.subr.mxu0 0.0
    %1963 = vmatpush1.msra.mxu0 0.0
    %1964 = vmatprep.subr.mxu0 0.0
    %1965 = vmatpush1.msra.mxu0 0.0
    %1966 = vmatprep.subr.mxu0 0.0
    %1967 = vmatpush1.msra.mxu0 0.0
    %1968 = vmatprep.subr.mxu0 0.0
    %1969 = vmatpush1.msra.mxu0 0.0
    %v1970 = vand.u32 %v1014, 4294901760
    %v1971 = vsub.f32 %v1014, %v1970
    %1972 = vmatprep.subr.mxu0 %v1971
    %v1973 = vand.u32 %v1013, 4294901760
    %v1974 = vsub.f32 %v1013, %v1973
    %1975 = vmatpush1.msra.mxu0 %v1974
    %v1976 = vand.u32 %v1012, 4294901760
    %v1977 = vsub.f32 %v1012, %v1976
    %1978 = vmatprep.subr.mxu0 %v1977
    %v1979 = vand.u32 %v1011, 4294901760
    %v1980 = vsub.f32 %v1011, %v1979
    %1981 = vmatpush1.msra.mxu0 %v1980
    %v1982 = vand.u32 %v1010, 4294901760
    %v1983 = vsub.f32 %v1010, %v1982
    %1984 = vmatprep.subr.mxu0 %v1983
    %v1985 = vand.u32 %v1009, 4294901760
    %v1986 = vsub.f32 %v1009, %v1985
    %1987 = vmatpush1.msra.mxu0 %v1986
    %v1988 = vand.u32 %v1008, 4294901760
    %v1989 = vsub.f32 %v1008, %v1988
    %1990 = vmatprep.subr.mxu0 %v1989
    %v1991 = vand.u32 %v1007, 4294901760
    %v1992 = vsub.f32 %v1007, %v1991
    %1993 = vmatpush1.msra.mxu0 %v1992
    %v1994 = vand.u32 %v1006, 4294901760
    %v1995 = vsub.f32 %v1006, %v1994
    %1996 = vmatprep.subr.mxu0 %v1995
    %v1997 = vand.u32 %v1005, 4294901760
    %v1998 = vsub.f32 %v1005, %v1997
    %1999 = vmatpush1.msra.mxu0 %v1998
    %v2000 = vand.u32 %v1004, 4294901760
    %v2001 = vsub.f32 %v1004, %v2000
    %2002 = vmatprep.subr.mxu0 %v2001
    %v2003 = vand.u32 %v1003, 4294901760
    %v2004 = vsub.f32 %v1003, %v2003
    %2005 = vmatpush1.msra.mxu0 %v2004
    %v2006 = vand.u32 %v1002, 4294901760
    %v2007 = vsub.f32 %v1002, %v2006
    %2008 = vmatprep.subr.mxu0 %v2007
    %v2009 = vand.u32 %v1001, 4294901760
    %v2010 = vsub.f32 %v1001, %v2009
    %2011 = vmatpush1.msra.mxu0 %v2010
    %v2012 = vand.u32 %v1000, 4294901760
    %v2013 = vsub.f32 %v1000, %v2012
    %2014 = vmatprep.subr.mxu0 %v2013
    %v2015 = vand.u32 %v999, 4294901760
    %v2016 = vsub.f32 %v999, %v2015
    %2017 = vmatpush1.msra.mxu0 %v2016
    %2018 = vmatprep.subr.mxu0 0.0
    %2019 = vmatpush2.msra.mxu0 0.0
    %2020 = vmatprep.subr.mxu0 0.0
    %2021 = vmatpush2.msra.mxu0 0.0
    %2022 = vmatprep.subr.mxu0 0.0
    %2023 = vmatpush2.msra.mxu0 0.0
    %2024 = vmatprep.subr.mxu0 0.0
    %2025 = vmatpush2.msra.mxu0 0.0
    %2026 = vmatprep.subr.mxu0 0.0
    %2027 = vmatpush2.msra.mxu0 0.0
    %2028 = vmatprep.subr.mxu0 0.0
    %2029 = vmatpush2.msra.mxu0 0.0
    %2030 = vmatprep.subr.mxu0 0.0
    %2031 = vmatpush2.msra.mxu0 0.0
    %2032 = vmatprep.subr.mxu0 0.0
    %2033 = vmatpush2.msra.mxu0 0.0
    %2034 = vmatprep.subr.mxu0 0.0
    %2035 = vmatpush2.msra.mxu0 0.0
    %2036 = vmatprep.subr.mxu0 0.0
    %2037 = vmatpush2.msra.mxu0 0.0
    %2038 = vmatprep.subr.mxu0 0.0
    %2039 = vmatpush2.msra.mxu0 0.0
    %2040 = vmatprep.subr.mxu0 0.0
    %2041 = vmatpush2.msra.mxu0 0.0
    %2042 = vmatprep.subr.mxu0 0.0
    %2043 = vmatpush2.msra.mxu0 0.0
    %2044 = vmatprep.subr.mxu0 0.0
    %2045 = vmatpush2.msra.mxu0 0.0
    %2046 = vmatprep.subr.mxu0 0.0
    %2047 = vmatpush2.msra.mxu0 0.0
    %2048 = vmatprep.subr.mxu0 0.0
    %2049 = vmatpush2.msra.mxu0 0.0
    %2050 = vmatprep.mubr.f32.mxu0 0.0
    %v2051 = vand.u32 %v1708, 4294901760
    %v2052 = vsub.f32 %v1708, %v2051
    %2053 = vmatmul.mubr.f32.gmra.mxu0 %v2052
    %v2054 = vpop.f32.mrf.mxu0
    %v2055 = vadd.f32 %v1950, %v2054
    %v2056 = vpop.f32.mrf.mxu0
    %v2057 = vadd.f32 %v1952, %v2056
    %2058 = vdwg.mxu0
    %2059 = vmatprep.subr.mxu0 0.0
    %2060 = vmatpush1.msra.mxu0 0.0
    %2061 = vmatprep.subr.mxu0 0.0
    %2062 = vmatpush1.msra.mxu0 0.0
    %2063 = vmatprep.subr.mxu0 0.0
    %2064 = vmatpush1.msra.mxu0 0.0
    %2065 = vmatprep.subr.mxu0 0.0
    %2066 = vmatpush1.msra.mxu0 0.0
    %2067 = vmatprep.subr.mxu0 0.0
    %2068 = vmatpush1.msra.mxu0 0.0
    %2069 = vmatprep.subr.mxu0 0.0
    %2070 = vmatpush1.msra.mxu0 0.0
    %2071 = vmatprep.subr.mxu0 0.0
    %2072 = vmatpush1.msra.mxu0 0.0
    %2073 = vmatprep.subr.mxu0 0.0
    %2074 = vmatpush1.msra.mxu0 0.0
    %v2075 = vand.u32 %v1014, 4294901760
    %2076 = vmatprep.subr.mxu0 %v2075
    %v2077 = vand.u32 %v1013, 4294901760
    %2078 = vmatpush1.msra.mxu0 %v2077
    %v2079 = vand.u32 %v1012, 4294901760
    %2080 = vmatprep.subr.mxu0 %v2079
    %v2081 = vand.u32 %v1011, 4294901760
    %2082 = vmatpush1.msra.mxu0 %v2081
    %v2083 = vand.u32 %v1010, 4294901760
    %2084 = vmatprep.subr.mxu0 %v2083
    %v2085 = vand.u32 %v1009, 4294901760
    %2086 = vmatpush1.msra.mxu0 %v2085
    %v2087 = vand.u32 %v1008, 4294901760
    %2088 = vmatprep.subr.mxu0 %v2087
    %v2089 = vand.u32 %v1007, 4294901760
    %2090 = vmatpush1.msra.mxu0 %v2089
    %v2091 = vand.u32 %v1006, 4294901760
    %2092 = vmatprep.subr.mxu0 %v2091
    %v2093 = vand.u32 %v1005, 4294901760
    %2094 = vmatpush1.msra.mxu0 %v2093
    %v2095 = vand.u32 %v1004, 4294901760
    %2096 = vmatprep.subr.mxu0 %v2095
    %v2097 = vand.u32 %v1003, 4294901760
    %2098 = vmatpush1.msra.mxu0 %v2097
    %v2099 = vand.u32 %v1002, 4294901760
    %2100 = vmatprep.subr.mxu0 %v2099
    %v2101 = vand.u32 %v1001, 4294901760
    %2102 = vmatpush1.msra.mxu0 %v2101
    %v2103 = vand.u32 %v1000, 4294901760
    %2104 = vmatprep.subr.mxu0 %v2103
    %v2105 = vand.u32 %v999, 4294901760
    %2106 = vmatpush1.msra.mxu0 %v2105
    %2107 = vmatprep.subr.mxu0 0.0
    %2108 = vmatpush2.msra.mxu0 0.0
    %2109 = vmatprep.subr.mxu0 0.0
    %2110 = vmatpush2.msra.mxu0 0.0
    %2111 = vmatprep.subr.mxu0 0.0
    %2112 = vmatpush2.msra.mxu0 0.0
    %2113 = vmatprep.subr.mxu0 0.0
    %2114 = vmatpush2.msra.mxu0 0.0
    %2115 = vmatprep.subr.mxu0 0.0
    %2116 = vmatpush2.msra.mxu0 0.0
    %2117 = vmatprep.subr.mxu0 0.0
    %2118 = vmatpush2.msra.mxu0 0.0
    %2119 = vmatprep.subr.mxu0 0.0
    %2120 = vmatpush2.msra.mxu0 0.0
    %2121 = vmatprep.subr.mxu0 0.0
    %2122 = vmatpush2.msra.mxu0 0.0
    %2123 = vmatprep.subr.mxu0 0.0
    %2124 = vmatpush2.msra.mxu0 0.0
    %2125 = vmatprep.subr.mxu0 0.0
    %2126 = vmatpush2.msra.mxu0 0.0
    %2127 = vmatprep.subr.mxu0 0.0
    %2128 = vmatpush2.msra.mxu0 0.0
    %2129 = vmatprep.subr.mxu0 0.0
    %2130 = vmatpush2.msra.mxu0 0.0
    %2131 = vmatprep.subr.mxu0 0.0
    %2132 = vmatpush2.msra.mxu0 0.0
    %2133 = vmatprep.subr.mxu0 0.0
    %2134 = vmatpush2.msra.mxu0 0.0
    %2135 = vmatprep.subr.mxu0 0.0
    %2136 = vmatpush2.msra.mxu0 0.0
    %2137 = vmatprep.subr.mxu0 0.0
    %2138 = vmatpush2.msra.mxu0 0.0
    %2139 = vmatprep.mubr.f32.mxu0 0.0
    %v2140 = vand.u32 %v1708, 4294901760
    %v2141 = vsub.f32 %v1708, %v2140
    %v2142 = vand.u32 %v2141, 4294901760
    %2143 = vmatmul.mubr.f32.gmra.mxu0 %v2142
    %v2144 = vpop.f32.mrf.mxu0
    %v2145 = vadd.f32 %v2055, %v2144
    %v2146 = vpop.f32.mrf.mxu0
    %v2147 = vadd.f32 %v2057, %v2146
    %2148 = vdwg.mxu0
    %2149 = vmatprep.subr.mxu0 0.0
    %2150 = vmatpush1.msra.mxu0 0.0
    %2151 = vmatprep.subr.mxu0 0.0
    %2152 = vmatpush1.msra.mxu0 0.0
    %2153 = vmatprep.subr.mxu0 0.0
    %2154 = vmatpush1.msra.mxu0 0.0
    %2155 = vmatprep.subr.mxu0 0.0
    %2156 = vmatpush1.msra.mxu0 0.0
    %2157 = vmatprep.subr.mxu0 0.0
    %2158 = vmatpush1.msra.mxu0 0.0
    %2159 = vmatprep.subr.mxu0 0.0
    %2160 = vmatpush1.msra.mxu0 0.0
    %2161 = vmatprep.subr.mxu0 0.0
    %2162 = vmatpush1.msra.mxu0 0.0
    %2163 = vmatprep.subr.mxu0 0.0
    %2164 = vmatpush1.msra.mxu0 0.0
    %v2165 = vand.u32 %v1014, 4294901760
    %v2166 = vsub.f32 %v1014, %v2165
    %v2167 = vand.u32 %v2166, 4294901760
    %2168 = vmatprep.subr.mxu0 %v2167
    %v2169 = vand.u32 %v1013, 4294901760
    %v2170 = vsub.f32 %v1013, %v2169
    %v2171 = vand.u32 %v2170, 4294901760
    %2172 = vmatpush1.msra.mxu0 %v2171
    %v2173 = vand.u32 %v1012, 4294901760
    %v2174 = vsub.f32 %v1012, %v2173
    %v2175 = vand.u32 %v2174, 4294901760
    %2176 = vmatprep.subr.mxu0 %v2175
    %v2177 = vand.u32 %v1011, 4294901760
    %v2178 = vsub.f32 %v1011, %v2177
    %v2179 = vand.u32 %v2178, 4294901760
    %2180 = vmatpush1.msra.mxu0 %v2179
    %v2181 = vand.u32 %v1010, 4294901760
    %v2182 = vsub.f32 %v1010, %v2181
    %v2183 = vand.u32 %v2182, 4294901760
    %2184 = vmatprep.subr.mxu0 %v2183
    %v2185 = vand.u32 %v1009, 4294901760
    %v2186 = vsub.f32 %v1009, %v2185
    %v2187 = vand.u32 %v2186, 4294901760
    %2188 = vmatpush1.msra.mxu0 %v2187
    %v2189 = vand.u32 %v1008, 4294901760
    %v2190 = vsub.f32 %v1008, %v2189
    %v2191 = vand.u32 %v2190, 4294901760
    %2192 = vmatprep.subr.mxu0 %v2191
    %v2193 = vand.u32 %v1007, 4294901760
    %v2194 = vsub.f32 %v1007, %v2193
    %v2195 = vand.u32 %v2194, 4294901760
    %2196 = vmatpush1.msra.mxu0 %v2195
    %v2197 = vand.u32 %v1006, 4294901760
    %v2198 = vsub.f32 %v1006, %v2197
    %v2199 = vand.u32 %v2198, 4294901760
    %2200 = vmatprep.subr.mxu0 %v2199
    %v2201 = vand.u32 %v1005, 4294901760
    %v2202 = vsub.f32 %v1005, %v2201
    %v2203 = vand.u32 %v2202, 4294901760
    %2204 = vmatpush1.msra.mxu0 %v2203
    %v2205 = vand.u32 %v1004, 4294901760
    %v2206 = vsub.f32 %v1004, %v2205
    %v2207 = vand.u32 %v2206, 4294901760
    %2208 = vmatprep.subr.mxu0 %v2207
    %v2209 = vand.u32 %v1003, 4294901760
    %v2210 = vsub.f32 %v1003, %v2209
    %v2211 = vand.u32 %v2210, 4294901760
    %2212 = vmatpush1.msra.mxu0 %v2211
    %v2213 = vand.u32 %v1002, 4294901760
    %v2214 = vsub.f32 %v1002, %v2213
    %v2215 = vand.u32 %v2214, 4294901760
    %2216 = vmatprep.subr.mxu0 %v2215
    %v2217 = vand.u32 %v1001, 4294901760
    %v2218 = vsub.f32 %v1001, %v2217
    %v2219 = vand.u32 %v2218, 4294901760
    %2220 = vmatpush1.msra.mxu0 %v2219
    %v2221 = vand.u32 %v1000, 4294901760
    %v2222 = vsub.f32 %v1000, %v2221
    %v2223 = vand.u32 %v2222, 4294901760
    %2224 = vmatprep.subr.mxu0 %v2223
    %v2225 = vand.u32 %v999, 4294901760
    %v2226 = vsub.f32 %v999, %v2225
    %v2227 = vand.u32 %v2226, 4294901760
    %2228 = vmatpush1.msra.mxu0 %v2227
    %2229 = vmatprep.subr.mxu0 0.0
    %2230 = vmatpush2.msra.mxu0 0.0
    %2231 = vmatprep.subr.mxu0 0.0
    %2232 = vmatpush2.msra.mxu0 0.0
    %2233 = vmatprep.subr.mxu0 0.0
    %2234 = vmatpush2.msra.mxu0 0.0
    %2235 = vmatprep.subr.mxu0 0.0
    %2236 = vmatpush2.msra.mxu0 0.0
    %2237 = vmatprep.subr.mxu0 0.0
    %2238 = vmatpush2.msra.mxu0 0.0
    %2239 = vmatprep.subr.mxu0 0.0
    %2240 = vmatpush2.msra.mxu0 0.0
    %2241 = vmatprep.subr.mxu0 0.0
    %2242 = vmatpush2.msra.mxu0 0.0
    %2243 = vmatprep.subr.mxu0 0.0
    %2244 = vmatpush2.msra.mxu0 0.0
    %2245 = vmatprep.subr.mxu0 0.0
    %2246 = vmatpush2.msra.mxu0 0.0
    %2247 = vmatprep.subr.mxu0 0.0
    %2248 = vmatpush2.msra.mxu0 0.0
    %2249 = vmatprep.subr.mxu0 0.0
    %2250 = vmatpush2.msra.mxu0 0.0
    %2251 = vmatprep.subr.mxu0 0.0
    %2252 = vmatpush2.msra.mxu0 0.0
    %2253 = vmatprep.subr.mxu0 0.0
    %2254 = vmatpush2.msra.mxu0 0.0
    %2255 = vmatprep.subr.mxu0 0.0
    %2256 = vmatpush2.msra.mxu0 0.0
    %2257 = vmatprep.subr.mxu0 0.0
    %2258 = vmatpush2.msra.mxu0 0.0
    %2259 = vmatprep.subr.mxu0 0.0
    %2260 = vmatpush2.msra.mxu0 0.0
    %2261 = vmatprep.mubr.f32.mxu0 0.0
    %v2262 = vand.u32 %v1708, 4294901760
    %2263 = vmatmul.mubr.f32.gmra.mxu0 %v2262
    %v2264 = vpop.f32.mrf.mxu0
    %v2265 = vadd.f32 %v2145, %v2264
    %v2266 = vpop.f32.mrf.mxu0
    %v2267 = vadd.f32 %v2147, %v2266
    %2268 = vdwg.mxu0
    %2269 = vmatprep.subr.mxu0 0.0
    %2270 = vmatpush1.msra.mxu0 0.0
    %2271 = vmatprep.subr.mxu0 0.0
    %2272 = vmatpush1.msra.mxu0 0.0
    %2273 = vmatprep.subr.mxu0 0.0
    %2274 = vmatpush1.msra.mxu0 0.0
    %2275 = vmatprep.subr.mxu0 0.0
    %2276 = vmatpush1.msra.mxu0 0.0
    %2277 = vmatprep.subr.mxu0 0.0
    %2278 = vmatpush1.msra.mxu0 0.0
    %2279 = vmatprep.subr.mxu0 0.0
    %2280 = vmatpush1.msra.mxu0 0.0
    %2281 = vmatprep.subr.mxu0 0.0
    %2282 = vmatpush1.msra.mxu0 0.0
    %2283 = vmatprep.subr.mxu0 0.0
    %2284 = vmatpush1.msra.mxu0 0.0
    %v2285 = vand.u32 %v1014, 4294901760
    %2286 = vmatprep.subr.mxu0 %v2285
    %v2287 = vand.u32 %v1013, 4294901760
    %2288 = vmatpush1.msra.mxu0 %v2287
    %v2289 = vand.u32 %v1012, 4294901760
    %2290 = vmatprep.subr.mxu0 %v2289
    %v2291 = vand.u32 %v1011, 4294901760
    %2292 = vmatpush1.msra.mxu0 %v2291
    %v2293 = vand.u32 %v1010, 4294901760
    %2294 = vmatprep.subr.mxu0 %v2293
    %v2295 = vand.u32 %v1009, 4294901760
    %2296 = vmatpush1.msra.mxu0 %v2295
    %v2297 = vand.u32 %v1008, 4294901760
    %2298 = vmatprep.subr.mxu0 %v2297
    %v2299 = vand.u32 %v1007, 4294901760
    %2300 = vmatpush1.msra.mxu0 %v2299
    %v2301 = vand.u32 %v1006, 4294901760
    %2302 = vmatprep.subr.mxu0 %v2301
    %v2303 = vand.u32 %v1005, 4294901760
    %2304 = vmatpush1.msra.mxu0 %v2303
    %v2305 = vand.u32 %v1004, 4294901760
    %2306 = vmatprep.subr.mxu0 %v2305
    %v2307 = vand.u32 %v1003, 4294901760
    %2308 = vmatpush1.msra.mxu0 %v2307
    %v2309 = vand.u32 %v1002, 4294901760
    %2310 = vmatprep.subr.mxu0 %v2309
    %v2311 = vand.u32 %v1001, 4294901760
    %2312 = vmatpush1.msra.mxu0 %v2311
    %v2313 = vand.u32 %v1000, 4294901760
    %2314 = vmatprep.subr.mxu0 %v2313
    %v2315 = vand.u32 %v999, 4294901760
    %2316 = vmatpush1.msra.mxu0 %v2315
    %2317 = vmatprep.subr.mxu0 0.0
    %2318 = vmatpush2.msra.mxu0 0.0
    %2319 = vmatprep.subr.mxu0 0.0
    %2320 = vmatpush2.msra.mxu0 0.0
    %2321 = vmatprep.subr.mxu0 0.0
    %2322 = vmatpush2.msra.mxu0 0.0
    %2323 = vmatprep.subr.mxu0 0.0
    %2324 = vmatpush2.msra.mxu0 0.0
    %2325 = vmatprep.subr.mxu0 0.0
    %2326 = vmatpush2.msra.mxu0 0.0
    %2327 = vmatprep.subr.mxu0 0.0
    %2328 = vmatpush2.msra.mxu0 0.0
    %2329 = vmatprep.subr.mxu0 0.0
    %2330 = vmatpush2.msra.mxu0 0.0
    %2331 = vmatprep.subr.mxu0 0.0
    %2332 = vmatpush2.msra.mxu0 0.0
    %2333 = vmatprep.subr.mxu0 0.0
    %2334 = vmatpush2.msra.mxu0 0.0
    %2335 = vmatprep.subr.mxu0 0.0
    %2336 = vmatpush2.msra.mxu0 0.0
    %2337 = vmatprep.subr.mxu0 0.0
    %2338 = vmatpush2.msra.mxu0 0.0
    %2339 = vmatprep.subr.mxu0 0.0
    %2340 = vmatpush2.msra.mxu0 0.0
    %2341 = vmatprep.subr.mxu0 0.0
    %2342 = vmatpush2.msra.mxu0 0.0
    %2343 = vmatprep.subr.mxu0 0.0
    %2344 = vmatpush2.msra.mxu0 0.0
    %2345 = vmatprep.subr.mxu0 0.0
    %2346 = vmatpush2.msra.mxu0 0.0
    %2347 = vmatprep.subr.mxu0 0.0
    %2348 = vmatpush2.msra.mxu0 0.0
    %2349 = vmatprep.mubr.f32.mxu0 0.0
    %v2350 = vand.u32 %v1708, 4294901760
    %2351 = vmatmul.mubr.f32.gmra.mxu0 %v2350
    %v2352 = vpop.f32.mrf.mxu0
    %v2353 = vadd.f32 %v2265, %v2352
    %v2354 = vpop.f32.mrf.mxu0
    %v2355 = vadd.f32 %v2267, %v2354
    %2356 = vdwg.mxu0
    %v2357 = vadd.f32 %v960, %v2353
    %v2358 = vxor.u32 %v2357, 2147483648
    %v2359 = vmul.f32 %v2358, 1.442695
    %v2360 = vpow.pop %v2359
    %v2361 = vadd.f32 %v2360, 1.0
    %v2362 = vrcp.pop %v2361
    %v2363 = vmul.f32 1.0, %v2362
    %v2364 = vmul.f32 %v2363, 2.0
    %v2365 = vsub.f32 %v2364, 1.0
    %v2366 = vmul.f32 %v2363, %v1695
    %2368 = vrot.lane.b32.xlu0 %v2365, 64
    %v2369 = vpop.permute.xlu0 %2368
    %v2371 = vmul.f32 %v2363, %v2369
    %2373 = vrot.lane.b32.xlu0 %v2371, 32
    %v2374 = vpop.permute.xlu0 %2373
    %v2376 = vadd.f32 %v2366, %v2374
    %v2377 = vtanh.pop %v2376
    %2379 = vrot.lane.b32.xlu0 %v2377, 64
    %v2380 = vpop.permute.xlu0 %2379
    %v2382 = vmul.f32 %v2363, %v2380
    %v2384 = vlaneseq
    %v2385 = vshrl.u32 %v2384, 7
    %v2386 = vsub.s32 0, %v2385
    %v2387 = vrot.slane %v1015, %v2386
    %v2389 = vadd.f32 %v2355, %v2387
    %v2390 = vxor.u32 %v2389, 2147483648
    %v2391 = vmul.f32 %v2390, 1.442695
    %v2392 = vpow.pop %v2391
    %v2393 = vadd.f32 %v2392, 1.0
    %v2394 = vrcp.pop %v2393
    %v2395 = vmul.f32 1.0, %v2394
    %v2396 = vmul.f32 %v2395, 2.0
    %v2397 = vsub.f32 %v2396, 1.0
    %2399 = vrot.lane.b32.xlu0 %v1021, 32
    %v2400 = vpop.permute.xlu0 %2399
    %v2402 = vmul.f32 %v2395, %v2400
    %2404 = vrot.lane.b32.xlu0 %v2397, 64
    %v2405 = vpop.permute.xlu0 %2404
    %v2407 = vmul.f32 %v2395, %v2405
    %2409 = vrot.lane.b32.xlu0 %v2407, 32
    %v2410 = vpop.permute.xlu0 %2409
    %v2412 = vadd.f32 %v2402, %v2410
    %v2413 = vtanh.pop %v2412
    %2415 = vrot.lane.b32.xlu0 %v2413, 64
    %v2416 = vpop.permute.xlu0 %2415
    %v2418 = vmul.f32 %v2395, %v2416
    %2420 = vrot.lane.b32.xlu0 %v2382, 32
    %v2421 = vpop.permute.xlu0 %2420
    %2424 = vrot.lane.b32.xlu0 %v2418, 64
    %v2425 = vpop.permute.xlu0 %2424
    %v2427 = vsel %vm1026, %v2421, %v2425
    %v2429 = vsel %vm136, %v2427, 0
    %2431 = vmatprep.subr.mxu0 0.0
    %2432 = vmatpush1.msra.mxu0 0.0
    %2433 = vmatprep.subr.mxu0 0.0
    %2434 = vmatpush1.msra.mxu0 0.0
    %2435 = vmatprep.subr.mxu0 0.0
    %2436 = vmatpush1.msra.mxu0 0.0
    %2437 = vmatprep.subr.mxu0 0.0
    %2438 = vmatpush1.msra.mxu0 0.0
    %2439 = vmatprep.subr.mxu0 0.0
    %2440 = vmatpush1.msra.mxu0 0.0
    %2441 = vmatprep.subr.mxu0 0.0
    %2442 = vmatpush1.msra.mxu0 0.0
    %2443 = vmatprep.subr.mxu0 0.0
    %2444 = vmatpush1.msra.mxu0 0.0
    %2445 = vmatprep.subr.mxu0 0.0
    %2446 = vmatpush1.msra.mxu0 0.0
    %v2447 = vand.u32 %v1014, 4294901760
    %2448 = vmatprep.subr.mxu0 %v2447
    %v2449 = vand.u32 %v1013, 4294901760
    %2450 = vmatpush1.msra.mxu0 %v2449
    %v2451 = vand.u32 %v1012, 4294901760
    %2452 = vmatprep.subr.mxu0 %v2451
    %v2453 = vand.u32 %v1011, 4294901760
    %2454 = vmatpush1.msra.mxu0 %v2453
    %v2455 = vand.u32 %v1010, 4294901760
    %2456 = vmatprep.subr.mxu0 %v2455
    %v2457 = vand.u32 %v1009, 4294901760
    %2458 = vmatpush1.msra.mxu0 %v2457
    %v2459 = vand.u32 %v1008, 4294901760
    %2460 = vmatprep.subr.mxu0 %v2459
    %v2461 = vand.u32 %v1007, 4294901760
    %2462 = vmatpush1.msra.mxu0 %v2461
    %v2463 = vand.u32 %v1006, 4294901760
    %2464 = vmatprep.subr.mxu0 %v2463
    %v2465 = vand.u32 %v1005, 4294901760
    %2466 = vmatpush1.msra.mxu0 %v2465
    %v2467 = vand.u32 %v1004, 4294901760
    %2468 = vmatprep.subr.mxu0 %v2467
    %v2469 = vand.u32 %v1003, 4294901760
    %2470 = vmatpush1.msra.mxu0 %v2469
    %v2471 = vand.u32 %v1002, 4294901760
    %2472 = vmatprep.subr.mxu0 %v2471
    %v2473 = vand.u32 %v1001, 4294901760
    %2474 = vmatpush1.msra.mxu0 %v2473
    %v2475 = vand.u32 %v1000, 4294901760
    %2476 = vmatprep.subr.mxu0 %v2475
    %v2477 = vand.u32 %v999, 4294901760
    %2478 = vmatpush1.msra.mxu0 %v2477
    %2479 = vmatprep.subr.mxu0 0.0
    %2480 = vmatpush2.msra.mxu0 0.0
    %2481 = vmatprep.subr.mxu0 0.0
    %2482 = vmatpush2.msra.mxu0 0.0
    %2483 = vmatprep.subr.mxu0 0.0
    %2484 = vmatpush2.msra.mxu0 0.0
    %2485 = vmatprep.subr.mxu0 0.0
    %2486 = vmatpush2.msra.mxu0 0.0
    %2487 = vmatprep.subr.mxu0 0.0
    %2488 = vmatpush2.msra.mxu0 0.0
    %2489 = vmatprep.subr.mxu0 0.0
    %2490 = vmatpush2.msra.mxu0 0.0
    %2491 = vmatprep.subr.mxu0 0.0
    %2492 = vmatpush2.msra.mxu0 0.0
    %2493 = vmatprep.subr.mxu0 0.0
    %2494 = vmatpush2.msra.mxu0 0.0
    %2495 = vmatprep.subr.mxu0 0.0
    %2496 = vmatpush2.msra.mxu0 0.0
    %2497 = vmatprep.subr.mxu0 0.0
    %2498 = vmatpush2.msra.mxu0 0.0
    %2499 = vmatprep.subr.mxu0 0.0
    %2500 = vmatpush2.msra.mxu0 0.0
    %2501 = vmatprep.subr.mxu0 0.0
    %2502 = vmatpush2.msra.mxu0 0.0
    %2503 = vmatprep.subr.mxu0 0.0
    %2504 = vmatpush2.msra.mxu0 0.0
    %2505 = vmatprep.subr.mxu0 0.0
    %2506 = vmatpush2.msra.mxu0 0.0
    %2507 = vmatprep.subr.mxu0 0.0
    %2508 = vmatpush2.msra.mxu0 0.0
    %2509 = vmatprep.subr.mxu0 0.0
    %2510 = vmatpush2.msra.mxu0 0.0
    %2511 = vmatprep.mubr.f32.mxu0 0.0
    %v2512 = vand.u32 %v2429, 4294901760
    %v2513 = vsub.f32 %v2429, %v2512
    %v2514 = vand.u32 %v2513, 4294901760
    %v2515 = vsub.f32 %v2513, %v2514
    %v2516 = vand.u32 %v2515, 4294901760
    %2517 = vmatmul.mubr.f32.gmra.mxu0 %v2516
    %v2518 = vpop.f32.mrf.mxu0
    %v2519 = vadd.f32 0.0, %v2518
    %v2520 = vpop.f32.mrf.mxu0
    %v2521 = vadd.f32 0.0, %v2520
    %2522 = vdwg.mxu0
    %2523 = vmatprep.subr.mxu0 0.0
    %2524 = vmatpush1.msra.mxu0 0.0
    %2525 = vmatprep.subr.mxu0 0.0
    %2526 = vmatpush1.msra.mxu0 0.0
    %2527 = vmatprep.subr.mxu0 0.0
    %2528 = vmatpush1.msra.mxu0 0.0
    %2529 = vmatprep.subr.mxu0 0.0
    %2530 = vmatpush1.msra.mxu0 0.0
    %2531 = vmatprep.subr.mxu0 0.0
    %2532 = vmatpush1.msra.mxu0 0.0
    %2533 = vmatprep.subr.mxu0 0.0
    %2534 = vmatpush1.msra.mxu0 0.0
    %2535 = vmatprep.subr.mxu0 0.0
    %2536 = vmatpush1.msra.mxu0 0.0
    %2537 = vmatprep.subr.mxu0 0.0
    %2538 = vmatpush1.msra.mxu0 0.0
    %v2539 = vand.u32 %v1014, 4294901760
    %v2540 = vsub.f32 %v1014, %v2539
    %v2541 = vand.u32 %v2540, 4294901760
    %v2542 = vsub.f32 %v2540, %v2541
    %v2543 = vand.u32 %v2542, 4294901760
    %2544 = vmatprep.subr.mxu0 %v2543
    %v2545 = vand.u32 %v1013, 4294901760
    %v2546 = vsub.f32 %v1013, %v2545
    %v2547 = vand.u32 %v2546, 4294901760
    %v2548 = vsub.f32 %v2546, %v2547
    %v2549 = vand.u32 %v2548, 4294901760
    %2550 = vmatpush1.msra.mxu0 %v2549
    %v2551 = vand.u32 %v1012, 4294901760
    %v2552 = vsub.f32 %v1012, %v2551
    %v2553 = vand.u32 %v2552, 4294901760
    %v2554 = vsub.f32 %v2552, %v2553
    %v2555 = vand.u32 %v2554, 4294901760
    %2556 = vmatprep.subr.mxu0 %v2555
    %v2557 = vand.u32 %v1011, 4294901760
    %v2558 = vsub.f32 %v1011, %v2557
    %v2559 = vand.u32 %v2558, 4294901760
    %v2560 = vsub.f32 %v2558, %v2559
    %v2561 = vand.u32 %v2560, 4294901760
    %2562 = vmatpush1.msra.mxu0 %v2561
    %v2563 = vand.u32 %v1010, 4294901760
    %v2564 = vsub.f32 %v1010, %v2563
    %v2565 = vand.u32 %v2564, 4294901760
    %v2566 = vsub.f32 %v2564, %v2565
    %v2567 = vand.u32 %v2566, 4294901760
    %2568 = vmatprep.subr.mxu0 %v2567
    %v2569 = vand.u32 %v1009, 4294901760
    %v2570 = vsub.f32 %v1009, %v2569
    %v2571 = vand.u32 %v2570, 4294901760
    %v2572 = vsub.f32 %v2570, %v2571
    %v2573 = vand.u32 %v2572, 4294901760
    %2574 = vmatpush1.msra.mxu0 %v2573
    %v2575 = vand.u32 %v1008, 4294901760
    %v2576 = vsub.f32 %v1008, %v2575
    %v2577 = vand.u32 %v2576, 4294901760
    %v2578 = vsub.f32 %v2576, %v2577
    %v2579 = vand.u32 %v2578, 4294901760
    %2580 = vmatprep.subr.mxu0 %v2579
    %v2581 = vand.u32 %v1007, 4294901760
    %v2582 = vsub.f32 %v1007, %v2581
    %v2583 = vand.u32 %v2582, 4294901760
    %v2584 = vsub.f32 %v2582, %v2583
    %v2585 = vand.u32 %v2584, 4294901760
    %2586 = vmatpush1.msra.mxu0 %v2585
    %v2587 = vand.u32 %v1006, 4294901760
    %v2588 = vsub.f32 %v1006, %v2587
    %v2589 = vand.u32 %v2588, 4294901760
    %v2590 = vsub.f32 %v2588, %v2589
    %v2591 = vand.u32 %v2590, 4294901760
    %2592 = vmatprep.subr.mxu0 %v2591
    %v2593 = vand.u32 %v1005, 4294901760
    %v2594 = vsub.f32 %v1005, %v2593
    %v2595 = vand.u32 %v2594, 4294901760
    %v2596 = vsub.f32 %v2594, %v2595
    %v2597 = vand.u32 %v2596, 4294901760
    %2598 = vmatpush1.msra.mxu0 %v2597
    %v2599 = vand.u32 %v1004, 4294901760
    %v2600 = vsub.f32 %v1004, %v2599
    %v2601 = vand.u32 %v2600, 4294901760
    %v2602 = vsub.f32 %v2600, %v2601
    %v2603 = vand.u32 %v2602, 4294901760
    %2604 = vmatprep.subr.mxu0 %v2603
    %v2605 = vand.u32 %v1003, 4294901760
    %v2606 = vsub.f32 %v1003, %v2605
    %v2607 = vand.u32 %v2606, 4294901760
    %v2608 = vsub.f32 %v2606, %v2607
    %v2609 = vand.u32 %v2608, 4294901760
    %2610 = vmatpush1.msra.mxu0 %v2609
    %v2611 = vand.u32 %v1002, 4294901760
    %v2612 = vsub.f32 %v1002, %v2611
    %v2613 = vand.u32 %v2612, 4294901760
    %v2614 = vsub.f32 %v2612, %v2613
    %v2615 = vand.u32 %v2614, 4294901760
    %2616 = vmatprep.subr.mxu0 %v2615
    %v2617 = vand.u32 %v1001, 4294901760
    %v2618 = vsub.f32 %v1001, %v2617
    %v2619 = vand.u32 %v2618, 4294901760
    %v2620 = vsub.f32 %v2618, %v2619
    %v2621 = vand.u32 %v2620, 4294901760
    %2622 = vmatpush1.msra.mxu0 %v2621
    %v2623 = vand.u32 %v1000, 4294901760
    %v2624 = vsub.f32 %v1000, %v2623
    %v2625 = vand.u32 %v2624, 4294901760
    %v2626 = vsub.f32 %v2624, %v2625
    %v2627 = vand.u32 %v2626, 4294901760
    %2628 = vmatprep.subr.mxu0 %v2627
    %v2629 = vand.u32 %v999, 4294901760
    %v2630 = vsub.f32 %v999, %v2629
    %v2631 = vand.u32 %v2630, 4294901760
    %v2632 = vsub.f32 %v2630, %v2631
    %v2633 = vand.u32 %v2632, 4294901760
    %2634 = vmatpush1.msra.mxu0 %v2633
    %2635 = vmatprep.subr.mxu0 0.0
    %2636 = vmatpush2.msra.mxu0 0.0
    %2637 = vmatprep.subr.mxu0 0.0
    %2638 = vmatpush2.msra.mxu0 0.0
    %2639 = vmatprep.subr.mxu0 0.0
    %2640 = vmatpush2.msra.mxu0 0.0
    %2641 = vmatprep.subr.mxu0 0.0
    %2642 = vmatpush2.msra.mxu0 0.0
    %2643 = vmatprep.subr.mxu0 0.0
    %2644 = vmatpush2.msra.mxu0 0.0
    %2645 = vmatprep.subr.mxu0 0.0
    %2646 = vmatpush2.msra.mxu0 0.0
    %2647 = vmatprep.subr.mxu0 0.0
    %2648 = vmatpush2.msra.mxu0 0.0
    %2649 = vmatprep.subr.mxu0 0.0
    %2650 = vmatpush2.msra.mxu0 0.0
    %2651 = vmatprep.subr.mxu0 0.0
    %2652 = vmatpush2.msra.mxu0 0.0
    %2653 = vmatprep.subr.mxu0 0.0
    %2654 = vmatpush2.msra.mxu0 0.0
    %2655 = vmatprep.subr.mxu0 0.0
    %2656 = vmatpush2.msra.mxu0 0.0
    %2657 = vmatprep.subr.mxu0 0.0
    %2658 = vmatpush2.msra.mxu0 0.0
    %2659 = vmatprep.subr.mxu0 0.0
    %2660 = vmatpush2.msra.mxu0 0.0
    %2661 = vmatprep.subr.mxu0 0.0
    %2662 = vmatpush2.msra.mxu0 0.0
    %2663 = vmatprep.subr.mxu0 0.0
    %2664 = vmatpush2.msra.mxu0 0.0
    %2665 = vmatprep.subr.mxu0 0.0
    %2666 = vmatpush2.msra.mxu0 0.0
    %2667 = vmatprep.mubr.f32.mxu0 0.0
    %v2668 = vand.u32 %v2429, 4294901760
    %2669 = vmatmul.mubr.f32.gmra.mxu0 %v2668
    %v2670 = vpop.f32.mrf.mxu0
    %v2671 = vadd.f32 %v2519, %v2670
    %v2672 = vpop.f32.mrf.mxu0
    %v2673 = vadd.f32 %v2521, %v2672
    %2674 = vdwg.mxu0
    %2675 = vmatprep.subr.mxu0 0.0
    %2676 = vmatpush1.msra.mxu0 0.0
    %2677 = vmatprep.subr.mxu0 0.0
    %2678 = vmatpush1.msra.mxu0 0.0
    %2679 = vmatprep.subr.mxu0 0.0
    %2680 = vmatpush1.msra.mxu0 0.0
    %2681 = vmatprep.subr.mxu0 0.0
    %2682 = vmatpush1.msra.mxu0 0.0
    %2683 = vmatprep.subr.mxu0 0.0
    %2684 = vmatpush1.msra.mxu0 0.0
    %2685 = vmatprep.subr.mxu0 0.0
    %2686 = vmatpush1.msra.mxu0 0.0
    %2687 = vmatprep.subr.mxu0 0.0
    %2688 = vmatpush1.msra.mxu0 0.0
    %2689 = vmatprep.subr.mxu0 0.0
    %2690 = vmatpush1.msra.mxu0 0.0
    %v2691 = vand.u32 %v1014, 4294901760
    %v2692 = vsub.f32 %v1014, %v2691
    %2693 = vmatprep.subr.mxu0 %v2692
    %v2694 = vand.u32 %v1013, 4294901760
    %v2695 = vsub.f32 %v1013, %v2694
    %2696 = vmatpush1.msra.mxu0 %v2695
    %v2697 = vand.u32 %v1012, 4294901760
    %v2698 = vsub.f32 %v1012, %v2697
    %2699 = vmatprep.subr.mxu0 %v2698
    %v2700 = vand.u32 %v1011, 4294901760
    %v2701 = vsub.f32 %v1011, %v2700
    %2702 = vmatpush1.msra.mxu0 %v2701
    %v2703 = vand.u32 %v1010, 4294901760
    %v2704 = vsub.f32 %v1010, %v2703
    %2705 = vmatprep.subr.mxu0 %v2704
    %v2706 = vand.u32 %v1009, 4294901760
    %v2707 = vsub.f32 %v1009, %v2706
    %2708 = vmatpush1.msra.mxu0 %v2707
    %v2709 = vand.u32 %v1008, 4294901760
    %v2710 = vsub.f32 %v1008, %v2709
    %2711 = vmatprep.subr.mxu0 %v2710
    %v2712 = vand.u32 %v1007, 4294901760
    %v2713 = vsub.f32 %v1007, %v2712
    %2714 = vmatpush1.msra.mxu0 %v2713
    %v2715 = vand.u32 %v1006, 4294901760
    %v2716 = vsub.f32 %v1006, %v2715
    %2717 = vmatprep.subr.mxu0 %v2716
    %v2718 = vand.u32 %v1005, 4294901760
    %v2719 = vsub.f32 %v1005, %v2718
    %2720 = vmatpush1.msra.mxu0 %v2719
    %v2721 = vand.u32 %v1004, 4294901760
    %v2722 = vsub.f32 %v1004, %v2721
    %2723 = vmatprep.subr.mxu0 %v2722
    %v2724 = vand.u32 %v1003, 4294901760
    %v2725 = vsub.f32 %v1003, %v2724
    %2726 = vmatpush1.msra.mxu0 %v2725
    %v2727 = vand.u32 %v1002, 4294901760
    %v2728 = vsub.f32 %v1002, %v2727
    %2729 = vmatprep.subr.mxu0 %v2728
    %v2730 = vand.u32 %v1001, 4294901760
    %v2731 = vsub.f32 %v1001, %v2730
    %2732 = vmatpush1.msra.mxu0 %v2731
    %v2733 = vand.u32 %v1000, 4294901760
    %v2734 = vsub.f32 %v1000, %v2733
    %2735 = vmatprep.subr.mxu0 %v2734
    %v2736 = vand.u32 %v999, 4294901760
    %v2737 = vsub.f32 %v999, %v2736
    %2738 = vmatpush1.msra.mxu0 %v2737
    %2739 = vmatprep.subr.mxu0 0.0
    %2740 = vmatpush2.msra.mxu0 0.0
    %2741 = vmatprep.subr.mxu0 0.0
    %2742 = vmatpush2.msra.mxu0 0.0
    %2743 = vmatprep.subr.mxu0 0.0
    %2744 = vmatpush2.msra.mxu0 0.0
    %2745 = vmatprep.subr.mxu0 0.0
    %2746 = vmatpush2.msra.mxu0 0.0
    %2747 = vmatprep.subr.mxu0 0.0
    %2748 = vmatpush2.msra.mxu0 0.0
    %2749 = vmatprep.subr.mxu0 0.0
    %2750 = vmatpush2.msra.mxu0 0.0
    %2751 = vmatprep.subr.mxu0 0.0
    %2752 = vmatpush2.msra.mxu0 0.0
    %2753 = vmatprep.subr.mxu0 0.0
    %2754 = vmatpush2.msra.mxu0 0.0
    %2755 = vmatprep.subr.mxu0 0.0
    %2756 = vmatpush2.msra.mxu0 0.0
    %2757 = vmatprep.subr.mxu0 0.0
    %2758 = vmatpush2.msra.mxu0 0.0
    %2759 = vmatprep.subr.mxu0 0.0
    %2760 = vmatpush2.msra.mxu0 0.0
    %2761 = vmatprep.subr.mxu0 0.0
    %2762 = vmatpush2.msra.mxu0 0.0
    %2763 = vmatprep.subr.mxu0 0.0
    %2764 = vmatpush2.msra.mxu0 0.0
    %2765 = vmatprep.subr.mxu0 0.0
    %2766 = vmatpush2.msra.mxu0 0.0
    %2767 = vmatprep.subr.mxu0 0.0
    %2768 = vmatpush2.msra.mxu0 0.0
    %2769 = vmatprep.subr.mxu0 0.0
    %2770 = vmatpush2.msra.mxu0 0.0
    %2771 = vmatprep.mubr.f32.mxu0 0.0
    %v2772 = vand.u32 %v2429, 4294901760
    %v2773 = vsub.f32 %v2429, %v2772
    %2774 = vmatmul.mubr.f32.gmra.mxu0 %v2773
    %v2775 = vpop.f32.mrf.mxu0
    %v2776 = vadd.f32 %v2671, %v2775
    %v2777 = vpop.f32.mrf.mxu0
    %v2778 = vadd.f32 %v2673, %v2777
    %2779 = vdwg.mxu0
    %2780 = vmatprep.subr.mxu0 0.0
    %2781 = vmatpush1.msra.mxu0 0.0
    %2782 = vmatprep.subr.mxu0 0.0
    %2783 = vmatpush1.msra.mxu0 0.0
    %2784 = vmatprep.subr.mxu0 0.0
    %2785 = vmatpush1.msra.mxu0 0.0
    %2786 = vmatprep.subr.mxu0 0.0
    %2787 = vmatpush1.msra.mxu0 0.0
    %2788 = vmatprep.subr.mxu0 0.0
    %2789 = vmatpush1.msra.mxu0 0.0
    %2790 = vmatprep.subr.mxu0 0.0
    %2791 = vmatpush1.msra.mxu0 0.0
    %2792 = vmatprep.subr.mxu0 0.0
    %2793 = vmatpush1.msra.mxu0 0.0
    %2794 = vmatprep.subr.mxu0 0.0
    %2795 = vmatpush1.msra.mxu0 0.0
    %v2796 = vand.u32 %v1014, 4294901760
    %2797 = vmatprep.subr.mxu0 %v2796
    %v2798 = vand.u32 %v1013, 4294901760
    %2799 = vmatpush1.msra.mxu0 %v2798
    %v2800 = vand.u32 %v1012, 4294901760
    %2801 = vmatprep.subr.mxu0 %v2800
    %v2802 = vand.u32 %v1011, 4294901760
    %2803 = vmatpush1.msra.mxu0 %v2802
    %v2804 = vand.u32 %v1010, 4294901760
    %2805 = vmatprep.subr.mxu0 %v2804
    %v2806 = vand.u32 %v1009, 4294901760
    %2807 = vmatpush1.msra.mxu0 %v2806
    %v2808 = vand.u32 %v1008, 4294901760
    %2809 = vmatprep.subr.mxu0 %v2808
    %v2810 = vand.u32 %v1007, 4294901760
    %2811 = vmatpush1.msra.mxu0 %v2810
    %v2812 = vand.u32 %v1006, 4294901760
    %2813 = vmatprep.subr.mxu0 %v2812
    %v2814 = vand.u32 %v1005, 4294901760
    %2815 = vmatpush1.msra.mxu0 %v2814
    %v2816 = vand.u32 %v1004, 4294901760
    %2817 = vmatprep.subr.mxu0 %v2816
    %v2818 = vand.u32 %v1003, 4294901760
    %2819 = vmatpush1.msra.mxu0 %v2818
    %v2820 = vand.u32 %v1002, 4294901760
    %2821 = vmatprep.subr.mxu0 %v2820
    %v2822 = vand.u32 %v1001, 4294901760
    %2823 = vmatpush1.msra.mxu0 %v2822
    %v2824 = vand.u32 %v1000, 4294901760
    %2825 = vmatprep.subr.mxu0 %v2824
    %v2826 = vand.u32 %v999, 4294901760
    %2827 = vmatpush1.msra.mxu0 %v2826
    %2828 = vmatprep.subr.mxu0 0.0
    %2829 = vmatpush2.msra.mxu0 0.0
    %2830 = vmatprep.subr.mxu0 0.0
    %2831 = vmatpush2.msra.mxu0 0.0
    %2832 = vmatprep.subr.mxu0 0.0
    %2833 = vmatpush2.msra.mxu0 0.0
    %2834 = vmatprep.subr.mxu0 0.0
    %2835 = vmatpush2.msra.mxu0 0.0
    %2836 = vmatprep.subr.mxu0 0.0
    %2837 = vmatpush2.msra.mxu0 0.0
    %2838 = vmatprep.subr.mxu0 0.0
    %2839 = vmatpush2.msra.mxu0 0.0
    %2840 = vmatprep.subr.mxu0 0.0
    %2841 = vmatpush2.msra.mxu0 0.0
    %2842 = vmatprep.subr.mxu0 0.0
    %2843 = vmatpush2.msra.mxu0 0.0
    %2844 = vmatprep.subr.mxu0 0.0
    %2845 = vmatpush2.msra.mxu0 0.0
    %2846 = vmatprep.subr.mxu0 0.0
    %2847 = vmatpush2.msra.mxu0 0.0
    %2848 = vmatprep.subr.mxu0 0.0
    %2849 = vmatpush2.msra.mxu0 0.0
    %2850 = vmatprep.subr.mxu0 0.0
    %2851 = vmatpush2.msra.mxu0 0.0
    %2852 = vmatprep.subr.mxu0 0.0
    %2853 = vmatpush2.msra.mxu0 0.0
    %2854 = vmatprep.subr.mxu0 0.0
    %2855 = vmatpush2.msra.mxu0 0.0
    %2856 = vmatprep.subr.mxu0 0.0
    %2857 = vmatpush2.msra.mxu0 0.0
    %2858 = vmatprep.subr.mxu0 0.0
    %2859 = vmatpush2.msra.mxu0 0.0
    %2860 = vmatprep.mubr.f32.mxu0 0.0
    %v2861 = vand.u32 %v2429, 4294901760
    %v2862 = vsub.f32 %v2429, %v2861
    %v2863 = vand.u32 %v2862, 4294901760
    %2864 = vmatmul.mubr.f32.gmra.mxu0 %v2863
    %v2865 = vpop.f32.mrf.mxu0
    %v2866 = vadd.f32 %v2776, %v2865
    %v2867 = vpop.f32.mrf.mxu0
    %v2868 = vadd.f32 %v2778, %v2867
    %2869 = vdwg.mxu0
    %2870 = vmatprep.subr.mxu0 0.0
    %2871 = vmatpush1.msra.mxu0 0.0
    %2872 = vmatprep.subr.mxu0 0.0
    %2873 = vmatpush1.msra.mxu0 0.0
    %2874 = vmatprep.subr.mxu0 0.0
    %2875 = vmatpush1.msra.mxu0 0.0
    %2876 = vmatprep.subr.mxu0 0.0
    %2877 = vmatpush1.msra.mxu0 0.0
    %2878 = vmatprep.subr.mxu0 0.0
    %2879 = vmatpush1.msra.mxu0 0.0
    %2880 = vmatprep.subr.mxu0 0.0
    %2881 = vmatpush1.msra.mxu0 0.0
    %2882 = vmatprep.subr.mxu0 0.0
    %2883 = vmatpush1.msra.mxu0 0.0
    %2884 = vmatprep.subr.mxu0 0.0
    %2885 = vmatpush1.msra.mxu0 0.0
    %v2886 = vand.u32 %v1014, 4294901760
    %v2887 = vsub.f32 %v1014, %v2886
    %v2888 = vand.u32 %v2887, 4294901760
    %2889 = vmatprep.subr.mxu0 %v2888
    %v2890 = vand.u32 %v1013, 4294901760
    %v2891 = vsub.f32 %v1013, %v2890
    %v2892 = vand.u32 %v2891, 4294901760
    %2893 = vmatpush1.msra.mxu0 %v2892
    %v2894 = vand.u32 %v1012, 4294901760
    %v2895 = vsub.f32 %v1012, %v2894
    %v2896 = vand.u32 %v2895, 4294901760
    %2897 = vmatprep.subr.mxu0 %v2896
    %v2898 = vand.u32 %v1011, 4294901760
    %v2899 = vsub.f32 %v1011, %v2898
    %v2900 = vand.u32 %v2899, 4294901760
    %2901 = vmatpush1.msra.mxu0 %v2900
    %v2902 = vand.u32 %v1010, 4294901760
    %v2903 = vsub.f32 %v1010, %v2902
    %v2904 = vand.u32 %v2903, 4294901760
    %2905 = vmatprep.subr.mxu0 %v2904
    %v2906 = vand.u32 %v1009, 4294901760
    %v2907 = vsub.f32 %v1009, %v2906
    %v2908 = vand.u32 %v2907, 4294901760
    %2909 = vmatpush1.msra.mxu0 %v2908
    %v2910 = vand.u32 %v1008, 4294901760
    %v2911 = vsub.f32 %v1008, %v2910
    %v2912 = vand.u32 %v2911, 4294901760
    %2913 = vmatprep.subr.mxu0 %v2912
    %v2914 = vand.u32 %v1007, 4294901760
    %v2915 = vsub.f32 %v1007, %v2914
    %v2916 = vand.u32 %v2915, 4294901760
    %2917 = vmatpush1.msra.mxu0 %v2916
    %v2918 = vand.u32 %v1006, 4294901760
    %v2919 = vsub.f32 %v1006, %v2918
    %v2920 = vand.u32 %v2919, 4294901760
    %2921 = vmatprep.subr.mxu0 %v2920
    %v2922 = vand.u32 %v1005, 4294901760
    %v2923 = vsub.f32 %v1005, %v2922
    %v2924 = vand.u32 %v2923, 4294901760
    %2925 = vmatpush1.msra.mxu0 %v2924
    %v2926 = vand.u32 %v1004, 4294901760
    %v2927 = vsub.f32 %v1004, %v2926
    %v2928 = vand.u32 %v2927, 4294901760
    %2929 = vmatprep.subr.mxu0 %v2928
    %v2930 = vand.u32 %v1003, 4294901760
    %v2931 = vsub.f32 %v1003, %v2930
    %v2932 = vand.u32 %v2931, 4294901760
    %2933 = vmatpush1.msra.mxu0 %v2932
    %v2934 = vand.u32 %v1002, 4294901760
    %v2935 = vsub.f32 %v1002, %v2934
    %v2936 = vand.u32 %v2935, 4294901760
    %2937 = vmatprep.subr.mxu0 %v2936
    %v2938 = vand.u32 %v1001, 4294901760
    %v2939 = vsub.f32 %v1001, %v2938
    %v2940 = vand.u32 %v2939, 4294901760
    %2941 = vmatpush1.msra.mxu0 %v2940
    %v2942 = vand.u32 %v1000, 4294901760
    %v2943 = vsub.f32 %v1000, %v2942
    %v2944 = vand.u32 %v2943, 4294901760
    %2945 = vmatprep.subr.mxu0 %v2944
    %v2946 = vand.u32 %v999, 4294901760
    %v2947 = vsub.f32 %v999, %v2946
    %v2948 = vand.u32 %v2947, 4294901760
    %2949 = vmatpush1.msra.mxu0 %v2948
    %2950 = vmatprep.subr.mxu0 0.0
    %2951 = vmatpush2.msra.mxu0 0.0
    %2952 = vmatprep.subr.mxu0 0.0
    %2953 = vmatpush2.msra.mxu0 0.0
    %2954 = vmatprep.subr.mxu0 0.0
    %2955 = vmatpush2.msra.mxu0 0.0
    %2956 = vmatprep.subr.mxu0 0.0
    %2957 = vmatpush2.msra.mxu0 0.0
    %2958 = vmatprep.subr.mxu0 0.0
    %2959 = vmatpush2.msra.mxu0 0.0
    %2960 = vmatprep.subr.mxu0 0.0
    %2961 = vmatpush2.msra.mxu0 0.0
    %2962 = vmatprep.subr.mxu0 0.0
    %2963 = vmatpush2.msra.mxu0 0.0
    %2964 = vmatprep.subr.mxu0 0.0
    %2965 = vmatpush2.msra.mxu0 0.0
    %2966 = vmatprep.subr.mxu0 0.0
    %2967 = vmatpush2.msra.mxu0 0.0
    %2968 = vmatprep.subr.mxu0 0.0
    %2969 = vmatpush2.msra.mxu0 0.0
    %2970 = vmatprep.subr.mxu0 0.0
    %2971 = vmatpush2.msra.mxu0 0.0
    %2972 = vmatprep.subr.mxu0 0.0
    %2973 = vmatpush2.msra.mxu0 0.0
    %2974 = vmatprep.subr.mxu0 0.0
    %2975 = vmatpush2.msra.mxu0 0.0
    %2976 = vmatprep.subr.mxu0 0.0
    %2977 = vmatpush2.msra.mxu0 0.0
    %2978 = vmatprep.subr.mxu0 0.0
    %2979 = vmatpush2.msra.mxu0 0.0
    %2980 = vmatprep.subr.mxu0 0.0
    %2981 = vmatpush2.msra.mxu0 0.0
    %2982 = vmatprep.mubr.f32.mxu0 0.0
    %v2983 = vand.u32 %v2429, 4294901760
    %2984 = vmatmul.mubr.f32.gmra.mxu0 %v2983
    %v2985 = vpop.f32.mrf.mxu0
    %v2986 = vadd.f32 %v2866, %v2985
    %v2987 = vpop.f32.mrf.mxu0
    %v2988 = vadd.f32 %v2868, %v2987
    %2989 = vdwg.mxu0
    %2990 = vmatprep.subr.mxu0 0.0
    %2991 = vmatpush1.msra.mxu0 0.0
    %2992 = vmatprep.subr.mxu0 0.0
    %2993 = vmatpush1.msra.mxu0 0.0
    %2994 = vmatprep.subr.mxu0 0.0
    %2995 = vmatpush1.msra.mxu0 0.0
    %2996 = vmatprep.subr.mxu0 0.0
    %2997 = vmatpush1.msra.mxu0 0.0
    %2998 = vmatprep.subr.mxu0 0.0
    %2999 = vmatpush1.msra.mxu0 0.0
    %3000 = vmatprep.subr.mxu0 0.0
    %3001 = vmatpush1.msra.mxu0 0.0
    %3002 = vmatprep.subr.mxu0 0.0
    %3003 = vmatpush1.msra.mxu0 0.0
    %3004 = vmatprep.subr.mxu0 0.0
    %3005 = vmatpush1.msra.mxu0 0.0
    %v3006 = vand.u32 %v1014, 4294901760
    %3007 = vmatprep.subr.mxu0 %v3006
    %v3008 = vand.u32 %v1013, 4294901760
    %3009 = vmatpush1.msra.mxu0 %v3008
    %v3010 = vand.u32 %v1012, 4294901760
    %3011 = vmatprep.subr.mxu0 %v3010
    %v3012 = vand.u32 %v1011, 4294901760
    %3013 = vmatpush1.msra.mxu0 %v3012
    %v3014 = vand.u32 %v1010, 4294901760
    %3015 = vmatprep.subr.mxu0 %v3014
    %v3016 = vand.u32 %v1009, 4294901760
    %3017 = vmatpush1.msra.mxu0 %v3016
    %v3018 = vand.u32 %v1008, 4294901760
    %3019 = vmatprep.subr.mxu0 %v3018
    %v3020 = vand.u32 %v1007, 4294901760
    %3021 = vmatpush1.msra.mxu0 %v3020
    %v3022 = vand.u32 %v1006, 4294901760
    %3023 = vmatprep.subr.mxu0 %v3022
    %v3024 = vand.u32 %v1005, 4294901760
    %3025 = vmatpush1.msra.mxu0 %v3024
    %v3026 = vand.u32 %v1004, 4294901760
    %3027 = vmatprep.subr.mxu0 %v3026
    %v3028 = vand.u32 %v1003, 4294901760
    %3029 = vmatpush1.msra.mxu0 %v3028
    %v3030 = vand.u32 %v1002, 4294901760
    %3031 = vmatprep.subr.mxu0 %v3030
    %v3032 = vand.u32 %v1001, 4294901760
    %3033 = vmatpush1.msra.mxu0 %v3032
    %v3034 = vand.u32 %v1000, 4294901760
    %3035 = vmatprep.subr.mxu0 %v3034
    %v3036 = vand.u32 %v999, 4294901760
    %3037 = vmatpush1.msra.mxu0 %v3036
    %3038 = vmatprep.subr.mxu0 0.0
    %3039 = vmatpush2.msra.mxu0 0.0
    %3040 = vmatprep.subr.mxu0 0.0
    %3041 = vmatpush2.msra.mxu0 0.0
    %3042 = vmatprep.subr.mxu0 0.0
    %3043 = vmatpush2.msra.mxu0 0.0
    %3044 = vmatprep.subr.mxu0 0.0
    %3045 = vmatpush2.msra.mxu0 0.0
    %3046 = vmatprep.subr.mxu0 0.0
    %3047 = vmatpush2.msra.mxu0 0.0
    %3048 = vmatprep.subr.mxu0 0.0
    %3049 = vmatpush2.msra.mxu0 0.0
    %3050 = vmatprep.subr.mxu0 0.0
    %3051 = vmatpush2.msra.mxu0 0.0
    %3052 = vmatprep.subr.mxu0 0.0
    %3053 = vmatpush2.msra.mxu0 0.0
    %3054 = vmatprep.subr.mxu0 0.0
    %3055 = vmatpush2.msra.mxu0 0.0
    %3056 = vmatprep.subr.mxu0 0.0
    %3057 = vmatpush2.msra.mxu0 0.0
    %3058 = vmatprep.subr.mxu0 0.0
    %3059 = vmatpush2.msra.mxu0 0.0
    %3060 = vmatprep.subr.mxu0 0.0
    %3061 = vmatpush2.msra.mxu0 0.0
    %3062 = vmatprep.subr.mxu0 0.0
    %3063 = vmatpush2.msra.mxu0 0.0
    %3064 = vmatprep.subr.mxu0 0.0
    %3065 = vmatpush2.msra.mxu0 0.0
    %3066 = vmatprep.subr.mxu0 0.0
    %3067 = vmatpush2.msra.mxu0 0.0
    %3068 = vmatprep.subr.mxu0 0.0
    %3069 = vmatpush2.msra.mxu0 0.0
    %3070 = vmatprep.mubr.f32.mxu0 0.0
    %v3071 = vand.u32 %v2429, 4294901760
    %3072 = vmatmul.mubr.f32.gmra.mxu0 %v3071
    %v3073 = vpop.f32.mrf.mxu0
    %v3074 = vadd.f32 %v2986, %v3073
    %v3075 = vpop.f32.mrf.mxu0
    %v3076 = vadd.f32 %v2988, %v3075
    %3077 = vdwg.mxu0
    %v3078 = vadd.f32 %v966, %v3074
    %v3079 = vxor.u32 %v3078, 2147483648
    %v3080 = vmul.f32 %v3079, 1.442695
    %v3081 = vpow.pop %v3080
    %v3082 = vadd.f32 %v3081, 1.0
    %v3083 = vrcp.pop %v3082
    %v3084 = vmul.f32 1.0, %v3083
    %v3085 = vmul.f32 %v3084, 2.0
    %v3086 = vsub.f32 %v3085, 1.0
    %v3087 = vmul.f32 %v3084, %v2376
    %3089 = vrot.lane.b32.xlu0 %v3086, 64
    %v3090 = vpop.permute.xlu0 %3089
    %v3092 = vmul.f32 %v3084, %v3090
    %3094 = vrot.lane.b32.xlu0 %v3092, 32
    %v3095 = vpop.permute.xlu0 %3094
    %v3097 = vadd.f32 %v3087, %v3095
    %v3098 = vtanh.pop %v3097
    %3100 = vrot.lane.b32.xlu0 %v3098, 64
    %v3101 = vpop.permute.xlu0 %3100
    %v3103 = vmul.f32 %v3084, %v3101
    %v3104 = vadd.f32 %v3076, %v2387
    %v3105 = vxor.u32 %v3104, 2147483648
    %v3106 = vmul.f32 %v3105, 1.442695
    %v3107 = vpow.pop %v3106
    %v3108 = vadd.f32 %v3107, 1.0
    %v3109 = vrcp.pop %v3108
    %v3110 = vmul.f32 1.0, %v3109
    %v3111 = vmul.f32 %v3110, 2.0
    %v3112 = vsub.f32 %v3111, 1.0
    %v3113 = vmul.f32 %v3110, %v2412
    %3115 = vrot.lane.b32.xlu0 %v3112, 64
    %v3116 = vpop.permute.xlu0 %3115
    %v3118 = vmul.f32 %v3110, %v3116
    %3120 = vrot.lane.b32.xlu0 %v3118, 32
    %v3121 = vpop.permute.xlu0 %3120
    %v3123 = vadd.f32 %v3113, %v3121
    %v3124 = vtanh.pop %v3123
    %3126 = vrot.lane.b32.xlu0 %v3124, 64
    %v3127 = vpop.permute.xlu0 %3126
    %v3129 = vmul.f32 %v3110, %v3127
    %3131 = vrot.lane.b32.xlu0 %v3103, 32
    %v3132 = vpop.permute.xlu0 %3131
    %3135 = vrot.lane.b32.xlu0 %v3129, 64
    %v3136 = vpop.permute.xlu0 %3135
    %v3138 = vsel %vm1026, %v3132, %v3136
    %v3140 = vsel %vm136, %v3138, 0
    %3142 = vmatprep.subr.mxu0 0.0
    %3143 = vmatpush1.msra.mxu0 0.0
    %3144 = vmatprep.subr.mxu0 0.0
    %3145 = vmatpush1.msra.mxu0 0.0
    %3146 = vmatprep.subr.mxu0 0.0
    %3147 = vmatpush1.msra.mxu0 0.0
    %3148 = vmatprep.subr.mxu0 0.0
    %3149 = vmatpush1.msra.mxu0 0.0
    %3150 = vmatprep.subr.mxu0 0.0
    %3151 = vmatpush1.msra.mxu0 0.0
    %3152 = vmatprep.subr.mxu0 0.0
    %3153 = vmatpush1.msra.mxu0 0.0
    %3154 = vmatprep.subr.mxu0 0.0
    %3155 = vmatpush1.msra.mxu0 0.0
    %3156 = vmatprep.subr.mxu0 0.0
    %3157 = vmatpush1.msra.mxu0 0.0
    %v3158 = vand.u32 %v1014, 4294901760
    %3159 = vmatprep.subr.mxu0 %v3158
    %v3160 = vand.u32 %v1013, 4294901760
    %3161 = vmatpush1.msra.mxu0 %v3160
    %v3162 = vand.u32 %v1012, 4294901760
    %3163 = vmatprep.subr.mxu0 %v3162
    %v3164 = vand.u32 %v1011, 4294901760
    %3165 = vmatpush1.msra.mxu0 %v3164
    %v3166 = vand.u32 %v1010, 4294901760
    %3167 = vmatprep.subr.mxu0 %v3166
    %v3168 = vand.u32 %v1009, 4294901760
    %3169 = vmatpush1.msra.mxu0 %v3168
    %v3170 = vand.u32 %v1008, 4294901760
    %3171 = vmatprep.subr.mxu0 %v3170
    %v3172 = vand.u32 %v1007, 4294901760
    %3173 = vmatpush1.msra.mxu0 %v3172
    %v3174 = vand.u32 %v1006, 4294901760
    %3175 = vmatprep.subr.mxu0 %v3174
    %v3176 = vand.u32 %v1005, 4294901760
    %3177 = vmatpush1.msra.mxu0 %v3176
    %v3178 = vand.u32 %v1004, 4294901760
    %3179 = vmatprep.subr.mxu0 %v3178
    %v3180 = vand.u32 %v1003, 4294901760
    %3181 = vmatpush1.msra.mxu0 %v3180
    %v3182 = vand.u32 %v1002, 4294901760
    %3183 = vmatprep.subr.mxu0 %v3182
    %v3184 = vand.u32 %v1001, 4294901760
    %3185 = vmatpush1.msra.mxu0 %v3184
    %v3186 = vand.u32 %v1000, 4294901760
    %3187 = vmatprep.subr.mxu0 %v3186
    %v3188 = vand.u32 %v999, 4294901760
    %3189 = vmatpush1.msra.mxu0 %v3188
    %3190 = vmatprep.subr.mxu0 0.0
    %3191 = vmatpush2.msra.mxu0 0.0
    %3192 = vmatprep.subr.mxu0 0.0
    %3193 = vmatpush2.msra.mxu0 0.0
    %3194 = vmatprep.subr.mxu0 0.0
    %3195 = vmatpush2.msra.mxu0 0.0
    %3196 = vmatprep.subr.mxu0 0.0
    %3197 = vmatpush2.msra.mxu0 0.0
    %3198 = vmatprep.subr.mxu0 0.0
    %3199 = vmatpush2.msra.mxu0 0.0
    %3200 = vmatprep.subr.mxu0 0.0
    %3201 = vmatpush2.msra.mxu0 0.0
    %3202 = vmatprep.subr.mxu0 0.0
    %3203 = vmatpush2.msra.mxu0 0.0
    %3204 = vmatprep.subr.mxu0 0.0
    %3205 = vmatpush2.msra.mxu0 0.0
    %3206 = vmatprep.subr.mxu0 0.0
    %3207 = vmatpush2.msra.mxu0 0.0
    %3208 = vmatprep.subr.mxu0 0.0
    %3209 = vmatpush2.msra.mxu0 0.0
    %3210 = vmatprep.subr.mxu0 0.0
    %3211 = vmatpush2.msra.mxu0 0.0
    %3212 = vmatprep.subr.mxu0 0.0
    %3213 = vmatpush2.msra.mxu0 0.0
    %3214 = vmatprep.subr.mxu0 0.0
    %3215 = vmatpush2.msra.mxu0 0.0
    %3216 = vmatprep.subr.mxu0 0.0
    %3217 = vmatpush2.msra.mxu0 0.0
    %3218 = vmatprep.subr.mxu0 0.0
    %3219 = vmatpush2.msra.mxu0 0.0
    %3220 = vmatprep.subr.mxu0 0.0
    %3221 = vmatpush2.msra.mxu0 0.0
    %3222 = vmatprep.mubr.f32.mxu0 0.0
    %v3223 = vand.u32 %v3140, 4294901760
    %v3224 = vsub.f32 %v3140, %v3223
    %v3225 = vand.u32 %v3224, 4294901760
    %v3226 = vsub.f32 %v3224, %v3225
    %v3227 = vand.u32 %v3226, 4294901760
    %3228 = vmatmul.mubr.f32.gmra.mxu0 %v3227
    %v3229 = vpop.f32.mrf.mxu0
    %v3230 = vadd.f32 0.0, %v3229
    %v3231 = vpop.f32.mrf.mxu0
    %v3232 = vadd.f32 0.0, %v3231
    %3233 = vdwg.mxu0
    %3234 = vmatprep.subr.mxu0 0.0
    %3235 = vmatpush1.msra.mxu0 0.0
    %3236 = vmatprep.subr.mxu0 0.0
    %3237 = vmatpush1.msra.mxu0 0.0
    %3238 = vmatprep.subr.mxu0 0.0
    %3239 = vmatpush1.msra.mxu0 0.0
    %3240 = vmatprep.subr.mxu0 0.0
    %3241 = vmatpush1.msra.mxu0 0.0
    %3242 = vmatprep.subr.mxu0 0.0
    %3243 = vmatpush1.msra.mxu0 0.0
    %3244 = vmatprep.subr.mxu0 0.0
    %3245 = vmatpush1.msra.mxu0 0.0
    %3246 = vmatprep.subr.mxu0 0.0
    %3247 = vmatpush1.msra.mxu0 0.0
    %3248 = vmatprep.subr.mxu0 0.0
    %3249 = vmatpush1.msra.mxu0 0.0
    %v3250 = vand.u32 %v1014, 4294901760
    %v3251 = vsub.f32 %v1014, %v3250
    %v3252 = vand.u32 %v3251, 4294901760
    %v3253 = vsub.f32 %v3251, %v3252
    %v3254 = vand.u32 %v3253, 4294901760
    %3255 = vmatprep.subr.mxu0 %v3254
    %v3256 = vand.u32 %v1013, 4294901760
    %v3257 = vsub.f32 %v1013, %v3256
    %v3258 = vand.u32 %v3257, 4294901760
    %v3259 = vsub.f32 %v3257, %v3258
    %v3260 = vand.u32 %v3259, 4294901760
    %3261 = vmatpush1.msra.mxu0 %v3260
    %v3262 = vand.u32 %v1012, 4294901760
    %v3263 = vsub.f32 %v1012, %v3262
    %v3264 = vand.u32 %v3263, 4294901760
    %v3265 = vsub.f32 %v3263, %v3264
    %v3266 = vand.u32 %v3265, 4294901760
    %3267 = vmatprep.subr.mxu0 %v3266
    %v3268 = vand.u32 %v1011, 4294901760
    %v3269 = vsub.f32 %v1011, %v3268
    %v3270 = vand.u32 %v3269, 4294901760
    %v3271 = vsub.f32 %v3269, %v3270
    %v3272 = vand.u32 %v3271, 4294901760
    %3273 = vmatpush1.msra.mxu0 %v3272
    %v3274 = vand.u32 %v1010, 4294901760
    %v3275 = vsub.f32 %v1010, %v3274
    %v3276 = vand.u32 %v3275, 4294901760
    %v3277 = vsub.f32 %v3275, %v3276
    %v3278 = vand.u32 %v3277, 4294901760
    %3279 = vmatprep.subr.mxu0 %v3278
    %v3280 = vand.u32 %v1009, 4294901760
    %v3281 = vsub.f32 %v1009, %v3280
    %v3282 = vand.u32 %v3281, 4294901760
    %v3283 = vsub.f32 %v3281, %v3282
    %v3284 = vand.u32 %v3283, 4294901760
    %3285 = vmatpush1.msra.mxu0 %v3284
    %v3286 = vand.u32 %v1008, 4294901760
    %v3287 = vsub.f32 %v1008, %v3286
    %v3288 = vand.u32 %v3287, 4294901760
    %v3289 = vsub.f32 %v3287, %v3288
    %v3290 = vand.u32 %v3289, 4294901760
    %3291 = vmatprep.subr.mxu0 %v3290
    %v3292 = vand.u32 %v1007, 4294901760
    %v3293 = vsub.f32 %v1007, %v3292
    %v3294 = vand.u32 %v3293, 4294901760
    %v3295 = vsub.f32 %v3293, %v3294
    %v3296 = vand.u32 %v3295, 4294901760
    %3297 = vmatpush1.msra.mxu0 %v3296
    %v3298 = vand.u32 %v1006, 4294901760
    %v3299 = vsub.f32 %v1006, %v3298
    %v3300 = vand.u32 %v3299, 4294901760
    %v3301 = vsub.f32 %v3299, %v3300
    %v3302 = vand.u32 %v3301, 4294901760
    %3303 = vmatprep.subr.mxu0 %v3302
    %v3304 = vand.u32 %v1005, 4294901760
    %v3305 = vsub.f32 %v1005, %v3304
    %v3306 = vand.u32 %v3305, 4294901760
    %v3307 = vsub.f32 %v3305, %v3306
    %v3308 = vand.u32 %v3307, 4294901760
    %3309 = vmatpush1.msra.mxu0 %v3308
    %v3310 = vand.u32 %v1004, 4294901760
    %v3311 = vsub.f32 %v1004, %v3310
    %v3312 = vand.u32 %v3311, 4294901760
    %v3313 = vsub.f32 %v3311, %v3312
    %v3314 = vand.u32 %v3313, 4294901760
    %3315 = vmatprep.subr.mxu0 %v3314
    %v3316 = vand.u32 %v1003, 4294901760
    %v3317 = vsub.f32 %v1003, %v3316
    %v3318 = vand.u32 %v3317, 4294901760
    %v3319 = vsub.f32 %v3317, %v3318
    %v3320 = vand.u32 %v3319, 4294901760
    %3321 = vmatpush1.msra.mxu0 %v3320
    %v3322 = vand.u32 %v1002, 4294901760
    %v3323 = vsub.f32 %v1002, %v3322
    %v3324 = vand.u32 %v3323, 4294901760
    %v3325 = vsub.f32 %v3323, %v3324
    %v3326 = vand.u32 %v3325, 4294901760
    %3327 = vmatprep.subr.mxu0 %v3326
    %v3328 = vand.u32 %v1001, 4294901760
    %v3329 = vsub.f32 %v1001, %v3328
    %v3330 = vand.u32 %v3329, 4294901760
    %v3331 = vsub.f32 %v3329, %v3330
    %v3332 = vand.u32 %v3331, 4294901760
    %3333 = vmatpush1.msra.mxu0 %v3332
    %v3334 = vand.u32 %v1000, 4294901760
    %v3335 = vsub.f32 %v1000, %v3334
    %v3336 = vand.u32 %v3335, 4294901760
    %v3337 = vsub.f32 %v3335, %v3336
    %v3338 = vand.u32 %v3337, 4294901760
    %3339 = vmatprep.subr.mxu0 %v3338
    %v3340 = vand.u32 %v999, 4294901760
    %v3341 = vsub.f32 %v999, %v3340
    %v3342 = vand.u32 %v3341, 4294901760
    %v3343 = vsub.f32 %v3341, %v3342
    %v3344 = vand.u32 %v3343, 4294901760
    %3345 = vmatpush1.msra.mxu0 %v3344
    %3346 = vmatprep.subr.mxu0 0.0
    %3347 = vmatpush2.msra.mxu0 0.0
    %3348 = vmatprep.subr.mxu0 0.0
    %3349 = vmatpush2.msra.mxu0 0.0
    %3350 = vmatprep.subr.mxu0 0.0
    %3351 = vmatpush2.msra.mxu0 0.0
    %3352 = vmatprep.subr.mxu0 0.0
    %3353 = vmatpush2.msra.mxu0 0.0
    %3354 = vmatprep.subr.mxu0 0.0
    %3355 = vmatpush2.msra.mxu0 0.0
    %3356 = vmatprep.subr.mxu0 0.0
    %3357 = vmatpush2.msra.mxu0 0.0
    %3358 = vmatprep.subr.mxu0 0.0
    %3359 = vmatpush2.msra.mxu0 0.0
    %3360 = vmatprep.subr.mxu0 0.0
    %3361 = vmatpush2.msra.mxu0 0.0
    %3362 = vmatprep.subr.mxu0 0.0
    %3363 = vmatpush2.msra.mxu0 0.0
    %3364 = vmatprep.subr.mxu0 0.0
    %3365 = vmatpush2.msra.mxu0 0.0
    %3366 = vmatprep.subr.mxu0 0.0
    %3367 = vmatpush2.msra.mxu0 0.0
    %3368 = vmatprep.subr.mxu0 0.0
    %3369 = vmatpush2.msra.mxu0 0.0
    %3370 = vmatprep.subr.mxu0 0.0
    %3371 = vmatpush2.msra.mxu0 0.0
    %3372 = vmatprep.subr.mxu0 0.0
    %3373 = vmatpush2.msra.mxu0 0.0
    %3374 = vmatprep.subr.mxu0 0.0
    %3375 = vmatpush2.msra.mxu0 0.0
    %3376 = vmatprep.subr.mxu0 0.0
    %3377 = vmatpush2.msra.mxu0 0.0
    %3378 = vmatprep.mubr.f32.mxu0 0.0
    %v3379 = vand.u32 %v3140, 4294901760
    %3380 = vmatmul.mubr.f32.gmra.mxu0 %v3379
    %v3381 = vpop.f32.mrf.mxu0
    %v3382 = vadd.f32 %v3230, %v3381
    %v3383 = vpop.f32.mrf.mxu0
    %v3384 = vadd.f32 %v3232, %v3383
    %3385 = vdwg.mxu0
    %3386 = vmatprep.subr.mxu0 0.0
    %3387 = vmatpush1.msra.mxu0 0.0
    %3388 = vmatprep.subr.mxu0 0.0
    %3389 = vmatpush1.msra.mxu0 0.0
    %3390 = vmatprep.subr.mxu0 0.0
    %3391 = vmatpush1.msra.mxu0 0.0
    %3392 = vmatprep.subr.mxu0 0.0
    %3393 = vmatpush1.msra.mxu0 0.0
    %3394 = vmatprep.subr.mxu0 0.0
    %3395 = vmatpush1.msra.mxu0 0.0
    %3396 = vmatprep.subr.mxu0 0.0
    %3397 = vmatpush1.msra.mxu0 0.0
    %3398 = vmatprep.subr.mxu0 0.0
    %3399 = vmatpush1.msra.mxu0 0.0
    %3400 = vmatprep.subr.mxu0 0.0
    %3401 = vmatpush1.msra.mxu0 0.0
    %v3402 = vand.u32 %v1014, 4294901760
    %v3403 = vsub.f32 %v1014, %v3402
    %3404 = vmatprep.subr.mxu0 %v3403
    %v3405 = vand.u32 %v1013, 4294901760
    %v3406 = vsub.f32 %v1013, %v3405
    %3407 = vmatpush1.msra.mxu0 %v3406
    %v3408 = vand.u32 %v1012, 4294901760
    %v3409 = vsub.f32 %v1012, %v3408
    %3410 = vmatprep.subr.mxu0 %v3409
    %v3411 = vand.u32 %v1011, 4294901760
    %v3412 = vsub.f32 %v1011, %v3411
    %3413 = vmatpush1.msra.mxu0 %v3412
    %v3414 = vand.u32 %v1010, 4294901760
    %v3415 = vsub.f32 %v1010, %v3414
    %3416 = vmatprep.subr.mxu0 %v3415
    %v3417 = vand.u32 %v1009, 4294901760
    %v3418 = vsub.f32 %v1009, %v3417
    %3419 = vmatpush1.msra.mxu0 %v3418
    %v3420 = vand.u32 %v1008, 4294901760
    %v3421 = vsub.f32 %v1008, %v3420
    %3422 = vmatprep.subr.mxu0 %v3421
    %v3423 = vand.u32 %v1007, 4294901760
    %v3424 = vsub.f32 %v1007, %v3423
    %3425 = vmatpush1.msra.mxu0 %v3424
    %v3426 = vand.u32 %v1006, 4294901760
    %v3427 = vsub.f32 %v1006, %v3426
    %3428 = vmatprep.subr.mxu0 %v3427
    %v3429 = vand.u32 %v1005, 4294901760
    %v3430 = vsub.f32 %v1005, %v3429
    %3431 = vmatpush1.msra.mxu0 %v3430
    %v3432 = vand.u32 %v1004, 4294901760
    %v3433 = vsub.f32 %v1004, %v3432
    %3434 = vmatprep.subr.mxu0 %v3433
    %v3435 = vand.u32 %v1003, 4294901760
    %v3436 = vsub.f32 %v1003, %v3435
    %3437 = vmatpush1.msra.mxu0 %v3436
    %v3438 = vand.u32 %v1002, 4294901760
    %v3439 = vsub.f32 %v1002, %v3438
    %3440 = vmatprep.subr.mxu0 %v3439
    %v3441 = vand.u32 %v1001, 4294901760
    %v3442 = vsub.f32 %v1001, %v3441
    %3443 = vmatpush1.msra.mxu0 %v3442
    %v3444 = vand.u32 %v1000, 4294901760
    %v3445 = vsub.f32 %v1000, %v3444
    %3446 = vmatprep.subr.mxu0 %v3445
    %v3447 = vand.u32 %v999, 4294901760
    %v3448 = vsub.f32 %v999, %v3447
    %3449 = vmatpush1.msra.mxu0 %v3448
    %3450 = vmatprep.subr.mxu0 0.0
    %3451 = vmatpush2.msra.mxu0 0.0
    %3452 = vmatprep.subr.mxu0 0.0
    %3453 = vmatpush2.msra.mxu0 0.0
    %3454 = vmatprep.subr.mxu0 0.0
    %3455 = vmatpush2.msra.mxu0 0.0
    %3456 = vmatprep.subr.mxu0 0.0
    %3457 = vmatpush2.msra.mxu0 0.0
    %3458 = vmatprep.subr.mxu0 0.0
    %3459 = vmatpush2.msra.mxu0 0.0
    %3460 = vmatprep.subr.mxu0 0.0
    %3461 = vmatpush2.msra.mxu0 0.0
    %3462 = vmatprep.subr.mxu0 0.0
    %3463 = vmatpush2.msra.mxu0 0.0
    %3464 = vmatprep.subr.mxu0 0.0
    %3465 = vmatpush2.msra.mxu0 0.0
    %3466 = vmatprep.subr.mxu0 0.0
    %3467 = vmatpush2.msra.mxu0 0.0
    %3468 = vmatprep.subr.mxu0 0.0
    %3469 = vmatpush2.msra.mxu0 0.0
    %3470 = vmatprep.subr.mxu0 0.0
    %3471 = vmatpush2.msra.mxu0 0.0
    %3472 = vmatprep.subr.mxu0 0.0
    %3473 = vmatpush2.msra.mxu0 0.0
    %3474 = vmatprep.subr.mxu0 0.0
    %3475 = vmatpush2.msra.mxu0 0.0
    %3476 = vmatprep.subr.mxu0 0.0
    %3477 = vmatpush2.msra.mxu0 0.0
    %3478 = vmatprep.subr.mxu0 0.0
    %3479 = vmatpush2.msra.mxu0 0.0
    %3480 = vmatprep.subr.mxu0 0.0
    %3481 = vmatpush2.msra.mxu0 0.0
    %3482 = vmatprep.mubr.f32.mxu0 0.0
    %v3483 = vand.u32 %v3140, 4294901760
    %v3484 = vsub.f32 %v3140, %v3483
    %3485 = vmatmul.mubr.f32.gmra.mxu0 %v3484
    %v3486 = vpop.f32.mrf.mxu0
    %v3487 = vadd.f32 %v3382, %v3486
    %v3488 = vpop.f32.mrf.mxu0
    %v3489 = vadd.f32 %v3384, %v3488
    %3490 = vdwg.mxu0
    %3491 = vmatprep.subr.mxu0 0.0
    %3492 = vmatpush1.msra.mxu0 0.0
    %3493 = vmatprep.subr.mxu0 0.0
    %3494 = vmatpush1.msra.mxu0 0.0
    %3495 = vmatprep.subr.mxu0 0.0
    %3496 = vmatpush1.msra.mxu0 0.0
    %3497 = vmatprep.subr.mxu0 0.0
    %3498 = vmatpush1.msra.mxu0 0.0
    %3499 = vmatprep.subr.mxu0 0.0
    %3500 = vmatpush1.msra.mxu0 0.0
    %3501 = vmatprep.subr.mxu0 0.0
    %3502 = vmatpush1.msra.mxu0 0.0
    %3503 = vmatprep.subr.mxu0 0.0
    %3504 = vmatpush1.msra.mxu0 0.0
    %3505 = vmatprep.subr.mxu0 0.0
    %3506 = vmatpush1.msra.mxu0 0.0
    %v3507 = vand.u32 %v1014, 4294901760
    %3508 = vmatprep.subr.mxu0 %v3507
    %v3509 = vand.u32 %v1013, 4294901760
    %3510 = vmatpush1.msra.mxu0 %v3509
    %v3511 = vand.u32 %v1012, 4294901760
    %3512 = vmatprep.subr.mxu0 %v3511
    %v3513 = vand.u32 %v1011, 4294901760
    %3514 = vmatpush1.msra.mxu0 %v3513
    %v3515 = vand.u32 %v1010, 4294901760
    %3516 = vmatprep.subr.mxu0 %v3515
    %v3517 = vand.u32 %v1009, 4294901760
    %3518 = vmatpush1.msra.mxu0 %v3517
    %v3519 = vand.u32 %v1008, 4294901760
    %3520 = vmatprep.subr.mxu0 %v3519
    %v3521 = vand.u32 %v1007, 4294901760
    %3522 = vmatpush1.msra.mxu0 %v3521
    %v3523 = vand.u32 %v1006, 4294901760
    %3524 = vmatprep.subr.mxu0 %v3523
    %v3525 = vand.u32 %v1005, 4294901760
    %3526 = vmatpush1.msra.mxu0 %v3525
    %v3527 = vand.u32 %v1004, 4294901760
    %3528 = vmatprep.subr.mxu0 %v3527
    %v3529 = vand.u32 %v1003, 4294901760
    %3530 = vmatpush1.msra.mxu0 %v3529
    %v3531 = vand.u32 %v1002, 4294901760
    %3532 = vmatprep.subr.mxu0 %v3531
    %v3533 = vand.u32 %v1001, 4294901760
    %3534 = vmatpush1.msra.mxu0 %v3533
    %v3535 = vand.u32 %v1000, 4294901760
    %3536 = vmatprep.subr.mxu0 %v3535
    %v3537 = vand.u32 %v999, 4294901760
    %3538 = vmatpush1.msra.mxu0 %v3537
    %3539 = vmatprep.subr.mxu0 0.0
    %3540 = vmatpush2.msra.mxu0 0.0
    %3541 = vmatprep.subr.mxu0 0.0
    %3542 = vmatpush2.msra.mxu0 0.0
    %3543 = vmatprep.subr.mxu0 0.0
    %3544 = vmatpush2.msra.mxu0 0.0
    %3545 = vmatprep.subr.mxu0 0.0
    %3546 = vmatpush2.msra.mxu0 0.0
    %3547 = vmatprep.subr.mxu0 0.0
    %3548 = vmatpush2.msra.mxu0 0.0
    %3549 = vmatprep.subr.mxu0 0.0
    %3550 = vmatpush2.msra.mxu0 0.0
    %3551 = vmatprep.subr.mxu0 0.0
    %3552 = vmatpush2.msra.mxu0 0.0
    %3553 = vmatprep.subr.mxu0 0.0
    %3554 = vmatpush2.msra.mxu0 0.0
    %3555 = vmatprep.subr.mxu0 0.0
    %3556 = vmatpush2.msra.mxu0 0.0
    %3557 = vmatprep.subr.mxu0 0.0
    %3558 = vmatpush2.msra.mxu0 0.0
    %3559 = vmatprep.subr.mxu0 0.0
    %3560 = vmatpush2.msra.mxu0 0.0
    %3561 = vmatprep.subr.mxu0 0.0
    %3562 = vmatpush2.msra.mxu0 0.0
    %3563 = vmatprep.subr.mxu0 0.0
    %3564 = vmatpush2.msra.mxu0 0.0
    %3565 = vmatprep.subr.mxu0 0.0
    %3566 = vmatpush2.msra.mxu0 0.0
    %3567 = vmatprep.subr.mxu0 0.0
    %3568 = vmatpush2.msra.mxu0 0.0
    %3569 = vmatprep.subr.mxu0 0.0
    %3570 = vmatpush2.msra.mxu0 0.0
    %3571 = vmatprep.mubr.f32.mxu0 0.0
    %v3572 = vand.u32 %v3140, 4294901760
    %v3573 = vsub.f32 %v3140, %v3572
    %v3574 = vand.u32 %v3573, 4294901760
    %3575 = vmatmul.mubr.f32.gmra.mxu0 %v3574
    %v3576 = vpop.f32.mrf.mxu0
    %v3577 = vadd.f32 %v3487, %v3576
    %v3578 = vpop.f32.mrf.mxu0
    %v3579 = vadd.f32 %v3489, %v3578
    %3580 = vdwg.mxu0
    %3581 = vmatprep.subr.mxu0 0.0
    %3582 = vmatpush1.msra.mxu0 0.0
    %3583 = vmatprep.subr.mxu0 0.0
    %3584 = vmatpush1.msra.mxu0 0.0
    %3585 = vmatprep.subr.mxu0 0.0
    %3586 = vmatpush1.msra.mxu0 0.0
    %3587 = vmatprep.subr.mxu0 0.0
    %3588 = vmatpush1.msra.mxu0 0.0
    %3589 = vmatprep.subr.mxu0 0.0
    %3590 = vmatpush1.msra.mxu0 0.0
    %3591 = vmatprep.subr.mxu0 0.0
    %3592 = vmatpush1.msra.mxu0 0.0
    %3593 = vmatprep.subr.mxu0 0.0
    %3594 = vmatpush1.msra.mxu0 0.0
    %3595 = vmatprep.subr.mxu0 0.0
    %3596 = vmatpush1.msra.mxu0 0.0
    %v3597 = vand.u32 %v1014, 4294901760
    %v3598 = vsub.f32 %v1014, %v3597
    %v3599 = vand.u32 %v3598, 4294901760
    %3600 = vmatprep.subr.mxu0 %v3599
    %v3601 = vand.u32 %v1013, 4294901760
    %v3602 = vsub.f32 %v1013, %v3601
    %v3603 = vand.u32 %v3602, 4294901760
    %3604 = vmatpush1.msra.mxu0 %v3603
    %v3605 = vand.u32 %v1012, 4294901760
    %v3606 = vsub.f32 %v1012, %v3605
    %v3607 = vand.u32 %v3606, 4294901760
    %3608 = vmatprep.subr.mxu0 %v3607
    %v3609 = vand.u32 %v1011, 4294901760
    %v3610 = vsub.f32 %v1011, %v3609
    %v3611 = vand.u32 %v3610, 4294901760
    %3612 = vmatpush1.msra.mxu0 %v3611
    %v3613 = vand.u32 %v1010, 4294901760
    %v3614 = vsub.f32 %v1010, %v3613
    %v3615 = vand.u32 %v3614, 4294901760
    %3616 = vmatprep.subr.mxu0 %v3615
    %v3617 = vand.u32 %v1009, 4294901760
    %v3618 = vsub.f32 %v1009, %v3617
    %v3619 = vand.u32 %v3618, 4294901760
    %3620 = vmatpush1.msra.mxu0 %v3619
    %v3621 = vand.u32 %v1008, 4294901760
    %v3622 = vsub.f32 %v1008, %v3621
    %v3623 = vand.u32 %v3622, 4294901760
    %3624 = vmatprep.subr.mxu0 %v3623
    %v3625 = vand.u32 %v1007, 4294901760
    %v3626 = vsub.f32 %v1007, %v3625
    %v3627 = vand.u32 %v3626, 4294901760
    %3628 = vmatpush1.msra.mxu0 %v3627
    %v3629 = vand.u32 %v1006, 4294901760
    %v3630 = vsub.f32 %v1006, %v3629
    %v3631 = vand.u32 %v3630, 4294901760
    %3632 = vmatprep.subr.mxu0 %v3631
    %v3633 = vand.u32 %v1005, 4294901760
    %v3634 = vsub.f32 %v1005, %v3633
    %v3635 = vand.u32 %v3634, 4294901760
    %3636 = vmatpush1.msra.mxu0 %v3635
    %v3637 = vand.u32 %v1004, 4294901760
    %v3638 = vsub.f32 %v1004, %v3637
    %v3639 = vand.u32 %v3638, 4294901760
    %3640 = vmatprep.subr.mxu0 %v3639
    %v3641 = vand.u32 %v1003, 4294901760
    %v3642 = vsub.f32 %v1003, %v3641
    %v3643 = vand.u32 %v3642, 4294901760
    %3644 = vmatpush1.msra.mxu0 %v3643
    %v3645 = vand.u32 %v1002, 4294901760
    %v3646 = vsub.f32 %v1002, %v3645
    %v3647 = vand.u32 %v3646, 4294901760
    %3648 = vmatprep.subr.mxu0 %v3647
    %v3649 = vand.u32 %v1001, 4294901760
    %v3650 = vsub.f32 %v1001, %v3649
    %v3651 = vand.u32 %v3650, 4294901760
    %3652 = vmatpush1.msra.mxu0 %v3651
    %v3653 = vand.u32 %v1000, 4294901760
    %v3654 = vsub.f32 %v1000, %v3653
    %v3655 = vand.u32 %v3654, 4294901760
    %3656 = vmatprep.subr.mxu0 %v3655
    %v3657 = vand.u32 %v999, 4294901760
    %v3658 = vsub.f32 %v999, %v3657
    %v3659 = vand.u32 %v3658, 4294901760
    %3660 = vmatpush1.msra.mxu0 %v3659
    %3661 = vmatprep.subr.mxu0 0.0
    %3662 = vmatpush2.msra.mxu0 0.0
    %3663 = vmatprep.subr.mxu0 0.0
    %3664 = vmatpush2.msra.mxu0 0.0
    %3665 = vmatprep.subr.mxu0 0.0
    %3666 = vmatpush2.msra.mxu0 0.0
    %3667 = vmatprep.subr.mxu0 0.0
    %3668 = vmatpush2.msra.mxu0 0.0
    %3669 = vmatprep.subr.mxu0 0.0
    %3670 = vmatpush2.msra.mxu0 0.0
    %3671 = vmatprep.subr.mxu0 0.0
    %3672 = vmatpush2.msra.mxu0 0.0
    %3673 = vmatprep.subr.mxu0 0.0
    %3674 = vmatpush2.msra.mxu0 0.0
    %3675 = vmatprep.subr.mxu0 0.0
    %3676 = vmatpush2.msra.mxu0 0.0
    %3677 = vmatprep.subr.mxu0 0.0
    %3678 = vmatpush2.msra.mxu0 0.0
    %3679 = vmatprep.subr.mxu0 0.0
    %3680 = vmatpush2.msra.mxu0 0.0
    %3681 = vmatprep.subr.mxu0 0.0
    %3682 = vmatpush2.msra.mxu0 0.0
    %3683 = vmatprep.subr.mxu0 0.0
    %3684 = vmatpush2.msra.mxu0 0.0
    %3685 = vmatprep.subr.mxu0 0.0
    %3686 = vmatpush2.msra.mxu0 0.0
    %3687 = vmatprep.subr.mxu0 0.0
    %3688 = vmatpush2.msra.mxu0 0.0
    %3689 = vmatprep.subr.mxu0 0.0
    %3690 = vmatpush2.msra.mxu0 0.0
    %3691 = vmatprep.subr.mxu0 0.0
    %3692 = vmatpush2.msra.mxu0 0.0
    %3693 = vmatprep.mubr.f32.mxu0 0.0
    %v3694 = vand.u32 %v3140, 4294901760
    %3695 = vmatmul.mubr.f32.gmra.mxu0 %v3694
    %v3696 = vpop.f32.mrf.mxu0
    %v3697 = vadd.f32 %v3577, %v3696
    %v3698 = vpop.f32.mrf.mxu0
    %v3699 = vadd.f32 %v3579, %v3698
    %3700 = vdwg.mxu0
    %3701 = vmatprep.subr.mxu0 0.0
    %3702 = vmatpush1.msra.mxu0 0.0
    %3703 = vmatprep.subr.mxu0 0.0
    %3704 = vmatpush1.msra.mxu0 0.0
    %3705 = vmatprep.subr.mxu0 0.0
    %3706 = vmatpush1.msra.mxu0 0.0
    %3707 = vmatprep.subr.mxu0 0.0
    %3708 = vmatpush1.msra.mxu0 0.0
    %3709 = vmatprep.subr.mxu0 0.0
    %3710 = vmatpush1.msra.mxu0 0.0
    %3711 = vmatprep.subr.mxu0 0.0
    %3712 = vmatpush1.msra.mxu0 0.0
    %3713 = vmatprep.subr.mxu0 0.0
    %3714 = vmatpush1.msra.mxu0 0.0
    %3715 = vmatprep.subr.mxu0 0.0
    %3716 = vmatpush1.msra.mxu0 0.0
    %v3717 = vand.u32 %v1014, 4294901760
    %3718 = vmatprep.subr.mxu0 %v3717
    %v3719 = vand.u32 %v1013, 4294901760
    %3720 = vmatpush1.msra.mxu0 %v3719
    %v3721 = vand.u32 %v1012, 4294901760
    %3722 = vmatprep.subr.mxu0 %v3721
    %v3723 = vand.u32 %v1011, 4294901760
    %3724 = vmatpush1.msra.mxu0 %v3723
    %v3725 = vand.u32 %v1010, 4294901760
    %3726 = vmatprep.subr.mxu0 %v3725
    %v3727 = vand.u32 %v1009, 4294901760
    %3728 = vmatpush1.msra.mxu0 %v3727
    %v3729 = vand.u32 %v1008, 4294901760
    %3730 = vmatprep.subr.mxu0 %v3729
    %v3731 = vand.u32 %v1007, 4294901760
    %3732 = vmatpush1.msra.mxu0 %v3731
    %v3733 = vand.u32 %v1006, 4294901760
    %3734 = vmatprep.subr.mxu0 %v3733
    %v3735 = vand.u32 %v1005, 4294901760
    %3736 = vmatpush1.msra.mxu0 %v3735
    %v3737 = vand.u32 %v1004, 4294901760
    %3738 = vmatprep.subr.mxu0 %v3737
    %v3739 = vand.u32 %v1003, 4294901760
    %3740 = vmatpush1.msra.mxu0 %v3739
    %v3741 = vand.u32 %v1002, 4294901760
    %3742 = vmatprep.subr.mxu0 %v3741
    %v3743 = vand.u32 %v1001, 4294901760
    %3744 = vmatpush1.msra.mxu0 %v3743
    %v3745 = vand.u32 %v1000, 4294901760
    %3746 = vmatprep.subr.mxu0 %v3745
    %v3747 = vand.u32 %v999, 4294901760
    %3748 = vmatpush1.msra.mxu0 %v3747
    %3749 = vmatprep.subr.mxu0 0.0
    %3750 = vmatpush2.msra.mxu0 0.0
    %3751 = vmatprep.subr.mxu0 0.0
    %3752 = vmatpush2.msra.mxu0 0.0
    %3753 = vmatprep.subr.mxu0 0.0
    %3754 = vmatpush2.msra.mxu0 0.0
    %3755 = vmatprep.subr.mxu0 0.0
    %3756 = vmatpush2.msra.mxu0 0.0
    %3757 = vmatprep.subr.mxu0 0.0
    %3758 = vmatpush2.msra.mxu0 0.0
    %3759 = vmatprep.subr.mxu0 0.0
    %3760 = vmatpush2.msra.mxu0 0.0
    %3761 = vmatprep.subr.mxu0 0.0
    %3762 = vmatpush2.msra.mxu0 0.0
    %3763 = vmatprep.subr.mxu0 0.0
    %3764 = vmatpush2.msra.mxu0 0.0
    %3765 = vmatprep.subr.mxu0 0.0
    %3766 = vmatpush2.msra.mxu0 0.0
    %3767 = vmatprep.subr.mxu0 0.0
    %3768 = vmatpush2.msra.mxu0 0.0
    %3769 = vmatprep.subr.mxu0 0.0
    %3770 = vmatpush2.msra.mxu0 0.0
    %3771 = vmatprep.subr.mxu0 0.0
    %3772 = vmatpush2.msra.mxu0 0.0
    %3773 = vmatprep.subr.mxu0 0.0
    %3774 = vmatpush2.msra.mxu0 0.0
    %3775 = vmatprep.subr.mxu0 0.0
    %3776 = vmatpush2.msra.mxu0 0.0
    %3777 = vmatprep.subr.mxu0 0.0
    %3778 = vmatpush2.msra.mxu0 0.0
    %3779 = vmatprep.subr.mxu0 0.0
    %3780 = vmatpush2.msra.mxu0 0.0
    %3781 = vmatprep.mubr.f32.mxu0 0.0
    %v3782 = vand.u32 %v3140, 4294901760
    %3783 = vmatmul.mubr.f32.gmra.mxu0 %v3782
    %v3784 = vpop.f32.mrf.mxu0
    %v3785 = vadd.f32 %v3697, %v3784
    %v3786 = vpop.f32.mrf.mxu0
    %v3787 = vadd.f32 %v3699, %v3786
    %3788 = vdwg.mxu0
    %v3789 = vadd.f32 %v972, %v3785
    %v3790 = vxor.u32 %v3789, 2147483648
    %v3791 = vmul.f32 %v3790, 1.442695
    %v3792 = vpow.pop %v3791
    %v3793 = vadd.f32 %v3792, 1.0
    %v3794 = vrcp.pop %v3793
    %v3795 = vmul.f32 1.0, %v3794
    %v3796 = vmul.f32 %v3795, 2.0
    %v3797 = vsub.f32 %v3796, 1.0
    %v3798 = vmul.f32 %v3795, %v3097
    %3800 = vrot.lane.b32.xlu0 %v3797, 64
    %v3801 = vpop.permute.xlu0 %3800
    %v3803 = vmul.f32 %v3795, %v3801
    %3805 = vrot.lane.b32.xlu0 %v3803, 32
    %v3806 = vpop.permute.xlu0 %3805
    %v3808 = vadd.f32 %v3798, %v3806
    %v3809 = vtanh.pop %v3808
    %3811 = vrot.lane.b32.xlu0 %v3809, 64
    %v3812 = vpop.permute.xlu0 %3811
    %v3814 = vmul.f32 %v3795, %v3812
    %v3815 = vadd.f32 %v3787, %v2387
    %v3816 = vxor.u32 %v3815, 2147483648
    %v3817 = vmul.f32 %v3816, 1.442695
    %v3818 = vpow.pop %v3817
    %v3819 = vadd.f32 %v3818, 1.0
    %v3820 = vrcp.pop %v3819
    %v3821 = vmul.f32 1.0, %v3820
    %v3822 = vmul.f32 %v3821, 2.0
    %v3823 = vsub.f32 %v3822, 1.0
    %v3824 = vmul.f32 %v3821, %v3123
    %3826 = vrot.lane.b32.xlu0 %v3823, 64
    %v3827 = vpop.permute.xlu0 %3826
    %v3829 = vmul.f32 %v3821, %v3827
    %3831 = vrot.lane.b32.xlu0 %v3829, 32
    %v3832 = vpop.permute.xlu0 %3831
    %v3834 = vadd.f32 %v3824, %v3832
    %v3835 = vtanh.pop %v3834
    %3837 = vrot.lane.b32.xlu0 %v3835, 64
    %v3838 = vpop.permute.xlu0 %3837
    %v3840 = vmul.f32 %v3821, %v3838
    %3842 = vrot.lane.b32.xlu0 %v3814, 32
    %v3843 = vpop.permute.xlu0 %3842
    %3846 = vrot.lane.b32.xlu0 %v3840, 64
    %v3847 = vpop.permute.xlu0 %3846
    %v3849 = vsel %vm1026, %v3843, %v3847
    %v3851 = vsel %vm136, %v3849, 0
    %3853 = vmatprep.subr.mxu0 0.0
    %3854 = vmatpush1.msra.mxu0 0.0
    %3855 = vmatprep.subr.mxu0 0.0
    %3856 = vmatpush1.msra.mxu0 0.0
    %3857 = vmatprep.subr.mxu0 0.0
    %3858 = vmatpush1.msra.mxu0 0.0
    %3859 = vmatprep.subr.mxu0 0.0
    %3860 = vmatpush1.msra.mxu0 0.0
    %3861 = vmatprep.subr.mxu0 0.0
    %3862 = vmatpush1.msra.mxu0 0.0
    %3863 = vmatprep.subr.mxu0 0.0
    %3864 = vmatpush1.msra.mxu0 0.0
    %3865 = vmatprep.subr.mxu0 0.0
    %3866 = vmatpush1.msra.mxu0 0.0
    %3867 = vmatprep.subr.mxu0 0.0
    %3868 = vmatpush1.msra.mxu0 0.0
    %v3869 = vand.u32 %v1014, 4294901760
    %3870 = vmatprep.subr.mxu0 %v3869
    %v3871 = vand.u32 %v1013, 4294901760
    %3872 = vmatpush1.msra.mxu0 %v3871
    %v3873 = vand.u32 %v1012, 4294901760
    %3874 = vmatprep.subr.mxu0 %v3873
    %v3875 = vand.u32 %v1011, 4294901760
    %3876 = vmatpush1.msra.mxu0 %v3875
    %v3877 = vand.u32 %v1010, 4294901760
    %3878 = vmatprep.subr.mxu0 %v3877
    %v3879 = vand.u32 %v1009, 4294901760
    %3880 = vmatpush1.msra.mxu0 %v3879
    %v3881 = vand.u32 %v1008, 4294901760
    %3882 = vmatprep.subr.mxu0 %v3881
    %v3883 = vand.u32 %v1007, 4294901760
    %3884 = vmatpush1.msra.mxu0 %v3883
    %v3885 = vand.u32 %v1006, 4294901760
    %3886 = vmatprep.subr.mxu0 %v3885
    %v3887 = vand.u32 %v1005, 4294901760
    %3888 = vmatpush1.msra.mxu0 %v3887
    %v3889 = vand.u32 %v1004, 4294901760
    %3890 = vmatprep.subr.mxu0 %v3889
    %v3891 = vand.u32 %v1003, 4294901760
    %3892 = vmatpush1.msra.mxu0 %v3891
    %v3893 = vand.u32 %v1002, 4294901760
    %3894 = vmatprep.subr.mxu0 %v3893
    %v3895 = vand.u32 %v1001, 4294901760
    %3896 = vmatpush1.msra.mxu0 %v3895
    %v3897 = vand.u32 %v1000, 4294901760
    %3898 = vmatprep.subr.mxu0 %v3897
    %v3899 = vand.u32 %v999, 4294901760
    %3900 = vmatpush1.msra.mxu0 %v3899
    %3901 = vmatprep.subr.mxu0 0.0
    %3902 = vmatpush2.msra.mxu0 0.0
    %3903 = vmatprep.subr.mxu0 0.0
    %3904 = vmatpush2.msra.mxu0 0.0
    %3905 = vmatprep.subr.mxu0 0.0
    %3906 = vmatpush2.msra.mxu0 0.0
    %3907 = vmatprep.subr.mxu0 0.0
    %3908 = vmatpush2.msra.mxu0 0.0
    %3909 = vmatprep.subr.mxu0 0.0
    %3910 = vmatpush2.msra.mxu0 0.0
    %3911 = vmatprep.subr.mxu0 0.0
    %3912 = vmatpush2.msra.mxu0 0.0
    %3913 = vmatprep.subr.mxu0 0.0
    %3914 = vmatpush2.msra.mxu0 0.0
    %3915 = vmatprep.subr.mxu0 0.0
    %3916 = vmatpush2.msra.mxu0 0.0
    %3917 = vmatprep.subr.mxu0 0.0
    %3918 = vmatpush2.msra.mxu0 0.0
    %3919 = vmatprep.subr.mxu0 0.0
    %3920 = vmatpush2.msra.mxu0 0.0
    %3921 = vmatprep.subr.mxu0 0.0
    %3922 = vmatpush2.msra.mxu0 0.0
    %3923 = vmatprep.subr.mxu0 0.0
    %3924 = vmatpush2.msra.mxu0 0.0
    %3925 = vmatprep.subr.mxu0 0.0
    %3926 = vmatpush2.msra.mxu0 0.0
    %3927 = vmatprep.subr.mxu0 0.0
    %3928 = vmatpush2.msra.mxu0 0.0
    %3929 = vmatprep.subr.mxu0 0.0
    %3930 = vmatpush2.msra.mxu0 0.0
    %3931 = vmatprep.subr.mxu0 0.0
    %3932 = vmatpush2.msra.mxu0 0.0
    %3933 = vmatprep.mubr.f32.mxu0 0.0
    %v3934 = vand.u32 %v3851, 4294901760
    %v3935 = vsub.f32 %v3851, %v3934
    %v3936 = vand.u32 %v3935, 4294901760
    %v3937 = vsub.f32 %v3935, %v3936
    %v3938 = vand.u32 %v3937, 4294901760
    %3939 = vmatmul.mubr.f32.gmra.mxu0 %v3938
    %v3940 = vpop.f32.mrf.mxu0
    %v3941 = vadd.f32 0.0, %v3940
    %v3942 = vpop.f32.mrf.mxu0
    %v3943 = vadd.f32 0.0, %v3942
    %3944 = vdwg.mxu0
    %3945 = vmatprep.subr.mxu0 0.0
    %3946 = vmatpush1.msra.mxu0 0.0
    %3947 = vmatprep.subr.mxu0 0.0
    %3948 = vmatpush1.msra.mxu0 0.0
    %3949 = vmatprep.subr.mxu0 0.0
    %3950 = vmatpush1.msra.mxu0 0.0
    %3951 = vmatprep.subr.mxu0 0.0
    %3952 = vmatpush1.msra.mxu0 0.0
    %3953 = vmatprep.subr.mxu0 0.0
    %3954 = vmatpush1.msra.mxu0 0.0
    %3955 = vmatprep.subr.mxu0 0.0
    %3956 = vmatpush1.msra.mxu0 0.0
    %3957 = vmatprep.subr.mxu0 0.0
    %3958 = vmatpush1.msra.mxu0 0.0
    %3959 = vmatprep.subr.mxu0 0.0
    %3960 = vmatpush1.msra.mxu0 0.0
    %v3961 = vand.u32 %v1014, 4294901760
    %v3962 = vsub.f32 %v1014, %v3961
    %v3963 = vand.u32 %v3962, 4294901760
    %v3964 = vsub.f32 %v3962, %v3963
    %v3965 = vand.u32 %v3964, 4294901760
    %3966 = vmatprep.subr.mxu0 %v3965
    %v3967 = vand.u32 %v1013, 4294901760
    %v3968 = vsub.f32 %v1013, %v3967
    %v3969 = vand.u32 %v3968, 4294901760
    %v3970 = vsub.f32 %v3968, %v3969
    %v3971 = vand.u32 %v3970, 4294901760
    %3972 = vmatpush1.msra.mxu0 %v3971
    %v3973 = vand.u32 %v1012, 4294901760
    %v3974 = vsub.f32 %v1012, %v3973
    %v3975 = vand.u32 %v3974, 4294901760
    %v3976 = vsub.f32 %v3974, %v3975
    %v3977 = vand.u32 %v3976, 4294901760
    %3978 = vmatprep.subr.mxu0 %v3977
    %v3979 = vand.u32 %v1011, 4294901760
    %v3980 = vsub.f32 %v1011, %v3979
    %v3981 = vand.u32 %v3980, 4294901760
    %v3982 = vsub.f32 %v3980, %v3981
    %v3983 = vand.u32 %v3982, 4294901760
    %3984 = vmatpush1.msra.mxu0 %v3983
    %v3985 = vand.u32 %v1010, 4294901760
    %v3986 = vsub.f32 %v1010, %v3985
    %v3987 = vand.u32 %v3986, 4294901760
    %v3988 = vsub.f32 %v3986, %v3987
    %v3989 = vand.u32 %v3988, 4294901760
    %3990 = vmatprep.subr.mxu0 %v3989
    %v3991 = vand.u32 %v1009, 4294901760
    %v3992 = vsub.f32 %v1009, %v3991
    %v3993 = vand.u32 %v3992, 4294901760
    %v3994 = vsub.f32 %v3992, %v3993
    %v3995 = vand.u32 %v3994, 4294901760
    %3996 = vmatpush1.msra.mxu0 %v3995
    %v3997 = vand.u32 %v1008, 4294901760
    %v3998 = vsub.f32 %v1008, %v3997
    %v3999 = vand.u32 %v3998, 4294901760
    %v4000 = vsub.f32 %v3998, %v3999
    %v4001 = vand.u32 %v4000, 4294901760
    %4002 = vmatprep.subr.mxu0 %v4001
    %v4003 = vand.u32 %v1007, 4294901760
    %v4004 = vsub.f32 %v1007, %v4003
    %v4005 = vand.u32 %v4004, 4294901760
    %v4006 = vsub.f32 %v4004, %v4005
    %v4007 = vand.u32 %v4006, 4294901760
    %4008 = vmatpush1.msra.mxu0 %v4007
    %v4009 = vand.u32 %v1006, 4294901760
    %v4010 = vsub.f32 %v1006, %v4009
    %v4011 = vand.u32 %v4010, 4294901760
    %v4012 = vsub.f32 %v4010, %v4011
    %v4013 = vand.u32 %v4012, 4294901760
    %4014 = vmatprep.subr.mxu0 %v4013
    %v4015 = vand.u32 %v1005, 4294901760
    %v4016 = vsub.f32 %v1005, %v4015
    %v4017 = vand.u32 %v4016, 4294901760
    %v4018 = vsub.f32 %v4016, %v4017
    %v4019 = vand.u32 %v4018, 4294901760
    %4020 = vmatpush1.msra.mxu0 %v4019
    %v4021 = vand.u32 %v1004, 4294901760
    %v4022 = vsub.f32 %v1004, %v4021
    %v4023 = vand.u32 %v4022, 4294901760
    %v4024 = vsub.f32 %v4022, %v4023
    %v4025 = vand.u32 %v4024, 4294901760
    %4026 = vmatprep.subr.mxu0 %v4025
    %v4027 = vand.u32 %v1003, 4294901760
    %v4028 = vsub.f32 %v1003, %v4027
    %v4029 = vand.u32 %v4028, 4294901760
    %v4030 = vsub.f32 %v4028, %v4029
    %v4031 = vand.u32 %v4030, 4294901760
    %4032 = vmatpush1.msra.mxu0 %v4031
    %v4033 = vand.u32 %v1002, 4294901760
    %v4034 = vsub.f32 %v1002, %v4033
    %v4035 = vand.u32 %v4034, 4294901760
    %v4036 = vsub.f32 %v4034, %v4035
    %v4037 = vand.u32 %v4036, 4294901760
    %4038 = vmatprep.subr.mxu0 %v4037
    %v4039 = vand.u32 %v1001, 4294901760
    %v4040 = vsub.f32 %v1001, %v4039
    %v4041 = vand.u32 %v4040, 4294901760
    %v4042 = vsub.f32 %v4040, %v4041
    %v4043 = vand.u32 %v4042, 4294901760
    %4044 = vmatpush1.msra.mxu0 %v4043
    %v4045 = vand.u32 %v1000, 4294901760
    %v4046 = vsub.f32 %v1000, %v4045
    %v4047 = vand.u32 %v4046, 4294901760
    %v4048 = vsub.f32 %v4046, %v4047
    %v4049 = vand.u32 %v4048, 4294901760
    %4050 = vmatprep.subr.mxu0 %v4049
    %v4051 = vand.u32 %v999, 4294901760
    %v4052 = vsub.f32 %v999, %v4051
    %v4053 = vand.u32 %v4052, 4294901760
    %v4054 = vsub.f32 %v4052, %v4053
    %v4055 = vand.u32 %v4054, 4294901760
    %4056 = vmatpush1.msra.mxu0 %v4055
    %4057 = vmatprep.subr.mxu0 0.0
    %4058 = vmatpush2.msra.mxu0 0.0
    %4059 = vmatprep.subr.mxu0 0.0
    %4060 = vmatpush2.msra.mxu0 0.0
    %4061 = vmatprep.subr.mxu0 0.0
    %4062 = vmatpush2.msra.mxu0 0.0
    %4063 = vmatprep.subr.mxu0 0.0
    %4064 = vmatpush2.msra.mxu0 0.0
    %4065 = vmatprep.subr.mxu0 0.0
    %4066 = vmatpush2.msra.mxu0 0.0
    %4067 = vmatprep.subr.mxu0 0.0
    %4068 = vmatpush2.msra.mxu0 0.0
    %4069 = vmatprep.subr.mxu0 0.0
    %4070 = vmatpush2.msra.mxu0 0.0
    %4071 = vmatprep.subr.mxu0 0.0
    %4072 = vmatpush2.msra.mxu0 0.0
    %4073 = vmatprep.subr.mxu0 0.0
    %4074 = vmatpush2.msra.mxu0 0.0
    %4075 = vmatprep.subr.mxu0 0.0
    %4076 = vmatpush2.msra.mxu0 0.0
    %4077 = vmatprep.subr.mxu0 0.0
    %4078 = vmatpush2.msra.mxu0 0.0
    %4079 = vmatprep.subr.mxu0 0.0
    %4080 = vmatpush2.msra.mxu0 0.0
    %4081 = vmatprep.subr.mxu0 0.0
    %4082 = vmatpush2.msra.mxu0 0.0
    %4083 = vmatprep.subr.mxu0 0.0
    %4084 = vmatpush2.msra.mxu0 0.0
    %4085 = vmatprep.subr.mxu0 0.0
    %4086 = vmatpush2.msra.mxu0 0.0
    %4087 = vmatprep.subr.mxu0 0.0
    %4088 = vmatpush2.msra.mxu0 0.0
    %4089 = vmatprep.mubr.f32.mxu0 0.0
    %v4090 = vand.u32 %v3851, 4294901760
    %4091 = vmatmul.mubr.f32.gmra.mxu0 %v4090
    %v4092 = vpop.f32.mrf.mxu0
    %v4093 = vadd.f32 %v3941, %v4092
    %v4094 = vpop.f32.mrf.mxu0
    %v4095 = vadd.f32 %v3943, %v4094
    %4096 = vdwg.mxu0
    %4097 = vmatprep.subr.mxu0 0.0
    %4098 = vmatpush1.msra.mxu0 0.0
    %4099 = vmatprep.subr.mxu0 0.0
    %4100 = vmatpush1.msra.mxu0 0.0
    %4101 = vmatprep.subr.mxu0 0.0
    %4102 = vmatpush1.msra.mxu0 0.0
    %4103 = vmatprep.subr.mxu0 0.0
    %4104 = vmatpush1.msra.mxu0 0.0
    %4105 = vmatprep.subr.mxu0 0.0
    %4106 = vmatpush1.msra.mxu0 0.0
    %4107 = vmatprep.subr.mxu0 0.0
    %4108 = vmatpush1.msra.mxu0 0.0
    %4109 = vmatprep.subr.mxu0 0.0
    %4110 = vmatpush1.msra.mxu0 0.0
    %4111 = vmatprep.subr.mxu0 0.0
    %4112 = vmatpush1.msra.mxu0 0.0
    %v4113 = vand.u32 %v1014, 4294901760
    %v4114 = vsub.f32 %v1014, %v4113
    %4115 = vmatprep.subr.mxu0 %v4114
    %v4116 = vand.u32 %v1013, 4294901760
    %v4117 = vsub.f32 %v1013, %v4116
    %4118 = vmatpush1.msra.mxu0 %v4117
    %v4119 = vand.u32 %v1012, 4294901760
    %v4120 = vsub.f32 %v1012, %v4119
    %4121 = vmatprep.subr.mxu0 %v4120
    %v4122 = vand.u32 %v1011, 4294901760
    %v4123 = vsub.f32 %v1011, %v4122
    %4124 = vmatpush1.msra.mxu0 %v4123
    %v4125 = vand.u32 %v1010, 4294901760
    %v4126 = vsub.f32 %v1010, %v4125
    %4127 = vmatprep.subr.mxu0 %v4126
    %v4128 = vand.u32 %v1009, 4294901760
    %v4129 = vsub.f32 %v1009, %v4128
    %4130 = vmatpush1.msra.mxu0 %v4129
    %v4131 = vand.u32 %v1008, 4294901760
    %v4132 = vsub.f32 %v1008, %v4131
    %4133 = vmatprep.subr.mxu0 %v4132
    %v4134 = vand.u32 %v1007, 4294901760
    %v4135 = vsub.f32 %v1007, %v4134
    %4136 = vmatpush1.msra.mxu0 %v4135
    %v4137 = vand.u32 %v1006, 4294901760
    %v4138 = vsub.f32 %v1006, %v4137
    %4139 = vmatprep.subr.mxu0 %v4138
    %v4140 = vand.u32 %v1005, 4294901760
    %v4141 = vsub.f32 %v1005, %v4140
    %4142 = vmatpush1.msra.mxu0 %v4141
    %v4143 = vand.u32 %v1004, 4294901760
    %v4144 = vsub.f32 %v1004, %v4143
    %4145 = vmatprep.subr.mxu0 %v4144
    %v4146 = vand.u32 %v1003, 4294901760
    %v4147 = vsub.f32 %v1003, %v4146
    %4148 = vmatpush1.msra.mxu0 %v4147
    %v4149 = vand.u32 %v1002, 4294901760
    %v4150 = vsub.f32 %v1002, %v4149
    %4151 = vmatprep.subr.mxu0 %v4150
    %v4152 = vand.u32 %v1001, 4294901760
    %v4153 = vsub.f32 %v1001, %v4152
    %4154 = vmatpush1.msra.mxu0 %v4153
    %v4155 = vand.u32 %v1000, 4294901760
    %v4156 = vsub.f32 %v1000, %v4155
    %4157 = vmatprep.subr.mxu0 %v4156
    %v4158 = vand.u32 %v999, 4294901760
    %v4159 = vsub.f32 %v999, %v4158
    %4160 = vmatpush1.msra.mxu0 %v4159
    %4161 = vmatprep.subr.mxu0 0.0
    %4162 = vmatpush2.msra.mxu0 0.0
    %4163 = vmatprep.subr.mxu0 0.0
    %4164 = vmatpush2.msra.mxu0 0.0
    %4165 = vmatprep.subr.mxu0 0.0
    %4166 = vmatpush2.msra.mxu0 0.0
    %4167 = vmatprep.subr.mxu0 0.0
    %4168 = vmatpush2.msra.mxu0 0.0
    %4169 = vmatprep.subr.mxu0 0.0
    %4170 = vmatpush2.msra.mxu0 0.0
    %4171 = vmatprep.subr.mxu0 0.0
    %4172 = vmatpush2.msra.mxu0 0.0
    %4173 = vmatprep.subr.mxu0 0.0
    %4174 = vmatpush2.msra.mxu0 0.0
    %4175 = vmatprep.subr.mxu0 0.0
    %4176 = vmatpush2.msra.mxu0 0.0
    %4177 = vmatprep.subr.mxu0 0.0
    %4178 = vmatpush2.msra.mxu0 0.0
    %4179 = vmatprep.subr.mxu0 0.0
    %4180 = vmatpush2.msra.mxu0 0.0
    %4181 = vmatprep.subr.mxu0 0.0
    %4182 = vmatpush2.msra.mxu0 0.0
    %4183 = vmatprep.subr.mxu0 0.0
    %4184 = vmatpush2.msra.mxu0 0.0
    %4185 = vmatprep.subr.mxu0 0.0
    %4186 = vmatpush2.msra.mxu0 0.0
    %4187 = vmatprep.subr.mxu0 0.0
    %4188 = vmatpush2.msra.mxu0 0.0
    %4189 = vmatprep.subr.mxu0 0.0
    %4190 = vmatpush2.msra.mxu0 0.0
    %4191 = vmatprep.subr.mxu0 0.0
    %4192 = vmatpush2.msra.mxu0 0.0
    %4193 = vmatprep.mubr.f32.mxu0 0.0
    %v4194 = vand.u32 %v3851, 4294901760
    %v4195 = vsub.f32 %v3851, %v4194
    %4196 = vmatmul.mubr.f32.gmra.mxu0 %v4195
    %v4197 = vpop.f32.mrf.mxu0
    %v4198 = vadd.f32 %v4093, %v4197
    %v4199 = vpop.f32.mrf.mxu0
    %v4200 = vadd.f32 %v4095, %v4199
    %4201 = vdwg.mxu0
    %4202 = vmatprep.subr.mxu0 0.0
    %4203 = vmatpush1.msra.mxu0 0.0
    %4204 = vmatprep.subr.mxu0 0.0
    %4205 = vmatpush1.msra.mxu0 0.0
    %4206 = vmatprep.subr.mxu0 0.0
    %4207 = vmatpush1.msra.mxu0 0.0
    %4208 = vmatprep.subr.mxu0 0.0
    %4209 = vmatpush1.msra.mxu0 0.0
    %4210 = vmatprep.subr.mxu0 0.0
    %4211 = vmatpush1.msra.mxu0 0.0
    %4212 = vmatprep.subr.mxu0 0.0
    %4213 = vmatpush1.msra.mxu0 0.0
    %4214 = vmatprep.subr.mxu0 0.0
    %4215 = vmatpush1.msra.mxu0 0.0
    %4216 = vmatprep.subr.mxu0 0.0
    %4217 = vmatpush1.msra.mxu0 0.0
    %v4218 = vand.u32 %v1014, 4294901760
    %4219 = vmatprep.subr.mxu0 %v4218
    %v4220 = vand.u32 %v1013, 4294901760
    %4221 = vmatpush1.msra.mxu0 %v4220
    %v4222 = vand.u32 %v1012, 4294901760
    %4223 = vmatprep.subr.mxu0 %v4222
    %v4224 = vand.u32 %v1011, 4294901760
    %4225 = vmatpush1.msra.mxu0 %v4224
    %v4226 = vand.u32 %v1010, 4294901760
    %4227 = vmatprep.subr.mxu0 %v4226
    %v4228 = vand.u32 %v1009, 4294901760
    %4229 = vmatpush1.msra.mxu0 %v4228
    %v4230 = vand.u32 %v1008, 4294901760
    %4231 = vmatprep.subr.mxu0 %v4230
    %v4232 = vand.u32 %v1007, 4294901760
    %4233 = vmatpush1.msra.mxu0 %v4232
    %v4234 = vand.u32 %v1006, 4294901760
    %4235 = vmatprep.subr.mxu0 %v4234
    %v4236 = vand.u32 %v1005, 4294901760
    %4237 = vmatpush1.msra.mxu0 %v4236
    %v4238 = vand.u32 %v1004, 4294901760
    %4239 = vmatprep.subr.mxu0 %v4238
    %v4240 = vand.u32 %v1003, 4294901760
    %4241 = vmatpush1.msra.mxu0 %v4240
    %v4242 = vand.u32 %v1002, 4294901760
    %4243 = vmatprep.subr.mxu0 %v4242
    %v4244 = vand.u32 %v1001, 4294901760
    %4245 = vmatpush1.msra.mxu0 %v4244
    %v4246 = vand.u32 %v1000, 4294901760
    %4247 = vmatprep.subr.mxu0 %v4246
    %v4248 = vand.u32 %v999, 4294901760
    %4249 = vmatpush1.msra.mxu0 %v4248
    %4250 = vmatprep.subr.mxu0 0.0
    %4251 = vmatpush2.msra.mxu0 0.0
    %4252 = vmatprep.subr.mxu0 0.0
    %4253 = vmatpush2.msra.mxu0 0.0
    %4254 = vmatprep.subr.mxu0 0.0
    %4255 = vmatpush2.msra.mxu0 0.0
    %4256 = vmatprep.subr.mxu0 0.0
    %4257 = vmatpush2.msra.mxu0 0.0
    %4258 = vmatprep.subr.mxu0 0.0
    %4259 = vmatpush2.msra.mxu0 0.0
    %4260 = vmatprep.subr.mxu0 0.0
    %4261 = vmatpush2.msra.mxu0 0.0
    %4262 = vmatprep.subr.mxu0 0.0
    %4263 = vmatpush2.msra.mxu0 0.0
    %4264 = vmatprep.subr.mxu0 0.0
    %4265 = vmatpush2.msra.mxu0 0.0
    %4266 = vmatprep.subr.mxu0 0.0
    %4267 = vmatpush2.msra.mxu0 0.0
    %4268 = vmatprep.subr.mxu0 0.0
    %4269 = vmatpush2.msra.mxu0 0.0
    %4270 = vmatprep.subr.mxu0 0.0
    %4271 = vmatpush2.msra.mxu0 0.0
    %4272 = vmatprep.subr.mxu0 0.0
    %4273 = vmatpush2.msra.mxu0 0.0
    %4274 = vmatprep.subr.mxu0 0.0
    %4275 = vmatpush2.msra.mxu0 0.0
    %4276 = vmatprep.subr.mxu0 0.0
    %4277 = vmatpush2.msra.mxu0 0.0
    %4278 = vmatprep.subr.mxu0 0.0
    %4279 = vmatpush2.msra.mxu0 0.0
    %4280 = vmatprep.subr.mxu0 0.0
    %4281 = vmatpush2.msra.mxu0 0.0
    %4282 = vmatprep.mubr.f32.mxu0 0.0
    %v4283 = vand.u32 %v3851, 4294901760
    %v4284 = vsub.f32 %v3851, %v4283
    %v4285 = vand.u32 %v4284, 4294901760
    %4286 = vmatmul.mubr.f32.gmra.mxu0 %v4285
    %v4287 = vpop.f32.mrf.mxu0
    %v4288 = vadd.f32 %v4198, %v4287
    %v4289 = vpop.f32.mrf.mxu0
    %v4290 = vadd.f32 %v4200, %v4289
    %4291 = vdwg.mxu0
    %4292 = vmatprep.subr.mxu0 0.0
    %4293 = vmatpush1.msra.mxu0 0.0
    %4294 = vmatprep.subr.mxu0 0.0
    %4295 = vmatpush1.msra.mxu0 0.0
    %4296 = vmatprep.subr.mxu0 0.0
    %4297 = vmatpush1.msra.mxu0 0.0
    %4298 = vmatprep.subr.mxu0 0.0
    %4299 = vmatpush1.msra.mxu0 0.0
    %4300 = vmatprep.subr.mxu0 0.0
    %4301 = vmatpush1.msra.mxu0 0.0
    %4302 = vmatprep.subr.mxu0 0.0
    %4303 = vmatpush1.msra.mxu0 0.0
    %4304 = vmatprep.subr.mxu0 0.0
    %4305 = vmatpush1.msra.mxu0 0.0
    %4306 = vmatprep.subr.mxu0 0.0
    %4307 = vmatpush1.msra.mxu0 0.0
    %v4308 = vand.u32 %v1014, 4294901760
    %v4309 = vsub.f32 %v1014, %v4308
    %v4310 = vand.u32 %v4309, 4294901760
    %4311 = vmatprep.subr.mxu0 %v4310
    %v4312 = vand.u32 %v1013, 4294901760
    %v4313 = vsub.f32 %v1013, %v4312
    %v4314 = vand.u32 %v4313, 4294901760
    %4315 = vmatpush1.msra.mxu0 %v4314
    %v4316 = vand.u32 %v1012, 4294901760
    %v4317 = vsub.f32 %v1012, %v4316
    %v4318 = vand.u32 %v4317, 4294901760
    %4319 = vmatprep.subr.mxu0 %v4318
    %v4320 = vand.u32 %v1011, 4294901760
    %v4321 = vsub.f32 %v1011, %v4320
    %v4322 = vand.u32 %v4321, 4294901760
    %4323 = vmatpush1.msra.mxu0 %v4322
    %v4324 = vand.u32 %v1010, 4294901760
    %v4325 = vsub.f32 %v1010, %v4324
    %v4326 = vand.u32 %v4325, 4294901760
    %4327 = vmatprep.subr.mxu0 %v4326
    %v4328 = vand.u32 %v1009, 4294901760
    %v4329 = vsub.f32 %v1009, %v4328
    %v4330 = vand.u32 %v4329, 4294901760
    %4331 = vmatpush1.msra.mxu0 %v4330
    %v4332 = vand.u32 %v1008, 4294901760
    %v4333 = vsub.f32 %v1008, %v4332
    %v4334 = vand.u32 %v4333, 4294901760
    %4335 = vmatprep.subr.mxu0 %v4334
    %v4336 = vand.u32 %v1007, 4294901760
    %v4337 = vsub.f32 %v1007, %v4336
    %v4338 = vand.u32 %v4337, 4294901760
    %4339 = vmatpush1.msra.mxu0 %v4338
    %v4340 = vand.u32 %v1006, 4294901760
    %v4341 = vsub.f32 %v1006, %v4340
    %v4342 = vand.u32 %v4341, 4294901760
    %4343 = vmatprep.subr.mxu0 %v4342
    %v4344 = vand.u32 %v1005, 4294901760
    %v4345 = vsub.f32 %v1005, %v4344
    %v4346 = vand.u32 %v4345, 4294901760
    %4347 = vmatpush1.msra.mxu0 %v4346
    %v4348 = vand.u32 %v1004, 4294901760
    %v4349 = vsub.f32 %v1004, %v4348
    %v4350 = vand.u32 %v4349, 4294901760
    %4351 = vmatprep.subr.mxu0 %v4350
    %v4352 = vand.u32 %v1003, 4294901760
    %v4353 = vsub.f32 %v1003, %v4352
    %v4354 = vand.u32 %v4353, 4294901760
    %4355 = vmatpush1.msra.mxu0 %v4354
    %v4356 = vand.u32 %v1002, 4294901760
    %v4357 = vsub.f32 %v1002, %v4356
    %v4358 = vand.u32 %v4357, 4294901760
    %4359 = vmatprep.subr.mxu0 %v4358
    %v4360 = vand.u32 %v1001, 4294901760
    %v4361 = vsub.f32 %v1001, %v4360
    %v4362 = vand.u32 %v4361, 4294901760
    %4363 = vmatpush1.msra.mxu0 %v4362
    %v4364 = vand.u32 %v1000, 4294901760
    %v4365 = vsub.f32 %v1000, %v4364
    %v4366 = vand.u32 %v4365, 4294901760
    %4367 = vmatprep.subr.mxu0 %v4366
    %v4368 = vand.u32 %v999, 4294901760
    %v4369 = vsub.f32 %v999, %v4368
    %v4370 = vand.u32 %v4369, 4294901760
    %4371 = vmatpush1.msra.mxu0 %v4370
    %4372 = vmatprep.subr.mxu0 0.0
    %4373 = vmatpush2.msra.mxu0 0.0
    %4374 = vmatprep.subr.mxu0 0.0
    %4375 = vmatpush2.msra.mxu0 0.0
    %4376 = vmatprep.subr.mxu0 0.0
    %4377 = vmatpush2.msra.mxu0 0.0
    %4378 = vmatprep.subr.mxu0 0.0
    %4379 = vmatpush2.msra.mxu0 0.0
    %4380 = vmatprep.subr.mxu0 0.0
    %4381 = vmatpush2.msra.mxu0 0.0
    %4382 = vmatprep.subr.mxu0 0.0
    %4383 = vmatpush2.msra.mxu0 0.0
    %4384 = vmatprep.subr.mxu0 0.0
    %4385 = vmatpush2.msra.mxu0 0.0
    %4386 = vmatprep.subr.mxu0 0.0
    %4387 = vmatpush2.msra.mxu0 0.0
    %4388 = vmatprep.subr.mxu0 0.0
    %4389 = vmatpush2.msra.mxu0 0.0
    %4390 = vmatprep.subr.mxu0 0.0
    %4391 = vmatpush2.msra.mxu0 0.0
    %4392 = vmatprep.subr.mxu0 0.0
    %4393 = vmatpush2.msra.mxu0 0.0
    %4394 = vmatprep.subr.mxu0 0.0
    %4395 = vmatpush2.msra.mxu0 0.0
    %4396 = vmatprep.subr.mxu0 0.0
    %4397 = vmatpush2.msra.mxu0 0.0
    %4398 = vmatprep.subr.mxu0 0.0
    %4399 = vmatpush2.msra.mxu0 0.0
    %4400 = vmatprep.subr.mxu0 0.0
    %4401 = vmatpush2.msra.mxu0 0.0
    %4402 = vmatprep.subr.mxu0 0.0
    %4403 = vmatpush2.msra.mxu0 0.0
    %4404 = vmatprep.mubr.f32.mxu0 0.0
    %v4405 = vand.u32 %v3851, 4294901760
    %4406 = vmatmul.mubr.f32.gmra.mxu0 %v4405
    %v4407 = vpop.f32.mrf.mxu0
    %v4408 = vadd.f32 %v4288, %v4407
    %v4409 = vpop.f32.mrf.mxu0
    %v4410 = vadd.f32 %v4290, %v4409
    %4411 = vdwg.mxu0
    %4412 = vmatprep.subr.mxu0 0.0
    %4413 = vmatpush1.msra.mxu0 0.0
    %4414 = vmatprep.subr.mxu0 0.0
    %4415 = vmatpush1.msra.mxu0 0.0
    %4416 = vmatprep.subr.mxu0 0.0
    %4417 = vmatpush1.msra.mxu0 0.0
    %4418 = vmatprep.subr.mxu0 0.0
    %4419 = vmatpush1.msra.mxu0 0.0
    %4420 = vmatprep.subr.mxu0 0.0
    %4421 = vmatpush1.msra.mxu0 0.0
    %4422 = vmatprep.subr.mxu0 0.0
    %4423 = vmatpush1.msra.mxu0 0.0
    %4424 = vmatprep.subr.mxu0 0.0
    %4425 = vmatpush1.msra.mxu0 0.0
    %4426 = vmatprep.subr.mxu0 0.0
    %4427 = vmatpush1.msra.mxu0 0.0
    %v4428 = vand.u32 %v1014, 4294901760
    %4429 = vmatprep.subr.mxu0 %v4428
    %v4430 = vand.u32 %v1013, 4294901760
    %4431 = vmatpush1.msra.mxu0 %v4430
    %v4432 = vand.u32 %v1012, 4294901760
    %4433 = vmatprep.subr.mxu0 %v4432
    %v4434 = vand.u32 %v1011, 4294901760
    %4435 = vmatpush1.msra.mxu0 %v4434
    %v4436 = vand.u32 %v1010, 4294901760
    %4437 = vmatprep.subr.mxu0 %v4436
    %v4438 = vand.u32 %v1009, 4294901760
    %4439 = vmatpush1.msra.mxu0 %v4438
    %v4440 = vand.u32 %v1008, 4294901760
    %4441 = vmatprep.subr.mxu0 %v4440
    %v4442 = vand.u32 %v1007, 4294901760
    %4443 = vmatpush1.msra.mxu0 %v4442
    %v4444 = vand.u32 %v1006, 4294901760
    %4445 = vmatprep.subr.mxu0 %v4444
    %v4446 = vand.u32 %v1005, 4294901760
    %4447 = vmatpush1.msra.mxu0 %v4446
    %v4448 = vand.u32 %v1004, 4294901760
    %4449 = vmatprep.subr.mxu0 %v4448
    %v4450 = vand.u32 %v1003, 4294901760
    %4451 = vmatpush1.msra.mxu0 %v4450
    %v4452 = vand.u32 %v1002, 4294901760
    %4453 = vmatprep.subr.mxu0 %v4452
    %v4454 = vand.u32 %v1001, 4294901760
    %4455 = vmatpush1.msra.mxu0 %v4454
    %v4456 = vand.u32 %v1000, 4294901760
    %4457 = vmatprep.subr.mxu0 %v4456
    %v4458 = vand.u32 %v999, 4294901760
    %4459 = vmatpush1.msra.mxu0 %v4458
    %4460 = vmatprep.subr.mxu0 0.0
    %4461 = vmatpush2.msra.mxu0 0.0
    %4462 = vmatprep.subr.mxu0 0.0
    %4463 = vmatpush2.msra.mxu0 0.0
    %4464 = vmatprep.subr.mxu0 0.0
    %4465 = vmatpush2.msra.mxu0 0.0
    %4466 = vmatprep.subr.mxu0 0.0
    %4467 = vmatpush2.msra.mxu0 0.0
    %4468 = vmatprep.subr.mxu0 0.0
    %4469 = vmatpush2.msra.mxu0 0.0
    %4470 = vmatprep.subr.mxu0 0.0
    %4471 = vmatpush2.msra.mxu0 0.0
    %4472 = vmatprep.subr.mxu0 0.0
    %4473 = vmatpush2.msra.mxu0 0.0
    %4474 = vmatprep.subr.mxu0 0.0
    %4475 = vmatpush2.msra.mxu0 0.0
    %4476 = vmatprep.subr.mxu0 0.0
    %4477 = vmatpush2.msra.mxu0 0.0
    %4478 = vmatprep.subr.mxu0 0.0
    %4479 = vmatpush2.msra.mxu0 0.0
    %4480 = vmatprep.subr.mxu0 0.0
    %4481 = vmatpush2.msra.mxu0 0.0
    %4482 = vmatprep.subr.mxu0 0.0
    %4483 = vmatpush2.msra.mxu0 0.0
    %4484 = vmatprep.subr.mxu0 0.0
    %4485 = vmatpush2.msra.mxu0 0.0
    %4486 = vmatprep.subr.mxu0 0.0
    %4487 = vmatpush2.msra.mxu0 0.0
    %4488 = vmatprep.subr.mxu0 0.0
    %4489 = vmatpush2.msra.mxu0 0.0
    %4490 = vmatprep.subr.mxu0 0.0
    %4491 = vmatpush2.msra.mxu0 0.0
    %4492 = vmatprep.mubr.f32.mxu0 0.0
    %v4493 = vand.u32 %v3851, 4294901760
    %4494 = vmatmul.mubr.f32.gmra.mxu0 %v4493
    %v4495 = vpop.f32.mrf.mxu0
    %v4496 = vadd.f32 %v4408, %v4495
    %v4497 = vpop.f32.mrf.mxu0
    %v4498 = vadd.f32 %v4410, %v4497
    %4499 = vdwg.mxu0
    %v4500 = vadd.f32 %v978, %v4496
    %v4501 = vxor.u32 %v4500, 2147483648
    %v4502 = vmul.f32 %v4501, 1.442695
    %v4503 = vpow.pop %v4502
    %v4504 = vadd.f32 %v4503, 1.0
    %v4505 = vrcp.pop %v4504
    %v4506 = vmul.f32 1.0, %v4505
    %v4507 = vmul.f32 %v4506, 2.0
    %v4508 = vsub.f32 %v4507, 1.0
    %v4509 = vmul.f32 %v4506, %v3808
    %4511 = vrot.lane.b32.xlu0 %v4508, 64
    %v4512 = vpop.permute.xlu0 %4511
    %v4514 = vmul.f32 %v4506, %v4512
    %4516 = vrot.lane.b32.xlu0 %v4514, 32
    %v4517 = vpop.permute.xlu0 %4516
    %v4519 = vadd.f32 %v4509, %v4517
    %v4520 = vtanh.pop %v4519
    %4522 = vrot.lane.b32.xlu0 %v4520, 64
    %v4523 = vpop.permute.xlu0 %4522
    %v4525 = vmul.f32 %v4506, %v4523
    %v4526 = vadd.f32 %v4498, %v2387
    %v4527 = vxor.u32 %v4526, 2147483648
    %v4528 = vmul.f32 %v4527, 1.442695
    %v4529 = vpow.pop %v4528
    %v4530 = vadd.f32 %v4529, 1.0
    %v4531 = vrcp.pop %v4530
    %v4532 = vmul.f32 1.0, %v4531
    %v4533 = vmul.f32 %v4532, 2.0
    %v4534 = vsub.f32 %v4533, 1.0
    %v4535 = vmul.f32 %v4532, %v3834
    %4537 = vrot.lane.b32.xlu0 %v4534, 64
    %v4538 = vpop.permute.xlu0 %4537
    %v4540 = vmul.f32 %v4532, %v4538
    %4542 = vrot.lane.b32.xlu0 %v4540, 32
    %v4543 = vpop.permute.xlu0 %4542
    %v4545 = vadd.f32 %v4535, %v4543
    %v4546 = vtanh.pop %v4545
    %4548 = vrot.lane.b32.xlu0 %v4546, 64
    %v4549 = vpop.permute.xlu0 %4548
    %v4551 = vmul.f32 %v4532, %v4549
    %4553 = vrot.lane.b32.xlu0 %v4525, 32
    %v4554 = vpop.permute.xlu0 %4553
    %4557 = vrot.lane.b32.xlu0 %v4551, 64
    %v4558 = vpop.permute.xlu0 %4557
    %v4560 = vsel %vm1026, %v4554, %v4558
    %v4562 = vsel %vm136, %v4560, 0
    %4564 = vmatprep.subr.mxu0 0.0
    %4565 = vmatpush1.msra.mxu0 0.0
    %4566 = vmatprep.subr.mxu0 0.0
    %4567 = vmatpush1.msra.mxu0 0.0
    %4568 = vmatprep.subr.mxu0 0.0
    %4569 = vmatpush1.msra.mxu0 0.0
    %4570 = vmatprep.subr.mxu0 0.0
    %4571 = vmatpush1.msra.mxu0 0.0
    %4572 = vmatprep.subr.mxu0 0.0
    %4573 = vmatpush1.msra.mxu0 0.0
    %4574 = vmatprep.subr.mxu0 0.0
    %4575 = vmatpush1.msra.mxu0 0.0
    %4576 = vmatprep.subr.mxu0 0.0
    %4577 = vmatpush1.msra.mxu0 0.0
    %4578 = vmatprep.subr.mxu0 0.0
    %4579 = vmatpush1.msra.mxu0 0.0
    %v4580 = vand.u32 %v1014, 4294901760
    %4581 = vmatprep.subr.mxu0 %v4580
    %v4582 = vand.u32 %v1013, 4294901760
    %4583 = vmatpush1.msra.mxu0 %v4582
    %v4584 = vand.u32 %v1012, 4294901760
    %4585 = vmatprep.subr.mxu0 %v4584
    %v4586 = vand.u32 %v1011, 4294901760
    %4587 = vmatpush1.msra.mxu0 %v4586
    %v4588 = vand.u32 %v1010, 4294901760
    %4589 = vmatprep.subr.mxu0 %v4588
    %v4590 = vand.u32 %v1009, 4294901760
    %4591 = vmatpush1.msra.mxu0 %v4590
    %v4592 = vand.u32 %v1008, 4294901760
    %4593 = vmatprep.subr.mxu0 %v4592
    %v4594 = vand.u32 %v1007, 4294901760
    %4595 = vmatpush1.msra.mxu0 %v4594
    %v4596 = vand.u32 %v1006, 4294901760
    %4597 = vmatprep.subr.mxu0 %v4596
    %v4598 = vand.u32 %v1005, 4294901760
    %4599 = vmatpush1.msra.mxu0 %v4598
    %v4600 = vand.u32 %v1004, 4294901760
    %4601 = vmatprep.subr.mxu0 %v4600
    %v4602 = vand.u32 %v1003, 4294901760
    %4603 = vmatpush1.msra.mxu0 %v4602
    %v4604 = vand.u32 %v1002, 4294901760
    %4605 = vmatprep.subr.mxu0 %v4604
    %v4606 = vand.u32 %v1001, 4294901760
    %4607 = vmatpush1.msra.mxu0 %v4606
    %v4608 = vand.u32 %v1000, 4294901760
    %4609 = vmatprep.subr.mxu0 %v4608
    %v4610 = vand.u32 %v999, 4294901760
    %4611 = vmatpush1.msra.mxu0 %v4610
    %4612 = vmatprep.subr.mxu0 0.0
    %4613 = vmatpush2.msra.mxu0 0.0
    %4614 = vmatprep.subr.mxu0 0.0
    %4615 = vmatpush2.msra.mxu0 0.0
    %4616 = vmatprep.subr.mxu0 0.0
    %4617 = vmatpush2.msra.mxu0 0.0
    %4618 = vmatprep.subr.mxu0 0.0
    %4619 = vmatpush2.msra.mxu0 0.0
    %4620 = vmatprep.subr.mxu0 0.0
    %4621 = vmatpush2.msra.mxu0 0.0
    %4622 = vmatprep.subr.mxu0 0.0
    %4623 = vmatpush2.msra.mxu0 0.0
    %4624 = vmatprep.subr.mxu0 0.0
    %4625 = vmatpush2.msra.mxu0 0.0
    %4626 = vmatprep.subr.mxu0 0.0
    %4627 = vmatpush2.msra.mxu0 0.0
    %4628 = vmatprep.subr.mxu0 0.0
    %4629 = vmatpush2.msra.mxu0 0.0
    %4630 = vmatprep.subr.mxu0 0.0
    %4631 = vmatpush2.msra.mxu0 0.0
    %4632 = vmatprep.subr.mxu0 0.0
    %4633 = vmatpush2.msra.mxu0 0.0
    %4634 = vmatprep.subr.mxu0 0.0
    %4635 = vmatpush2.msra.mxu0 0.0
    %4636 = vmatprep.subr.mxu0 0.0
    %4637 = vmatpush2.msra.mxu0 0.0
    %4638 = vmatprep.subr.mxu0 0.0
    %4639 = vmatpush2.msra.mxu0 0.0
    %4640 = vmatprep.subr.mxu0 0.0
    %4641 = vmatpush2.msra.mxu0 0.0
    %4642 = vmatprep.subr.mxu0 0.0
    %4643 = vmatpush2.msra.mxu0 0.0
    %4644 = vmatprep.mubr.f32.mxu0 0.0
    %v4645 = vand.u32 %v4562, 4294901760
    %v4646 = vsub.f32 %v4562, %v4645
    %v4647 = vand.u32 %v4646, 4294901760
    %v4648 = vsub.f32 %v4646, %v4647
    %v4649 = vand.u32 %v4648, 4294901760
    %4650 = vmatmul.mubr.f32.gmra.mxu0 %v4649
    %v4651 = vpop.f32.mrf.mxu0
    %v4652 = vadd.f32 0.0, %v4651
    %v4653 = vpop.f32.mrf.mxu0
    %v4654 = vadd.f32 0.0, %v4653
    %4655 = vdwg.mxu0
    %4656 = vmatprep.subr.mxu0 0.0
    %4657 = vmatpush1.msra.mxu0 0.0
    %4658 = vmatprep.subr.mxu0 0.0
    %4659 = vmatpush1.msra.mxu0 0.0
    %4660 = vmatprep.subr.mxu0 0.0
    %4661 = vmatpush1.msra.mxu0 0.0
    %4662 = vmatprep.subr.mxu0 0.0
    %4663 = vmatpush1.msra.mxu0 0.0
    %4664 = vmatprep.subr.mxu0 0.0
    %4665 = vmatpush1.msra.mxu0 0.0
    %4666 = vmatprep.subr.mxu0 0.0
    %4667 = vmatpush1.msra.mxu0 0.0
    %4668 = vmatprep.subr.mxu0 0.0
    %4669 = vmatpush1.msra.mxu0 0.0
    %4670 = vmatprep.subr.mxu0 0.0
    %4671 = vmatpush1.msra.mxu0 0.0
    %v4672 = vand.u32 %v1014, 4294901760
    %v4673 = vsub.f32 %v1014, %v4672
    %v4674 = vand.u32 %v4673, 4294901760
    %v4675 = vsub.f32 %v4673, %v4674
    %v4676 = vand.u32 %v4675, 4294901760
    %4677 = vmatprep.subr.mxu0 %v4676
    %v4678 = vand.u32 %v1013, 4294901760
    %v4679 = vsub.f32 %v1013, %v4678
    %v4680 = vand.u32 %v4679, 4294901760
    %v4681 = vsub.f32 %v4679, %v4680
    %v4682 = vand.u32 %v4681, 4294901760
    %4683 = vmatpush1.msra.mxu0 %v4682
    %v4684 = vand.u32 %v1012, 4294901760
    %v4685 = vsub.f32 %v1012, %v4684
    %v4686 = vand.u32 %v4685, 4294901760
    %v4687 = vsub.f32 %v4685, %v4686
    %v4688 = vand.u32 %v4687, 4294901760
    %4689 = vmatprep.subr.mxu0 %v4688
    %v4690 = vand.u32 %v1011, 4294901760
    %v4691 = vsub.f32 %v1011, %v4690
    %v4692 = vand.u32 %v4691, 4294901760
    %v4693 = vsub.f32 %v4691, %v4692
    %v4694 = vand.u32 %v4693, 4294901760
    %4695 = vmatpush1.msra.mxu0 %v4694
    %v4696 = vand.u32 %v1010, 4294901760
    %v4697 = vsub.f32 %v1010, %v4696
    %v4698 = vand.u32 %v4697, 4294901760
    %v4699 = vsub.f32 %v4697, %v4698
    %v4700 = vand.u32 %v4699, 4294901760
    %4701 = vmatprep.subr.mxu0 %v4700
    %v4702 = vand.u32 %v1009, 4294901760
    %v4703 = vsub.f32 %v1009, %v4702
    %v4704 = vand.u32 %v4703, 4294901760
    %v4705 = vsub.f32 %v4703, %v4704
    %v4706 = vand.u32 %v4705, 4294901760
    %4707 = vmatpush1.msra.mxu0 %v4706
    %v4708 = vand.u32 %v1008, 4294901760
    %v4709 = vsub.f32 %v1008, %v4708
    %v4710 = vand.u32 %v4709, 4294901760
    %v4711 = vsub.f32 %v4709, %v4710
    %v4712 = vand.u32 %v4711, 4294901760
    %4713 = vmatprep.subr.mxu0 %v4712
    %v4714 = vand.u32 %v1007, 4294901760
    %v4715 = vsub.f32 %v1007, %v4714
    %v4716 = vand.u32 %v4715, 4294901760
    %v4717 = vsub.f32 %v4715, %v4716
    %v4718 = vand.u32 %v4717, 4294901760
    %4719 = vmatpush1.msra.mxu0 %v4718
    %v4720 = vand.u32 %v1006, 4294901760
    %v4721 = vsub.f32 %v1006, %v4720
    %v4722 = vand.u32 %v4721, 4294901760
    %v4723 = vsub.f32 %v4721, %v4722
    %v4724 = vand.u32 %v4723, 4294901760
    %4725 = vmatprep.subr.mxu0 %v4724
    %v4726 = vand.u32 %v1005, 4294901760
    %v4727 = vsub.f32 %v1005, %v4726
    %v4728 = vand.u32 %v4727, 4294901760
    %v4729 = vsub.f32 %v4727, %v4728
    %v4730 = vand.u32 %v4729, 4294901760
    %4731 = vmatpush1.msra.mxu0 %v4730
    %v4732 = vand.u32 %v1004, 4294901760
    %v4733 = vsub.f32 %v1004, %v4732
    %v4734 = vand.u32 %v4733, 4294901760
    %v4735 = vsub.f32 %v4733, %v4734
    %v4736 = vand.u32 %v4735, 4294901760
    %4737 = vmatprep.subr.mxu0 %v4736
    %v4738 = vand.u32 %v1003, 4294901760
    %v4739 = vsub.f32 %v1003, %v4738
    %v4740 = vand.u32 %v4739, 4294901760
    %v4741 = vsub.f32 %v4739, %v4740
    %v4742 = vand.u32 %v4741, 4294901760
    %4743 = vmatpush1.msra.mxu0 %v4742
    %v4744 = vand.u32 %v1002, 4294901760
    %v4745 = vsub.f32 %v1002, %v4744
    %v4746 = vand.u32 %v4745, 4294901760
    %v4747 = vsub.f32 %v4745, %v4746
    %v4748 = vand.u32 %v4747, 4294901760
    %4749 = vmatprep.subr.mxu0 %v4748
    %v4750 = vand.u32 %v1001, 4294901760
    %v4751 = vsub.f32 %v1001, %v4750
    %v4752 = vand.u32 %v4751, 4294901760
    %v4753 = vsub.f32 %v4751, %v4752
    %v4754 = vand.u32 %v4753, 4294901760
    %4755 = vmatpush1.msra.mxu0 %v4754
    %v4756 = vand.u32 %v1000, 4294901760
    %v4757 = vsub.f32 %v1000, %v4756
    %v4758 = vand.u32 %v4757, 4294901760
    %v4759 = vsub.f32 %v4757, %v4758
    %v4760 = vand.u32 %v4759, 4294901760
    %4761 = vmatprep.subr.mxu0 %v4760
    %v4762 = vand.u32 %v999, 4294901760
    %v4763 = vsub.f32 %v999, %v4762
    %v4764 = vand.u32 %v4763, 4294901760
    %v4765 = vsub.f32 %v4763, %v4764
    %v4766 = vand.u32 %v4765, 4294901760
    %4767 = vmatpush1.msra.mxu0 %v4766
    %4768 = vmatprep.subr.mxu0 0.0
    %4769 = vmatpush2.msra.mxu0 0.0
    %4770 = vmatprep.subr.mxu0 0.0
    %4771 = vmatpush2.msra.mxu0 0.0
    %4772 = vmatprep.subr.mxu0 0.0
    %4773 = vmatpush2.msra.mxu0 0.0
    %4774 = vmatprep.subr.mxu0 0.0
    %4775 = vmatpush2.msra.mxu0 0.0
    %4776 = vmatprep.subr.mxu0 0.0
    %4777 = vmatpush2.msra.mxu0 0.0
    %4778 = vmatprep.subr.mxu0 0.0
    %4779 = vmatpush2.msra.mxu0 0.0
    %4780 = vmatprep.subr.mxu0 0.0
    %4781 = vmatpush2.msra.mxu0 0.0
    %4782 = vmatprep.subr.mxu0 0.0
    %4783 = vmatpush2.msra.mxu0 0.0
    %4784 = vmatprep.subr.mxu0 0.0
    %4785 = vmatpush2.msra.mxu0 0.0
    %4786 = vmatprep.subr.mxu0 0.0
    %4787 = vmatpush2.msra.mxu0 0.0
    %4788 = vmatprep.subr.mxu0 0.0
    %4789 = vmatpush2.msra.mxu0 0.0
    %4790 = vmatprep.subr.mxu0 0.0
    %4791 = vmatpush2.msra.mxu0 0.0
    %4792 = vmatprep.subr.mxu0 0.0
    %4793 = vmatpush2.msra.mxu0 0.0
    %4794 = vmatprep.subr.mxu0 0.0
    %4795 = vmatpush2.msra.mxu0 0.0
    %4796 = vmatprep.subr.mxu0 0.0
    %4797 = vmatpush2.msra.mxu0 0.0
    %4798 = vmatprep.subr.mxu0 0.0
    %4799 = vmatpush2.msra.mxu0 0.0
    %4800 = vmatprep.mubr.f32.mxu0 0.0
    %v4801 = vand.u32 %v4562, 4294901760
    %4802 = vmatmul.mubr.f32.gmra.mxu0 %v4801
    %v4803 = vpop.f32.mrf.mxu0
    %v4804 = vadd.f32 %v4652, %v4803
    %v4805 = vpop.f32.mrf.mxu0
    %v4806 = vadd.f32 %v4654, %v4805
    %4807 = vdwg.mxu0
    %4808 = vmatprep.subr.mxu0 0.0
    %4809 = vmatpush1.msra.mxu0 0.0
    %4810 = vmatprep.subr.mxu0 0.0
    %4811 = vmatpush1.msra.mxu0 0.0
    %4812 = vmatprep.subr.mxu0 0.0
    %4813 = vmatpush1.msra.mxu0 0.0
    %4814 = vmatprep.subr.mxu0 0.0
    %4815 = vmatpush1.msra.mxu0 0.0
    %4816 = vmatprep.subr.mxu0 0.0
    %4817 = vmatpush1.msra.mxu0 0.0
    %4818 = vmatprep.subr.mxu0 0.0
    %4819 = vmatpush1.msra.mxu0 0.0
    %4820 = vmatprep.subr.mxu0 0.0
    %4821 = vmatpush1.msra.mxu0 0.0
    %4822 = vmatprep.subr.mxu0 0.0
    %4823 = vmatpush1.msra.mxu0 0.0
    %v4824 = vand.u32 %v1014, 4294901760
    %v4825 = vsub.f32 %v1014, %v4824
    %4826 = vmatprep.subr.mxu0 %v4825
    %v4827 = vand.u32 %v1013, 4294901760
    %v4828 = vsub.f32 %v1013, %v4827
    %4829 = vmatpush1.msra.mxu0 %v4828
    %v4830 = vand.u32 %v1012, 4294901760
    %v4831 = vsub.f32 %v1012, %v4830
    %4832 = vmatprep.subr.mxu0 %v4831
    %v4833 = vand.u32 %v1011, 4294901760
    %v4834 = vsub.f32 %v1011, %v4833
    %4835 = vmatpush1.msra.mxu0 %v4834
    %v4836 = vand.u32 %v1010, 4294901760
    %v4837 = vsub.f32 %v1010, %v4836
    %4838 = vmatprep.subr.mxu0 %v4837
    %v4839 = vand.u32 %v1009, 4294901760
    %v4840 = vsub.f32 %v1009, %v4839
    %4841 = vmatpush1.msra.mxu0 %v4840
    %v4842 = vand.u32 %v1008, 4294901760
    %v4843 = vsub.f32 %v1008, %v4842
    %4844 = vmatprep.subr.mxu0 %v4843
    %v4845 = vand.u32 %v1007, 4294901760
    %v4846 = vsub.f32 %v1007, %v4845
    %4847 = vmatpush1.msra.mxu0 %v4846
    %v4848 = vand.u32 %v1006, 4294901760
    %v4849 = vsub.f32 %v1006, %v4848
    %4850 = vmatprep.subr.mxu0 %v4849
    %v4851 = vand.u32 %v1005, 4294901760
    %v4852 = vsub.f32 %v1005, %v4851
    %4853 = vmatpush1.msra.mxu0 %v4852
    %v4854 = vand.u32 %v1004, 4294901760
    %v4855 = vsub.f32 %v1004, %v4854
    %4856 = vmatprep.subr.mxu0 %v4855
    %v4857 = vand.u32 %v1003, 4294901760
    %v4858 = vsub.f32 %v1003, %v4857
    %4859 = vmatpush1.msra.mxu0 %v4858
    %v4860 = vand.u32 %v1002, 4294901760
    %v4861 = vsub.f32 %v1002, %v4860
    %4862 = vmatprep.subr.mxu0 %v4861
    %v4863 = vand.u32 %v1001, 4294901760
    %v4864 = vsub.f32 %v1001, %v4863
    %4865 = vmatpush1.msra.mxu0 %v4864
    %v4866 = vand.u32 %v1000, 4294901760
    %v4867 = vsub.f32 %v1000, %v4866
    %4868 = vmatprep.subr.mxu0 %v4867
    %v4869 = vand.u32 %v999, 4294901760
    %v4870 = vsub.f32 %v999, %v4869
    %4871 = vmatpush1.msra.mxu0 %v4870
    %4872 = vmatprep.subr.mxu0 0.0
    %4873 = vmatpush2.msra.mxu0 0.0
    %4874 = vmatprep.subr.mxu0 0.0
    %4875 = vmatpush2.msra.mxu0 0.0
    %4876 = vmatprep.subr.mxu0 0.0
    %4877 = vmatpush2.msra.mxu0 0.0
    %4878 = vmatprep.subr.mxu0 0.0
    %4879 = vmatpush2.msra.mxu0 0.0
    %4880 = vmatprep.subr.mxu0 0.0
    %4881 = vmatpush2.msra.mxu0 0.0
    %4882 = vmatprep.subr.mxu0 0.0
    %4883 = vmatpush2.msra.mxu0 0.0
    %4884 = vmatprep.subr.mxu0 0.0
    %4885 = vmatpush2.msra.mxu0 0.0
    %4886 = vmatprep.subr.mxu0 0.0
    %4887 = vmatpush2.msra.mxu0 0.0
    %4888 = vmatprep.subr.mxu0 0.0
    %4889 = vmatpush2.msra.mxu0 0.0
    %4890 = vmatprep.subr.mxu0 0.0
    %4891 = vmatpush2.msra.mxu0 0.0
    %4892 = vmatprep.subr.mxu0 0.0
    %4893 = vmatpush2.msra.mxu0 0.0
    %4894 = vmatprep.subr.mxu0 0.0
    %4895 = vmatpush2.msra.mxu0 0.0
    %4896 = vmatprep.subr.mxu0 0.0
    %4897 = vmatpush2.msra.mxu0 0.0
    %4898 = vmatprep.subr.mxu0 0.0
    %4899 = vmatpush2.msra.mxu0 0.0
    %4900 = vmatprep.subr.mxu0 0.0
    %4901 = vmatpush2.msra.mxu0 0.0
    %4902 = vmatprep.subr.mxu0 0.0
    %4903 = vmatpush2.msra.mxu0 0.0
    %4904 = vmatprep.mubr.f32.mxu0 0.0
    %v4905 = vand.u32 %v4562, 4294901760
    %v4906 = vsub.f32 %v4562, %v4905
    %4907 = vmatmul.mubr.f32.gmra.mxu0 %v4906
    %v4908 = vpop.f32.mrf.mxu0
    %v4909 = vadd.f32 %v4804, %v4908
    %v4910 = vpop.f32.mrf.mxu0
    %v4911 = vadd.f32 %v4806, %v4910
    %4912 = vdwg.mxu0
    %4913 = vmatprep.subr.mxu0 0.0
    %4914 = vmatpush1.msra.mxu0 0.0
    %4915 = vmatprep.subr.mxu0 0.0
    %4916 = vmatpush1.msra.mxu0 0.0
    %4917 = vmatprep.subr.mxu0 0.0
    %4918 = vmatpush1.msra.mxu0 0.0
    %4919 = vmatprep.subr.mxu0 0.0
    %4920 = vmatpush1.msra.mxu0 0.0
    %4921 = vmatprep.subr.mxu0 0.0
    %4922 = vmatpush1.msra.mxu0 0.0
    %4923 = vmatprep.subr.mxu0 0.0
    %4924 = vmatpush1.msra.mxu0 0.0
    %4925 = vmatprep.subr.mxu0 0.0
    %4926 = vmatpush1.msra.mxu0 0.0
    %4927 = vmatprep.subr.mxu0 0.0
    %4928 = vmatpush1.msra.mxu0 0.0
    %v4929 = vand.u32 %v1014, 4294901760
    %4930 = vmatprep.subr.mxu0 %v4929
    %v4931 = vand.u32 %v1013, 4294901760
    %4932 = vmatpush1.msra.mxu0 %v4931
    %v4933 = vand.u32 %v1012, 4294901760
    %4934 = vmatprep.subr.mxu0 %v4933
    %v4935 = vand.u32 %v1011, 4294901760
    %4936 = vmatpush1.msra.mxu0 %v4935
    %v4937 = vand.u32 %v1010, 4294901760
    %4938 = vmatprep.subr.mxu0 %v4937
    %v4939 = vand.u32 %v1009, 4294901760
    %4940 = vmatpush1.msra.mxu0 %v4939
    %v4941 = vand.u32 %v1008, 4294901760
    %4942 = vmatprep.subr.mxu0 %v4941
    %v4943 = vand.u32 %v1007, 4294901760
    %4944 = vmatpush1.msra.mxu0 %v4943
    %v4945 = vand.u32 %v1006, 4294901760
    %4946 = vmatprep.subr.mxu0 %v4945
    %v4947 = vand.u32 %v1005, 4294901760
    %4948 = vmatpush1.msra.mxu0 %v4947
    %v4949 = vand.u32 %v1004, 4294901760
    %4950 = vmatprep.subr.mxu0 %v4949
    %v4951 = vand.u32 %v1003, 4294901760
    %4952 = vmatpush1.msra.mxu0 %v4951
    %v4953 = vand.u32 %v1002, 4294901760
    %4954 = vmatprep.subr.mxu0 %v4953
    %v4955 = vand.u32 %v1001, 4294901760
    %4956 = vmatpush1.msra.mxu0 %v4955
    %v4957 = vand.u32 %v1000, 4294901760
    %4958 = vmatprep.subr.mxu0 %v4957
    %v4959 = vand.u32 %v999, 4294901760
    %4960 = vmatpush1.msra.mxu0 %v4959
    %4961 = vmatprep.subr.mxu0 0.0
    %4962 = vmatpush2.msra.mxu0 0.0
    %4963 = vmatprep.subr.mxu0 0.0
    %4964 = vmatpush2.msra.mxu0 0.0
    %4965 = vmatprep.subr.mxu0 0.0
    %4966 = vmatpush2.msra.mxu0 0.0
    %4967 = vmatprep.subr.mxu0 0.0
    %4968 = vmatpush2.msra.mxu0 0.0
    %4969 = vmatprep.subr.mxu0 0.0
    %4970 = vmatpush2.msra.mxu0 0.0
    %4971 = vmatprep.subr.mxu0 0.0
    %4972 = vmatpush2.msra.mxu0 0.0
    %4973 = vmatprep.subr.mxu0 0.0
    %4974 = vmatpush2.msra.mxu0 0.0
    %4975 = vmatprep.subr.mxu0 0.0
    %4976 = vmatpush2.msra.mxu0 0.0
    %4977 = vmatprep.subr.mxu0 0.0
    %4978 = vmatpush2.msra.mxu0 0.0
    %4979 = vmatprep.subr.mxu0 0.0
    %4980 = vmatpush2.msra.mxu0 0.0
    %4981 = vmatprep.subr.mxu0 0.0
    %4982 = vmatpush2.msra.mxu0 0.0
    %4983 = vmatprep.subr.mxu0 0.0
    %4984 = vmatpush2.msra.mxu0 0.0
    %4985 = vmatprep.subr.mxu0 0.0
    %4986 = vmatpush2.msra.mxu0 0.0
    %4987 = vmatprep.subr.mxu0 0.0
    %4988 = vmatpush2.msra.mxu0 0.0
    %4989 = vmatprep.subr.mxu0 0.0
    %4990 = vmatpush2.msra.mxu0 0.0
    %4991 = vmatprep.subr.mxu0 0.0
    %4992 = vmatpush2.msra.mxu0 0.0
    %4993 = vmatprep.mubr.f32.mxu0 0.0
    %v4994 = vand.u32 %v4562, 4294901760
    %v4995 = vsub.f32 %v4562, %v4994
    %v4996 = vand.u32 %v4995, 4294901760
    %4997 = vmatmul.mubr.f32.gmra.mxu0 %v4996
    %v4998 = vpop.f32.mrf.mxu0
    %v4999 = vadd.f32 %v4909, %v4998
    %v5000 = vpop.f32.mrf.mxu0
    %v5001 = vadd.f32 %v4911, %v5000
    %5002 = vdwg.mxu0
    %5003 = vmatprep.subr.mxu0 0.0
    %5004 = vmatpush1.msra.mxu0 0.0
    %5005 = vmatprep.subr.mxu0 0.0
    %5006 = vmatpush1.msra.mxu0 0.0
    %5007 = vmatprep.subr.mxu0 0.0
    %5008 = vmatpush1.msra.mxu0 0.0
    %5009 = vmatprep.subr.mxu0 0.0
    %5010 = vmatpush1.msra.mxu0 0.0
    %5011 = vmatprep.subr.mxu0 0.0
    %5012 = vmatpush1.msra.mxu0 0.0
    %5013 = vmatprep.subr.mxu0 0.0
    %5014 = vmatpush1.msra.mxu0 0.0
    %5015 = vmatprep.subr.mxu0 0.0
    %5016 = vmatpush1.msra.mxu0 0.0
    %5017 = vmatprep.subr.mxu0 0.0
    %5018 = vmatpush1.msra.mxu0 0.0
    %v5019 = vand.u32 %v1014, 4294901760
    %v5020 = vsub.f32 %v1014, %v5019
    %v5021 = vand.u32 %v5020, 4294901760
    %5022 = vmatprep.subr.mxu0 %v5021
    %v5023 = vand.u32 %v1013, 4294901760
    %v5024 = vsub.f32 %v1013, %v5023
    %v5025 = vand.u32 %v5024, 4294901760
    %5026 = vmatpush1.msra.mxu0 %v5025
    %v5027 = vand.u32 %v1012, 4294901760
    %v5028 = vsub.f32 %v1012, %v5027
    %v5029 = vand.u32 %v5028, 4294901760
    %5030 = vmatprep.subr.mxu0 %v5029
    %v5031 = vand.u32 %v1011, 4294901760
    %v5032 = vsub.f32 %v1011, %v5031
    %v5033 = vand.u32 %v5032, 4294901760
    %5034 = vmatpush1.msra.mxu0 %v5033
    %v5035 = vand.u32 %v1010, 4294901760
    %v5036 = vsub.f32 %v1010, %v5035
    %v5037 = vand.u32 %v5036, 4294901760
    %5038 = vmatprep.subr.mxu0 %v5037
    %v5039 = vand.u32 %v1009, 4294901760
    %v5040 = vsub.f32 %v1009, %v5039
    %v5041 = vand.u32 %v5040, 4294901760
    %5042 = vmatpush1.msra.mxu0 %v5041
    %v5043 = vand.u32 %v1008, 4294901760
    %v5044 = vsub.f32 %v1008, %v5043
    %v5045 = vand.u32 %v5044, 4294901760
    %5046 = vmatprep.subr.mxu0 %v5045
    %v5047 = vand.u32 %v1007, 4294901760
    %v5048 = vsub.f32 %v1007, %v5047
    %v5049 = vand.u32 %v5048, 4294901760
    %5050 = vmatpush1.msra.mxu0 %v5049
    %v5051 = vand.u32 %v1006, 4294901760
    %v5052 = vsub.f32 %v1006, %v5051
    %v5053 = vand.u32 %v5052, 4294901760
    %5054 = vmatprep.subr.mxu0 %v5053
    %v5055 = vand.u32 %v1005, 4294901760
    %v5056 = vsub.f32 %v1005, %v5055
    %v5057 = vand.u32 %v5056, 4294901760
    %5058 = vmatpush1.msra.mxu0 %v5057
    %v5059 = vand.u32 %v1004, 4294901760
    %v5060 = vsub.f32 %v1004, %v5059
    %v5061 = vand.u32 %v5060, 4294901760
    %5062 = vmatprep.subr.mxu0 %v5061
    %v5063 = vand.u32 %v1003, 4294901760
    %v5064 = vsub.f32 %v1003, %v5063
    %v5065 = vand.u32 %v5064, 4294901760
    %5066 = vmatpush1.msra.mxu0 %v5065
    %v5067 = vand.u32 %v1002, 4294901760
    %v5068 = vsub.f32 %v1002, %v5067
    %v5069 = vand.u32 %v5068, 4294901760
    %5070 = vmatprep.subr.mxu0 %v5069
    %v5071 = vand.u32 %v1001, 4294901760
    %v5072 = vsub.f32 %v1001, %v5071
    %v5073 = vand.u32 %v5072, 4294901760
    %5074 = vmatpush1.msra.mxu0 %v5073
    %v5075 = vand.u32 %v1000, 4294901760
    %v5076 = vsub.f32 %v1000, %v5075
    %v5077 = vand.u32 %v5076, 4294901760
    %5078 = vmatprep.subr.mxu0 %v5077
    %v5079 = vand.u32 %v999, 4294901760
    %v5080 = vsub.f32 %v999, %v5079
    %v5081 = vand.u32 %v5080, 4294901760
    %5082 = vmatpush1.msra.mxu0 %v5081
    %5083 = vmatprep.subr.mxu0 0.0
    %5084 = vmatpush2.msra.mxu0 0.0
    %5085 = vmatprep.subr.mxu0 0.0
    %5086 = vmatpush2.msra.mxu0 0.0
    %5087 = vmatprep.subr.mxu0 0.0
    %5088 = vmatpush2.msra.mxu0 0.0
    %5089 = vmatprep.subr.mxu0 0.0
    %5090 = vmatpush2.msra.mxu0 0.0
    %5091 = vmatprep.subr.mxu0 0.0
    %5092 = vmatpush2.msra.mxu0 0.0
    %5093 = vmatprep.subr.mxu0 0.0
    %5094 = vmatpush2.msra.mxu0 0.0
    %5095 = vmatprep.subr.mxu0 0.0
    %5096 = vmatpush2.msra.mxu0 0.0
    %5097 = vmatprep.subr.mxu0 0.0
    %5098 = vmatpush2.msra.mxu0 0.0
    %5099 = vmatprep.subr.mxu0 0.0
    %5100 = vmatpush2.msra.mxu0 0.0
    %5101 = vmatprep.subr.mxu0 0.0
    %5102 = vmatpush2.msra.mxu0 0.0
    %5103 = vmatprep.subr.mxu0 0.0
    %5104 = vmatpush2.msra.mxu0 0.0
    %5105 = vmatprep.subr.mxu0 0.0
    %5106 = vmatpush2.msra.mxu0 0.0
    %5107 = vmatprep.subr.mxu0 0.0
    %5108 = vmatpush2.msra.mxu0 0.0
    %5109 = vmatprep.subr.mxu0 0.0
    %5110 = vmatpush2.msra.mxu0 0.0
    %5111 = vmatprep.subr.mxu0 0.0
    %5112 = vmatpush2.msra.mxu0 0.0
    %5113 = vmatprep.subr.mxu0 0.0
    %5114 = vmatpush2.msra.mxu0 0.0
    %5115 = vmatprep.mubr.f32.mxu0 0.0
    %v5116 = vand.u32 %v4562, 4294901760
    %5117 = vmatmul.mubr.f32.gmra.mxu0 %v5116
    %v5118 = vpop.f32.mrf.mxu0
    %v5119 = vadd.f32 %v4999, %v5118
    %v5120 = vpop.f32.mrf.mxu0
    %v5121 = vadd.f32 %v5001, %v5120
    %5122 = vdwg.mxu0
    %5123 = vmatprep.subr.mxu0 0.0
    %5124 = vmatpush1.msra.mxu0 0.0
    %5125 = vmatprep.subr.mxu0 0.0
    %5126 = vmatpush1.msra.mxu0 0.0
    %5127 = vmatprep.subr.mxu0 0.0
    %5128 = vmatpush1.msra.mxu0 0.0
    %5129 = vmatprep.subr.mxu0 0.0
    %5130 = vmatpush1.msra.mxu0 0.0
    %5131 = vmatprep.subr.mxu0 0.0
    %5132 = vmatpush1.msra.mxu0 0.0
    %5133 = vmatprep.subr.mxu0 0.0
    %5134 = vmatpush1.msra.mxu0 0.0
    %5135 = vmatprep.subr.mxu0 0.0
    %5136 = vmatpush1.msra.mxu0 0.0
    %5137 = vmatprep.subr.mxu0 0.0
    %5138 = vmatpush1.msra.mxu0 0.0
    %v5139 = vand.u32 %v1014, 4294901760
    %5140 = vmatprep.subr.mxu0 %v5139
    %v5141 = vand.u32 %v1013, 4294901760
    %5142 = vmatpush1.msra.mxu0 %v5141
    %v5143 = vand.u32 %v1012, 4294901760
    %5144 = vmatprep.subr.mxu0 %v5143
    %v5145 = vand.u32 %v1011, 4294901760
    %5146 = vmatpush1.msra.mxu0 %v5145
    %v5147 = vand.u32 %v1010, 4294901760
    %5148 = vmatprep.subr.mxu0 %v5147
    %v5149 = vand.u32 %v1009, 4294901760
    %5150 = vmatpush1.msra.mxu0 %v5149
    %v5151 = vand.u32 %v1008, 4294901760
    %5152 = vmatprep.subr.mxu0 %v5151
    %v5153 = vand.u32 %v1007, 4294901760
    %5154 = vmatpush1.msra.mxu0 %v5153
    %v5155 = vand.u32 %v1006, 4294901760
    %5156 = vmatprep.subr.mxu0 %v5155
    %v5157 = vand.u32 %v1005, 4294901760
    %5158 = vmatpush1.msra.mxu0 %v5157
    %v5159 = vand.u32 %v1004, 4294901760
    %5160 = vmatprep.subr.mxu0 %v5159
    %v5161 = vand.u32 %v1003, 4294901760
    %5162 = vmatpush1.msra.mxu0 %v5161
    %v5163 = vand.u32 %v1002, 4294901760
    %5164 = vmatprep.subr.mxu0 %v5163
    %v5165 = vand.u32 %v1001, 4294901760
    %5166 = vmatpush1.msra.mxu0 %v5165
    %v5167 = vand.u32 %v1000, 4294901760
    %5168 = vmatprep.subr.mxu0 %v5167
    %v5169 = vand.u32 %v999, 4294901760
    %5170 = vmatpush1.msra.mxu0 %v5169
    %5171 = vmatprep.subr.mxu0 0.0
    %5172 = vmatpush2.msra.mxu0 0.0
    %5173 = vmatprep.subr.mxu0 0.0
    %5174 = vmatpush2.msra.mxu0 0.0
    %5175 = vmatprep.subr.mxu0 0.0
    %5176 = vmatpush2.msra.mxu0 0.0
    %5177 = vmatprep.subr.mxu0 0.0
    %5178 = vmatpush2.msra.mxu0 0.0
    %5179 = vmatprep.subr.mxu0 0.0
    %5180 = vmatpush2.msra.mxu0 0.0
    %5181 = vmatprep.subr.mxu0 0.0
    %5182 = vmatpush2.msra.mxu0 0.0
    %5183 = vmatprep.subr.mxu0 0.0
    %5184 = vmatpush2.msra.mxu0 0.0
    %5185 = vmatprep.subr.mxu0 0.0
    %5186 = vmatpush2.msra.mxu0 0.0
    %5187 = vmatprep.subr.mxu0 0.0
    %5188 = vmatpush2.msra.mxu0 0.0
    %5189 = vmatprep.subr.mxu0 0.0
    %5190 = vmatpush2.msra.mxu0 0.0
    %5191 = vmatprep.subr.mxu0 0.0
    %5192 = vmatpush2.msra.mxu0 0.0
    %5193 = vmatprep.subr.mxu0 0.0
    %5194 = vmatpush2.msra.mxu0 0.0
    %5195 = vmatprep.subr.mxu0 0.0
    %5196 = vmatpush2.msra.mxu0 0.0
    %5197 = vmatprep.subr.mxu0 0.0
    %5198 = vmatpush2.msra.mxu0 0.0
    %5199 = vmatprep.subr.mxu0 0.0
    %5200 = vmatpush2.msra.mxu0 0.0
    %5201 = vmatprep.subr.mxu0 0.0
    %5202 = vmatpush2.msra.mxu0 0.0
    %5203 = vmatprep.mubr.f32.mxu0 0.0
    %v5204 = vand.u32 %v4562, 4294901760
    %5205 = vmatmul.mubr.f32.gmra.mxu0 %v5204
    %v5206 = vpop.f32.mrf.mxu0
    %v5207 = vadd.f32 %v5119, %v5206
    %v5208 = vpop.f32.mrf.mxu0
    %v5209 = vadd.f32 %v5121, %v5208
    %5210 = vdwg.mxu0
    %v5211 = vadd.f32 %v984, %v5207
    %v5212 = vxor.u32 %v5211, 2147483648
    %v5213 = vmul.f32 %v5212, 1.442695
    %v5214 = vpow.pop %v5213
    %v5215 = vadd.f32 %v5214, 1.0
    %v5216 = vrcp.pop %v5215
    %v5217 = vmul.f32 1.0, %v5216
    %v5218 = vmul.f32 %v5217, 2.0
    %v5219 = vsub.f32 %v5218, 1.0
    %v5220 = vmul.f32 %v5217, %v4519
    %5222 = vrot.lane.b32.xlu0 %v5219, 64
    %v5223 = vpop.permute.xlu0 %5222
    %v5225 = vmul.f32 %v5217, %v5223
    %5227 = vrot.lane.b32.xlu0 %v5225, 32
    %v5228 = vpop.permute.xlu0 %5227
    %v5230 = vadd.f32 %v5220, %v5228
    %v5231 = vtanh.pop %v5230
    %5233 = vrot.lane.b32.xlu0 %v5231, 64
    %v5234 = vpop.permute.xlu0 %5233
    %v5236 = vmul.f32 %v5217, %v5234
    %v5237 = vadd.f32 %v5209, %v2387
    %v5238 = vxor.u32 %v5237, 2147483648
    %v5239 = vmul.f32 %v5238, 1.442695
    %v5240 = vpow.pop %v5239
    %v5241 = vadd.f32 %v5240, 1.0
    %v5242 = vrcp.pop %v5241
    %v5243 = vmul.f32 1.0, %v5242
    %v5244 = vmul.f32 %v5243, 2.0
    %v5245 = vsub.f32 %v5244, 1.0
    %v5246 = vmul.f32 %v5243, %v4545
    %5248 = vrot.lane.b32.xlu0 %v5245, 64
    %v5249 = vpop.permute.xlu0 %5248
    %v5251 = vmul.f32 %v5243, %v5249
    %5253 = vrot.lane.b32.xlu0 %v5251, 32
    %v5254 = vpop.permute.xlu0 %5253
    %v5256 = vadd.f32 %v5246, %v5254
    %v5257 = vtanh.pop %v5256
    %5259 = vrot.lane.b32.xlu0 %v5257, 64
    %v5260 = vpop.permute.xlu0 %5259
    %v5262 = vmul.f32 %v5243, %v5260
    %5264 = vrot.lane.b32.xlu0 %v5236, 32
    %v5265 = vpop.permute.xlu0 %5264
    %5268 = vrot.lane.b32.xlu0 %v5262, 64
    %v5269 = vpop.permute.xlu0 %5268
    %v5271 = vsel %vm1026, %v5265, %v5269
    %v5273 = vsel %vm136, %v5271, 0
    %5275 = vmatprep.subr.mxu0 0.0
    %5276 = vmatpush1.msra.mxu0 0.0
    %5277 = vmatprep.subr.mxu0 0.0
    %5278 = vmatpush1.msra.mxu0 0.0
    %5279 = vmatprep.subr.mxu0 0.0
    %5280 = vmatpush1.msra.mxu0 0.0
    %5281 = vmatprep.subr.mxu0 0.0
    %5282 = vmatpush1.msra.mxu0 0.0
    %5283 = vmatprep.subr.mxu0 0.0
    %5284 = vmatpush1.msra.mxu0 0.0
    %5285 = vmatprep.subr.mxu0 0.0
    %5286 = vmatpush1.msra.mxu0 0.0
    %5287 = vmatprep.subr.mxu0 0.0
    %5288 = vmatpush1.msra.mxu0 0.0
    %5289 = vmatprep.subr.mxu0 0.0
    %5290 = vmatpush1.msra.mxu0 0.0
    %v5291 = vand.u32 %v1014, 4294901760
    %5292 = vmatprep.subr.mxu0 %v5291
    %v5293 = vand.u32 %v1013, 4294901760
    %5294 = vmatpush1.msra.mxu0 %v5293
    %v5295 = vand.u32 %v1012, 4294901760
    %5296 = vmatprep.subr.mxu0 %v5295
    %v5297 = vand.u32 %v1011, 4294901760
    %5298 = vmatpush1.msra.mxu0 %v5297
    %v5299 = vand.u32 %v1010, 4294901760
    %5300 = vmatprep.subr.mxu0 %v5299
    %v5301 = vand.u32 %v1009, 4294901760
    %5302 = vmatpush1.msra.mxu0 %v5301
    %v5303 = vand.u32 %v1008, 4294901760
    %5304 = vmatprep.subr.mxu0 %v5303
    %v5305 = vand.u32 %v1007, 4294901760
    %5306 = vmatpush1.msra.mxu0 %v5305
    %v5307 = vand.u32 %v1006, 4294901760
    %5308 = vmatprep.subr.mxu0 %v5307
    %v5309 = vand.u32 %v1005, 4294901760
    %5310 = vmatpush1.msra.mxu0 %v5309
    %v5311 = vand.u32 %v1004, 4294901760
    %5312 = vmatprep.subr.mxu0 %v5311
    %v5313 = vand.u32 %v1003, 4294901760
    %5314 = vmatpush1.msra.mxu0 %v5313
    %v5315 = vand.u32 %v1002, 4294901760
    %5316 = vmatprep.subr.mxu0 %v5315
    %v5317 = vand.u32 %v1001, 4294901760
    %5318 = vmatpush1.msra.mxu0 %v5317
    %v5319 = vand.u32 %v1000, 4294901760
    %5320 = vmatprep.subr.mxu0 %v5319
    %v5321 = vand.u32 %v999, 4294901760
    %5322 = vmatpush1.msra.mxu0 %v5321
    %5323 = vmatprep.subr.mxu0 0.0
    %5324 = vmatpush2.msra.mxu0 0.0
    %5325 = vmatprep.subr.mxu0 0.0
    %5326 = vmatpush2.msra.mxu0 0.0
    %5327 = vmatprep.subr.mxu0 0.0
    %5328 = vmatpush2.msra.mxu0 0.0
    %5329 = vmatprep.subr.mxu0 0.0
    %5330 = vmatpush2.msra.mxu0 0.0
    %5331 = vmatprep.subr.mxu0 0.0
    %5332 = vmatpush2.msra.mxu0 0.0
    %5333 = vmatprep.subr.mxu0 0.0
    %5334 = vmatpush2.msra.mxu0 0.0
    %5335 = vmatprep.subr.mxu0 0.0
    %5336 = vmatpush2.msra.mxu0 0.0
    %5337 = vmatprep.subr.mxu0 0.0
    %5338 = vmatpush2.msra.mxu0 0.0
    %5339 = vmatprep.subr.mxu0 0.0
    %5340 = vmatpush2.msra.mxu0 0.0
    %5341 = vmatprep.subr.mxu0 0.0
    %5342 = vmatpush2.msra.mxu0 0.0
    %5343 = vmatprep.subr.mxu0 0.0
    %5344 = vmatpush2.msra.mxu0 0.0
    %5345 = vmatprep.subr.mxu0 0.0
    %5346 = vmatpush2.msra.mxu0 0.0
    %5347 = vmatprep.subr.mxu0 0.0
    %5348 = vmatpush2.msra.mxu0 0.0
    %5349 = vmatprep.subr.mxu0 0.0
    %5350 = vmatpush2.msra.mxu0 0.0
    %5351 = vmatprep.subr.mxu0 0.0
    %5352 = vmatpush2.msra.mxu0 0.0
    %5353 = vmatprep.subr.mxu0 0.0
    %5354 = vmatpush2.msra.mxu0 0.0
    %5355 = vmatprep.mubr.f32.mxu0 0.0
    %v5356 = vand.u32 %v5273, 4294901760
    %v5357 = vsub.f32 %v5273, %v5356
    %v5358 = vand.u32 %v5357, 4294901760
    %v5359 = vsub.f32 %v5357, %v5358
    %v5360 = vand.u32 %v5359, 4294901760
    %5361 = vmatmul.mubr.f32.gmra.mxu0 %v5360
    %v5362 = vpop.f32.mrf.mxu0
    %v5363 = vadd.f32 0.0, %v5362
    %v5364 = vpop.f32.mrf.mxu0
    %v5365 = vadd.f32 0.0, %v5364
    %5366 = vdwg.mxu0
    %5367 = vmatprep.subr.mxu0 0.0
    %5368 = vmatpush1.msra.mxu0 0.0
    %5369 = vmatprep.subr.mxu0 0.0
    %5370 = vmatpush1.msra.mxu0 0.0
    %5371 = vmatprep.subr.mxu0 0.0
    %5372 = vmatpush1.msra.mxu0 0.0
    %5373 = vmatprep.subr.mxu0 0.0
    %5374 = vmatpush1.msra.mxu0 0.0
    %5375 = vmatprep.subr.mxu0 0.0
    %5376 = vmatpush1.msra.mxu0 0.0
    %5377 = vmatprep.subr.mxu0 0.0
    %5378 = vmatpush1.msra.mxu0 0.0
    %5379 = vmatprep.subr.mxu0 0.0
    %5380 = vmatpush1.msra.mxu0 0.0
    %5381 = vmatprep.subr.mxu0 0.0
    %5382 = vmatpush1.msra.mxu0 0.0
    %v5383 = vand.u32 %v1014, 4294901760
    %v5384 = vsub.f32 %v1014, %v5383
    %v5385 = vand.u32 %v5384, 4294901760
    %v5386 = vsub.f32 %v5384, %v5385
    %v5387 = vand.u32 %v5386, 4294901760
    %5388 = vmatprep.subr.mxu0 %v5387
    %v5389 = vand.u32 %v1013, 4294901760
    %v5390 = vsub.f32 %v1013, %v5389
    %v5391 = vand.u32 %v5390, 4294901760
    %v5392 = vsub.f32 %v5390, %v5391
    %v5393 = vand.u32 %v5392, 4294901760
    %5394 = vmatpush1.msra.mxu0 %v5393
    %v5395 = vand.u32 %v1012, 4294901760
    %v5396 = vsub.f32 %v1012, %v5395
    %v5397 = vand.u32 %v5396, 4294901760
    %v5398 = vsub.f32 %v5396, %v5397
    %v5399 = vand.u32 %v5398, 4294901760
    %5400 = vmatprep.subr.mxu0 %v5399
    %v5401 = vand.u32 %v1011, 4294901760
    %v5402 = vsub.f32 %v1011, %v5401
    %v5403 = vand.u32 %v5402, 4294901760
    %v5404 = vsub.f32 %v5402, %v5403
    %v5405 = vand.u32 %v5404, 4294901760
    %5406 = vmatpush1.msra.mxu0 %v5405
    %v5407 = vand.u32 %v1010, 4294901760
    %v5408 = vsub.f32 %v1010, %v5407
    %v5409 = vand.u32 %v5408, 4294901760
    %v5410 = vsub.f32 %v5408, %v5409
    %v5411 = vand.u32 %v5410, 4294901760
    %5412 = vmatprep.subr.mxu0 %v5411
    %v5413 = vand.u32 %v1009, 4294901760
    %v5414 = vsub.f32 %v1009, %v5413
    %v5415 = vand.u32 %v5414, 4294901760
    %v5416 = vsub.f32 %v5414, %v5415
    %v5417 = vand.u32 %v5416, 4294901760
    %5418 = vmatpush1.msra.mxu0 %v5417
    %v5419 = vand.u32 %v1008, 4294901760
    %v5420 = vsub.f32 %v1008, %v5419
    %v5421 = vand.u32 %v5420, 4294901760
    %v5422 = vsub.f32 %v5420, %v5421
    %v5423 = vand.u32 %v5422, 4294901760
    %5424 = vmatprep.subr.mxu0 %v5423
    %v5425 = vand.u32 %v1007, 4294901760
    %v5426 = vsub.f32 %v1007, %v5425
    %v5427 = vand.u32 %v5426, 4294901760
    %v5428 = vsub.f32 %v5426, %v5427
    %v5429 = vand.u32 %v5428, 4294901760
    %5430 = vmatpush1.msra.mxu0 %v5429
    %v5431 = vand.u32 %v1006, 4294901760
    %v5432 = vsub.f32 %v1006, %v5431
    %v5433 = vand.u32 %v5432, 4294901760
    %v5434 = vsub.f32 %v5432, %v5433
    %v5435 = vand.u32 %v5434, 4294901760
    %5436 = vmatprep.subr.mxu0 %v5435
    %v5437 = vand.u32 %v1005, 4294901760
    %v5438 = vsub.f32 %v1005, %v5437
    %v5439 = vand.u32 %v5438, 4294901760
    %v5440 = vsub.f32 %v5438, %v5439
    %v5441 = vand.u32 %v5440, 4294901760
    %5442 = vmatpush1.msra.mxu0 %v5441
    %v5443 = vand.u32 %v1004, 4294901760
    %v5444 = vsub.f32 %v1004, %v5443
    %v5445 = vand.u32 %v5444, 4294901760
    %v5446 = vsub.f32 %v5444, %v5445
    %v5447 = vand.u32 %v5446, 4294901760
    %5448 = vmatprep.subr.mxu0 %v5447
    %v5449 = vand.u32 %v1003, 4294901760
    %v5450 = vsub.f32 %v1003, %v5449
    %v5451 = vand.u32 %v5450, 4294901760
    %v5452 = vsub.f32 %v5450, %v5451
    %v5453 = vand.u32 %v5452, 4294901760
    %5454 = vmatpush1.msra.mxu0 %v5453
    %v5455 = vand.u32 %v1002, 4294901760
    %v5456 = vsub.f32 %v1002, %v5455
    %v5457 = vand.u32 %v5456, 4294901760
    %v5458 = vsub.f32 %v5456, %v5457
    %v5459 = vand.u32 %v5458, 4294901760
    %5460 = vmatprep.subr.mxu0 %v5459
    %v5461 = vand.u32 %v1001, 4294901760
    %v5462 = vsub.f32 %v1001, %v5461
    %v5463 = vand.u32 %v5462, 4294901760
    %v5464 = vsub.f32 %v5462, %v5463
    %v5465 = vand.u32 %v5464, 4294901760
    %5466 = vmatpush1.msra.mxu0 %v5465
    %v5467 = vand.u32 %v1000, 4294901760
    %v5468 = vsub.f32 %v1000, %v5467
    %v5469 = vand.u32 %v5468, 4294901760
    %v5470 = vsub.f32 %v5468, %v5469
    %v5471 = vand.u32 %v5470, 4294901760
    %5472 = vmatprep.subr.mxu0 %v5471
    %v5473 = vand.u32 %v999, 4294901760
    %v5474 = vsub.f32 %v999, %v5473
    %v5475 = vand.u32 %v5474, 4294901760
    %v5476 = vsub.f32 %v5474, %v5475
    %v5477 = vand.u32 %v5476, 4294901760
    %5478 = vmatpush1.msra.mxu0 %v5477
    %5479 = vmatprep.subr.mxu0 0.0
    %5480 = vmatpush2.msra.mxu0 0.0
    %5481 = vmatprep.subr.mxu0 0.0
    %5482 = vmatpush2.msra.mxu0 0.0
    %5483 = vmatprep.subr.mxu0 0.0
    %5484 = vmatpush2.msra.mxu0 0.0
    %5485 = vmatprep.subr.mxu0 0.0
    %5486 = vmatpush2.msra.mxu0 0.0
    %5487 = vmatprep.subr.mxu0 0.0
    %5488 = vmatpush2.msra.mxu0 0.0
    %5489 = vmatprep.subr.mxu0 0.0
    %5490 = vmatpush2.msra.mxu0 0.0
    %5491 = vmatprep.subr.mxu0 0.0
    %5492 = vmatpush2.msra.mxu0 0.0
    %5493 = vmatprep.subr.mxu0 0.0
    %5494 = vmatpush2.msra.mxu0 0.0
    %5495 = vmatprep.subr.mxu0 0.0
    %5496 = vmatpush2.msra.mxu0 0.0
    %5497 = vmatprep.subr.mxu0 0.0
    %5498 = vmatpush2.msra.mxu0 0.0
    %5499 = vmatprep.subr.mxu0 0.0
    %5500 = vmatpush2.msra.mxu0 0.0
    %5501 = vmatprep.subr.mxu0 0.0
    %5502 = vmatpush2.msra.mxu0 0.0
    %5503 = vmatprep.subr.mxu0 0.0
    %5504 = vmatpush2.msra.mxu0 0.0
    %5505 = vmatprep.subr.mxu0 0.0
    %5506 = vmatpush2.msra.mxu0 0.0
    %5507 = vmatprep.subr.mxu0 0.0
    %5508 = vmatpush2.msra.mxu0 0.0
    %5509 = vmatprep.subr.mxu0 0.0
    %5510 = vmatpush2.msra.mxu0 0.0
    %5511 = vmatprep.mubr.f32.mxu0 0.0
    %v5512 = vand.u32 %v5273, 4294901760
    %5513 = vmatmul.mubr.f32.gmra.mxu0 %v5512
    %v5514 = vpop.f32.mrf.mxu0
    %v5515 = vadd.f32 %v5363, %v5514
    %v5516 = vpop.f32.mrf.mxu0
    %v5517 = vadd.f32 %v5365, %v5516
    %5518 = vdwg.mxu0
    %5519 = vmatprep.subr.mxu0 0.0
    %5520 = vmatpush1.msra.mxu0 0.0
    %5521 = vmatprep.subr.mxu0 0.0
    %5522 = vmatpush1.msra.mxu0 0.0
    %5523 = vmatprep.subr.mxu0 0.0
    %5524 = vmatpush1.msra.mxu0 0.0
    %5525 = vmatprep.subr.mxu0 0.0
    %5526 = vmatpush1.msra.mxu0 0.0
    %5527 = vmatprep.subr.mxu0 0.0
    %5528 = vmatpush1.msra.mxu0 0.0
    %5529 = vmatprep.subr.mxu0 0.0
    %5530 = vmatpush1.msra.mxu0 0.0
    %5531 = vmatprep.subr.mxu0 0.0
    %5532 = vmatpush1.msra.mxu0 0.0
    %5533 = vmatprep.subr.mxu0 0.0
    %5534 = vmatpush1.msra.mxu0 0.0
    %v5535 = vand.u32 %v1014, 4294901760
    %v5536 = vsub.f32 %v1014, %v5535
    %5537 = vmatprep.subr.mxu0 %v5536
    %v5538 = vand.u32 %v1013, 4294901760
    %v5539 = vsub.f32 %v1013, %v5538
    %5540 = vmatpush1.msra.mxu0 %v5539
    %v5541 = vand.u32 %v1012, 4294901760
    %v5542 = vsub.f32 %v1012, %v5541
    %5543 = vmatprep.subr.mxu0 %v5542
    %v5544 = vand.u32 %v1011, 4294901760
    %v5545 = vsub.f32 %v1011, %v5544
    %5546 = vmatpush1.msra.mxu0 %v5545
    %v5547 = vand.u32 %v1010, 4294901760
    %v5548 = vsub.f32 %v1010, %v5547
    %5549 = vmatprep.subr.mxu0 %v5548
    %v5550 = vand.u32 %v1009, 4294901760
    %v5551 = vsub.f32 %v1009, %v5550
    %5552 = vmatpush1.msra.mxu0 %v5551
    %v5553 = vand.u32 %v1008, 4294901760
    %v5554 = vsub.f32 %v1008, %v5553
    %5555 = vmatprep.subr.mxu0 %v5554
    %v5556 = vand.u32 %v1007, 4294901760
    %v5557 = vsub.f32 %v1007, %v5556
    %5558 = vmatpush1.msra.mxu0 %v5557
    %v5559 = vand.u32 %v1006, 4294901760
    %v5560 = vsub.f32 %v1006, %v5559
    %5561 = vmatprep.subr.mxu0 %v5560
    %v5562 = vand.u32 %v1005, 4294901760
    %v5563 = vsub.f32 %v1005, %v5562
    %5564 = vmatpush1.msra.mxu0 %v5563
    %v5565 = vand.u32 %v1004, 4294901760
    %v5566 = vsub.f32 %v1004, %v5565
    %5567 = vmatprep.subr.mxu0 %v5566
    %v5568 = vand.u32 %v1003, 4294901760
    %v5569 = vsub.f32 %v1003, %v5568
    %5570 = vmatpush1.msra.mxu0 %v5569
    %v5571 = vand.u32 %v1002, 4294901760
    %v5572 = vsub.f32 %v1002, %v5571
    %5573 = vmatprep.subr.mxu0 %v5572
    %v5574 = vand.u32 %v1001, 4294901760
    %v5575 = vsub.f32 %v1001, %v5574
    %5576 = vmatpush1.msra.mxu0 %v5575
    %v5577 = vand.u32 %v1000, 4294901760
    %v5578 = vsub.f32 %v1000, %v5577
    %5579 = vmatprep.subr.mxu0 %v5578
    %v5580 = vand.u32 %v999, 4294901760
    %v5581 = vsub.f32 %v999, %v5580
    %5582 = vmatpush1.msra.mxu0 %v5581
    %5583 = vmatprep.subr.mxu0 0.0
    %5584 = vmatpush2.msra.mxu0 0.0
    %5585 = vmatprep.subr.mxu0 0.0
    %5586 = vmatpush2.msra.mxu0 0.0
    %5587 = vmatprep.subr.mxu0 0.0
    %5588 = vmatpush2.msra.mxu0 0.0
    %5589 = vmatprep.subr.mxu0 0.0
    %5590 = vmatpush2.msra.mxu0 0.0
    %5591 = vmatprep.subr.mxu0 0.0
    %5592 = vmatpush2.msra.mxu0 0.0
    %5593 = vmatprep.subr.mxu0 0.0
    %5594 = vmatpush2.msra.mxu0 0.0
    %5595 = vmatprep.subr.mxu0 0.0
    %5596 = vmatpush2.msra.mxu0 0.0
    %5597 = vmatprep.subr.mxu0 0.0
    %5598 = vmatpush2.msra.mxu0 0.0
    %5599 = vmatprep.subr.mxu0 0.0
    %5600 = vmatpush2.msra.mxu0 0.0
    %5601 = vmatprep.subr.mxu0 0.0
    %5602 = vmatpush2.msra.mxu0 0.0
    %5603 = vmatprep.subr.mxu0 0.0
    %5604 = vmatpush2.msra.mxu0 0.0
    %5605 = vmatprep.subr.mxu0 0.0
    %5606 = vmatpush2.msra.mxu0 0.0
    %5607 = vmatprep.subr.mxu0 0.0
    %5608 = vmatpush2.msra.mxu0 0.0
    %5609 = vmatprep.subr.mxu0 0.0
    %5610 = vmatpush2.msra.mxu0 0.0
    %5611 = vmatprep.subr.mxu0 0.0
    %5612 = vmatpush2.msra.mxu0 0.0
    %5613 = vmatprep.subr.mxu0 0.0
    %5614 = vmatpush2.msra.mxu0 0.0
    %5615 = vmatprep.mubr.f32.mxu0 0.0
    %v5616 = vand.u32 %v5273, 4294901760
    %v5617 = vsub.f32 %v5273, %v5616
    %5618 = vmatmul.mubr.f32.gmra.mxu0 %v5617
    %v5619 = vpop.f32.mrf.mxu0
    %v5620 = vadd.f32 %v5515, %v5619
    %v5621 = vpop.f32.mrf.mxu0
    %v5622 = vadd.f32 %v5517, %v5621
    %5623 = vdwg.mxu0
    %5624 = vmatprep.subr.mxu0 0.0
    %5625 = vmatpush1.msra.mxu0 0.0
    %5626 = vmatprep.subr.mxu0 0.0
    %5627 = vmatpush1.msra.mxu0 0.0
    %5628 = vmatprep.subr.mxu0 0.0
    %5629 = vmatpush1.msra.mxu0 0.0
    %5630 = vmatprep.subr.mxu0 0.0
    %5631 = vmatpush1.msra.mxu0 0.0
    %5632 = vmatprep.subr.mxu0 0.0
    %5633 = vmatpush1.msra.mxu0 0.0
    %5634 = vmatprep.subr.mxu0 0.0
    %5635 = vmatpush1.msra.mxu0 0.0
    %5636 = vmatprep.subr.mxu0 0.0
    %5637 = vmatpush1.msra.mxu0 0.0
    %5638 = vmatprep.subr.mxu0 0.0
    %5639 = vmatpush1.msra.mxu0 0.0
    %v5640 = vand.u32 %v1014, 4294901760
    %5641 = vmatprep.subr.mxu0 %v5640
    %v5642 = vand.u32 %v1013, 4294901760
    %5643 = vmatpush1.msra.mxu0 %v5642
    %v5644 = vand.u32 %v1012, 4294901760
    %5645 = vmatprep.subr.mxu0 %v5644
    %v5646 = vand.u32 %v1011, 4294901760
    %5647 = vmatpush1.msra.mxu0 %v5646
    %v5648 = vand.u32 %v1010, 4294901760
    %5649 = vmatprep.subr.mxu0 %v5648
    %v5650 = vand.u32 %v1009, 4294901760
    %5651 = vmatpush1.msra.mxu0 %v5650
    %v5652 = vand.u32 %v1008, 4294901760
    %5653 = vmatprep.subr.mxu0 %v5652
    %v5654 = vand.u32 %v1007, 4294901760
    %5655 = vmatpush1.msra.mxu0 %v5654
    %v5656 = vand.u32 %v1006, 4294901760
    %5657 = vmatprep.subr.mxu0 %v5656
    %v5658 = vand.u32 %v1005, 4294901760
    %5659 = vmatpush1.msra.mxu0 %v5658
    %v5660 = vand.u32 %v1004, 4294901760
    %5661 = vmatprep.subr.mxu0 %v5660
    %v5662 = vand.u32 %v1003, 4294901760
    %5663 = vmatpush1.msra.mxu0 %v5662
    %v5664 = vand.u32 %v1002, 4294901760
    %5665 = vmatprep.subr.mxu0 %v5664
    %v5666 = vand.u32 %v1001, 4294901760
    %5667 = vmatpush1.msra.mxu0 %v5666
    %v5668 = vand.u32 %v1000, 4294901760
    %5669 = vmatprep.subr.mxu0 %v5668
    %v5670 = vand.u32 %v999, 4294901760
    %5671 = vmatpush1.msra.mxu0 %v5670
    %5672 = vmatprep.subr.mxu0 0.0
    %5673 = vmatpush2.msra.mxu0 0.0
    %5674 = vmatprep.subr.mxu0 0.0
    %5675 = vmatpush2.msra.mxu0 0.0
    %5676 = vmatprep.subr.mxu0 0.0
    %5677 = vmatpush2.msra.mxu0 0.0
    %5678 = vmatprep.subr.mxu0 0.0
    %5679 = vmatpush2.msra.mxu0 0.0
    %5680 = vmatprep.subr.mxu0 0.0
    %5681 = vmatpush2.msra.mxu0 0.0
    %5682 = vmatprep.subr.mxu0 0.0
    %5683 = vmatpush2.msra.mxu0 0.0
    %5684 = vmatprep.subr.mxu0 0.0
    %5685 = vmatpush2.msra.mxu0 0.0
    %5686 = vmatprep.subr.mxu0 0.0
    %5687 = vmatpush2.msra.mxu0 0.0
    %5688 = vmatprep.subr.mxu0 0.0
    %5689 = vmatpush2.msra.mxu0 0.0
    %5690 = vmatprep.subr.mxu0 0.0
    %5691 = vmatpush2.msra.mxu0 0.0
    %5692 = vmatprep.subr.mxu0 0.0
    %5693 = vmatpush2.msra.mxu0 0.0
    %5694 = vmatprep.subr.mxu0 0.0
    %5695 = vmatpush2.msra.mxu0 0.0
    %5696 = vmatprep.subr.mxu0 0.0
    %5697 = vmatpush2.msra.mxu0 0.0
    %5698 = vmatprep.subr.mxu0 0.0
    %5699 = vmatpush2.msra.mxu0 0.0
    %5700 = vmatprep.subr.mxu0 0.0
    %5701 = vmatpush2.msra.mxu0 0.0
    %5702 = vmatprep.subr.mxu0 0.0
    %5703 = vmatpush2.msra.mxu0 0.0
    %5704 = vmatprep.mubr.f32.mxu0 0.0
    %v5705 = vand.u32 %v5273, 4294901760
    %v5706 = vsub.f32 %v5273, %v5705
    %v5707 = vand.u32 %v5706, 4294901760
    %5708 = vmatmul.mubr.f32.gmra.mxu0 %v5707
    %v5709 = vpop.f32.mrf.mxu0
    %v5710 = vadd.f32 %v5620, %v5709
    %v5711 = vpop.f32.mrf.mxu0
    %v5712 = vadd.f32 %v5622, %v5711
    %5713 = vdwg.mxu0
    %5714 = vmatprep.subr.mxu0 0.0
    %5715 = vmatpush1.msra.mxu0 0.0
    %5716 = vmatprep.subr.mxu0 0.0
    %5717 = vmatpush1.msra.mxu0 0.0
    %5718 = vmatprep.subr.mxu0 0.0
    %5719 = vmatpush1.msra.mxu0 0.0
    %5720 = vmatprep.subr.mxu0 0.0
    %5721 = vmatpush1.msra.mxu0 0.0
    %5722 = vmatprep.subr.mxu0 0.0
    %5723 = vmatpush1.msra.mxu0 0.0
    %5724 = vmatprep.subr.mxu0 0.0
    %5725 = vmatpush1.msra.mxu0 0.0
    %5726 = vmatprep.subr.mxu0 0.0
    %5727 = vmatpush1.msra.mxu0 0.0
    %5728 = vmatprep.subr.mxu0 0.0
    %5729 = vmatpush1.msra.mxu0 0.0
    %v5730 = vand.u32 %v1014, 4294901760
    %v5731 = vsub.f32 %v1014, %v5730
    %v5732 = vand.u32 %v5731, 4294901760
    %5733 = vmatprep.subr.mxu0 %v5732
    %v5734 = vand.u32 %v1013, 4294901760
    %v5735 = vsub.f32 %v1013, %v5734
    %v5736 = vand.u32 %v5735, 4294901760
    %5737 = vmatpush1.msra.mxu0 %v5736
    %v5738 = vand.u32 %v1012, 4294901760
    %v5739 = vsub.f32 %v1012, %v5738
    %v5740 = vand.u32 %v5739, 4294901760
    %5741 = vmatprep.subr.mxu0 %v5740
    %v5742 = vand.u32 %v1011, 4294901760
    %v5743 = vsub.f32 %v1011, %v5742
    %v5744 = vand.u32 %v5743, 4294901760
    %5745 = vmatpush1.msra.mxu0 %v5744
    %v5746 = vand.u32 %v1010, 4294901760
    %v5747 = vsub.f32 %v1010, %v5746
    %v5748 = vand.u32 %v5747, 4294901760
    %5749 = vmatprep.subr.mxu0 %v5748
    %v5750 = vand.u32 %v1009, 4294901760
    %v5751 = vsub.f32 %v1009, %v5750
    %v5752 = vand.u32 %v5751, 4294901760
    %5753 = vmatpush1.msra.mxu0 %v5752
    %v5754 = vand.u32 %v1008, 4294901760
    %v5755 = vsub.f32 %v1008, %v5754
    %v5756 = vand.u32 %v5755, 4294901760
    %5757 = vmatprep.subr.mxu0 %v5756
    %v5758 = vand.u32 %v1007, 4294901760
    %v5759 = vsub.f32 %v1007, %v5758
    %v5760 = vand.u32 %v5759, 4294901760
    %5761 = vmatpush1.msra.mxu0 %v5760
    %v5762 = vand.u32 %v1006, 4294901760
    %v5763 = vsub.f32 %v1006, %v5762
    %v5764 = vand.u32 %v5763, 4294901760
    %5765 = vmatprep.subr.mxu0 %v5764
    %v5766 = vand.u32 %v1005, 4294901760
    %v5767 = vsub.f32 %v1005, %v5766
    %v5768 = vand.u32 %v5767, 4294901760
    %5769 = vmatpush1.msra.mxu0 %v5768
    %v5770 = vand.u32 %v1004, 4294901760
    %v5771 = vsub.f32 %v1004, %v5770
    %v5772 = vand.u32 %v5771, 4294901760
    %5773 = vmatprep.subr.mxu0 %v5772
    %v5774 = vand.u32 %v1003, 4294901760
    %v5775 = vsub.f32 %v1003, %v5774
    %v5776 = vand.u32 %v5775, 4294901760
    %5777 = vmatpush1.msra.mxu0 %v5776
    %v5778 = vand.u32 %v1002, 4294901760
    %v5779 = vsub.f32 %v1002, %v5778
    %v5780 = vand.u32 %v5779, 4294901760
    %5781 = vmatprep.subr.mxu0 %v5780
    %v5782 = vand.u32 %v1001, 4294901760
    %v5783 = vsub.f32 %v1001, %v5782
    %v5784 = vand.u32 %v5783, 4294901760
    %5785 = vmatpush1.msra.mxu0 %v5784
    %v5786 = vand.u32 %v1000, 4294901760
    %v5787 = vsub.f32 %v1000, %v5786
    %v5788 = vand.u32 %v5787, 4294901760
    %5789 = vmatprep.subr.mxu0 %v5788
    %v5790 = vand.u32 %v999, 4294901760
    %v5791 = vsub.f32 %v999, %v5790
    %v5792 = vand.u32 %v5791, 4294901760
    %5793 = vmatpush1.msra.mxu0 %v5792
    %5794 = vmatprep.subr.mxu0 0.0
    %5795 = vmatpush2.msra.mxu0 0.0
    %5796 = vmatprep.subr.mxu0 0.0
    %5797 = vmatpush2.msra.mxu0 0.0
    %5798 = vmatprep.subr.mxu0 0.0
    %5799 = vmatpush2.msra.mxu0 0.0
    %5800 = vmatprep.subr.mxu0 0.0
    %5801 = vmatpush2.msra.mxu0 0.0
    %5802 = vmatprep.subr.mxu0 0.0
    %5803 = vmatpush2.msra.mxu0 0.0
    %5804 = vmatprep.subr.mxu0 0.0
    %5805 = vmatpush2.msra.mxu0 0.0
    %5806 = vmatprep.subr.mxu0 0.0
    %5807 = vmatpush2.msra.mxu0 0.0
    %5808 = vmatprep.subr.mxu0 0.0
    %5809 = vmatpush2.msra.mxu0 0.0
    %5810 = vmatprep.subr.mxu0 0.0
    %5811 = vmatpush2.msra.mxu0 0.0
    %5812 = vmatprep.subr.mxu0 0.0
    %5813 = vmatpush2.msra.mxu0 0.0
    %5814 = vmatprep.subr.mxu0 0.0
    %5815 = vmatpush2.msra.mxu0 0.0
    %5816 = vmatprep.subr.mxu0 0.0
    %5817 = vmatpush2.msra.mxu0 0.0
    %5818 = vmatprep.subr.mxu0 0.0
    %5819 = vmatpush2.msra.mxu0 0.0
    %5820 = vmatprep.subr.mxu0 0.0
    %5821 = vmatpush2.msra.mxu0 0.0
    %5822 = vmatprep.subr.mxu0 0.0
    %5823 = vmatpush2.msra.mxu0 0.0
    %5824 = vmatprep.subr.mxu0 0.0
    %5825 = vmatpush2.msra.mxu0 0.0
    %5826 = vmatprep.mubr.f32.mxu0 0.0
    %v5827 = vand.u32 %v5273, 4294901760
    %5828 = vmatmul.mubr.f32.gmra.mxu0 %v5827
    %v5829 = vpop.f32.mrf.mxu0
    %v5830 = vadd.f32 %v5710, %v5829
    %v5831 = vpop.f32.mrf.mxu0
    %v5832 = vadd.f32 %v5712, %v5831
    %5833 = vdwg.mxu0
    %5834 = vmatprep.subr.mxu0 0.0
    %5835 = vmatpush1.msra.mxu0 0.0
    %5836 = vmatprep.subr.mxu0 0.0
    %5837 = vmatpush1.msra.mxu0 0.0
    %5838 = vmatprep.subr.mxu0 0.0
    %5839 = vmatpush1.msra.mxu0 0.0
    %5840 = vmatprep.subr.mxu0 0.0
    %5841 = vmatpush1.msra.mxu0 0.0
    %5842 = vmatprep.subr.mxu0 0.0
    %5843 = vmatpush1.msra.mxu0 0.0
    %5844 = vmatprep.subr.mxu0 0.0
    %5845 = vmatpush1.msra.mxu0 0.0
    %5846 = vmatprep.subr.mxu0 0.0
    %5847 = vmatpush1.msra.mxu0 0.0
    %5848 = vmatprep.subr.mxu0 0.0
    %5849 = vmatpush1.msra.mxu0 0.0
    %v5850 = vand.u32 %v1014, 4294901760
    %5851 = vmatprep.subr.mxu0 %v5850
    %v5852 = vand.u32 %v1013, 4294901760
    %5853 = vmatpush1.msra.mxu0 %v5852
    %v5854 = vand.u32 %v1012, 4294901760
    %5855 = vmatprep.subr.mxu0 %v5854
    %v5856 = vand.u32 %v1011, 4294901760
    %5857 = vmatpush1.msra.mxu0 %v5856
    %v5858 = vand.u32 %v1010, 4294901760
    %5859 = vmatprep.subr.mxu0 %v5858
    %v5860 = vand.u32 %v1009, 4294901760
    %5861 = vmatpush1.msra.mxu0 %v5860
    %v5862 = vand.u32 %v1008, 4294901760
    %5863 = vmatprep.subr.mxu0 %v5862
    %v5864 = vand.u32 %v1007, 4294901760
    %5865 = vmatpush1.msra.mxu0 %v5864
    %v5866 = vand.u32 %v1006, 4294901760
    %5867 = vmatprep.subr.mxu0 %v5866
    %v5868 = vand.u32 %v1005, 4294901760
    %5869 = vmatpush1.msra.mxu0 %v5868
    %v5870 = vand.u32 %v1004, 4294901760
    %5871 = vmatprep.subr.mxu0 %v5870
    %v5872 = vand.u32 %v1003, 4294901760
    %5873 = vmatpush1.msra.mxu0 %v5872
    %v5874 = vand.u32 %v1002, 4294901760
    %5875 = vmatprep.subr.mxu0 %v5874
    %v5876 = vand.u32 %v1001, 4294901760
    %5877 = vmatpush1.msra.mxu0 %v5876
    %v5878 = vand.u32 %v1000, 4294901760
    %5879 = vmatprep.subr.mxu0 %v5878
    %v5880 = vand.u32 %v999, 4294901760
    %5881 = vmatpush1.msra.mxu0 %v5880
    %5882 = vmatprep.subr.mxu0 0.0
    %5883 = vmatpush2.msra.mxu0 0.0
    %5884 = vmatprep.subr.mxu0 0.0
    %5885 = vmatpush2.msra.mxu0 0.0
    %5886 = vmatprep.subr.mxu0 0.0
    %5887 = vmatpush2.msra.mxu0 0.0
    %5888 = vmatprep.subr.mxu0 0.0
    %5889 = vmatpush2.msra.mxu0 0.0
    %5890 = vmatprep.subr.mxu0 0.0
    %5891 = vmatpush2.msra.mxu0 0.0
    %5892 = vmatprep.subr.mxu0 0.0
    %5893 = vmatpush2.msra.mxu0 0.0
    %5894 = vmatprep.subr.mxu0 0.0
    %5895 = vmatpush2.msra.mxu0 0.0
    %5896 = vmatprep.subr.mxu0 0.0
    %5897 = vmatpush2.msra.mxu0 0.0
    %5898 = vmatprep.subr.mxu0 0.0
    %5899 = vmatpush2.msra.mxu0 0.0
    %5900 = vmatprep.subr.mxu0 0.0
    %5901 = vmatpush2.msra.mxu0 0.0
    %5902 = vmatprep.subr.mxu0 0.0
    %5903 = vmatpush2.msra.mxu0 0.0
    %5904 = vmatprep.subr.mxu0 0.0
    %5905 = vmatpush2.msra.mxu0 0.0
    %5906 = vmatprep.subr.mxu0 0.0
    %5907 = vmatpush2.msra.mxu0 0.0
    %5908 = vmatprep.subr.mxu0 0.0
    %5909 = vmatpush2.msra.mxu0 0.0
    %5910 = vmatprep.subr.mxu0 0.0
    %5911 = vmatpush2.msra.mxu0 0.0
    %5912 = vmatprep.subr.mxu0 0.0
    %5913 = vmatpush2.msra.mxu0 0.0
    %5914 = vmatprep.mubr.f32.mxu0 0.0
    %v5915 = vand.u32 %v5273, 4294901760
    %5916 = vmatmul.mubr.f32.gmra.mxu0 %v5915
    %v5917 = vpop.f32.mrf.mxu0
    %v5918 = vadd.f32 %v5830, %v5917
    %v5919 = vpop.f32.mrf.mxu0
    %v5920 = vadd.f32 %v5832, %v5919
    %5921 = vdwg.mxu0
    %v5922 = vadd.f32 %v990, %v5918
    %v5923 = vxor.u32 %v5922, 2147483648
    %v5924 = vmul.f32 %v5923, 1.442695
    %v5925 = vpow.pop %v5924
    %v5926 = vadd.f32 %v5925, 1.0
    %v5927 = vrcp.pop %v5926
    %v5928 = vmul.f32 1.0, %v5927
    %v5929 = vmul.f32 %v5928, 2.0
    %v5930 = vsub.f32 %v5929, 1.0
    %v5931 = vmul.f32 %v5928, %v5230
    %5933 = vrot.lane.b32.xlu0 %v5930, 64
    %v5934 = vpop.permute.xlu0 %5933
    %v5936 = vmul.f32 %v5928, %v5934
    %5938 = vrot.lane.b32.xlu0 %v5936, 32
    %v5939 = vpop.permute.xlu0 %5938
    %v5941 = vadd.f32 %v5931, %v5939
    %v5942 = vtanh.pop %v5941
    %5944 = vrot.lane.b32.xlu0 %v5942, 64
    %v5945 = vpop.permute.xlu0 %5944
    %v5947 = vmul.f32 %v5928, %v5945
    %v5948 = vadd.f32 %v5920, %v2387
    %v5949 = vxor.u32 %v5948, 2147483648
    %v5950 = vmul.f32 %v5949, 1.442695
    %v5951 = vpow.pop %v5950
    %v5952 = vadd.f32 %v5951, 1.0
    %v5953 = vrcp.pop %v5952
    %v5954 = vmul.f32 1.0, %v5953
    %v5955 = vmul.f32 %v5954, 2.0
    %v5956 = vsub.f32 %v5955, 1.0
    %v5957 = vmul.f32 %v5954, %v5256
    %5959 = vrot.lane.b32.xlu0 %v5956, 64
    %v5960 = vpop.permute.xlu0 %5959
    %v5962 = vmul.f32 %v5954, %v5960
    %5964 = vrot.lane.b32.xlu0 %v5962, 32
    %v5965 = vpop.permute.xlu0 %5964
    %v5967 = vadd.f32 %v5957, %v5965
    %v5968 = vtanh.pop %v5967
    %5970 = vrot.lane.b32.xlu0 %v5968, 64
    %v5971 = vpop.permute.xlu0 %5970
    %v5973 = vmul.f32 %v5954, %v5971
    %5975 = vrot.lane.b32.xlu0 %v5947, 32
    %v5976 = vpop.permute.xlu0 %5975
    %5979 = vrot.lane.b32.xlu0 %v5973, 64
    %v5980 = vpop.permute.xlu0 %5979
    %v5982 = vsel %vm1026, %v5976, %v5980
    %v5984 = vsel %vm136, %v5982, 0
    %5986 = vmatprep.subr.mxu0 0.0
    %5987 = vmatpush1.msra.mxu0 0.0
    %5988 = vmatprep.subr.mxu0 0.0
    %5989 = vmatpush1.msra.mxu0 0.0
    %5990 = vmatprep.subr.mxu0 0.0
    %5991 = vmatpush1.msra.mxu0 0.0
    %5992 = vmatprep.subr.mxu0 0.0
    %5993 = vmatpush1.msra.mxu0 0.0
    %5994 = vmatprep.subr.mxu0 0.0
    %5995 = vmatpush1.msra.mxu0 0.0
    %5996 = vmatprep.subr.mxu0 0.0
    %5997 = vmatpush1.msra.mxu0 0.0
    %5998 = vmatprep.subr.mxu0 0.0
    %5999 = vmatpush1.msra.mxu0 0.0
    %6000 = vmatprep.subr.mxu0 0.0
    %6001 = vmatpush1.msra.mxu0 0.0
    %v6002 = vand.u32 %v1014, 4294901760
    %6003 = vmatprep.subr.mxu0 %v6002
    %v6004 = vand.u32 %v1013, 4294901760
    %6005 = vmatpush1.msra.mxu0 %v6004
    %v6006 = vand.u32 %v1012, 4294901760
    %6007 = vmatprep.subr.mxu0 %v6006
    %v6008 = vand.u32 %v1011, 4294901760
    %6009 = vmatpush1.msra.mxu0 %v6008
    %v6010 = vand.u32 %v1010, 4294901760
    %6011 = vmatprep.subr.mxu0 %v6010
    %v6012 = vand.u32 %v1009, 4294901760
    %6013 = vmatpush1.msra.mxu0 %v6012
    %v6014 = vand.u32 %v1008, 4294901760
    %6015 = vmatprep.subr.mxu0 %v6014
    %v6016 = vand.u32 %v1007, 4294901760
    %6017 = vmatpush1.msra.mxu0 %v6016
    %v6018 = vand.u32 %v1006, 4294901760
    %6019 = vmatprep.subr.mxu0 %v6018
    %v6020 = vand.u32 %v1005, 4294901760
    %6021 = vmatpush1.msra.mxu0 %v6020
    %v6022 = vand.u32 %v1004, 4294901760
    %6023 = vmatprep.subr.mxu0 %v6022
    %v6024 = vand.u32 %v1003, 4294901760
    %6025 = vmatpush1.msra.mxu0 %v6024
    %v6026 = vand.u32 %v1002, 4294901760
    %6027 = vmatprep.subr.mxu0 %v6026
    %v6028 = vand.u32 %v1001, 4294901760
    %6029 = vmatpush1.msra.mxu0 %v6028
    %v6030 = vand.u32 %v1000, 4294901760
    %6031 = vmatprep.subr.mxu0 %v6030
    %v6032 = vand.u32 %v999, 4294901760
    %6033 = vmatpush1.msra.mxu0 %v6032
    %6034 = vmatprep.subr.mxu0 0.0
    %6035 = vmatpush2.msra.mxu0 0.0
    %6036 = vmatprep.subr.mxu0 0.0
    %6037 = vmatpush2.msra.mxu0 0.0
    %6038 = vmatprep.subr.mxu0 0.0
    %6039 = vmatpush2.msra.mxu0 0.0
    %6040 = vmatprep.subr.mxu0 0.0
    %6041 = vmatpush2.msra.mxu0 0.0
    %6042 = vmatprep.subr.mxu0 0.0
    %6043 = vmatpush2.msra.mxu0 0.0
    %6044 = vmatprep.subr.mxu0 0.0
    %6045 = vmatpush2.msra.mxu0 0.0
    %6046 = vmatprep.subr.mxu0 0.0
    %6047 = vmatpush2.msra.mxu0 0.0
    %6048 = vmatprep.subr.mxu0 0.0
    %6049 = vmatpush2.msra.mxu0 0.0
    %6050 = vmatprep.subr.mxu0 0.0
    %6051 = vmatpush2.msra.mxu0 0.0
    %6052 = vmatprep.subr.mxu0 0.0
    %6053 = vmatpush2.msra.mxu0 0.0
    %6054 = vmatprep.subr.mxu0 0.0
    %6055 = vmatpush2.msra.mxu0 0.0
    %6056 = vmatprep.subr.mxu0 0.0
    %6057 = vmatpush2.msra.mxu0 0.0
    %6058 = vmatprep.subr.mxu0 0.0
    %6059 = vmatpush2.msra.mxu0 0.0
    %6060 = vmatprep.subr.mxu0 0.0
    %6061 = vmatpush2.msra.mxu0 0.0
    %6062 = vmatprep.subr.mxu0 0.0
    %6063 = vmatpush2.msra.mxu0 0.0
    %6064 = vmatprep.subr.mxu0 0.0
    %6065 = vmatpush2.msra.mxu0 0.0
    %6066 = vmatprep.mubr.f32.mxu0 0.0
    %v6067 = vand.u32 %v5984, 4294901760
    %v6068 = vsub.f32 %v5984, %v6067
    %v6069 = vand.u32 %v6068, 4294901760
    %v6070 = vsub.f32 %v6068, %v6069
    %v6071 = vand.u32 %v6070, 4294901760
    %6072 = vmatmul.mubr.f32.gmra.mxu0 %v6071
    %v6073 = vpop.f32.mrf.mxu0
    %v6074 = vadd.f32 0.0, %v6073
    %v6075 = vpop.f32.mrf.mxu0
    %v6076 = vadd.f32 0.0, %v6075
    %6077 = vdwg.mxu0
    %6078 = vmatprep.subr.mxu0 0.0
    %6079 = vmatpush1.msra.mxu0 0.0
    %6080 = vmatprep.subr.mxu0 0.0
    %6081 = vmatpush1.msra.mxu0 0.0
    %6082 = vmatprep.subr.mxu0 0.0
    %6083 = vmatpush1.msra.mxu0 0.0
    %6084 = vmatprep.subr.mxu0 0.0
    %6085 = vmatpush1.msra.mxu0 0.0
    %6086 = vmatprep.subr.mxu0 0.0
    %6087 = vmatpush1.msra.mxu0 0.0
    %6088 = vmatprep.subr.mxu0 0.0
    %6089 = vmatpush1.msra.mxu0 0.0
    %6090 = vmatprep.subr.mxu0 0.0
    %6091 = vmatpush1.msra.mxu0 0.0
    %6092 = vmatprep.subr.mxu0 0.0
    %6093 = vmatpush1.msra.mxu0 0.0
    %v6094 = vand.u32 %v1014, 4294901760
    %v6095 = vsub.f32 %v1014, %v6094
    %v6096 = vand.u32 %v6095, 4294901760
    %v6097 = vsub.f32 %v6095, %v6096
    %v6098 = vand.u32 %v6097, 4294901760
    %6099 = vmatprep.subr.mxu0 %v6098
    %v6100 = vand.u32 %v1013, 4294901760
    %v6101 = vsub.f32 %v1013, %v6100
    %v6102 = vand.u32 %v6101, 4294901760
    %v6103 = vsub.f32 %v6101, %v6102
    %v6104 = vand.u32 %v6103, 4294901760
    %6105 = vmatpush1.msra.mxu0 %v6104
    %v6106 = vand.u32 %v1012, 4294901760
    %v6107 = vsub.f32 %v1012, %v6106
    %v6108 = vand.u32 %v6107, 4294901760
    %v6109 = vsub.f32 %v6107, %v6108
    %v6110 = vand.u32 %v6109, 4294901760
    %6111 = vmatprep.subr.mxu0 %v6110
    %v6112 = vand.u32 %v1011, 4294901760
    %v6113 = vsub.f32 %v1011, %v6112
    %v6114 = vand.u32 %v6113, 4294901760
    %v6115 = vsub.f32 %v6113, %v6114
    %v6116 = vand.u32 %v6115, 4294901760
    %6117 = vmatpush1.msra.mxu0 %v6116
    %v6118 = vand.u32 %v1010, 4294901760
    %v6119 = vsub.f32 %v1010, %v6118
    %v6120 = vand.u32 %v6119, 4294901760
    %v6121 = vsub.f32 %v6119, %v6120
    %v6122 = vand.u32 %v6121, 4294901760
    %6123 = vmatprep.subr.mxu0 %v6122
    %v6124 = vand.u32 %v1009, 4294901760
    %v6125 = vsub.f32 %v1009, %v6124
    %v6126 = vand.u32 %v6125, 4294901760
    %v6127 = vsub.f32 %v6125, %v6126
    %v6128 = vand.u32 %v6127, 4294901760
    %6129 = vmatpush1.msra.mxu0 %v6128
    %v6130 = vand.u32 %v1008, 4294901760
    %v6131 = vsub.f32 %v1008, %v6130
    %v6132 = vand.u32 %v6131, 4294901760
    %v6133 = vsub.f32 %v6131, %v6132
    %v6134 = vand.u32 %v6133, 4294901760
    %6135 = vmatprep.subr.mxu0 %v6134
    %v6136 = vand.u32 %v1007, 4294901760
    %v6137 = vsub.f32 %v1007, %v6136
    %v6138 = vand.u32 %v6137, 4294901760
    %v6139 = vsub.f32 %v6137, %v6138
    %v6140 = vand.u32 %v6139, 4294901760
    %6141 = vmatpush1.msra.mxu0 %v6140
    %v6142 = vand.u32 %v1006, 4294901760
    %v6143 = vsub.f32 %v1006, %v6142
    %v6144 = vand.u32 %v6143, 4294901760
    %v6145 = vsub.f32 %v6143, %v6144
    %v6146 = vand.u32 %v6145, 4294901760
    %6147 = vmatprep.subr.mxu0 %v6146
    %v6148 = vand.u32 %v1005, 4294901760
    %v6149 = vsub.f32 %v1005, %v6148
    %v6150 = vand.u32 %v6149, 4294901760
    %v6151 = vsub.f32 %v6149, %v6150
    %v6152 = vand.u32 %v6151, 4294901760
    %6153 = vmatpush1.msra.mxu0 %v6152
    %v6154 = vand.u32 %v1004, 4294901760
    %v6155 = vsub.f32 %v1004, %v6154
    %v6156 = vand.u32 %v6155, 4294901760
    %v6157 = vsub.f32 %v6155, %v6156
    %v6158 = vand.u32 %v6157, 4294901760
    %6159 = vmatprep.subr.mxu0 %v6158
    %v6160 = vand.u32 %v1003, 4294901760
    %v6161 = vsub.f32 %v1003, %v6160
    %v6162 = vand.u32 %v6161, 4294901760
    %v6163 = vsub.f32 %v6161, %v6162
    %v6164 = vand.u32 %v6163, 4294901760
    %6165 = vmatpush1.msra.mxu0 %v6164
    %v6166 = vand.u32 %v1002, 4294901760
    %v6167 = vsub.f32 %v1002, %v6166
    %v6168 = vand.u32 %v6167, 4294901760
    %v6169 = vsub.f32 %v6167, %v6168
    %v6170 = vand.u32 %v6169, 4294901760
    %6171 = vmatprep.subr.mxu0 %v6170
    %v6172 = vand.u32 %v1001, 4294901760
    %v6173 = vsub.f32 %v1001, %v6172
    %v6174 = vand.u32 %v6173, 4294901760
    %v6175 = vsub.f32 %v6173, %v6174
    %v6176 = vand.u32 %v6175, 4294901760
    %6177 = vmatpush1.msra.mxu0 %v6176
    %v6178 = vand.u32 %v1000, 4294901760
    %v6179 = vsub.f32 %v1000, %v6178
    %v6180 = vand.u32 %v6179, 4294901760
    %v6181 = vsub.f32 %v6179, %v6180
    %v6182 = vand.u32 %v6181, 4294901760
    %6183 = vmatprep.subr.mxu0 %v6182
    %v6184 = vand.u32 %v999, 4294901760
    %v6185 = vsub.f32 %v999, %v6184
    %v6186 = vand.u32 %v6185, 4294901760
    %v6187 = vsub.f32 %v6185, %v6186
    %v6188 = vand.u32 %v6187, 4294901760
    %6189 = vmatpush1.msra.mxu0 %v6188
    %6190 = vmatprep.subr.mxu0 0.0
    %6191 = vmatpush2.msra.mxu0 0.0
    %6192 = vmatprep.subr.mxu0 0.0
    %6193 = vmatpush2.msra.mxu0 0.0
    %6194 = vmatprep.subr.mxu0 0.0
    %6195 = vmatpush2.msra.mxu0 0.0
    %6196 = vmatprep.subr.mxu0 0.0
    %6197 = vmatpush2.msra.mxu0 0.0
    %6198 = vmatprep.subr.mxu0 0.0
    %6199 = vmatpush2.msra.mxu0 0.0
    %6200 = vmatprep.subr.mxu0 0.0
    %6201 = vmatpush2.msra.mxu0 0.0
    %6202 = vmatprep.subr.mxu0 0.0
    %6203 = vmatpush2.msra.mxu0 0.0
    %6204 = vmatprep.subr.mxu0 0.0
    %6205 = vmatpush2.msra.mxu0 0.0
    %6206 = vmatprep.subr.mxu0 0.0
    %6207 = vmatpush2.msra.mxu0 0.0
    %6208 = vmatprep.subr.mxu0 0.0
    %6209 = vmatpush2.msra.mxu0 0.0
    %6210 = vmatprep.subr.mxu0 0.0
    %6211 = vmatpush2.msra.mxu0 0.0
    %6212 = vmatprep.subr.mxu0 0.0
    %6213 = vmatpush2.msra.mxu0 0.0
    %6214 = vmatprep.subr.mxu0 0.0
    %6215 = vmatpush2.msra.mxu0 0.0
    %6216 = vmatprep.subr.mxu0 0.0
    %6217 = vmatpush2.msra.mxu0 0.0
    %6218 = vmatprep.subr.mxu0 0.0
    %6219 = vmatpush2.msra.mxu0 0.0
    %6220 = vmatprep.subr.mxu0 0.0
    %6221 = vmatpush2.msra.mxu0 0.0
    %6222 = vmatprep.mubr.f32.mxu0 0.0
    %v6223 = vand.u32 %v5984, 4294901760
    %6224 = vmatmul.mubr.f32.gmra.mxu0 %v6223
    %v6225 = vpop.f32.mrf.mxu0
    %v6226 = vadd.f32 %v6074, %v6225
    %v6227 = vpop.f32.mrf.mxu0
    %v6228 = vadd.f32 %v6076, %v6227
    %6229 = vdwg.mxu0
    %6230 = vmatprep.subr.mxu0 0.0
    %6231 = vmatpush1.msra.mxu0 0.0
    %6232 = vmatprep.subr.mxu0 0.0
    %6233 = vmatpush1.msra.mxu0 0.0
    %6234 = vmatprep.subr.mxu0 0.0
    %6235 = vmatpush1.msra.mxu0 0.0
    %6236 = vmatprep.subr.mxu0 0.0
    %6237 = vmatpush1.msra.mxu0 0.0
    %6238 = vmatprep.subr.mxu0 0.0
    %6239 = vmatpush1.msra.mxu0 0.0
    %6240 = vmatprep.subr.mxu0 0.0
    %6241 = vmatpush1.msra.mxu0 0.0
    %6242 = vmatprep.subr.mxu0 0.0
    %6243 = vmatpush1.msra.mxu0 0.0
    %6244 = vmatprep.subr.mxu0 0.0
    %6245 = vmatpush1.msra.mxu0 0.0
    %v6246 = vand.u32 %v1014, 4294901760
    %v6247 = vsub.f32 %v1014, %v6246
    %6248 = vmatprep.subr.mxu0 %v6247
    %v6249 = vand.u32 %v1013, 4294901760
    %v6250 = vsub.f32 %v1013, %v6249
    %6251 = vmatpush1.msra.mxu0 %v6250
    %v6252 = vand.u32 %v1012, 4294901760
    %v6253 = vsub.f32 %v1012, %v6252
    %6254 = vmatprep.subr.mxu0 %v6253
    %v6255 = vand.u32 %v1011, 4294901760
    %v6256 = vsub.f32 %v1011, %v6255
    %6257 = vmatpush1.msra.mxu0 %v6256
    %v6258 = vand.u32 %v1010, 4294901760
    %v6259 = vsub.f32 %v1010, %v6258
    %6260 = vmatprep.subr.mxu0 %v6259
    %v6261 = vand.u32 %v1009, 4294901760
    %v6262 = vsub.f32 %v1009, %v6261
    %6263 = vmatpush1.msra.mxu0 %v6262
    %v6264 = vand.u32 %v1008, 4294901760
    %v6265 = vsub.f32 %v1008, %v6264
    %6266 = vmatprep.subr.mxu0 %v6265
    %v6267 = vand.u32 %v1007, 4294901760
    %v6268 = vsub.f32 %v1007, %v6267
    %6269 = vmatpush1.msra.mxu0 %v6268
    %v6270 = vand.u32 %v1006, 4294901760
    %v6271 = vsub.f32 %v1006, %v6270
    %6272 = vmatprep.subr.mxu0 %v6271
    %v6273 = vand.u32 %v1005, 4294901760
    %v6274 = vsub.f32 %v1005, %v6273
    %6275 = vmatpush1.msra.mxu0 %v6274
    %v6276 = vand.u32 %v1004, 4294901760
    %v6277 = vsub.f32 %v1004, %v6276
    %6278 = vmatprep.subr.mxu0 %v6277
    %v6279 = vand.u32 %v1003, 4294901760
    %v6280 = vsub.f32 %v1003, %v6279
    %6281 = vmatpush1.msra.mxu0 %v6280
    %v6282 = vand.u32 %v1002, 4294901760
    %v6283 = vsub.f32 %v1002, %v6282
    %6284 = vmatprep.subr.mxu0 %v6283
    %v6285 = vand.u32 %v1001, 4294901760
    %v6286 = vsub.f32 %v1001, %v6285
    %6287 = vmatpush1.msra.mxu0 %v6286
    %v6288 = vand.u32 %v1000, 4294901760
    %v6289 = vsub.f32 %v1000, %v6288
    %6290 = vmatprep.subr.mxu0 %v6289
    %v6291 = vand.u32 %v999, 4294901760
    %v6292 = vsub.f32 %v999, %v6291
    %6293 = vmatpush1.msra.mxu0 %v6292
    %6294 = vmatprep.subr.mxu0 0.0
    %6295 = vmatpush2.msra.mxu0 0.0
    %6296 = vmatprep.subr.mxu0 0.0
    %6297 = vmatpush2.msra.mxu0 0.0
    %6298 = vmatprep.subr.mxu0 0.0
    %6299 = vmatpush2.msra.mxu0 0.0
    %6300 = vmatprep.subr.mxu0 0.0
    %6301 = vmatpush2.msra.mxu0 0.0
    %6302 = vmatprep.subr.mxu0 0.0
    %6303 = vmatpush2.msra.mxu0 0.0
    %6304 = vmatprep.subr.mxu0 0.0
    %6305 = vmatpush2.msra.mxu0 0.0
    %6306 = vmatprep.subr.mxu0 0.0
    %6307 = vmatpush2.msra.mxu0 0.0
    %6308 = vmatprep.subr.mxu0 0.0
    %6309 = vmatpush2.msra.mxu0 0.0
    %6310 = vmatprep.subr.mxu0 0.0
    %6311 = vmatpush2.msra.mxu0 0.0
    %6312 = vmatprep.subr.mxu0 0.0
    %6313 = vmatpush2.msra.mxu0 0.0
    %6314 = vmatprep.subr.mxu0 0.0
    %6315 = vmatpush2.msra.mxu0 0.0
    %6316 = vmatprep.subr.mxu0 0.0
    %6317 = vmatpush2.msra.mxu0 0.0
    %6318 = vmatprep.subr.mxu0 0.0
    %6319 = vmatpush2.msra.mxu0 0.0
    %6320 = vmatprep.subr.mxu0 0.0
    %6321 = vmatpush2.msra.mxu0 0.0
    %6322 = vmatprep.subr.mxu0 0.0
    %6323 = vmatpush2.msra.mxu0 0.0
    %6324 = vmatprep.subr.mxu0 0.0
    %6325 = vmatpush2.msra.mxu0 0.0
    %6326 = vmatprep.mubr.f32.mxu0 0.0
    %v6327 = vand.u32 %v5984, 4294901760
    %v6328 = vsub.f32 %v5984, %v6327
    %6329 = vmatmul.mubr.f32.gmra.mxu0 %v6328
    %v6330 = vpop.f32.mrf.mxu0
    %v6331 = vadd.f32 %v6226, %v6330
    %v6332 = vpop.f32.mrf.mxu0
    %v6333 = vadd.f32 %v6228, %v6332
    %6334 = vdwg.mxu0
    %6335 = vmatprep.subr.mxu0 0.0
    %6336 = vmatpush1.msra.mxu0 0.0
    %6337 = vmatprep.subr.mxu0 0.0
    %6338 = vmatpush1.msra.mxu0 0.0
    %6339 = vmatprep.subr.mxu0 0.0
    %6340 = vmatpush1.msra.mxu0 0.0
    %6341 = vmatprep.subr.mxu0 0.0
    %6342 = vmatpush1.msra.mxu0 0.0
    %6343 = vmatprep.subr.mxu0 0.0
    %6344 = vmatpush1.msra.mxu0 0.0
    %6345 = vmatprep.subr.mxu0 0.0
    %6346 = vmatpush1.msra.mxu0 0.0
    %6347 = vmatprep.subr.mxu0 0.0
    %6348 = vmatpush1.msra.mxu0 0.0
    %6349 = vmatprep.subr.mxu0 0.0
    %6350 = vmatpush1.msra.mxu0 0.0
    %v6351 = vand.u32 %v1014, 4294901760
    %6352 = vmatprep.subr.mxu0 %v6351
    %v6353 = vand.u32 %v1013, 4294901760
    %6354 = vmatpush1.msra.mxu0 %v6353
    %v6355 = vand.u32 %v1012, 4294901760
    %6356 = vmatprep.subr.mxu0 %v6355
    %v6357 = vand.u32 %v1011, 4294901760
    %6358 = vmatpush1.msra.mxu0 %v6357
    %v6359 = vand.u32 %v1010, 4294901760
    %6360 = vmatprep.subr.mxu0 %v6359
    %v6361 = vand.u32 %v1009, 4294901760
    %6362 = vmatpush1.msra.mxu0 %v6361
    %v6363 = vand.u32 %v1008, 4294901760
    %6364 = vmatprep.subr.mxu0 %v6363
    %v6365 = vand.u32 %v1007, 4294901760
    %6366 = vmatpush1.msra.mxu0 %v6365
    %v6367 = vand.u32 %v1006, 4294901760
    %6368 = vmatprep.subr.mxu0 %v6367
    %v6369 = vand.u32 %v1005, 4294901760
    %6370 = vmatpush1.msra.mxu0 %v6369
    %v6371 = vand.u32 %v1004, 4294901760
    %6372 = vmatprep.subr.mxu0 %v6371
    %v6373 = vand.u32 %v1003, 4294901760
    %6374 = vmatpush1.msra.mxu0 %v6373
    %v6375 = vand.u32 %v1002, 4294901760
    %6376 = vmatprep.subr.mxu0 %v6375
    %v6377 = vand.u32 %v1001, 4294901760
    %6378 = vmatpush1.msra.mxu0 %v6377
    %v6379 = vand.u32 %v1000, 4294901760
    %6380 = vmatprep.subr.mxu0 %v6379
    %v6381 = vand.u32 %v999, 4294901760
    %6382 = vmatpush1.msra.mxu0 %v6381
    %6383 = vmatprep.subr.mxu0 0.0
    %6384 = vmatpush2.msra.mxu0 0.0
    %6385 = vmatprep.subr.mxu0 0.0
    %6386 = vmatpush2.msra.mxu0 0.0
    %6387 = vmatprep.subr.mxu0 0.0
    %6388 = vmatpush2.msra.mxu0 0.0
    %6389 = vmatprep.subr.mxu0 0.0
    %6390 = vmatpush2.msra.mxu0 0.0
    %6391 = vmatprep.subr.mxu0 0.0
    %6392 = vmatpush2.msra.mxu0 0.0
    %6393 = vmatprep.subr.mxu0 0.0
    %6394 = vmatpush2.msra.mxu0 0.0
    %6395 = vmatprep.subr.mxu0 0.0
    %6396 = vmatpush2.msra.mxu0 0.0
    %6397 = vmatprep.subr.mxu0 0.0
    %6398 = vmatpush2.msra.mxu0 0.0
    %6399 = vmatprep.subr.mxu0 0.0
    %6400 = vmatpush2.msra.mxu0 0.0
    %6401 = vmatprep.subr.mxu0 0.0
    %6402 = vmatpush2.msra.mxu0 0.0
    %6403 = vmatprep.subr.mxu0 0.0
    %6404 = vmatpush2.msra.mxu0 0.0
    %6405 = vmatprep.subr.mxu0 0.0
    %6406 = vmatpush2.msra.mxu0 0.0
    %6407 = vmatprep.subr.mxu0 0.0
    %6408 = vmatpush2.msra.mxu0 0.0
    %6409 = vmatprep.subr.mxu0 0.0
    %6410 = vmatpush2.msra.mxu0 0.0
    %6411 = vmatprep.subr.mxu0 0.0
    %6412 = vmatpush2.msra.mxu0 0.0
    %6413 = vmatprep.subr.mxu0 0.0
    %6414 = vmatpush2.msra.mxu0 0.0
    %6415 = vmatprep.mubr.f32.mxu0 0.0
    %v6416 = vand.u32 %v5984, 4294901760
    %v6417 = vsub.f32 %v5984, %v6416
    %v6418 = vand.u32 %v6417, 4294901760
    %6419 = vmatmul.mubr.f32.gmra.mxu0 %v6418
    %v6420 = vpop.f32.mrf.mxu0
    %v6421 = vadd.f32 %v6331, %v6420
    %v6422 = vpop.f32.mrf.mxu0
    %v6423 = vadd.f32 %v6333, %v6422
    %6424 = vdwg.mxu0
    %6425 = vmatprep.subr.mxu0 0.0
    %6426 = vmatpush1.msra.mxu0 0.0
    %6427 = vmatprep.subr.mxu0 0.0
    %6428 = vmatpush1.msra.mxu0 0.0
    %6429 = vmatprep.subr.mxu0 0.0
    %6430 = vmatpush1.msra.mxu0 0.0
    %6431 = vmatprep.subr.mxu0 0.0
    %6432 = vmatpush1.msra.mxu0 0.0
    %6433 = vmatprep.subr.mxu0 0.0
    %6434 = vmatpush1.msra.mxu0 0.0
    %6435 = vmatprep.subr.mxu0 0.0
    %6436 = vmatpush1.msra.mxu0 0.0
    %6437 = vmatprep.subr.mxu0 0.0
    %6438 = vmatpush1.msra.mxu0 0.0
    %6439 = vmatprep.subr.mxu0 0.0
    %6440 = vmatpush1.msra.mxu0 0.0
    %v6441 = vand.u32 %v1014, 4294901760
    %v6442 = vsub.f32 %v1014, %v6441
    %v6443 = vand.u32 %v6442, 4294901760
    %6444 = vmatprep.subr.mxu0 %v6443
    %v6445 = vand.u32 %v1013, 4294901760
    %v6446 = vsub.f32 %v1013, %v6445
    %v6447 = vand.u32 %v6446, 4294901760
    %6448 = vmatpush1.msra.mxu0 %v6447
    %v6449 = vand.u32 %v1012, 4294901760
    %v6450 = vsub.f32 %v1012, %v6449
    %v6451 = vand.u32 %v6450, 4294901760
    %6452 = vmatprep.subr.mxu0 %v6451
    %v6453 = vand.u32 %v1011, 4294901760
    %v6454 = vsub.f32 %v1011, %v6453
    %v6455 = vand.u32 %v6454, 4294901760
    %6456 = vmatpush1.msra.mxu0 %v6455
    %v6457 = vand.u32 %v1010, 4294901760
    %v6458 = vsub.f32 %v1010, %v6457
    %v6459 = vand.u32 %v6458, 4294901760
    %6460 = vmatprep.subr.mxu0 %v6459
    %v6461 = vand.u32 %v1009, 4294901760
    %v6462 = vsub.f32 %v1009, %v6461
    %v6463 = vand.u32 %v6462, 4294901760
    %6464 = vmatpush1.msra.mxu0 %v6463
    %v6465 = vand.u32 %v1008, 4294901760
    %v6466 = vsub.f32 %v1008, %v6465
    %v6467 = vand.u32 %v6466, 4294901760
    %6468 = vmatprep.subr.mxu0 %v6467
    %v6469 = vand.u32 %v1007, 4294901760
    %v6470 = vsub.f32 %v1007, %v6469
    %v6471 = vand.u32 %v6470, 4294901760
    %6472 = vmatpush1.msra.mxu0 %v6471
    %v6473 = vand.u32 %v1006, 4294901760
    %v6474 = vsub.f32 %v1006, %v6473
    %v6475 = vand.u32 %v6474, 4294901760
    %6476 = vmatprep.subr.mxu0 %v6475
    %v6477 = vand.u32 %v1005, 4294901760
    %v6478 = vsub.f32 %v1005, %v6477
    %v6479 = vand.u32 %v6478, 4294901760
    %6480 = vmatpush1.msra.mxu0 %v6479
    %v6481 = vand.u32 %v1004, 4294901760
    %v6482 = vsub.f32 %v1004, %v6481
    %v6483 = vand.u32 %v6482, 4294901760
    %6484 = vmatprep.subr.mxu0 %v6483
    %v6485 = vand.u32 %v1003, 4294901760
    %v6486 = vsub.f32 %v1003, %v6485
    %v6487 = vand.u32 %v6486, 4294901760
    %6488 = vmatpush1.msra.mxu0 %v6487
    %v6489 = vand.u32 %v1002, 4294901760
    %v6490 = vsub.f32 %v1002, %v6489
    %v6491 = vand.u32 %v6490, 4294901760
    %6492 = vmatprep.subr.mxu0 %v6491
    %v6493 = vand.u32 %v1001, 4294901760
    %v6494 = vsub.f32 %v1001, %v6493
    %v6495 = vand.u32 %v6494, 4294901760
    %6496 = vmatpush1.msra.mxu0 %v6495
    %v6497 = vand.u32 %v1000, 4294901760
    %v6498 = vsub.f32 %v1000, %v6497
    %v6499 = vand.u32 %v6498, 4294901760
    %6500 = vmatprep.subr.mxu0 %v6499
    %v6501 = vand.u32 %v999, 4294901760
    %v6502 = vsub.f32 %v999, %v6501
    %v6503 = vand.u32 %v6502, 4294901760
    %6504 = vmatpush1.msra.mxu0 %v6503
    %6505 = vmatprep.subr.mxu0 0.0
    %6506 = vmatpush2.msra.mxu0 0.0
    %6507 = vmatprep.subr.mxu0 0.0
    %6508 = vmatpush2.msra.mxu0 0.0
    %6509 = vmatprep.subr.mxu0 0.0
    %6510 = vmatpush2.msra.mxu0 0.0
    %6511 = vmatprep.subr.mxu0 0.0
    %6512 = vmatpush2.msra.mxu0 0.0
    %6513 = vmatprep.subr.mxu0 0.0
    %6514 = vmatpush2.msra.mxu0 0.0
    %6515 = vmatprep.subr.mxu0 0.0
    %6516 = vmatpush2.msra.mxu0 0.0
    %6517 = vmatprep.subr.mxu0 0.0
    %6518 = vmatpush2.msra.mxu0 0.0
    %6519 = vmatprep.subr.mxu0 0.0
    %6520 = vmatpush2.msra.mxu0 0.0
    %6521 = vmatprep.subr.mxu0 0.0
    %6522 = vmatpush2.msra.mxu0 0.0
    %6523 = vmatprep.subr.mxu0 0.0
    %6524 = vmatpush2.msra.mxu0 0.0
    %6525 = vmatprep.subr.mxu0 0.0
    %6526 = vmatpush2.msra.mxu0 0.0
    %6527 = vmatprep.subr.mxu0 0.0
    %6528 = vmatpush2.msra.mxu0 0.0
    %6529 = vmatprep.subr.mxu0 0.0
    %6530 = vmatpush2.msra.mxu0 0.0
    %6531 = vmatprep.subr.mxu0 0.0
    %6532 = vmatpush2.msra.mxu0 0.0
    %6533 = vmatprep.subr.mxu0 0.0
    %6534 = vmatpush2.msra.mxu0 0.0
    %6535 = vmatprep.subr.mxu0 0.0
    %6536 = vmatpush2.msra.mxu0 0.0
    %6537 = vmatprep.mubr.f32.mxu0 0.0
    %v6538 = vand.u32 %v5984, 4294901760
    %6539 = vmatmul.mubr.f32.gmra.mxu0 %v6538
    %v6540 = vpop.f32.mrf.mxu0
    %v6541 = vadd.f32 %v6421, %v6540
    %v6542 = vpop.f32.mrf.mxu0
    %v6543 = vadd.f32 %v6423, %v6542
    %6544 = vdwg.mxu0
    %6545 = vmatprep.subr.mxu0 0.0
    %6546 = vmatpush1.msra.mxu0 0.0
    %6547 = vmatprep.subr.mxu0 0.0
    %6548 = vmatpush1.msra.mxu0 0.0
    %6549 = vmatprep.subr.mxu0 0.0
    %6550 = vmatpush1.msra.mxu0 0.0
    %6551 = vmatprep.subr.mxu0 0.0
    %6552 = vmatpush1.msra.mxu0 0.0
    %6553 = vmatprep.subr.mxu0 0.0
    %6554 = vmatpush1.msra.mxu0 0.0
    %6555 = vmatprep.subr.mxu0 0.0
    %6556 = vmatpush1.msra.mxu0 0.0
    %6557 = vmatprep.subr.mxu0 0.0
    %6558 = vmatpush1.msra.mxu0 0.0
    %6559 = vmatprep.subr.mxu0 0.0
    %6560 = vmatpush1.msra.mxu0 0.0
    %v6561 = vand.u32 %v1014, 4294901760
    %6562 = vmatprep.subr.mxu0 %v6561
    %v6563 = vand.u32 %v1013, 4294901760
    %6564 = vmatpush1.msra.mxu0 %v6563
    %v6565 = vand.u32 %v1012, 4294901760
    %6566 = vmatprep.subr.mxu0 %v6565
    %v6567 = vand.u32 %v1011, 4294901760
    %6568 = vmatpush1.msra.mxu0 %v6567
    %v6569 = vand.u32 %v1010, 4294901760
    %6570 = vmatprep.subr.mxu0 %v6569
    %v6571 = vand.u32 %v1009, 4294901760
    %6572 = vmatpush1.msra.mxu0 %v6571
    %v6573 = vand.u32 %v1008, 4294901760
    %6574 = vmatprep.subr.mxu0 %v6573
    %v6575 = vand.u32 %v1007, 4294901760
    %6576 = vmatpush1.msra.mxu0 %v6575
    %v6577 = vand.u32 %v1006, 4294901760
    %6578 = vmatprep.subr.mxu0 %v6577
    %v6579 = vand.u32 %v1005, 4294901760
    %6580 = vmatpush1.msra.mxu0 %v6579
    %v6581 = vand.u32 %v1004, 4294901760
    %6582 = vmatprep.subr.mxu0 %v6581
    %v6583 = vand.u32 %v1003, 4294901760
    %6584 = vmatpush1.msra.mxu0 %v6583
    %v6585 = vand.u32 %v1002, 4294901760
    %6586 = vmatprep.subr.mxu0 %v6585
    %v6587 = vand.u32 %v1001, 4294901760
    %6588 = vmatpush1.msra.mxu0 %v6587
    %v6589 = vand.u32 %v1000, 4294901760
    %6590 = vmatprep.subr.mxu0 %v6589
    %v6591 = vand.u32 %v999, 4294901760
    %6592 = vmatpush1.msra.mxu0 %v6591
    %6593 = vmatprep.subr.mxu0 0.0
    %6594 = vmatpush2.msra.mxu0 0.0
    %6595 = vmatprep.subr.mxu0 0.0
    %6596 = vmatpush2.msra.mxu0 0.0
    %6597 = vmatprep.subr.mxu0 0.0
    %6598 = vmatpush2.msra.mxu0 0.0
    %6599 = vmatprep.subr.mxu0 0.0
    %6600 = vmatpush2.msra.mxu0 0.0
    %6601 = vmatprep.subr.mxu0 0.0
    %6602 = vmatpush2.msra.mxu0 0.0
    %6603 = vmatprep.subr.mxu0 0.0
    %6604 = vmatpush2.msra.mxu0 0.0
    %6605 = vmatprep.subr.mxu0 0.0
    %6606 = vmatpush2.msra.mxu0 0.0
    %6607 = vmatprep.subr.mxu0 0.0
    %6608 = vmatpush2.msra.mxu0 0.0
    %6609 = vmatprep.subr.mxu0 0.0
    %6610 = vmatpush2.msra.mxu0 0.0
    %6611 = vmatprep.subr.mxu0 0.0
    %6612 = vmatpush2.msra.mxu0 0.0
    %6613 = vmatprep.subr.mxu0 0.0
    %6614 = vmatpush2.msra.mxu0 0.0
    %6615 = vmatprep.subr.mxu0 0.0
    %6616 = vmatpush2.msra.mxu0 0.0
    %6617 = vmatprep.subr.mxu0 0.0
    %6618 = vmatpush2.msra.mxu0 0.0
    %6619 = vmatprep.subr.mxu0 0.0
    %6620 = vmatpush2.msra.mxu0 0.0
    %6621 = vmatprep.subr.mxu0 0.0
    %6622 = vmatpush2.msra.mxu0 0.0
    %6623 = vmatprep.subr.mxu0 0.0
    %6624 = vmatpush2.msra.mxu0 0.0
    %6625 = vmatprep.mubr.f32.mxu0 0.0
    %v6626 = vand.u32 %v5984, 4294901760
    %6627 = vmatmul.mubr.f32.gmra.mxu0 %v6626
    %v6628 = vpop.f32.mrf.mxu0
    %v6629 = vadd.f32 %v6541, %v6628
    %v6630 = vpop.f32.mrf.mxu0
    %v6631 = vadd.f32 %v6543, %v6630
    %6632 = vdwg.mxu0
    %v6633 = vadd.f32 %v996, %v6629
    %v6634 = vxor.u32 %v6633, 2147483648
    %v6635 = vmul.f32 %v6634, 1.442695
    %v6636 = vpow.pop %v6635
    %v6637 = vadd.f32 %v6636, 1.0
    %v6638 = vrcp.pop %v6637
    %v6639 = vmul.f32 1.0, %v6638
    %v6640 = vmul.f32 %v6639, 2.0
    %v6641 = vsub.f32 %v6640, 1.0
    %v6642 = vmul.f32 %v6639, %v5941
    %6644 = vrot.lane.b32.xlu0 %v6641, 64
    %v6645 = vpop.permute.xlu0 %6644
    %v6647 = vmul.f32 %v6639, %v6645
    %6649 = vrot.lane.b32.xlu0 %v6647, 32
    %v6650 = vpop.permute.xlu0 %6649
    %v6652 = vadd.f32 %v6642, %v6650
    %v6653 = vtanh.pop %v6652
    %6655 = vrot.lane.b32.xlu0 %v6653, 64
    %v6656 = vpop.permute.xlu0 %6655
    %v6658 = vmul.f32 %v6639, %v6656
    %v6659 = vadd.f32 %v6631, %v2387
    %v6660 = vxor.u32 %v6659, 2147483648
    %v6661 = vmul.f32 %v6660, 1.442695
    %v6662 = vpow.pop %v6661
    %v6663 = vadd.f32 %v6662, 1.0
    %v6664 = vrcp.pop %v6663
    %v6665 = vmul.f32 1.0, %v6664
    %v6666 = vmul.f32 %v6665, 2.0
    %v6667 = vsub.f32 %v6666, 1.0
    %v6668 = vmul.f32 %v6665, %v5967
    %6670 = vrot.lane.b32.xlu0 %v6667, 64
    %v6671 = vpop.permute.xlu0 %6670
    %v6673 = vmul.f32 %v6665, %v6671
    %6675 = vrot.lane.b32.xlu0 %v6673, 32
    %v6676 = vpop.permute.xlu0 %6675
    %v6678 = vadd.f32 %v6668, %v6676
    %v6679 = vtanh.pop %v6678
    %6681 = vrot.lane.b32.xlu0 %v6679, 64
    %v6682 = vpop.permute.xlu0 %6681
    %v6684 = vmul.f32 %v6665, %v6682
    %6686 = vrot.lane.b32.xlu0 %v6658, 32
    %v6687 = vpop.permute.xlu0 %6686
    %6690 = vrot.lane.b32.xlu0 %v6684, 64
    %v6691 = vpop.permute.xlu0 %6690
    %v6693 = vsel %vm1026, %v6687, %v6691
    %v6695 = vsel %vm136, %v6693, 0
    %6697 = vmatprep.subr.mxu0 0.0
    %6698 = vmatpush1.msra.mxu0 0.0
    %6699 = vmatprep.subr.mxu0 0.0
    %6700 = vmatpush1.msra.mxu0 0.0
    %6701 = vmatprep.subr.mxu0 0.0
    %6702 = vmatpush1.msra.mxu0 0.0
    %6703 = vmatprep.subr.mxu0 0.0
    %6704 = vmatpush1.msra.mxu0 0.0
    %6705 = vmatprep.subr.mxu0 0.0
    %6706 = vmatpush1.msra.mxu0 0.0
    %6707 = vmatprep.subr.mxu0 0.0
    %6708 = vmatpush1.msra.mxu0 0.0
    %6709 = vmatprep.subr.mxu0 0.0
    %6710 = vmatpush1.msra.mxu0 0.0
    %6711 = vmatprep.subr.mxu0 0.0
    %6712 = vmatpush1.msra.mxu0 0.0
    %v6713 = vand.u32 %v1014, 4294901760
    %6714 = vmatprep.subr.mxu0 %v6713
    %v6715 = vand.u32 %v1013, 4294901760
    %6716 = vmatpush1.msra.mxu0 %v6715
    %v6717 = vand.u32 %v1012, 4294901760
    %6718 = vmatprep.subr.mxu0 %v6717
    %v6719 = vand.u32 %v1011, 4294901760
    %6720 = vmatpush1.msra.mxu0 %v6719
    %v6721 = vand.u32 %v1010, 4294901760
    %6722 = vmatprep.subr.mxu0 %v6721
    %v6723 = vand.u32 %v1009, 4294901760
    %6724 = vmatpush1.msra.mxu0 %v6723
    %v6725 = vand.u32 %v1008, 4294901760
    %6726 = vmatprep.subr.mxu0 %v6725
    %v6727 = vand.u32 %v1007, 4294901760
    %6728 = vmatpush1.msra.mxu0 %v6727
    %v6729 = vand.u32 %v1006, 4294901760
    %6730 = vmatprep.subr.mxu0 %v6729
    %v6731 = vand.u32 %v1005, 4294901760
    %6732 = vmatpush1.msra.mxu0 %v6731
    %v6733 = vand.u32 %v1004, 4294901760
    %6734 = vmatprep.subr.mxu0 %v6733
    %v6735 = vand.u32 %v1003, 4294901760
    %6736 = vmatpush1.msra.mxu0 %v6735
    %v6737 = vand.u32 %v1002, 4294901760
    %6738 = vmatprep.subr.mxu0 %v6737
    %v6739 = vand.u32 %v1001, 4294901760
    %6740 = vmatpush1.msra.mxu0 %v6739
    %v6741 = vand.u32 %v1000, 4294901760
    %6742 = vmatprep.subr.mxu0 %v6741
    %v6743 = vand.u32 %v999, 4294901760
    %6744 = vmatpush1.msra.mxu0 %v6743
    %6745 = vmatprep.subr.mxu0 0.0
    %6746 = vmatpush2.msra.mxu0 0.0
    %6747 = vmatprep.subr.mxu0 0.0
    %6748 = vmatpush2.msra.mxu0 0.0
    %6749 = vmatprep.subr.mxu0 0.0
    %6750 = vmatpush2.msra.mxu0 0.0
    %6751 = vmatprep.subr.mxu0 0.0
    %6752 = vmatpush2.msra.mxu0 0.0
    %6753 = vmatprep.subr.mxu0 0.0
    %6754 = vmatpush2.msra.mxu0 0.0
    %6755 = vmatprep.subr.mxu0 0.0
    %6756 = vmatpush2.msra.mxu0 0.0
    %6757 = vmatprep.subr.mxu0 0.0
    %6758 = vmatpush2.msra.mxu0 0.0
    %6759 = vmatprep.subr.mxu0 0.0
    %6760 = vmatpush2.msra.mxu0 0.0
    %6761 = vmatprep.subr.mxu0 0.0
    %6762 = vmatpush2.msra.mxu0 0.0
    %6763 = vmatprep.subr.mxu0 0.0
    %6764 = vmatpush2.msra.mxu0 0.0
    %6765 = vmatprep.subr.mxu0 0.0
    %6766 = vmatpush2.msra.mxu0 0.0
    %6767 = vmatprep.subr.mxu0 0.0
    %6768 = vmatpush2.msra.mxu0 0.0
    %6769 = vmatprep.subr.mxu0 0.0
    %6770 = vmatpush2.msra.mxu0 0.0
    %6771 = vmatprep.subr.mxu0 0.0
    %6772 = vmatpush2.msra.mxu0 0.0
    %6773 = vmatprep.subr.mxu0 0.0
    %6774 = vmatpush2.msra.mxu0 0.0
    %6775 = vmatprep.subr.mxu0 0.0
    %6776 = vmatpush2.msra.mxu0 0.0
    %6777 = vmatprep.mubr.f32.mxu0 0.0
    %v6778 = vand.u32 %v6695, 4294901760
    %v6779 = vsub.f32 %v6695, %v6778
    %v6780 = vand.u32 %v6779, 4294901760
    %v6781 = vsub.f32 %v6779, %v6780
    %v6782 = vand.u32 %v6781, 4294901760
    %6783 = vmatmul.mubr.f32.gmra.mxu0 %v6782
    %v6784 = vpop.f32.mrf.mxu0
    %v6785 = vpop.f32.mrf.mxu0
    %v6786 = vadd.f32 0.0, %v6785
    %6787 = vdwg.mxu0
    %6788 = vmatprep.subr.mxu0 0.0
    %6789 = vmatpush1.msra.mxu0 0.0
    %6790 = vmatprep.subr.mxu0 0.0
    %6791 = vmatpush1.msra.mxu0 0.0
    %6792 = vmatprep.subr.mxu0 0.0
    %6793 = vmatpush1.msra.mxu0 0.0
    %6794 = vmatprep.subr.mxu0 0.0
    %6795 = vmatpush1.msra.mxu0 0.0
    %6796 = vmatprep.subr.mxu0 0.0
    %6797 = vmatpush1.msra.mxu0 0.0
    %6798 = vmatprep.subr.mxu0 0.0
    %6799 = vmatpush1.msra.mxu0 0.0
    %6800 = vmatprep.subr.mxu0 0.0
    %6801 = vmatpush1.msra.mxu0 0.0
    %6802 = vmatprep.subr.mxu0 0.0
    %6803 = vmatpush1.msra.mxu0 0.0
    %v6804 = vand.u32 %v1014, 4294901760
    %v6805 = vsub.f32 %v1014, %v6804
    %v6806 = vand.u32 %v6805, 4294901760
    %v6807 = vsub.f32 %v6805, %v6806
    %v6808 = vand.u32 %v6807, 4294901760
    %6809 = vmatprep.subr.mxu0 %v6808
    %v6810 = vand.u32 %v1013, 4294901760
    %v6811 = vsub.f32 %v1013, %v6810
    %v6812 = vand.u32 %v6811, 4294901760
    %v6813 = vsub.f32 %v6811, %v6812
    %v6814 = vand.u32 %v6813, 4294901760
    %6815 = vmatpush1.msra.mxu0 %v6814
    %v6816 = vand.u32 %v1012, 4294901760
    %v6817 = vsub.f32 %v1012, %v6816
    %v6818 = vand.u32 %v6817, 4294901760
    %v6819 = vsub.f32 %v6817, %v6818
    %v6820 = vand.u32 %v6819, 4294901760
    %6821 = vmatprep.subr.mxu0 %v6820
    %v6822 = vand.u32 %v1011, 4294901760
    %v6823 = vsub.f32 %v1011, %v6822
    %v6824 = vand.u32 %v6823, 4294901760
    %v6825 = vsub.f32 %v6823, %v6824
    %v6826 = vand.u32 %v6825, 4294901760
    %6827 = vmatpush1.msra.mxu0 %v6826
    %v6828 = vand.u32 %v1010, 4294901760
    %v6829 = vsub.f32 %v1010, %v6828
    %v6830 = vand.u32 %v6829, 4294901760
    %v6831 = vsub.f32 %v6829, %v6830
    %v6832 = vand.u32 %v6831, 4294901760
    %6833 = vmatprep.subr.mxu0 %v6832
    %v6834 = vand.u32 %v1009, 4294901760
    %v6835 = vsub.f32 %v1009, %v6834
    %v6836 = vand.u32 %v6835, 4294901760
    %v6837 = vsub.f32 %v6835, %v6836
    %v6838 = vand.u32 %v6837, 4294901760
    %6839 = vmatpush1.msra.mxu0 %v6838
    %v6840 = vand.u32 %v1008, 4294901760
    %v6841 = vsub.f32 %v1008, %v6840
    %v6842 = vand.u32 %v6841, 4294901760
    %v6843 = vsub.f32 %v6841, %v6842
    %v6844 = vand.u32 %v6843, 4294901760
    %6845 = vmatprep.subr.mxu0 %v6844
    %v6846 = vand.u32 %v1007, 4294901760
    %v6847 = vsub.f32 %v1007, %v6846
    %v6848 = vand.u32 %v6847, 4294901760
    %v6849 = vsub.f32 %v6847, %v6848
    %v6850 = vand.u32 %v6849, 4294901760
    %6851 = vmatpush1.msra.mxu0 %v6850
    %v6852 = vand.u32 %v1006, 4294901760
    %v6853 = vsub.f32 %v1006, %v6852
    %v6854 = vand.u32 %v6853, 4294901760
    %v6855 = vsub.f32 %v6853, %v6854
    %v6856 = vand.u32 %v6855, 4294901760
    %6857 = vmatprep.subr.mxu0 %v6856
    %v6858 = vand.u32 %v1005, 4294901760
    %v6859 = vsub.f32 %v1005, %v6858
    %v6860 = vand.u32 %v6859, 4294901760
    %v6861 = vsub.f32 %v6859, %v6860
    %v6862 = vand.u32 %v6861, 4294901760
    %6863 = vmatpush1.msra.mxu0 %v6862
    %v6864 = vand.u32 %v1004, 4294901760
    %v6865 = vsub.f32 %v1004, %v6864
    %v6866 = vand.u32 %v6865, 4294901760
    %v6867 = vsub.f32 %v6865, %v6866
    %v6868 = vand.u32 %v6867, 4294901760
    %6869 = vmatprep.subr.mxu0 %v6868
    %v6870 = vand.u32 %v1003, 4294901760
    %v6871 = vsub.f32 %v1003, %v6870
    %v6872 = vand.u32 %v6871, 4294901760
    %v6873 = vsub.f32 %v6871, %v6872
    %v6874 = vand.u32 %v6873, 4294901760
    %6875 = vmatpush1.msra.mxu0 %v6874
    %v6876 = vand.u32 %v1002, 4294901760
    %v6877 = vsub.f32 %v1002, %v6876
    %v6878 = vand.u32 %v6877, 4294901760
    %v6879 = vsub.f32 %v6877, %v6878
    %v6880 = vand.u32 %v6879, 4294901760
    %6881 = vmatprep.subr.mxu0 %v6880
    %v6882 = vand.u32 %v1001, 4294901760
    %v6883 = vsub.f32 %v1001, %v6882
    %v6884 = vand.u32 %v6883, 4294901760
    %v6885 = vsub.f32 %v6883, %v6884
    %v6886 = vand.u32 %v6885, 4294901760
    %6887 = vmatpush1.msra.mxu0 %v6886
    %v6888 = vand.u32 %v1000, 4294901760
    %v6889 = vsub.f32 %v1000, %v6888
    %v6890 = vand.u32 %v6889, 4294901760
    %v6891 = vsub.f32 %v6889, %v6890
    %v6892 = vand.u32 %v6891, 4294901760
    %6893 = vmatprep.subr.mxu0 %v6892
    %v6894 = vand.u32 %v999, 4294901760
    %v6895 = vsub.f32 %v999, %v6894
    %v6896 = vand.u32 %v6895, 4294901760
    %v6897 = vsub.f32 %v6895, %v6896
    %v6898 = vand.u32 %v6897, 4294901760
    %6899 = vmatpush1.msra.mxu0 %v6898
    %6900 = vmatprep.subr.mxu0 0.0
    %6901 = vmatpush2.msra.mxu0 0.0
    %6902 = vmatprep.subr.mxu0 0.0
    %6903 = vmatpush2.msra.mxu0 0.0
    %6904 = vmatprep.subr.mxu0 0.0
    %6905 = vmatpush2.msra.mxu0 0.0
    %6906 = vmatprep.subr.mxu0 0.0
    %6907 = vmatpush2.msra.mxu0 0.0
    %6908 = vmatprep.subr.mxu0 0.0
    %6909 = vmatpush2.msra.mxu0 0.0
    %6910 = vmatprep.subr.mxu0 0.0
    %6911 = vmatpush2.msra.mxu0 0.0
    %6912 = vmatprep.subr.mxu0 0.0
    %6913 = vmatpush2.msra.mxu0 0.0
    %6914 = vmatprep.subr.mxu0 0.0
    %6915 = vmatpush2.msra.mxu0 0.0
    %6916 = vmatprep.subr.mxu0 0.0
    %6917 = vmatpush2.msra.mxu0 0.0
    %6918 = vmatprep.subr.mxu0 0.0
    %6919 = vmatpush2.msra.mxu0 0.0
    %6920 = vmatprep.subr.mxu0 0.0
    %6921 = vmatpush2.msra.mxu0 0.0
    %6922 = vmatprep.subr.mxu0 0.0
    %6923 = vmatpush2.msra.mxu0 0.0
    %6924 = vmatprep.subr.mxu0 0.0
    %6925 = vmatpush2.msra.mxu0 0.0
    %6926 = vmatprep.subr.mxu0 0.0
    %6927 = vmatpush2.msra.mxu0 0.0
    %6928 = vmatprep.subr.mxu0 0.0
    %6929 = vmatpush2.msra.mxu0 0.0
    %6930 = vmatprep.subr.mxu0 0.0
    %6931 = vmatpush2.msra.mxu0 0.0
    %6932 = vmatprep.mubr.f32.mxu0 0.0
    %v6933 = vand.u32 %v6695, 4294901760
    %6934 = vmatmul.mubr.f32.gmra.mxu0 %v6933
    %v6935 = vpop.f32.mrf.mxu0
    %v6936 = vpop.f32.mrf.mxu0
    %v6937 = vadd.f32 %v6786, %v6936
    %6938 = vdwg.mxu0
    %6939 = vmatprep.subr.mxu0 0.0
    %6940 = vmatpush1.msra.mxu0 0.0
    %6941 = vmatprep.subr.mxu0 0.0
    %6942 = vmatpush1.msra.mxu0 0.0
    %6943 = vmatprep.subr.mxu0 0.0
    %6944 = vmatpush1.msra.mxu0 0.0
    %6945 = vmatprep.subr.mxu0 0.0
    %6946 = vmatpush1.msra.mxu0 0.0
    %6947 = vmatprep.subr.mxu0 0.0
    %6948 = vmatpush1.msra.mxu0 0.0
    %6949 = vmatprep.subr.mxu0 0.0
    %6950 = vmatpush1.msra.mxu0 0.0
    %6951 = vmatprep.subr.mxu0 0.0
    %6952 = vmatpush1.msra.mxu0 0.0
    %6953 = vmatprep.subr.mxu0 0.0
    %6954 = vmatpush1.msra.mxu0 0.0
    %v6955 = vand.u32 %v1014, 4294901760
    %v6956 = vsub.f32 %v1014, %v6955
    %6957 = vmatprep.subr.mxu0 %v6956
    %v6958 = vand.u32 %v1013, 4294901760
    %v6959 = vsub.f32 %v1013, %v6958
    %6960 = vmatpush1.msra.mxu0 %v6959
    %v6961 = vand.u32 %v1012, 4294901760
    %v6962 = vsub.f32 %v1012, %v6961
    %6963 = vmatprep.subr.mxu0 %v6962
    %v6964 = vand.u32 %v1011, 4294901760
    %v6965 = vsub.f32 %v1011, %v6964
    %6966 = vmatpush1.msra.mxu0 %v6965
    %v6967 = vand.u32 %v1010, 4294901760
    %v6968 = vsub.f32 %v1010, %v6967
    %6969 = vmatprep.subr.mxu0 %v6968
    %v6970 = vand.u32 %v1009, 4294901760
    %v6971 = vsub.f32 %v1009, %v6970
    %6972 = vmatpush1.msra.mxu0 %v6971
    %v6973 = vand.u32 %v1008, 4294901760
    %v6974 = vsub.f32 %v1008, %v6973
    %6975 = vmatprep.subr.mxu0 %v6974
    %v6976 = vand.u32 %v1007, 4294901760
    %v6977 = vsub.f32 %v1007, %v6976
    %6978 = vmatpush1.msra.mxu0 %v6977
    %v6979 = vand.u32 %v1006, 4294901760
    %v6980 = vsub.f32 %v1006, %v6979
    %6981 = vmatprep.subr.mxu0 %v6980
    %v6982 = vand.u32 %v1005, 4294901760
    %v6983 = vsub.f32 %v1005, %v6982
    %6984 = vmatpush1.msra.mxu0 %v6983
    %v6985 = vand.u32 %v1004, 4294901760
    %v6986 = vsub.f32 %v1004, %v6985
    %6987 = vmatprep.subr.mxu0 %v6986
    %v6988 = vand.u32 %v1003, 4294901760
    %v6989 = vsub.f32 %v1003, %v6988
    %6990 = vmatpush1.msra.mxu0 %v6989
    %v6991 = vand.u32 %v1002, 4294901760
    %v6992 = vsub.f32 %v1002, %v6991
    %6993 = vmatprep.subr.mxu0 %v6992
    %v6994 = vand.u32 %v1001, 4294901760
    %v6995 = vsub.f32 %v1001, %v6994
    %6996 = vmatpush1.msra.mxu0 %v6995
    %v6997 = vand.u32 %v1000, 4294901760
    %v6998 = vsub.f32 %v1000, %v6997
    %6999 = vmatprep.subr.mxu0 %v6998
    %v7000 = vand.u32 %v999, 4294901760
    %v7001 = vsub.f32 %v999, %v7000
    %7002 = vmatpush1.msra.mxu0 %v7001
    %7003 = vmatprep.subr.mxu0 0.0
    %7004 = vmatpush2.msra.mxu0 0.0
    %7005 = vmatprep.subr.mxu0 0.0
    %7006 = vmatpush2.msra.mxu0 0.0
    %7007 = vmatprep.subr.mxu0 0.0
    %7008 = vmatpush2.msra.mxu0 0.0
    %7009 = vmatprep.subr.mxu0 0.0
    %7010 = vmatpush2.msra.mxu0 0.0
    %7011 = vmatprep.subr.mxu0 0.0
    %7012 = vmatpush2.msra.mxu0 0.0
    %7013 = vmatprep.subr.mxu0 0.0
    %7014 = vmatpush2.msra.mxu0 0.0
    %7015 = vmatprep.subr.mxu0 0.0
    %7016 = vmatpush2.msra.mxu0 0.0
    %7017 = vmatprep.subr.mxu0 0.0
    %7018 = vmatpush2.msra.mxu0 0.0
    %7019 = vmatprep.subr.mxu0 0.0
    %7020 = vmatpush2.msra.mxu0 0.0
    %7021 = vmatprep.subr.mxu0 0.0
    %7022 = vmatpush2.msra.mxu0 0.0
    %7023 = vmatprep.subr.mxu0 0.0
    %7024 = vmatpush2.msra.mxu0 0.0
    %7025 = vmatprep.subr.mxu0 0.0
    %7026 = vmatpush2.msra.mxu0 0.0
    %7027 = vmatprep.subr.mxu0 0.0
    %7028 = vmatpush2.msra.mxu0 0.0
    %7029 = vmatprep.subr.mxu0 0.0
    %7030 = vmatpush2.msra.mxu0 0.0
    %7031 = vmatprep.subr.mxu0 0.0
    %7032 = vmatpush2.msra.mxu0 0.0
    %7033 = vmatprep.subr.mxu0 0.0
    %7034 = vmatpush2.msra.mxu0 0.0
    %7035 = vmatprep.mubr.f32.mxu0 0.0
    %v7036 = vand.u32 %v6695, 4294901760
    %v7037 = vsub.f32 %v6695, %v7036
    %7038 = vmatmul.mubr.f32.gmra.mxu0 %v7037
    %v7039 = vpop.f32.mrf.mxu0
    %v7040 = vpop.f32.mrf.mxu0
    %v7041 = vadd.f32 %v6937, %v7040
    %7042 = vdwg.mxu0
    %7043 = vmatprep.subr.mxu0 0.0
    %7044 = vmatpush1.msra.mxu0 0.0
    %7045 = vmatprep.subr.mxu0 0.0
    %7046 = vmatpush1.msra.mxu0 0.0
    %7047 = vmatprep.subr.mxu0 0.0
    %7048 = vmatpush1.msra.mxu0 0.0
    %7049 = vmatprep.subr.mxu0 0.0
    %7050 = vmatpush1.msra.mxu0 0.0
    %7051 = vmatprep.subr.mxu0 0.0
    %7052 = vmatpush1.msra.mxu0 0.0
    %7053 = vmatprep.subr.mxu0 0.0
    %7054 = vmatpush1.msra.mxu0 0.0
    %7055 = vmatprep.subr.mxu0 0.0
    %7056 = vmatpush1.msra.mxu0 0.0
    %7057 = vmatprep.subr.mxu0 0.0
    %7058 = vmatpush1.msra.mxu0 0.0
    %v7059 = vand.u32 %v1014, 4294901760
    %7060 = vmatprep.subr.mxu0 %v7059
    %v7061 = vand.u32 %v1013, 4294901760
    %7062 = vmatpush1.msra.mxu0 %v7061
    %v7063 = vand.u32 %v1012, 4294901760
    %7064 = vmatprep.subr.mxu0 %v7063
    %v7065 = vand.u32 %v1011, 4294901760
    %7066 = vmatpush1.msra.mxu0 %v7065
    %v7067 = vand.u32 %v1010, 4294901760
    %7068 = vmatprep.subr.mxu0 %v7067
    %v7069 = vand.u32 %v1009, 4294901760
    %7070 = vmatpush1.msra.mxu0 %v7069
    %v7071 = vand.u32 %v1008, 4294901760
    %7072 = vmatprep.subr.mxu0 %v7071
    %v7073 = vand.u32 %v1007, 4294901760
    %7074 = vmatpush1.msra.mxu0 %v7073
    %v7075 = vand.u32 %v1006, 4294901760
    %7076 = vmatprep.subr.mxu0 %v7075
    %v7077 = vand.u32 %v1005, 4294901760
    %7078 = vmatpush1.msra.mxu0 %v7077
    %v7079 = vand.u32 %v1004, 4294901760
    %7080 = vmatprep.subr.mxu0 %v7079
    %v7081 = vand.u32 %v1003, 4294901760
    %7082 = vmatpush1.msra.mxu0 %v7081
    %v7083 = vand.u32 %v1002, 4294901760
    %7084 = vmatprep.subr.mxu0 %v7083
    %v7085 = vand.u32 %v1001, 4294901760
    %7086 = vmatpush1.msra.mxu0 %v7085
    %v7087 = vand.u32 %v1000, 4294901760
    %7088 = vmatprep.subr.mxu0 %v7087
    %v7089 = vand.u32 %v999, 4294901760
    %7090 = vmatpush1.msra.mxu0 %v7089
    %7091 = vmatprep.subr.mxu0 0.0
    %7092 = vmatpush2.msra.mxu0 0.0
    %7093 = vmatprep.subr.mxu0 0.0
    %7094 = vmatpush2.msra.mxu0 0.0
    %7095 = vmatprep.subr.mxu0 0.0
    %7096 = vmatpush2.msra.mxu0 0.0
    %7097 = vmatprep.subr.mxu0 0.0
    %7098 = vmatpush2.msra.mxu0 0.0
    %7099 = vmatprep.subr.mxu0 0.0
    %7100 = vmatpush2.msra.mxu0 0.0
    %7101 = vmatprep.subr.mxu0 0.0
    %7102 = vmatpush2.msra.mxu0 0.0
    %7103 = vmatprep.subr.mxu0 0.0
    %7104 = vmatpush2.msra.mxu0 0.0
    %7105 = vmatprep.subr.mxu0 0.0
    %7106 = vmatpush2.msra.mxu0 0.0
    %7107 = vmatprep.subr.mxu0 0.0
    %7108 = vmatpush2.msra.mxu0 0.0
    %7109 = vmatprep.subr.mxu0 0.0
    %7110 = vmatpush2.msra.mxu0 0.0
    %7111 = vmatprep.subr.mxu0 0.0
    %7112 = vmatpush2.msra.mxu0 0.0
    %7113 = vmatprep.subr.mxu0 0.0
    %7114 = vmatpush2.msra.mxu0 0.0
    %7115 = vmatprep.subr.mxu0 0.0
    %7116 = vmatpush2.msra.mxu0 0.0
    %7117 = vmatprep.subr.mxu0 0.0
    %7118 = vmatpush2.msra.mxu0 0.0
    %7119 = vmatprep.subr.mxu0 0.0
    %7120 = vmatpush2.msra.mxu0 0.0
    %7121 = vmatprep.subr.mxu0 0.0
    %7122 = vmatpush2.msra.mxu0 0.0
    %7123 = vmatprep.mubr.f32.mxu0 0.0
    %v7124 = vand.u32 %v6695, 4294901760
    %v7125 = vsub.f32 %v6695, %v7124
    %v7126 = vand.u32 %v7125, 4294901760
    %7127 = vmatmul.mubr.f32.gmra.mxu0 %v7126
    %v7128 = vpop.f32.mrf.mxu0
    %v7129 = vpop.f32.mrf.mxu0
    %v7130 = vadd.f32 %v7041, %v7129
    %7131 = vdwg.mxu0
    %7132 = vmatprep.subr.mxu0 0.0
    %7133 = vmatpush1.msra.mxu0 0.0
    %7134 = vmatprep.subr.mxu0 0.0
    %7135 = vmatpush1.msra.mxu0 0.0
    %7136 = vmatprep.subr.mxu0 0.0
    %7137 = vmatpush1.msra.mxu0 0.0
    %7138 = vmatprep.subr.mxu0 0.0
    %7139 = vmatpush1.msra.mxu0 0.0
    %7140 = vmatprep.subr.mxu0 0.0
    %7141 = vmatpush1.msra.mxu0 0.0
    %7142 = vmatprep.subr.mxu0 0.0
    %7143 = vmatpush1.msra.mxu0 0.0
    %7144 = vmatprep.subr.mxu0 0.0
    %7145 = vmatpush1.msra.mxu0 0.0
    %7146 = vmatprep.subr.mxu0 0.0
    %7147 = vmatpush1.msra.mxu0 0.0
    %v7148 = vand.u32 %v1014, 4294901760
    %v7149 = vsub.f32 %v1014, %v7148
    %v7150 = vand.u32 %v7149, 4294901760
    %7151 = vmatprep.subr.mxu0 %v7150
    %v7152 = vand.u32 %v1013, 4294901760
    %v7153 = vsub.f32 %v1013, %v7152
    %v7154 = vand.u32 %v7153, 4294901760
    %7155 = vmatpush1.msra.mxu0 %v7154
    %v7156 = vand.u32 %v1012, 4294901760
    %v7157 = vsub.f32 %v1012, %v7156
    %v7158 = vand.u32 %v7157, 4294901760
    %7159 = vmatprep.subr.mxu0 %v7158
    %v7160 = vand.u32 %v1011, 4294901760
    %v7161 = vsub.f32 %v1011, %v7160
    %v7162 = vand.u32 %v7161, 4294901760
    %7163 = vmatpush1.msra.mxu0 %v7162
    %v7164 = vand.u32 %v1010, 4294901760
    %v7165 = vsub.f32 %v1010, %v7164
    %v7166 = vand.u32 %v7165, 4294901760
    %7167 = vmatprep.subr.mxu0 %v7166
    %v7168 = vand.u32 %v1009, 4294901760
    %v7169 = vsub.f32 %v1009, %v7168
    %v7170 = vand.u32 %v7169, 4294901760
    %7171 = vmatpush1.msra.mxu0 %v7170
    %v7172 = vand.u32 %v1008, 4294901760
    %v7173 = vsub.f32 %v1008, %v7172
    %v7174 = vand.u32 %v7173, 4294901760
    %7175 = vmatprep.subr.mxu0 %v7174
    %v7176 = vand.u32 %v1007, 4294901760
    %v7177 = vsub.f32 %v1007, %v7176
    %v7178 = vand.u32 %v7177, 4294901760
    %7179 = vmatpush1.msra.mxu0 %v7178
    %v7180 = vand.u32 %v1006, 4294901760
    %v7181 = vsub.f32 %v1006, %v7180
    %v7182 = vand.u32 %v7181, 4294901760
    %7183 = vmatprep.subr.mxu0 %v7182
    %v7184 = vand.u32 %v1005, 4294901760
    %v7185 = vsub.f32 %v1005, %v7184
    %v7186 = vand.u32 %v7185, 4294901760
    %7187 = vmatpush1.msra.mxu0 %v7186
    %v7188 = vand.u32 %v1004, 4294901760
    %v7189 = vsub.f32 %v1004, %v7188
    %v7190 = vand.u32 %v7189, 4294901760
    %7191 = vmatprep.subr.mxu0 %v7190
    %v7192 = vand.u32 %v1003, 4294901760
    %v7193 = vsub.f32 %v1003, %v7192
    %v7194 = vand.u32 %v7193, 4294901760
    %7195 = vmatpush1.msra.mxu0 %v7194
    %v7196 = vand.u32 %v1002, 4294901760
    %v7197 = vsub.f32 %v1002, %v7196
    %v7198 = vand.u32 %v7197, 4294901760
    %7199 = vmatprep.subr.mxu0 %v7198
    %v7200 = vand.u32 %v1001, 4294901760
    %v7201 = vsub.f32 %v1001, %v7200
    %v7202 = vand.u32 %v7201, 4294901760
    %7203 = vmatpush1.msra.mxu0 %v7202
    %v7204 = vand.u32 %v1000, 4294901760
    %v7205 = vsub.f32 %v1000, %v7204
    %v7206 = vand.u32 %v7205, 4294901760
    %7207 = vmatprep.subr.mxu0 %v7206
    %v7208 = vand.u32 %v999, 4294901760
    %v7209 = vsub.f32 %v999, %v7208
    %v7210 = vand.u32 %v7209, 4294901760
    %7211 = vmatpush1.msra.mxu0 %v7210
    %7212 = vmatprep.subr.mxu0 0.0
    %7213 = vmatpush2.msra.mxu0 0.0
    %7214 = vmatprep.subr.mxu0 0.0
    %7215 = vmatpush2.msra.mxu0 0.0
    %7216 = vmatprep.subr.mxu0 0.0
    %7217 = vmatpush2.msra.mxu0 0.0
    %7218 = vmatprep.subr.mxu0 0.0
    %7219 = vmatpush2.msra.mxu0 0.0
    %7220 = vmatprep.subr.mxu0 0.0
    %7221 = vmatpush2.msra.mxu0 0.0
    %7222 = vmatprep.subr.mxu0 0.0
    %7223 = vmatpush2.msra.mxu0 0.0
    %7224 = vmatprep.subr.mxu0 0.0
    %7225 = vmatpush2.msra.mxu0 0.0
    %7226 = vmatprep.subr.mxu0 0.0
    %7227 = vmatpush2.msra.mxu0 0.0
    %7228 = vmatprep.subr.mxu0 0.0
    %7229 = vmatpush2.msra.mxu0 0.0
    %7230 = vmatprep.subr.mxu0 0.0
    %7231 = vmatpush2.msra.mxu0 0.0
    %7232 = vmatprep.subr.mxu0 0.0
    %7233 = vmatpush2.msra.mxu0 0.0
    %7234 = vmatprep.subr.mxu0 0.0
    %7235 = vmatpush2.msra.mxu0 0.0
    %7236 = vmatprep.subr.mxu0 0.0
    %7237 = vmatpush2.msra.mxu0 0.0
    %7238 = vmatprep.subr.mxu0 0.0
    %7239 = vmatpush2.msra.mxu0 0.0
    %7240 = vmatprep.subr.mxu0 0.0
    %7241 = vmatpush2.msra.mxu0 0.0
    %7242 = vmatprep.subr.mxu0 0.0
    %7243 = vmatpush2.msra.mxu0 0.0
    %7244 = vmatprep.mubr.f32.mxu0 0.0
    %v7245 = vand.u32 %v6695, 4294901760
    %7246 = vmatmul.mubr.f32.gmra.mxu0 %v7245
    %v7247 = vpop.f32.mrf.mxu0
    %v7248 = vpop.f32.mrf.mxu0
    %v7249 = vadd.f32 %v7130, %v7248
    %7250 = vdwg.mxu0
    %7251 = vmatprep.subr.mxu0 0.0
    %7252 = vmatpush1.msra.mxu0 0.0
    %7253 = vmatprep.subr.mxu0 0.0
    %7254 = vmatpush1.msra.mxu0 0.0
    %7255 = vmatprep.subr.mxu0 0.0
    %7256 = vmatpush1.msra.mxu0 0.0
    %7257 = vmatprep.subr.mxu0 0.0
    %7258 = vmatpush1.msra.mxu0 0.0
    %7259 = vmatprep.subr.mxu0 0.0
    %7260 = vmatpush1.msra.mxu0 0.0
    %7261 = vmatprep.subr.mxu0 0.0
    %7262 = vmatpush1.msra.mxu0 0.0
    %7263 = vmatprep.subr.mxu0 0.0
    %7264 = vmatpush1.msra.mxu0 0.0
    %7265 = vmatprep.subr.mxu0 0.0
    %7266 = vmatpush1.msra.mxu0 0.0
    %v7267 = vand.u32 %v1014, 4294901760
    %7268 = vmatprep.subr.mxu0 %v7267
    %v7269 = vand.u32 %v1013, 4294901760
    %7270 = vmatpush1.msra.mxu0 %v7269
    %v7271 = vand.u32 %v1012, 4294901760
    %7272 = vmatprep.subr.mxu0 %v7271
    %v7273 = vand.u32 %v1011, 4294901760
    %7274 = vmatpush1.msra.mxu0 %v7273
    %v7275 = vand.u32 %v1010, 4294901760
    %7276 = vmatprep.subr.mxu0 %v7275
    %v7277 = vand.u32 %v1009, 4294901760
    %7278 = vmatpush1.msra.mxu0 %v7277
    %v7279 = vand.u32 %v1008, 4294901760
    %7280 = vmatprep.subr.mxu0 %v7279
    %v7281 = vand.u32 %v1007, 4294901760
    %7282 = vmatpush1.msra.mxu0 %v7281
    %v7283 = vand.u32 %v1006, 4294901760
    %7284 = vmatprep.subr.mxu0 %v7283
    %v7285 = vand.u32 %v1005, 4294901760
    %7286 = vmatpush1.msra.mxu0 %v7285
    %v7287 = vand.u32 %v1004, 4294901760
    %7288 = vmatprep.subr.mxu0 %v7287
    %v7289 = vand.u32 %v1003, 4294901760
    %7290 = vmatpush1.msra.mxu0 %v7289
    %v7291 = vand.u32 %v1002, 4294901760
    %7292 = vmatprep.subr.mxu0 %v7291
    %v7293 = vand.u32 %v1001, 4294901760
    %7294 = vmatpush1.msra.mxu0 %v7293
    %v7295 = vand.u32 %v1000, 4294901760
    %7296 = vmatprep.subr.mxu0 %v7295
    %v7297 = vand.u32 %v999, 4294901760
    %7298 = vmatpush1.msra.mxu0 %v7297
    %7299 = vmatprep.subr.mxu0 0.0
    %7300 = vmatpush2.msra.mxu0 0.0
    %7301 = vmatprep.subr.mxu0 0.0
    %7302 = vmatpush2.msra.mxu0 0.0
    %7303 = vmatprep.subr.mxu0 0.0
    %7304 = vmatpush2.msra.mxu0 0.0
    %7305 = vmatprep.subr.mxu0 0.0
    %7306 = vmatpush2.msra.mxu0 0.0
    %7307 = vmatprep.subr.mxu0 0.0
    %7308 = vmatpush2.msra.mxu0 0.0
    %7309 = vmatprep.subr.mxu0 0.0
    %7310 = vmatpush2.msra.mxu0 0.0
    %7311 = vmatprep.subr.mxu0 0.0
    %7312 = vmatpush2.msra.mxu0 0.0
    %7313 = vmatprep.subr.mxu0 0.0
    %7314 = vmatpush2.msra.mxu0 0.0
    %7315 = vmatprep.subr.mxu0 0.0
    %7316 = vmatpush2.msra.mxu0 0.0
    %7317 = vmatprep.subr.mxu0 0.0
    %7318 = vmatpush2.msra.mxu0 0.0
    %7319 = vmatprep.subr.mxu0 0.0
    %7320 = vmatpush2.msra.mxu0 0.0
    %7321 = vmatprep.subr.mxu0 0.0
    %7322 = vmatpush2.msra.mxu0 0.0
    %7323 = vmatprep.subr.mxu0 0.0
    %7324 = vmatpush2.msra.mxu0 0.0
    %7325 = vmatprep.subr.mxu0 0.0
    %7326 = vmatpush2.msra.mxu0 0.0
    %7327 = vmatprep.subr.mxu0 0.0
    %7328 = vmatpush2.msra.mxu0 0.0
    %7329 = vmatprep.subr.mxu0 0.0
    %7330 = vmatpush2.msra.mxu0 0.0
    %7331 = vmatprep.mubr.f32.mxu0 0.0
    %v7332 = vand.u32 %v6695, 4294901760
    %7333 = vmatmul.mubr.f32.gmra.mxu0 %v7332
    %v7334 = vpop.f32.mrf.mxu0
    %v7335 = vpop.f32.mrf.mxu0
    %v7336 = vadd.f32 %v7249, %v7335
    %7337 = vdwg.mxu0
    %v7338 = vadd.f32 %v7336, %v2387
    %v7339 = vxor.u32 %v7338, 2147483648
    %v7340 = vmul.f32 %v7339, 1.442695
    %v7341 = vpow.pop %v7340
    %v7342 = vadd.f32 %v7341, 1.0
    %v7343 = vrcp.pop %v7342
    %v7344 = vmul.f32 1.0, %v7343
    %v7345 = vmul.f32 %v7344, 2.0
    %v7346 = vsub.f32 %v7345, 1.0
    %v7347 = vmul.f32 %v7344, %v6678
    %7349 = vrot.lane.b32.xlu0 %v7346, 64
    %v7350 = vpop.permute.xlu0 %7349
    %v7352 = vmul.f32 %v7344, %v7350
    %7354 = vrot.lane.b32.xlu0 %v7352, 32
    %v7355 = vpop.permute.xlu0 %7354
    %v7357 = vadd.f32 %v7347, %v7355
    %v7358 = vtanh.pop %v7357
    %7360 = vrot.lane.b32.xlu0 %v7358, 64
    %v7361 = vpop.permute.xlu0 %7360
    %v7363 = vmul.f32 %v7344, %v7361
    %v7364 = vld [vmem:[#allocation4] sm:$0xff]
    %v7365 = vld [vmem:[#allocation4 + $0x8] sm:$0xff]
    %v7366 = vld [vmem:[#allocation4 + $0x10] sm:$0xff]
    %v7367 = vld [vmem:[#allocation4 + $0x18] sm:$0xff]
    %v7368 = vld [vmem:[%s8] sm:$0x1]
    %v7370 = vlaneseq
    %v7371 = vshrl.u32 %v7370, 7
    %v7372 = vsub.s32 0, %v7371
    %v7373 = vrot.slane %v7368, %v7372
    %7376 = vrot.lane.b32.xlu0 %v2418, 32
    %v7377 = vpop.permute.xlu0 %7376
    %7378 = vrot.lane.b32.xlu0 %v3129, 32
    %v7379 = vpop.permute.xlu0 %7378
    %7380 = vrot.lane.b32.xlu0 %v3840, 32
    %v7381 = vpop.permute.xlu0 %7380
    %7382 = vrot.lane.b32.xlu0 %v4551, 32
    %v7383 = vpop.permute.xlu0 %7382
    %7384 = vrot.lane.b32.xlu0 %v5262, 32
    %v7385 = vpop.permute.xlu0 %7384
    %7386 = vrot.lane.b32.xlu0 %v5973, 32
    %v7387 = vpop.permute.xlu0 %7386
    %7388 = vrot.lane.b32.xlu0 %v6684, 32
    %v7389 = vpop.permute.xlu0 %7388
    %7390 = vrot.lane.b32.xlu0 %v7363, 32
    %v7391 = vpop.permute.xlu0 %7390
    %v7392 = vsel %vm1026, %v7377, 0
    %v7394 = vsel %vm1026, %v7379, 0
    %v7396 = vsel %vm1026, %v7381, 0
    %v7398 = vsel %vm1026, %v7383, 0
    %v7400 = vsel %vm1026, %v7385, 0
    %v7402 = vsel %vm1026, %v7387, 0
    %v7404 = vsel %vm1026, %v7389, 0
    %v7406 = vsel %vm1026, %v7391, 0
    %7408 = vmatprep.subr.mxu0 0.0
    %7409 = vmatpush1.msra.mxu0 0.0
    %7410 = vmatprep.subr.mxu0 0.0
    %7411 = vmatpush1.msra.mxu0 0.0
    %7412 = vmatprep.subr.mxu0 0.0
    %7413 = vmatpush1.msra.mxu0 0.0
    %7414 = vmatprep.subr.mxu0 0.0
    %7415 = vmatpush1.msra.mxu0 0.0
    %7416 = vmatprep.subr.mxu0 0.0
    %7417 = vmatpush1.msra.mxu0 0.0
    %7418 = vmatprep.subr.mxu0 0.0
    %7419 = vmatpush1.msra.mxu0 0.0
    %7420 = vmatprep.subr.mxu0 0.0
    %7421 = vmatpush1.msra.mxu0 0.0
    %7422 = vmatprep.subr.mxu0 0.0
    %7423 = vmatpush1.msra.mxu0 0.0
    %7424 = vmatprep.subr.mxu0 0.0
    %7425 = vmatpush1.msra.mxu0 0.0
    %7426 = vmatprep.subr.mxu0 0.0
    %7427 = vmatpush1.msra.mxu0 0.0
    %7428 = vmatprep.subr.mxu0 0.0
    %7429 = vmatpush1.msra.mxu0 0.0
    %7430 = vmatprep.subr.mxu0 0.0
    %7431 = vmatpush1.msra.mxu0 0.0
    %7432 = vmatprep.subr.mxu0 0.0
    %v7433 = vand.u32 %v7367, 4294901760
    %7434 = vmatpush1.msra.mxu0 %v7433
    %7435 = vmatprep.subr.mxu0 0.0
    %v7436 = vand.u32 %v7366, 4294901760
    %7437 = vmatpush1.msra.mxu0 %v7436
    %7438 = vmatprep.subr.mxu0 0.0
    %v7439 = vand.u32 %v7365, 4294901760
    %7440 = vmatpush1.msra.mxu0 %v7439
    %7441 = vmatprep.subr.mxu0 0.0
    %v7442 = vand.u32 %v7364, 4294901760
    %7443 = vmatpush1.msra.mxu0 %v7442
    %7444 = vmatprep.subr.mxu0 0.0
    %7445 = vmatpush2.msra.mxu0 0.0
    %7446 = vmatprep.subr.mxu0 0.0
    %7447 = vmatpush2.msra.mxu0 0.0
    %7448 = vmatprep.subr.mxu0 0.0
    %7449 = vmatpush2.msra.mxu0 0.0
    %7450 = vmatprep.subr.mxu0 0.0
    %7451 = vmatpush2.msra.mxu0 0.0
    %7452 = vmatprep.subr.mxu0 0.0
    %7453 = vmatpush2.msra.mxu0 0.0
    %7454 = vmatprep.subr.mxu0 0.0
    %7455 = vmatpush2.msra.mxu0 0.0
    %7456 = vmatprep.subr.mxu0 0.0
    %7457 = vmatpush2.msra.mxu0 0.0
    %7458 = vmatprep.subr.mxu0 0.0
    %7459 = vmatpush2.msra.mxu0 0.0
    %7460 = vmatprep.subr.mxu0 0.0
    %7461 = vmatpush2.msra.mxu0 0.0
    %7462 = vmatprep.subr.mxu0 0.0
    %7463 = vmatpush2.msra.mxu0 0.0
    %7464 = vmatprep.subr.mxu0 0.0
    %7465 = vmatpush2.msra.mxu0 0.0
    %7466 = vmatprep.subr.mxu0 0.0
    %7467 = vmatpush2.msra.mxu0 0.0
    %7468 = vmatprep.subr.mxu0 0.0
    %7469 = vmatpush2.msra.mxu0 0.0
    %7470 = vmatprep.subr.mxu0 0.0
    %7471 = vmatpush2.msra.mxu0 0.0
    %7472 = vmatprep.subr.mxu0 0.0
    %7473 = vmatpush2.msra.mxu0 0.0
    %7474 = vmatprep.subr.mxu0 0.0
    %7475 = vmatpush2.msra.mxu0 0.0
    %7476 = vmatprep.mubr.f32.mxu0 0.0
    %v7477 = vand.u32 %v7392, 4294901760
    %v7478 = vsub.f32 %v7392, %v7477
    %v7479 = vand.u32 %v7478, 4294901760
    %v7480 = vsub.f32 %v7478, %v7479
    %v7481 = vand.u32 %v7480, 4294901760
    %7482 = vmatmul.mubr.f32.gmra.mxu0 %v7481
    %v7483 = vpop.f32.mrf.mxu0
    %v7484 = vadd.f32 %v7373, %v7483
    %v7485 = vpop.f32.mrf.mxu0
    %7486 = vmatprep.mubr.f32.mxu0 0.0
    %v7487 = vand.u32 %v7394, 4294901760
    %v7488 = vsub.f32 %v7394, %v7487
    %v7489 = vand.u32 %v7488, 4294901760
    %v7490 = vsub.f32 %v7488, %v7489
    %v7491 = vand.u32 %v7490, 4294901760
    %7492 = vmatmul.mubr.f32.gmra.mxu0 %v7491
    %v7493 = vpop.f32.mrf.mxu0
    %v7494 = vadd.f32 %v7373, %v7493
    %v7495 = vpop.f32.mrf.mxu0
    %7496 = vmatprep.mubr.f32.mxu0 0.0
    %v7497 = vand.u32 %v7396, 4294901760
    %v7498 = vsub.f32 %v7396, %v7497
    %v7499 = vand.u32 %v7498, 4294901760
    %v7500 = vsub.f32 %v7498, %v7499
    %v7501 = vand.u32 %v7500, 4294901760
    %7502 = vmatmul.mubr.f32.gmra.mxu0 %v7501
    %v7503 = vpop.f32.mrf.mxu0
    %v7504 = vadd.f32 %v7373, %v7503
    %v7505 = vpop.f32.mrf.mxu0
    %7506 = vmatprep.mubr.f32.mxu0 0.0
    %v7507 = vand.u32 %v7398, 4294901760
    %v7508 = vsub.f32 %v7398, %v7507
    %v7509 = vand.u32 %v7508, 4294901760
    %v7510 = vsub.f32 %v7508, %v7509
    %v7511 = vand.u32 %v7510, 4294901760
    %7512 = vmatmul.mubr.f32.gmra.mxu0 %v7511
    %v7513 = vpop.f32.mrf.mxu0
    %v7514 = vadd.f32 %v7373, %v7513
    %v7515 = vpop.f32.mrf.mxu0
    %7516 = vmatprep.mubr.f32.mxu0 0.0
    %v7517 = vand.u32 %v7400, 4294901760
    %v7518 = vsub.f32 %v7400, %v7517
    %v7519 = vand.u32 %v7518, 4294901760
    %v7520 = vsub.f32 %v7518, %v7519
    %v7521 = vand.u32 %v7520, 4294901760
    %7522 = vmatmul.mubr.f32.gmra.mxu0 %v7521
    %v7523 = vpop.f32.mrf.mxu0
    %v7524 = vadd.f32 %v7373, %v7523
    %v7525 = vpop.f32.mrf.mxu0
    %7526 = vmatprep.mubr.f32.mxu0 0.0
    %v7527 = vand.u32 %v7402, 4294901760
    %v7528 = vsub.f32 %v7402, %v7527
    %v7529 = vand.u32 %v7528, 4294901760
    %v7530 = vsub.f32 %v7528, %v7529
    %v7531 = vand.u32 %v7530, 4294901760
    %7532 = vmatmul.mubr.f32.gmra.mxu0 %v7531
    %v7533 = vpop.f32.mrf.mxu0
    %v7534 = vadd.f32 %v7373, %v7533
    %v7535 = vpop.f32.mrf.mxu0
    %7536 = vmatprep.mubr.f32.mxu0 0.0
    %v7537 = vand.u32 %v7404, 4294901760
    %v7538 = vsub.f32 %v7404, %v7537
    %v7539 = vand.u32 %v7538, 4294901760
    %v7540 = vsub.f32 %v7538, %v7539
    %v7541 = vand.u32 %v7540, 4294901760
    %7542 = vmatmul.mubr.f32.gmra.mxu0 %v7541
    %v7543 = vpop.f32.mrf.mxu0
    %v7544 = vadd.f32 %v7373, %v7543
    %v7545 = vpop.f32.mrf.mxu0
    %7546 = vmatprep.mubr.f32.mxu0 0.0
    %v7547 = vand.u32 %v7406, 4294901760
    %v7548 = vsub.f32 %v7406, %v7547
    %v7549 = vand.u32 %v7548, 4294901760
    %v7550 = vsub.f32 %v7548, %v7549
    %v7551 = vand.u32 %v7550, 4294901760
    %7552 = vmatmul.mubr.f32.gmra.mxu0 %v7551
    %v7553 = vpop.f32.mrf.mxu0
    %v7554 = vadd.f32 %v7373, %v7553
    %v7555 = vpop.f32.mrf.mxu0
    %7556 = vdwg.mxu0
    %7557 = vmatprep.subr.mxu0 0.0
    %7558 = vmatpush1.msra.mxu0 0.0
    %7559 = vmatprep.subr.mxu0 0.0
    %7560 = vmatpush1.msra.mxu0 0.0
    %7561 = vmatprep.subr.mxu0 0.0
    %7562 = vmatpush1.msra.mxu0 0.0
    %7563 = vmatprep.subr.mxu0 0.0
    %7564 = vmatpush1.msra.mxu0 0.0
    %7565 = vmatprep.subr.mxu0 0.0
    %7566 = vmatpush1.msra.mxu0 0.0
    %7567 = vmatprep.subr.mxu0 0.0
    %7568 = vmatpush1.msra.mxu0 0.0
    %7569 = vmatprep.subr.mxu0 0.0
    %7570 = vmatpush1.msra.mxu0 0.0
    %7571 = vmatprep.subr.mxu0 0.0
    %7572 = vmatpush1.msra.mxu0 0.0
    %7573 = vmatprep.subr.mxu0 0.0
    %7574 = vmatpush1.msra.mxu0 0.0
    %7575 = vmatprep.subr.mxu0 0.0
    %7576 = vmatpush1.msra.mxu0 0.0
    %7577 = vmatprep.subr.mxu0 0.0
    %7578 = vmatpush1.msra.mxu0 0.0
    %7579 = vmatprep.subr.mxu0 0.0
    %7580 = vmatpush1.msra.mxu0 0.0
    %7581 = vmatprep.subr.mxu0 0.0
    %v7582 = vand.u32 %v7367, 4294901760
    %v7583 = vsub.f32 %v7367, %v7582
    %v7584 = vand.u32 %v7583, 4294901760
    %v7585 = vsub.f32 %v7583, %v7584
    %v7586 = vand.u32 %v7585, 4294901760
    %7587 = vmatpush1.msra.mxu0 %v7586
    %7588 = vmatprep.subr.mxu0 0.0
    %v7589 = vand.u32 %v7366, 4294901760
    %v7590 = vsub.f32 %v7366, %v7589
    %v7591 = vand.u32 %v7590, 4294901760
    %v7592 = vsub.f32 %v7590, %v7591
    %v7593 = vand.u32 %v7592, 4294901760
    %7594 = vmatpush1.msra.mxu0 %v7593
    %7595 = vmatprep.subr.mxu0 0.0
    %v7596 = vand.u32 %v7365, 4294901760
    %v7597 = vsub.f32 %v7365, %v7596
    %v7598 = vand.u32 %v7597, 4294901760
    %v7599 = vsub.f32 %v7597, %v7598
    %v7600 = vand.u32 %v7599, 4294901760
    %7601 = vmatpush1.msra.mxu0 %v7600
    %7602 = vmatprep.subr.mxu0 0.0
    %v7603 = vand.u32 %v7364, 4294901760
    %v7604 = vsub.f32 %v7364, %v7603
    %v7605 = vand.u32 %v7604, 4294901760
    %v7606 = vsub.f32 %v7604, %v7605
    %v7607 = vand.u32 %v7606, 4294901760
    %7608 = vmatpush1.msra.mxu0 %v7607
    %7609 = vmatprep.subr.mxu0 0.0
    %7610 = vmatpush2.msra.mxu0 0.0
    %7611 = vmatprep.subr.mxu0 0.0
    %7612 = vmatpush2.msra.mxu0 0.0
    %7613 = vmatprep.subr.mxu0 0.0
    %7614 = vmatpush2.msra.mxu0 0.0
    %7615 = vmatprep.subr.mxu0 0.0
    %7616 = vmatpush2.msra.mxu0 0.0
    %7617 = vmatprep.subr.mxu0 0.0
    %7618 = vmatpush2.msra.mxu0 0.0
    %7619 = vmatprep.subr.mxu0 0.0
    %7620 = vmatpush2.msra.mxu0 0.0
    %7621 = vmatprep.subr.mxu0 0.0
    %7622 = vmatpush2.msra.mxu0 0.0
    %7623 = vmatprep.subr.mxu0 0.0
    %7624 = vmatpush2.msra.mxu0 0.0
    %7625 = vmatprep.subr.mxu0 0.0
    %7626 = vmatpush2.msra.mxu0 0.0
    %7627 = vmatprep.subr.mxu0 0.0
    %7628 = vmatpush2.msra.mxu0 0.0
    %7629 = vmatprep.subr.mxu0 0.0
    %7630 = vmatpush2.msra.mxu0 0.0
    %7631 = vmatprep.subr.mxu0 0.0
    %7632 = vmatpush2.msra.mxu0 0.0
    %7633 = vmatprep.subr.mxu0 0.0
    %7634 = vmatpush2.msra.mxu0 0.0
    %7635 = vmatprep.subr.mxu0 0.0
    %7636 = vmatpush2.msra.mxu0 0.0
    %7637 = vmatprep.subr.mxu0 0.0
    %7638 = vmatpush2.msra.mxu0 0.0
    %7639 = vmatprep.subr.mxu0 0.0
    %7640 = vmatpush2.msra.mxu0 0.0
    %7641 = vmatprep.mubr.f32.mxu0 0.0
    %v7642 = vand.u32 %v7392, 4294901760
    %7643 = vmatmul.mubr.f32.gmra.mxu0 %v7642
    %v7644 = vpop.f32.mrf.mxu0
    %v7645 = vadd.f32 %v7484, %v7644
    %v7646 = vpop.f32.mrf.mxu0
    %7647 = vmatprep.mubr.f32.mxu0 0.0
    %v7648 = vand.u32 %v7394, 4294901760
    %7649 = vmatmul.mubr.f32.gmra.mxu0 %v7648
    %v7650 = vpop.f32.mrf.mxu0
    %v7651 = vadd.f32 %v7494, %v7650
    %v7652 = vpop.f32.mrf.mxu0
    %7653 = vmatprep.mubr.f32.mxu0 0.0
    %v7654 = vand.u32 %v7396, 4294901760
    %7655 = vmatmul.mubr.f32.gmra.mxu0 %v7654
    %v7656 = vpop.f32.mrf.mxu0
    %v7657 = vadd.f32 %v7504, %v7656
    %v7658 = vpop.f32.mrf.mxu0
    %7659 = vmatprep.mubr.f32.mxu0 0.0
    %v7660 = vand.u32 %v7398, 4294901760
    %7661 = vmatmul.mubr.f32.gmra.mxu0 %v7660
    %v7662 = vpop.f32.mrf.mxu0
    %v7663 = vadd.f32 %v7514, %v7662
    %v7664 = vpop.f32.mrf.mxu0
    %7665 = vmatprep.mubr.f32.mxu0 0.0
    %v7666 = vand.u32 %v7400, 4294901760
    %7667 = vmatmul.mubr.f32.gmra.mxu0 %v7666
    %v7668 = vpop.f32.mrf.mxu0
    %v7669 = vadd.f32 %v7524, %v7668
    %v7670 = vpop.f32.mrf.mxu0
    %7671 = vmatprep.mubr.f32.mxu0 0.0
    %v7672 = vand.u32 %v7402, 4294901760
    %7673 = vmatmul.mubr.f32.gmra.mxu0 %v7672
    %v7674 = vpop.f32.mrf.mxu0
    %v7675 = vadd.f32 %v7534, %v7674
    %v7676 = vpop.f32.mrf.mxu0
    %7677 = vmatprep.mubr.f32.mxu0 0.0
    %v7678 = vand.u32 %v7404, 4294901760
    %7679 = vmatmul.mubr.f32.gmra.mxu0 %v7678
    %v7680 = vpop.f32.mrf.mxu0
    %v7681 = vadd.f32 %v7544, %v7680
    %v7682 = vpop.f32.mrf.mxu0
    %7683 = vmatprep.mubr.f32.mxu0 0.0
    %v7684 = vand.u32 %v7406, 4294901760
    %7685 = vmatmul.mubr.f32.gmra.mxu0 %v7684
    %v7686 = vpop.f32.mrf.mxu0
    %v7687 = vadd.f32 %v7554, %v7686
    %v7688 = vpop.f32.mrf.mxu0
    %7689 = vdwg.mxu0
    %7690 = vmatprep.subr.mxu0 0.0
    %7691 = vmatpush1.msra.mxu0 0.0
    %7692 = vmatprep.subr.mxu0 0.0
    %7693 = vmatpush1.msra.mxu0 0.0
    %7694 = vmatprep.subr.mxu0 0.0
    %7695 = vmatpush1.msra.mxu0 0.0
    %7696 = vmatprep.subr.mxu0 0.0
    %7697 = vmatpush1.msra.mxu0 0.0
    %7698 = vmatprep.subr.mxu0 0.0
    %7699 = vmatpush1.msra.mxu0 0.0
    %7700 = vmatprep.subr.mxu0 0.0
    %7701 = vmatpush1.msra.mxu0 0.0
    %7702 = vmatprep.subr.mxu0 0.0
    %7703 = vmatpush1.msra.mxu0 0.0
    %7704 = vmatprep.subr.mxu0 0.0
    %7705 = vmatpush1.msra.mxu0 0.0
    %7706 = vmatprep.subr.mxu0 0.0
    %7707 = vmatpush1.msra.mxu0 0.0
    %7708 = vmatprep.subr.mxu0 0.0
    %7709 = vmatpush1.msra.mxu0 0.0
    %7710 = vmatprep.subr.mxu0 0.0
    %7711 = vmatpush1.msra.mxu0 0.0
    %7712 = vmatprep.subr.mxu0 0.0
    %7713 = vmatpush1.msra.mxu0 0.0
    %7714 = vmatprep.subr.mxu0 0.0
    %v7715 = vand.u32 %v7367, 4294901760
    %v7716 = vsub.f32 %v7367, %v7715
    %7717 = vmatpush1.msra.mxu0 %v7716
    %7718 = vmatprep.subr.mxu0 0.0
    %v7719 = vand.u32 %v7366, 4294901760
    %v7720 = vsub.f32 %v7366, %v7719
    %7721 = vmatpush1.msra.mxu0 %v7720
    %7722 = vmatprep.subr.mxu0 0.0
    %v7723 = vand.u32 %v7365, 4294901760
    %v7724 = vsub.f32 %v7365, %v7723
    %7725 = vmatpush1.msra.mxu0 %v7724
    %7726 = vmatprep.subr.mxu0 0.0
    %v7727 = vand.u32 %v7364, 4294901760
    %v7728 = vsub.f32 %v7364, %v7727
    %7729 = vmatpush1.msra.mxu0 %v7728
    %7730 = vmatprep.subr.mxu0 0.0
    %7731 = vmatpush2.msra.mxu0 0.0
    %7732 = vmatprep.subr.mxu0 0.0
    %7733 = vmatpush2.msra.mxu0 0.0
    %7734 = vmatprep.subr.mxu0 0.0
    %7735 = vmatpush2.msra.mxu0 0.0
    %7736 = vmatprep.subr.mxu0 0.0
    %7737 = vmatpush2.msra.mxu0 0.0
    %7738 = vmatprep.subr.mxu0 0.0
    %7739 = vmatpush2.msra.mxu0 0.0
    %7740 = vmatprep.subr.mxu0 0.0
    %7741 = vmatpush2.msra.mxu0 0.0
    %7742 = vmatprep.subr.mxu0 0.0
    %7743 = vmatpush2.msra.mxu0 0.0
    %7744 = vmatprep.subr.mxu0 0.0
    %7745 = vmatpush2.msra.mxu0 0.0
    %7746 = vmatprep.subr.mxu0 0.0
    %7747 = vmatpush2.msra.mxu0 0.0
    %7748 = vmatprep.subr.mxu0 0.0
    %7749 = vmatpush2.msra.mxu0 0.0
    %7750 = vmatprep.subr.mxu0 0.0
    %7751 = vmatpush2.msra.mxu0 0.0
    %7752 = vmatprep.subr.mxu0 0.0
    %7753 = vmatpush2.msra.mxu0 0.0
    %7754 = vmatprep.subr.mxu0 0.0
    %7755 = vmatpush2.msra.mxu0 0.0
    %7756 = vmatprep.subr.mxu0 0.0
    %7757 = vmatpush2.msra.mxu0 0.0
    %7758 = vmatprep.subr.mxu0 0.0
    %7759 = vmatpush2.msra.mxu0 0.0
    %7760 = vmatprep.subr.mxu0 0.0
    %7761 = vmatpush2.msra.mxu0 0.0
    %7762 = vmatprep.mubr.f32.mxu0 0.0
    %v7763 = vand.u32 %v7392, 4294901760
    %v7764 = vsub.f32 %v7392, %v7763
    %7765 = vmatmul.mubr.f32.gmra.mxu0 %v7764
    %v7766 = vpop.f32.mrf.mxu0
    %v7767 = vadd.f32 %v7645, %v7766
    %v7768 = vpop.f32.mrf.mxu0
    %7769 = vmatprep.mubr.f32.mxu0 0.0
    %v7770 = vand.u32 %v7394, 4294901760
    %v7771 = vsub.f32 %v7394, %v7770
    %7772 = vmatmul.mubr.f32.gmra.mxu0 %v7771
    %v7773 = vpop.f32.mrf.mxu0
    %v7774 = vadd.f32 %v7651, %v7773
    %v7775 = vpop.f32.mrf.mxu0
    %7776 = vmatprep.mubr.f32.mxu0 0.0
    %v7777 = vand.u32 %v7396, 4294901760
    %v7778 = vsub.f32 %v7396, %v7777
    %7779 = vmatmul.mubr.f32.gmra.mxu0 %v7778
    %v7780 = vpop.f32.mrf.mxu0
    %v7781 = vadd.f32 %v7657, %v7780
    %v7782 = vpop.f32.mrf.mxu0
    %7783 = vmatprep.mubr.f32.mxu0 0.0
    %v7784 = vand.u32 %v7398, 4294901760
    %v7785 = vsub.f32 %v7398, %v7784
    %7786 = vmatmul.mubr.f32.gmra.mxu0 %v7785
    %v7787 = vpop.f32.mrf.mxu0
    %v7788 = vadd.f32 %v7663, %v7787
    %v7789 = vpop.f32.mrf.mxu0
    %7790 = vmatprep.mubr.f32.mxu0 0.0
    %v7791 = vand.u32 %v7400, 4294901760
    %v7792 = vsub.f32 %v7400, %v7791
    %7793 = vmatmul.mubr.f32.gmra.mxu0 %v7792
    %v7794 = vpop.f32.mrf.mxu0
    %v7795 = vadd.f32 %v7669, %v7794
    %v7796 = vpop.f32.mrf.mxu0
    %7797 = vmatprep.mubr.f32.mxu0 0.0
    %v7798 = vand.u32 %v7402, 4294901760
    %v7799 = vsub.f32 %v7402, %v7798
    %7800 = vmatmul.mubr.f32.gmra.mxu0 %v7799
    %v7801 = vpop.f32.mrf.mxu0
    %v7802 = vadd.f32 %v7675, %v7801
    %v7803 = vpop.f32.mrf.mxu0
    %7804 = vmatprep.mubr.f32.mxu0 0.0
    %v7805 = vand.u32 %v7404, 4294901760
    %v7806 = vsub.f32 %v7404, %v7805
    %7807 = vmatmul.mubr.f32.gmra.mxu0 %v7806
    %v7808 = vpop.f32.mrf.mxu0
    %v7809 = vadd.f32 %v7681, %v7808
    %v7810 = vpop.f32.mrf.mxu0
    %7811 = vmatprep.mubr.f32.mxu0 0.0
    %v7812 = vand.u32 %v7406, 4294901760
    %v7813 = vsub.f32 %v7406, %v7812
    %7814 = vmatmul.mubr.f32.gmra.mxu0 %v7813
    %v7815 = vpop.f32.mrf.mxu0
    %v7816 = vadd.f32 %v7687, %v7815
    %v7817 = vpop.f32.mrf.mxu0
    %7818 = vdwg.mxu0
    %7819 = vmatprep.subr.mxu0 0.0
    %7820 = vmatpush1.msra.mxu0 0.0
    %7821 = vmatprep.subr.mxu0 0.0
    %7822 = vmatpush1.msra.mxu0 0.0
    %7823 = vmatprep.subr.mxu0 0.0
    %7824 = vmatpush1.msra.mxu0 0.0
    %7825 = vmatprep.subr.mxu0 0.0
    %7826 = vmatpush1.msra.mxu0 0.0
    %7827 = vmatprep.subr.mxu0 0.0
    %7828 = vmatpush1.msra.mxu0 0.0
    %7829 = vmatprep.subr.mxu0 0.0
    %7830 = vmatpush1.msra.mxu0 0.0
    %7831 = vmatprep.subr.mxu0 0.0
    %7832 = vmatpush1.msra.mxu0 0.0
    %7833 = vmatprep.subr.mxu0 0.0
    %7834 = vmatpush1.msra.mxu0 0.0
    %7835 = vmatprep.subr.mxu0 0.0
    %7836 = vmatpush1.msra.mxu0 0.0
    %7837 = vmatprep.subr.mxu0 0.0
    %7838 = vmatpush1.msra.mxu0 0.0
    %7839 = vmatprep.subr.mxu0 0.0
    %7840 = vmatpush1.msra.mxu0 0.0
    %7841 = vmatprep.subr.mxu0 0.0
    %7842 = vmatpush1.msra.mxu0 0.0
    %7843 = vmatprep.subr.mxu0 0.0
    %v7844 = vand.u32 %v7367, 4294901760
    %7845 = vmatpush1.msra.mxu0 %v7844
    %7846 = vmatprep.subr.mxu0 0.0
    %v7847 = vand.u32 %v7366, 4294901760
    %7848 = vmatpush1.msra.mxu0 %v7847
    %7849 = vmatprep.subr.mxu0 0.0
    %v7850 = vand.u32 %v7365, 4294901760
    %7851 = vmatpush1.msra.mxu0 %v7850
    %7852 = vmatprep.subr.mxu0 0.0
    %v7853 = vand.u32 %v7364, 4294901760
    %7854 = vmatpush1.msra.mxu0 %v7853
    %7855 = vmatprep.subr.mxu0 0.0
    %7856 = vmatpush2.msra.mxu0 0.0
    %7857 = vmatprep.subr.mxu0 0.0
    %7858 = vmatpush2.msra.mxu0 0.0
    %7859 = vmatprep.subr.mxu0 0.0
    %7860 = vmatpush2.msra.mxu0 0.0
    %7861 = vmatprep.subr.mxu0 0.0
    %7862 = vmatpush2.msra.mxu0 0.0
    %7863 = vmatprep.subr.mxu0 0.0
    %7864 = vmatpush2.msra.mxu0 0.0
    %7865 = vmatprep.subr.mxu0 0.0
    %7866 = vmatpush2.msra.mxu0 0.0
    %7867 = vmatprep.subr.mxu0 0.0
    %7868 = vmatpush2.msra.mxu0 0.0
    %7869 = vmatprep.subr.mxu0 0.0
    %7870 = vmatpush2.msra.mxu0 0.0
    %7871 = vmatprep.subr.mxu0 0.0
    %7872 = vmatpush2.msra.mxu0 0.0
    %7873 = vmatprep.subr.mxu0 0.0
    %7874 = vmatpush2.msra.mxu0 0.0
    %7875 = vmatprep.subr.mxu0 0.0
    %7876 = vmatpush2.msra.mxu0 0.0
    %7877 = vmatprep.subr.mxu0 0.0
    %7878 = vmatpush2.msra.mxu0 0.0
    %7879 = vmatprep.subr.mxu0 0.0
    %7880 = vmatpush2.msra.mxu0 0.0
    %7881 = vmatprep.subr.mxu0 0.0
    %7882 = vmatpush2.msra.mxu0 0.0
    %7883 = vmatprep.subr.mxu0 0.0
    %7884 = vmatpush2.msra.mxu0 0.0
    %7885 = vmatprep.subr.mxu0 0.0
    %7886 = vmatpush2.msra.mxu0 0.0
    %7887 = vmatprep.mubr.f32.mxu0 0.0
    %v7888 = vand.u32 %v7392, 4294901760
    %v7889 = vsub.f32 %v7392, %v7888
    %v7890 = vand.u32 %v7889, 4294901760
    %7891 = vmatmul.mubr.f32.gmra.mxu0 %v7890
    %v7892 = vpop.f32.mrf.mxu0
    %v7893 = vadd.f32 %v7767, %v7892
    %v7894 = vpop.f32.mrf.mxu0
    %7895 = vmatprep.mubr.f32.mxu0 0.0
    %v7896 = vand.u32 %v7394, 4294901760
    %v7897 = vsub.f32 %v7394, %v7896
    %v7898 = vand.u32 %v7897, 4294901760
    %7899 = vmatmul.mubr.f32.gmra.mxu0 %v7898
    %v7900 = vpop.f32.mrf.mxu0
    %v7901 = vadd.f32 %v7774, %v7900
    %v7902 = vpop.f32.mrf.mxu0
    %7903 = vmatprep.mubr.f32.mxu0 0.0
    %v7904 = vand.u32 %v7396, 4294901760
    %v7905 = vsub.f32 %v7396, %v7904
    %v7906 = vand.u32 %v7905, 4294901760
    %7907 = vmatmul.mubr.f32.gmra.mxu0 %v7906
    %v7908 = vpop.f32.mrf.mxu0
    %v7909 = vadd.f32 %v7781, %v7908
    %v7910 = vpop.f32.mrf.mxu0
    %7911 = vmatprep.mubr.f32.mxu0 0.0
    %v7912 = vand.u32 %v7398, 4294901760
    %v7913 = vsub.f32 %v7398, %v7912
    %v7914 = vand.u32 %v7913, 4294901760
    %7915 = vmatmul.mubr.f32.gmra.mxu0 %v7914
    %v7916 = vpop.f32.mrf.mxu0
    %v7917 = vadd.f32 %v7788, %v7916
    %v7918 = vpop.f32.mrf.mxu0
    %7919 = vmatprep.mubr.f32.mxu0 0.0
    %v7920 = vand.u32 %v7400, 4294901760
    %v7921 = vsub.f32 %v7400, %v7920
    %v7922 = vand.u32 %v7921, 4294901760
    %7923 = vmatmul.mubr.f32.gmra.mxu0 %v7922
    %v7924 = vpop.f32.mrf.mxu0
    %v7925 = vadd.f32 %v7795, %v7924
    %v7926 = vpop.f32.mrf.mxu0
    %7927 = vmatprep.mubr.f32.mxu0 0.0
    %v7928 = vand.u32 %v7402, 4294901760
    %v7929 = vsub.f32 %v7402, %v7928
    %v7930 = vand.u32 %v7929, 4294901760
    %7931 = vmatmul.mubr.f32.gmra.mxu0 %v7930
    %v7932 = vpop.f32.mrf.mxu0
    %v7933 = vadd.f32 %v7802, %v7932
    %v7934 = vpop.f32.mrf.mxu0
    %7935 = vmatprep.mubr.f32.mxu0 0.0
    %v7936 = vand.u32 %v7404, 4294901760
    %v7937 = vsub.f32 %v7404, %v7936
    %v7938 = vand.u32 %v7937, 4294901760
    %7939 = vmatmul.mubr.f32.gmra.mxu0 %v7938
    %v7940 = vpop.f32.mrf.mxu0
    %v7941 = vadd.f32 %v7809, %v7940
    %v7942 = vpop.f32.mrf.mxu0
    %7943 = vmatprep.mubr.f32.mxu0 0.0
    %v7944 = vand.u32 %v7406, 4294901760
    %v7945 = vsub.f32 %v7406, %v7944
    %v7946 = vand.u32 %v7945, 4294901760
    %7947 = vmatmul.mubr.f32.gmra.mxu0 %v7946
    %v7948 = vpop.f32.mrf.mxu0
    %v7949 = vadd.f32 %v7816, %v7948
    %v7950 = vpop.f32.mrf.mxu0
    %7951 = vdwg.mxu0
    %7952 = vmatprep.subr.mxu0 0.0
    %7953 = vmatpush1.msra.mxu0 0.0
    %7954 = vmatprep.subr.mxu0 0.0
    %7955 = vmatpush1.msra.mxu0 0.0
    %7956 = vmatprep.subr.mxu0 0.0
    %7957 = vmatpush1.msra.mxu0 0.0
    %7958 = vmatprep.subr.mxu0 0.0
    %7959 = vmatpush1.msra.mxu0 0.0
    %7960 = vmatprep.subr.mxu0 0.0
    %7961 = vmatpush1.msra.mxu0 0.0
    %7962 = vmatprep.subr.mxu0 0.0
    %7963 = vmatpush1.msra.mxu0 0.0
    %7964 = vmatprep.subr.mxu0 0.0
    %7965 = vmatpush1.msra.mxu0 0.0
    %7966 = vmatprep.subr.mxu0 0.0
    %7967 = vmatpush1.msra.mxu0 0.0
    %7968 = vmatprep.subr.mxu0 0.0
    %7969 = vmatpush1.msra.mxu0 0.0
    %7970 = vmatprep.subr.mxu0 0.0
    %7971 = vmatpush1.msra.mxu0 0.0
    %7972 = vmatprep.subr.mxu0 0.0
    %7973 = vmatpush1.msra.mxu0 0.0
    %7974 = vmatprep.subr.mxu0 0.0
    %7975 = vmatpush1.msra.mxu0 0.0
    %7976 = vmatprep.subr.mxu0 0.0
    %v7977 = vand.u32 %v7367, 4294901760
    %v7978 = vsub.f32 %v7367, %v7977
    %v7979 = vand.u32 %v7978, 4294901760
    %7980 = vmatpush1.msra.mxu0 %v7979
    %7981 = vmatprep.subr.mxu0 0.0
    %v7982 = vand.u32 %v7366, 4294901760
    %v7983 = vsub.f32 %v7366, %v7982
    %v7984 = vand.u32 %v7983, 4294901760
    %7985 = vmatpush1.msra.mxu0 %v7984
    %7986 = vmatprep.subr.mxu0 0.0
    %v7987 = vand.u32 %v7365, 4294901760
    %v7988 = vsub.f32 %v7365, %v7987
    %v7989 = vand.u32 %v7988, 4294901760
    %7990 = vmatpush1.msra.mxu0 %v7989
    %7991 = vmatprep.subr.mxu0 0.0
    %v7992 = vand.u32 %v7364, 4294901760
    %v7993 = vsub.f32 %v7364, %v7992
    %v7994 = vand.u32 %v7993, 4294901760
    %7995 = vmatpush1.msra.mxu0 %v7994
    %7996 = vmatprep.subr.mxu0 0.0
    %7997 = vmatpush2.msra.mxu0 0.0
    %7998 = vmatprep.subr.mxu0 0.0
    %7999 = vmatpush2.msra.mxu0 0.0
    %8000 = vmatprep.subr.mxu0 0.0
    %8001 = vmatpush2.msra.mxu0 0.0
    %8002 = vmatprep.subr.mxu0 0.0
    %8003 = vmatpush2.msra.mxu0 0.0
    %8004 = vmatprep.subr.mxu0 0.0
    %8005 = vmatpush2.msra.mxu0 0.0
    %8006 = vmatprep.subr.mxu0 0.0
    %8007 = vmatpush2.msra.mxu0 0.0
    %8008 = vmatprep.subr.mxu0 0.0
    %8009 = vmatpush2.msra.mxu0 0.0
    %8010 = vmatprep.subr.mxu0 0.0
    %8011 = vmatpush2.msra.mxu0 0.0
    %8012 = vmatprep.subr.mxu0 0.0
    %8013 = vmatpush2.msra.mxu0 0.0
    %8014 = vmatprep.subr.mxu0 0.0
    %8015 = vmatpush2.msra.mxu0 0.0
    %8016 = vmatprep.subr.mxu0 0.0
    %8017 = vmatpush2.msra.mxu0 0.0
    %8018 = vmatprep.subr.mxu0 0.0
    %8019 = vmatpush2.msra.mxu0 0.0
    %8020 = vmatprep.subr.mxu0 0.0
    %8021 = vmatpush2.msra.mxu0 0.0
    %8022 = vmatprep.subr.mxu0 0.0
    %8023 = vmatpush2.msra.mxu0 0.0
    %8024 = vmatprep.subr.mxu0 0.0
    %8025 = vmatpush2.msra.mxu0 0.0
    %8026 = vmatprep.subr.mxu0 0.0
    %8027 = vmatpush2.msra.mxu0 0.0
    %8028 = vmatprep.mubr.f32.mxu0 0.0
    %v8029 = vand.u32 %v7392, 4294901760
    %8030 = vmatmul.mubr.f32.gmra.mxu0 %v8029
    %v8031 = vpop.f32.mrf.mxu0
    %v8032 = vadd.f32 %v7893, %v8031
    %v8033 = vpop.f32.mrf.mxu0
    %8034 = vmatprep.mubr.f32.mxu0 0.0
    %v8035 = vand.u32 %v7394, 4294901760
    %8036 = vmatmul.mubr.f32.gmra.mxu0 %v8035
    %v8037 = vpop.f32.mrf.mxu0
    %v8038 = vadd.f32 %v7901, %v8037
    %v8039 = vpop.f32.mrf.mxu0
    %8040 = vmatprep.mubr.f32.mxu0 0.0
    %v8041 = vand.u32 %v7396, 4294901760
    %8042 = vmatmul.mubr.f32.gmra.mxu0 %v8041
    %v8043 = vpop.f32.mrf.mxu0
    %v8044 = vadd.f32 %v7909, %v8043
    %v8045 = vpop.f32.mrf.mxu0
    %8046 = vmatprep.mubr.f32.mxu0 0.0
    %v8047 = vand.u32 %v7398, 4294901760
    %8048 = vmatmul.mubr.f32.gmra.mxu0 %v8047
    %v8049 = vpop.f32.mrf.mxu0
    %v8050 = vadd.f32 %v7917, %v8049
    %v8051 = vpop.f32.mrf.mxu0
    %8052 = vmatprep.mubr.f32.mxu0 0.0
    %v8053 = vand.u32 %v7400, 4294901760
    %8054 = vmatmul.mubr.f32.gmra.mxu0 %v8053
    %v8055 = vpop.f32.mrf.mxu0
    %v8056 = vadd.f32 %v7925, %v8055
    %v8057 = vpop.f32.mrf.mxu0
    %8058 = vmatprep.mubr.f32.mxu0 0.0
    %v8059 = vand.u32 %v7402, 4294901760
    %8060 = vmatmul.mubr.f32.gmra.mxu0 %v8059
    %v8061 = vpop.f32.mrf.mxu0
    %v8062 = vadd.f32 %v7933, %v8061
    %v8063 = vpop.f32.mrf.mxu0
    %8064 = vmatprep.mubr.f32.mxu0 0.0
    %v8065 = vand.u32 %v7404, 4294901760
    %8066 = vmatmul.mubr.f32.gmra.mxu0 %v8065
    %v8067 = vpop.f32.mrf.mxu0
    %v8068 = vadd.f32 %v7941, %v8067
    %v8069 = vpop.f32.mrf.mxu0
    %8070 = vmatprep.mubr.f32.mxu0 0.0
    %v8071 = vand.u32 %v7406, 4294901760
    %8072 = vmatmul.mubr.f32.gmra.mxu0 %v8071
    %v8073 = vpop.f32.mrf.mxu0
    %v8074 = vadd.f32 %v7949, %v8073
    %v8075 = vpop.f32.mrf.mxu0
    %8076 = vdwg.mxu0
    %8077 = vmatprep.subr.mxu0 0.0
    %8078 = vmatpush1.msra.mxu0 0.0
    %8079 = vmatprep.subr.mxu0 0.0
    %8080 = vmatpush1.msra.mxu0 0.0
    %8081 = vmatprep.subr.mxu0 0.0
    %8082 = vmatpush1.msra.mxu0 0.0
    %8083 = vmatprep.subr.mxu0 0.0
    %8084 = vmatpush1.msra.mxu0 0.0
    %8085 = vmatprep.subr.mxu0 0.0
    %8086 = vmatpush1.msra.mxu0 0.0
    %8087 = vmatprep.subr.mxu0 0.0
    %8088 = vmatpush1.msra.mxu0 0.0
    %8089 = vmatprep.subr.mxu0 0.0
    %8090 = vmatpush1.msra.mxu0 0.0
    %8091 = vmatprep.subr.mxu0 0.0
    %8092 = vmatpush1.msra.mxu0 0.0
    %8093 = vmatprep.subr.mxu0 0.0
    %8094 = vmatpush1.msra.mxu0 0.0
    %8095 = vmatprep.subr.mxu0 0.0
    %8096 = vmatpush1.msra.mxu0 0.0
    %8097 = vmatprep.subr.mxu0 0.0
    %8098 = vmatpush1.msra.mxu0 0.0
    %8099 = vmatprep.subr.mxu0 0.0
    %8100 = vmatpush1.msra.mxu0 0.0
    %8101 = vmatprep.subr.mxu0 0.0
    %v8102 = vand.u32 %v7367, 4294901760
    %8103 = vmatpush1.msra.mxu0 %v8102
    %8104 = vmatprep.subr.mxu0 0.0
    %v8105 = vand.u32 %v7366, 4294901760
    %8106 = vmatpush1.msra.mxu0 %v8105
    %8107 = vmatprep.subr.mxu0 0.0
    %v8108 = vand.u32 %v7365, 4294901760
    %8109 = vmatpush1.msra.mxu0 %v8108
    %8110 = vmatprep.subr.mxu0 0.0
    %v8111 = vand.u32 %v7364, 4294901760
    %8112 = vmatpush1.msra.mxu0 %v8111
    %8113 = vmatprep.subr.mxu0 0.0
    %8114 = vmatpush2.msra.mxu0 0.0
    %8115 = vmatprep.subr.mxu0 0.0
    %8116 = vmatpush2.msra.mxu0 0.0
    %8117 = vmatprep.subr.mxu0 0.0
    %8118 = vmatpush2.msra.mxu0 0.0
    %8119 = vmatprep.subr.mxu0 0.0
    %8120 = vmatpush2.msra.mxu0 0.0
    %8121 = vmatprep.subr.mxu0 0.0
    %8122 = vmatpush2.msra.mxu0 0.0
    %8123 = vmatprep.subr.mxu0 0.0
    %8124 = vmatpush2.msra.mxu0 0.0
    %8125 = vmatprep.subr.mxu0 0.0
    %8126 = vmatpush2.msra.mxu0 0.0
    %8127 = vmatprep.subr.mxu0 0.0
    %8128 = vmatpush2.msra.mxu0 0.0
    %8129 = vmatprep.subr.mxu0 0.0
    %8130 = vmatpush2.msra.mxu0 0.0
    %8131 = vmatprep.subr.mxu0 0.0
    %8132 = vmatpush2.msra.mxu0 0.0
    %8133 = vmatprep.subr.mxu0 0.0
    %8134 = vmatpush2.msra.mxu0 0.0
    %8135 = vmatprep.subr.mxu0 0.0
    %8136 = vmatpush2.msra.mxu0 0.0
    %8137 = vmatprep.subr.mxu0 0.0
    %8138 = vmatpush2.msra.mxu0 0.0
    %8139 = vmatprep.subr.mxu0 0.0
    %8140 = vmatpush2.msra.mxu0 0.0
    %8141 = vmatprep.subr.mxu0 0.0
    %8142 = vmatpush2.msra.mxu0 0.0
    %8143 = vmatprep.subr.mxu0 0.0
    %8144 = vmatpush2.msra.mxu0 0.0
    %8145 = vmatprep.mubr.f32.mxu0 0.0
    %v8146 = vand.u32 %v7392, 4294901760
    %8147 = vmatmul.mubr.f32.gmra.mxu0 %v8146
    %v8148 = vpop.f32.mrf.mxu0
    %v8149 = vadd.f32 %v8032, %v8148
    %v8150 = vpop.f32.mrf.mxu0
    %8151 = vmatprep.mubr.f32.mxu0 0.0
    %v8152 = vand.u32 %v7394, 4294901760
    %8153 = vmatmul.mubr.f32.gmra.mxu0 %v8152
    %v8154 = vpop.f32.mrf.mxu0
    %v8155 = vadd.f32 %v8038, %v8154
    %v8156 = vpop.f32.mrf.mxu0
    %8157 = vmatprep.mubr.f32.mxu0 0.0
    %v8158 = vand.u32 %v7396, 4294901760
    %8159 = vmatmul.mubr.f32.gmra.mxu0 %v8158
    %v8160 = vpop.f32.mrf.mxu0
    %v8161 = vadd.f32 %v8044, %v8160
    %v8162 = vpop.f32.mrf.mxu0
    %8163 = vmatprep.mubr.f32.mxu0 0.0
    %v8164 = vand.u32 %v7398, 4294901760
    %8165 = vmatmul.mubr.f32.gmra.mxu0 %v8164
    %v8166 = vpop.f32.mrf.mxu0
    %v8167 = vadd.f32 %v8050, %v8166
    %v8168 = vpop.f32.mrf.mxu0
    %8169 = vmatprep.mubr.f32.mxu0 0.0
    %v8170 = vand.u32 %v7400, 4294901760
    %8171 = vmatmul.mubr.f32.gmra.mxu0 %v8170
    %v8172 = vpop.f32.mrf.mxu0
    %v8173 = vadd.f32 %v8056, %v8172
    %v8174 = vpop.f32.mrf.mxu0
    %8175 = vmatprep.mubr.f32.mxu0 0.0
    %v8176 = vand.u32 %v7402, 4294901760
    %8177 = vmatmul.mubr.f32.gmra.mxu0 %v8176
    %v8178 = vpop.f32.mrf.mxu0
    %v8179 = vadd.f32 %v8062, %v8178
    %v8180 = vpop.f32.mrf.mxu0
    %8181 = vmatprep.mubr.f32.mxu0 0.0
    %v8182 = vand.u32 %v7404, 4294901760
    %8183 = vmatmul.mubr.f32.gmra.mxu0 %v8182
    %v8184 = vpop.f32.mrf.mxu0
    %v8185 = vadd.f32 %v8068, %v8184
    %v8186 = vpop.f32.mrf.mxu0
    %8187 = vmatprep.mubr.f32.mxu0 0.0
    %v8188 = vand.u32 %v7406, 4294901760
    %8189 = vmatmul.mubr.f32.gmra.mxu0 %v8188
    %v8190 = vpop.f32.mrf.mxu0
    %v8191 = vadd.f32 %v8074, %v8190
    %v8192 = vpop.f32.mrf.mxu0
    %8193 = vdwg.mxu0
    %8194 = vst [vmem:[%s9] sm:$0xff] %v8149
    %8195 = vst [vmem:[%s9 + $0x8] sm:$0xff] %v8155
    %8196 = vst [vmem:[%s9 + $0x10] sm:$0xff] %v8161
    %8197 = vst [vmem:[%s9 + $0x18] sm:$0xff] %v8167
    %8198 = vst [vmem:[%s9 + $0x20] sm:$0xff] %v8173
    %8199 = vst [vmem:[%s9 + $0x28] sm:$0xff] %v8179
    %8200 = vst [vmem:[%s9 + $0x30] sm:$0xff] %v8185
    %8201 = vst [vmem:[%s9 + $0x38] sm:$0xff] %v8191
    %8202 = vst.msk [vmem:[%s10] sm:$0xff] %vm1026, %v6687
    %s8204 = scalar_lea.vmem %s10, 8
    %8205 = vst.msk [vmem:[%s8204] sm:$0xff] %vm1026, %v7391
    %8207 = vrot.lane.b32.xlu0 %v6652, 96
    %v8208 = vpop.permute.xlu0 %8207
    %8210 = vst.msk [vmem:[%s11] sm:$0xff] %vm1026, %v8208
    %8212 = vrot.lane.b32.xlu0 %v7357, 96
    %v8213 = vpop.permute.xlu0 %8212
    %s8215 = scalar_lea.vmem %s11, 8
    %8216 = vst.msk [vmem:[%s8215] sm:$0xff] %vm1026, %v8213
    // Predicated region
    $region46: #{fused_forward.1} parent=1 // pred_check
      _
    $region47: #{fused_forward.1} parent=1 // pred_check_branch
      %8218 = sbr.rel (0) target = $region49
    $region48: #{fused_forward.1} parent=1 // pred_region
      _
    $region49: #{fused_forward.1} parent=1 // pred_fallthru
      _
    // Predicated region
    $region50: #{fused_forward.1} parent=1 // pred_check
      _
    $region51: #{fused_forward.1} parent=1 // pred_check_branch
      %8220 = sbr.rel (0) target = $region53
    $region52: #{fused_forward.1} parent=1 // pred_region
      _
    $region53: #{fused_forward.1} parent=1 // pred_fallthru
      _
    // Predicated region
    $region54: #{fused_forward.1} parent=1 // pred_check
      _
    $region55: #{fused_forward.1} parent=1 // pred_check_branch
      %8222 = sbr.rel (0) target = $region57
    $region56: #{fused_forward.1} parent=1 // pred_region
      _
    $region57: #{fused_forward.1} parent=1 // pred_fallthru
      _
    // Predicated region
    $region58: #{fused_forward.1} parent=1 // pred_check
      _
    $region59: #{fused_forward.1} parent=1 // pred_check_branch
      %8224 = sbr.rel (0) target = $region61
    $region60: #{fused_forward.1} parent=1 // pred_region
      _
    $region61: #{fused_forward.1} parent=1 // pred_fallthru
      _
    // Predicated region
    $region62: #{fused_forward.1} parent=1 // pred_check
      _
    $region63: #{fused_forward.1} parent=1 // pred_check_branch
      %8226 = sbr.rel (0) target = $region65
    $region64: #{fused_forward.1} parent=1 // pred_region
      _
    $region65: #{fused_forward.1} parent=1 // pred_fallthru
      _
    // Predicated region
    $region66: #{fused_forward.1} parent=1 // pred_check
      _
    $region67: #{fused_forward.1} parent=1 // pred_check_branch
      %8228 = sbr.rel (0) target = $region69
    $region68: #{fused_forward.1} parent=1 // pred_region
      _
    $region69: #{fused_forward.1} parent=1 // pred_fallthru
      _
    %8229 = vsyncpa [#allocation3], 1
    %8230 = vsyncpa [#allocation5], 1

</llo_original>
